<compile_context>
chip_gen: v7x
topology: tpu7x:2x2x1
jax: 0.10.0
libtpu: 0.0.40
codegen_flags: <defaults>
</compile_context>

<pallas_src>
import functools

import jax
import jax.numpy as jnp
from jax.experimental import pallas as pl
from jax.experimental.pallas import tpu as pltpu


BN_EPS = 1e-5
BF16 = jnp.bfloat16
VMEM_LIMIT_BYTES = 32 * 1024 * 1024   # explicit scoped-VMEM budget (safe on v5e/v6e/v7x)


# ---------------------------------------------------------------------------
# Pallas kernels
# ---------------------------------------------------------------------------

def matmul_kernel(a_ref, b_ref, o_ref):
    # patches = x_flat @ W_mat  (ConvTranspose2d as a dense, zero-free matmul)
    o_ref[...] = jnp.dot(a_ref[...], b_ref[...], preferred_element_type=jnp.float32)


def bn_relu_matmul_kernel(a_ref, scale_ref, shift_ref, b_ref, o_ref):
    # Fused prologue: BatchNorm (pre-folded scale/shift) + ReLU of the PREVIOUS
    # block applied to the A tile as it is loaded, then the ConvTranspose matmul.
    a = jnp.maximum(a_ref[...] * scale_ref[...] + shift_ref[...], 0.0)
    o_ref[...] = jnp.dot(a.astype(b_ref.dtype), b_ref[...],
                         preferred_element_type=jnp.float32)


def bn_stats_kernel(y_ref, sum_ref, sq_ref):
    # Per-channel sum / sum-of-squares accumulated across the (usually 1-step)
    # M grid.  Two separate (1, CO) outputs -> no concatenate, no sub-row RMW.
    @pl.when(pl.program_id(0) == 0)
    def _():
        sum_ref[...] = jnp.zeros_like(sum_ref)
        sq_ref[...] = jnp.zeros_like(sq_ref)

    y = y_ref[...]
    sum_ref[...] += jnp.sum(y, axis=0, keepdims=True)
    sq_ref[...] += jnp.sum(y * y, axis=0, keepdims=True)


def bias_tanh_kernel(y_ref, bias_ref, o_ref):
    # Final ConvTranspose2d bias + Tanh (bias pre-tiled along the lane axis).
    o_ref[...] = jnp.tanh(y_ref[...] + bias_ref[...])


# ---------------------------------------------------------------------------
# Pallas wrappers
# ---------------------------------------------------------------------------

def _cparams(sem):
    return pltpu.CompilerParams(dimension_semantics=sem,
                                vmem_limit_bytes=VMEM_LIMIT_BYTES)


def _tile_m(m, cap=4096):
    """Row tile for matmul / elementwise kernels: one block when M is small
    (per-grid-step overhead dominates at these sizes); at least two 'parallel'
    blocks when M >= 512 so both v7x TensorCores get work; <= `cap` rows/block."""
    if m < 512 or m % 16 != 0:
        return m
    tm = m // 2
    while tm > cap and tm % 2 == 0 and (tm // 2) % 8 == 0:
        tm //= 2
    return tm


def _stats_tile_m(m, cap=8192):
    """Row tile for the stats reduction: whole array when it fits comfortably in
    VMEM, otherwise halve (sequential accumulation over an 'arbitrary' grid)."""
    tm = m
    while tm > cap and tm % 2 == 0 and (tm // 2) % 8 == 0:
        tm //= 2
    return tm


def pallas_matmul(a, b):
    m, k = a.shape
    n_out = b.shape[1]
    tm = _tile_m(m)
    return pl.pallas_call(
        matmul_kernel,
        out_shape=jax.ShapeDtypeStruct((m, n_out), jnp.float32),
        grid=(m // tm,),
        in_specs=[pl.BlockSpec((tm, k), lambda i: (i, 0)),
                  pl.BlockSpec((k, n_out), lambda i: (0, 0))],
        out_specs=pl.BlockSpec((tm, n_out), lambda i: (i, 0)),
        compiler_params=_cparams(("parallel",)),
    )(a, b)


def pallas_bn_relu_matmul(a, scale, shift, b):
    m, k = a.shape
    n_out = b.shape[1]
    tm = _tile_m(m)
    return pl.pallas_call(
        bn_relu_matmul_kernel,
        out_shape=jax.ShapeDtypeStruct((m, n_out), jnp.float32),
        grid=(m // tm,),
        in_specs=[pl.BlockSpec((tm, k), lambda i: (i, 0)),
                  pl.BlockSpec((1, k), lambda i: (0, 0)),
                  pl.BlockSpec((1, k), lambda i: (0, 0)),
                  pl.BlockSpec((k, n_out), lambda i: (0, 0))],
        out_specs=pl.BlockSpec((tm, n_out), lambda i: (i, 0)),
        compiler_params=_cparams(("parallel",)),
    )(a, scale, shift, b)


def pallas_bn_stats(y):
    m, co = y.shape
    tm = _stats_tile_m(m)
    s, sq = pl.pallas_call(
        bn_stats_kernel,
        out_shape=(jax.ShapeDtypeStruct((1, co), jnp.float32),
                   jax.ShapeDtypeStruct((1, co), jnp.float32)),
        grid=(m // tm,),
        in_specs=[pl.BlockSpec((tm, co), lambda i: (i, 0))],
        out_specs=(pl.BlockSpec((1, co), lambda i: (0, 0)),
                   pl.BlockSpec((1, co), lambda i: (0, 0))),
        compiler_params=_cparams(("arbitrary",)),
    )(y)
    return s[0], sq[0]


def pallas_bias_tanh(y, bias_row):
    m, n = y.shape
    tm = _tile_m(m)
    return pl.pallas_call(
        bias_tanh_kernel,
        out_shape=jax.ShapeDtypeStruct((m, n), jnp.float32),
        grid=(m // tm,),
        in_specs=[pl.BlockSpec((tm, n), lambda i: (i, 0)),
                  pl.BlockSpec((1, n), lambda i: (0, 0))],
        out_specs=pl.BlockSpec((tm, n), lambda i: (i, 0)),
        compiler_params=_cparams(("parallel",)),
    )(y, bias_row)


# ---------------------------------------------------------------------------
# ConvTranspose2d glue: weight flattening + overlap-add (col2im), plain JAX
# ---------------------------------------------------------------------------

def convT_weight_mat(w, co_pad=None):
    """PyTorch ConvTranspose2d weight (CI, CO, K, K) -> (CI, K*K*CO) bf16 matrix
    with last-dim layout (kh, kw, co). Optionally zero-pads CO for lane-dense out."""
    ci, co, k, _ = w.shape
    if co_pad is not None and co_pad > co:
        w = jnp.pad(w, ((0, 0), (0, co_pad - co), (0, 0), (0, 0)))
        co = co_pad
    return jnp.transpose(w, (0, 2, 3, 1)).reshape(ci, k * k * co).astype(BF16)


def col2im_convT(patches, n, h, w, k, co, stride, padding):
    """Overlap-add for ConvTranspose2d written as x @ W_mat[CI, K*K*CO].

    patches: (N*H*W, K*K*CO) f32, last-dim layout (kh, kw, co).
    Pure static pads/adds/reshapes (no scatters, no dilation zeros).
    out[n, i*s - p + kh, j*s - p + kw, c] += patches[n, i, j, kh, kw, c]
    """
    s = stride
    assert k % s == 0
    g = k // s                                  # taps per output phase
    p6 = patches.reshape(n, h, w, k, k, co)

    # overlap-add along H (input axis 1, tap axis 3)
    qh = h - 1 + g
    rows = []
    for r in range(s):
        acc = 0.0
        for d in range(g):
            acc = acc + jnp.pad(p6[:, :, :, r + d * s, :, :],
                                ((0, 0), (d, g - 1 - d), (0, 0), (0, 0), (0, 0)))
        rows.append(acc)                        # (n, qh, w, k, co)
    t = jnp.stack(rows, axis=2).reshape(n, qh * s, w, k, co)

    # overlap-add along W (input axis 2, tap axis 3)
    qw = w - 1 + g
    cols = []
    for r in range(s):
        acc = 0.0
        for d in range(g):
            acc = acc + jnp.pad(t[:, :, :, r + d * s, :],
                                ((0, 0), (0, 0), (d, g - 1 - d), (0, 0)))
        cols.append(acc)                        # (n, FH, qw, co)
    y = jnp.stack(cols, axis=3).reshape(n, qh * s, qw * s, co)

    oh = (h - 1) * s - 2 * padding + k
    ow = (w - 1) * s - 2 * padding + k
    y = y[:, padding:padding + oh, padding:padding + ow, :]
    return y, (n, oh, ow)


# ---------------------------------------------------------------------------
# Generator forward
# ---------------------------------------------------------------------------

def generator_forward(x_nchw, params):
    x = jnp.transpose(x_nchw, (0, 2, 3, 1)).astype(jnp.float32)    # -> NHWC
    block_cfgs = [(1, 0), (2, 1), (2, 1), (2, 1)]                  # (stride, padding)
    pending = None   # (scale, shift) of the previous BN, applied in the next matmul

    for (stride, padding), (w, gamma, beta) in zip(block_cfgs, params["blocks"]):
        n, h, wd, ci = x.shape
        co, k = w.shape[1], w.shape[2]
        a = x.reshape(n * h * wd, ci)
        w_mat = convT_weight_mat(w)
        if pending is None:
            patches = pallas_matmul(a.astype(BF16), w_mat)          # block 1: no BN prologue
        else:
            patches = pallas_bn_relu_matmul(a, pending[0], pending[1], w_mat)
        y, (n, oh, ow) = col2im_convT(patches, n, h, wd, k, co, stride, padding)

        # BatchNorm2d batch statistics (training mode, biased variance, eps=1e-5)
        y2 = y.reshape(n * oh * ow, co)
        s_vec, sq_vec = pallas_bn_stats(y2)
        cnt = jnp.float32(y2.shape[0])
        mean = s_vec / cnt
        var = jnp.maximum(sq_vec / cnt - mean * mean, 0.0)          # clamp cancellation
        scale = gamma * jax.lax.rsqrt(var + BN_EPS)
        shift = beta - mean * scale
        pending = (scale[None, :], shift[None, :])
        x = y    # raw conv output; BN + ReLU deferred into the next matmul's prologue

    # final ConvTranspose2d (stride 2, padding 1, bias=True) + Tanh
    w_f, b_f = params["final"]
    co = w_f.shape[1]
    co_pad = -(-co // 8) * 8                   # lane-dense: 16*co_pad is a mult of 128
    n, h, wd, ci = x.shape
    a = x.reshape(n * h * wd, ci)
    w_mat = convT_weight_mat(w_f, co_pad=co_pad)
    patches = pallas_bn_relu_matmul(a, pending[0], pending[1], w_mat)
    y, (n, oh, ow) = col2im_convT(patches, n, h, wd, 4, co_pad, 2, 1)
    y = y[..., :co]                            # drop channel padding (zero weights)

    y2 = y.reshape(n * oh, ow * co)            # lane-dense flattening for the epilogue
    bias_row = jnp.tile(b_f, ow)[None, :]
    out = pallas_bias_tanh(y2, bias_row).reshape(n, oh, ow, co)
    return jnp.transpose(out, (0, 3, 1, 2))    # back to NCHW


def init_params(key, z_dim, channels_img, features_g):
    dims = [z_dim, features_g * 16, features_g * 8, features_g * 4, features_g * 2]
    blocks = []
    for i in range(4):
        key, kw = jax.random.split(key)
        w = jax.random.normal(kw, (dims[i], dims[i + 1], 4, 4), jnp.float32) * 0.02
        gamma = jnp.ones((dims[i + 1],), jnp.float32)
        beta = jnp.zeros((dims[i + 1],), jnp.float32)
        blocks.append((w, gamma, beta))
    key, kw, kb = jax.random.split(key, 3)
    w_f = jax.random.normal(kw, (dims[4], channels_img, 4, 4), jnp.float32) * 0.02
    b_f = jax.random.normal(kb, (channels_img,), jnp.float32) * 0.02
    return {"blocks": blocks, "final": (w_f, b_f)}


if __name__ == "__main__":
    z_dim, channels_img, features_g, batch = 8, 3, 4, 2

    key = jax.random.PRNGKey(0)
    key, kx, kp = jax.random.split(key, 3)
    params = init_params(kp, z_dim, channels_img, features_g)
    x = jax.random.normal(kx, (batch, z_dim, 1, 1), jnp.float32)    # NCHW latent

    fwd = jax.jit(functools.partial(generator_forward, params=params))
    out = jax.block_until_ready(fwd(x))

    assert out.shape == (batch, channels_img, 64, 64), out.shape
    assert bool(jnp.all(jnp.isfinite(out)))
    assert bool(jnp.all(jnp.abs(out) <= 1.0 + 1e-6))   # tanh range
    print("KERNEL_OK")
</pallas_src>

<mosaic_0001>
module attributes {stable_mosaic.version = 11 : i64} {
  func.func @matmul_kernel(%arg0: i32, %arg1: memref<2x8xbf16, #tpu.memory_space<vmem>>, %arg2: memref<8x1024xbf16, #tpu.memory_space<vmem>>, %arg3: memref<2x1024xf32, #tpu.memory_space<vmem>>) attributes {dimension_semantics = [#tpu.dimension_semantics<parallel>], iteration_bounds = array<i64: 1>, scalar_prefetch = 0 : i64, scratch_operands = 0 : i64, tpu.core_type = #tpu.core_type<tc>, window_params = [{transform_indices = @transform_0, window_bounds = array<i64: 2, 8>}, {pipeline_mode = #tpu.pipeline_mode<synchronous>, transform_indices = @transform_1, window_bounds = array<i64: 8, 1024>}, {transform_indices = @transform_2, window_bounds = array<i64: 2, 1024>}]} {
    %c0 = arith.constant 0 : index
    %c0_0 = arith.constant 0 : index
    %0 = vector.load %arg1[%c0, %c0_0] : memref<2x8xbf16, #tpu.memory_space<vmem>>, vector<2x8xbf16>
    %c0_1 = arith.constant 0 : index
    %c0_2 = arith.constant 0 : index
    %1 = vector.load %arg2[%c0_1, %c0_2] : memref<8x1024xbf16, #tpu.memory_space<vmem>>, vector<8x1024xbf16>
    %cst = arith.constant dense<0.000000e+00> : vector<2x1024xf32>
    %2 = tpu.matmul %0, %1, %cst {dimension_numbers = #tpu.dot_dimension_numbers<[1], [0], [0], [1], [0, 0, 1, 1], [], []>} : vector<2x8xbf16>, vector<8x1024xbf16>, vector<2x1024xf32> -> vector<2x1024xf32>
    %c0_3 = arith.constant 0 : index
    %c0_4 = arith.constant 0 : index
    %3 = vector.load %arg3[%c0_3, %c0_4] : memref<2x1024xf32, #tpu.memory_space<vmem>>, vector<2x1024xf32>
    tpu.vector_store %arg3[%c0_3, %c0_4], %2 {strides = array<i32>} : memref<2x1024xf32, #tpu.memory_space<vmem>>, vector<2x1024xf32>,
    return
  }
  func.func @transform_0(%arg0: i32) -> (i32, i32) {
    %c0_i32 = arith.constant 0 : i32
    %c0_i32_0 = arith.constant 0 : i32
    return %arg0, %c0_i32 : i32, i32
  }
  func.func @transform_1(%arg0: i32) -> (i32, i32) {
    %c0_i32 = arith.constant 0 : i32
    %c0_i32_0 = arith.constant 0 : i32
    %c0_i32_1 = arith.constant 0 : i32
    return %c0_i32, %c0_i32_0 : i32, i32
  }
  func.func @transform_2(%arg0: i32) -> (i32, i32) {
    %c0_i32 = arith.constant 0 : i32
    %c0_i32_0 = arith.constant 0 : i32
    return %arg0, %c0_i32 : i32, i32
  }
}

module attributes {stable_mosaic.version = 11 : i64} {
  func.func @bn_stats_kernel(%arg0: i32, %arg1: memref<32x64xf32, #tpu.memory_space<vmem>>, %arg2: memref<1x64xf32, #tpu.memory_space<vmem>>, %arg3: memref<1x64xf32, #tpu.memory_space<vmem>>) attributes {dimension_semantics = [#tpu.dimension_semantics<arbitrary>], iteration_bounds = array<i64: 1>, scalar_prefetch = 0 : i64, scratch_operands = 0 : i64, tpu.core_type = #tpu.core_type<tc>, window_params = [{transform_indices = @transform_0, window_bounds = array<i64: 32, 64>}, {pipeline_mode = #tpu.pipeline_mode<synchronous>, transform_indices = @transform_1, window_bounds = array<i64: 1, 64>}, {pipeline_mode = #tpu.pipeline_mode<synchronous>, transform_indices = @transform_2, window_bounds = array<i64: 1, 64>}]} {
    %c0_i32 = arith.constant 0 : i32
    %0 = arith.cmpi eq, %arg0, %c0_i32 : i32
    %1 = arith.extui %0 : i1 to i32
    %c0_i32_0 = arith.constant 0 : i32
    %2 = arith.cmpi ne, %1, %c0_i32_0 : i32
    scf.if %2 {
      %cst_11 = arith.constant 0.000000e+00 : f32
      %15 = vector.broadcast %cst_11 : f32 to vector<1x64xf32>
      %c0_12 = arith.constant 0 : index
      %c0_13 = arith.constant 0 : index
      %16 = vector.load %arg2[%c0_12, %c0_13] : memref<1x64xf32, #tpu.memory_space<vmem>>, vector<1x64xf32>
      tpu.vector_store %arg2[%c0_12, %c0_13], %15 {strides = array<i32>} : memref<1x64xf32, #tpu.memory_space<vmem>>, vector<1x64xf32>,
      %cst_14 = arith.constant 0.000000e+00 : f32
      %17 = vector.broadcast %cst_14 : f32 to vector<1x64xf32>
      %c0_15 = arith.constant 0 : index
      %c0_16 = arith.constant 0 : index
      %18 = vector.load %arg3[%c0_15, %c0_16] : memref<1x64xf32, #tpu.memory_space<vmem>>, vector<1x64xf32>
      tpu.vector_store %arg3[%c0_15, %c0_16], %17 {strides = array<i32>} : memref<1x64xf32, #tpu.memory_space<vmem>>, vector<1x64xf32>,
    } else {
    }
    %c0 = arith.constant 0 : index
    %c0_1 = arith.constant 0 : index
    %3 = vector.load %arg1[%c0, %c0_1] : memref<32x64xf32, #tpu.memory_space<vmem>>, vector<32x64xf32>
    %c0_2 = arith.constant 0 : index
    %c0_3 = arith.constant 0 : index
    %4 = vector.load %arg2[%c0_2, %c0_3] : memref<1x64xf32, #tpu.memory_space<vmem>>, vector<1x64xf32>
    %cst = arith.constant dense<0.000000e+00> : vector<64xf32>
    %5 = vector.multi_reduction <add>, %3, %cst [0] : vector<32x64xf32> to vector<64xf32>
    %6 = vector.shape_cast %5 : vector<64xf32> to vector<1x64xf32>
    %7 = arith.addf %4, %6 : vector<1x64xf32>
    %c0_4 = arith.constant 0 : index
    %c0_5 = arith.constant 0 : index
    %8 = vector.load %arg2[%c0_4, %c0_5] : memref<1x64xf32, #tpu.memory_space<vmem>>, vector<1x64xf32>
    tpu.vector_store %arg2[%c0_4, %c0_5], %7 {strides = array<i32>} : memref<1x64xf32, #tpu.memory_space<vmem>>, vector<1x64xf32>,
    %c0_6 = arith.constant 0 : index
    %c0_7 = arith.constant 0 : index
    %9 = vector.load %arg3[%c0_6, %c0_7] : memref<1x64xf32, #tpu.memory_space<vmem>>, vector<1x64xf32>
    %10 = arith.mulf %3, %3 : vector<32x64xf32>
    %cst_8 = arith.constant dense<0.000000e+00> : vector<64xf32>
    %11 = vector.multi_reduction <add>, %10, %cst_8 [0] : vector<32x64xf32> to vector<64xf32>
    %12 = vector.shape_cast %11 : vector<64xf32> to vector<1x64xf32>
    %13 = arith.addf %9, %12 : vector<1x64xf32>
    %c0_9 = arith.constant 0 : index
    %c0_10 = arith.constant 0 : index
    %14 = vector.load %arg3[%c0_9, %c0_10] : memref<1x64xf32, #tpu.memory_space<vmem>>, vector<1x64xf32>
    tpu.vector_store %arg3[%c0_9, %c0_10], %13 {strides = array<i32>} : memref<1x64xf32, #tpu.memory_space<vmem>>, vector<1x64xf32>,
    return
  }
  func.func @transform_0(%arg0: i32) -> (i32, i32) {
    %c0_i32 = arith.constant 0 : i32
    %c0_i32_0 = arith.constant 0 : i32
    return %arg0, %c0_i32 : i32, i32
  }
  func.func @transform_1(%arg0: i32) -> (i32, i32) {
    %c0_i32 = arith.constant 0 : i32
    %c0_i32_0 = arith.constant 0 : i32
    %c0_i32_1 = arith.constant 0 : i32
    return %c0_i32, %c0_i32_0 : i32, i32
  }
  func.func @transform_2(%arg0: i32) -> (i32, i32) {
    %c0_i32 = arith.constant 0 : i32
    %c0_i32_0 = arith.constant 0 : i32
    %c0_i32_1 = arith.constant 0 : i32
    return %c0_i32, %c0_i32_0 : i32, i32
  }
}

module attributes {stable_mosaic.version = 11 : i64} {
  func.func @bn_relu_matmul_kernel(%arg0: i32, %arg1: memref<32x64xf32, #tpu.memory_space<vmem>>, %arg2: memref<1x64xf32, #tpu.memory_space<vmem>>, %arg3: memref<1x64xf32, #tpu.memory_space<vmem>>, %arg4: memref<64x512xbf16, #tpu.memory_space<vmem>>, %arg5: memref<32x512xf32, #tpu.memory_space<vmem>>) attributes {dimension_semantics = [#tpu.dimension_semantics<parallel>], iteration_bounds = array<i64: 1>, scalar_prefetch = 0 : i64, scratch_operands = 0 : i64, tpu.core_type = #tpu.core_type<tc>, window_params = [{transform_indices = @transform_0, window_bounds = array<i64: 32, 64>}, {pipeline_mode = #tpu.pipeline_mode<synchronous>, transform_indices = @transform_1, window_bounds = array<i64: 1, 64>}, {pipeline_mode = #tpu.pipeline_mode<synchronous>, transform_indices = @transform_2, window_bounds = array<i64: 1, 64>}, {pipeline_mode = #tpu.pipeline_mode<synchronous>, transform_indices = @transform_3, window_bounds = array<i64: 64, 512>}, {transform_indices = @transform_4, window_bounds = array<i64: 32, 512>}]} {
    %c0 = arith.constant 0 : index
    %c0_0 = arith.constant 0 : index
    %0 = vector.load %arg1[%c0, %c0_0] : memref<32x64xf32, #tpu.memory_space<vmem>>, vector<32x64xf32>
    %c0_1 = arith.constant 0 : index
    %c0_2 = arith.constant 0 : index
    %1 = vector.load %arg2[%c0_1, %c0_2] : memref<1x64xf32, #tpu.memory_space<vmem>>, vector<1x64xf32>
    %2 = vector.broadcast %1 : vector<1x64xf32> to vector<32x64xf32>
    %3 = arith.mulf %0, %2 : vector<32x64xf32>
    %c0_3 = arith.constant 0 : index
    %c0_4 = arith.constant 0 : index
    %4 = vector.load %arg3[%c0_3, %c0_4] : memref<1x64xf32, #tpu.memory_space<vmem>>, vector<1x64xf32>
    %5 = vector.broadcast %4 : vector<1x64xf32> to vector<32x64xf32>
    %6 = arith.addf %3, %5 : vector<32x64xf32>
    %cst = arith.constant 0.000000e+00 : f32
    %7 = vector.broadcast %cst : f32 to vector<32x64xf32>
    %8 = arith.maximumf %6, %7 : vector<32x64xf32>
    %9 = arith.truncf %8 : vector<32x64xf32> to vector<32x64xbf16>
    %c0_5 = arith.constant 0 : index
    %c0_6 = arith.constant 0 : index
    %10 = vector.load %arg4[%c0_5, %c0_6] : memref<64x512xbf16, #tpu.memory_space<vmem>>, vector<64x512xbf16>
    %cst_7 = arith.constant dense<0.000000e+00> : vector<32x512xf32>
    %11 = tpu.matmul %9, %10, %cst_7 {dimension_numbers = #tpu.dot_dimension_numbers<[1], [0], [0], [1], [0, 0, 1, 1], [], []>} : vector<32x64xbf16>, vector<64x512xbf16>, vector<32x512xf32> -> vector<32x512xf32>
    %c0_8 = arith.constant 0 : index
    %c0_9 = arith.constant 0 : index
    %12 = vector.load %arg5[%c0_8, %c0_9] : memref<32x512xf32, #tpu.memory_space<vmem>>, vector<32x512xf32>
    tpu.vector_store %arg5[%c0_8, %c0_9], %11 {strides = array<i32>} : memref<32x512xf32, #tpu.memory_space<vmem>>, vector<32x512xf32>,
    return
  }
  func.func @transform_0(%arg0: i32) -> (i32, i32) {
    %c0_i32 = arith.constant 0 : i32
    %c0_i32_0 = arith.constant 0 : i32
    return %arg0, %c0_i32 : i32, i32
  }
  func.func @transform_1(%arg0: i32) -> (i32, i32) {
    %c0_i32 = arith.constant 0 : i32
    %c0_i32_0 = arith.constant 0 : i32
    %c0_i32_1 = arith.constant 0 : i32
    return %c0_i32, %c0_i32_0 : i32, i32
  }
  func.func @transform_2(%arg0: i32) -> (i32, i32) {
    %c0_i32 = arith.constant 0 : i32
    %c0_i32_0 = arith.constant 0 : i32
    %c0_i32_1 = arith.constant 0 : i32
    return %c0_i32, %c0_i32_0 : i32, i32
  }
  func.func @transform_3(%arg0: i32) -> (i32, i32) {
    %c0_i32 = arith.constant 0 : i32
    %c0_i32_0 = arith.constant 0 : i32
    %c0_i32_1 = arith.constant 0 : i32
    return %c0_i32, %c0_i32_0 : i32, i32
  }
  func.func @transform_4(%arg0: i32) -> (i32, i32) {
    %c0_i32 = arith.constant 0 : i32
    %c0_i32_0 = arith.constant 0 : i32
    return %arg0, %c0_i32 : i32, i32
  }
}

module attributes {stable_mosaic.version = 11 : i64} {
  func.func @bn_relu_matmul_kernel(%arg0: i32, %arg1: memref<128x32xf32, #tpu.memory_space<vmem>>, %arg2: memref<1x32xf32, #tpu.memory_space<vmem>>, %arg3: memref<1x32xf32, #tpu.memory_space<vmem>>, %arg4: memref<32x256xbf16, #tpu.memory_space<vmem>>, %arg5: memref<128x256xf32, #tpu.memory_space<vmem>>) attributes {dimension_semantics = [#tpu.dimension_semantics<parallel>], iteration_bounds = array<i64: 1>, scalar_prefetch = 0 : i64, scratch_operands = 0 : i64, tpu.core_type = #tpu.core_type<tc>, window_params = [{transform_indices = @transform_0, window_bounds = array<i64: 128, 32>}, {pipeline_mode = #tpu.pipeline_mode<synchronous>, transform_indices = @transform_1, window_bounds = array<i64: 1, 32>}, {pipeline_mode = #tpu.pipeline_mode<synchronous>, transform_indices = @transform_2, window_bounds = array<i64: 1, 32>}, {pipeline_mode = #tpu.pipeline_mode<synchronous>, transform_indices = @transform_3, window_bounds = array<i64: 32, 256>}, {transform_indices = @transform_4, window_bounds = array<i64: 128, 256>}]} {
    %c0 = arith.constant 0 : index
    %c0_0 = arith.constant 0 : index
    %0 = vector.load %arg1[%c0, %c0_0] : memref<128x32xf32, #tpu.memory_space<vmem>>, vector<128x32xf32>
    %c0_1 = arith.constant 0 : index
    %c0_2 = arith.constant 0 : index
    %1 = vector.load %arg2[%c0_1, %c0_2] : memref<1x32xf32, #tpu.memory_space<vmem>>, vector<1x32xf32>
    %2 = vector.broadcast %1 : vector<1x32xf32> to vector<128x32xf32>
    %3 = arith.mulf %0, %2 : vector<128x32xf32>
    %c0_3 = arith.constant 0 : index
    %c0_4 = arith.constant 0 : index
    %4 = vector.load %arg3[%c0_3, %c0_4] : memref<1x32xf32, #tpu.memory_space<vmem>>, vector<1x32xf32>
    %5 = vector.broadcast %4 : vector<1x32xf32> to vector<128x32xf32>
    %6 = arith.addf %3, %5 : vector<128x32xf32>
    %cst = arith.constant 0.000000e+00 : f32
    %7 = vector.broadcast %cst : f32 to vector<128x32xf32>
    %8 = arith.maximumf %6, %7 : vector<128x32xf32>
    %9 = arith.truncf %8 : vector<128x32xf32> to vector<128x32xbf16>
    %c0_5 = arith.constant 0 : index
    %c0_6 = arith.constant 0 : index
    %10 = vector.load %arg4[%c0_5, %c0_6] : memref<32x256xbf16, #tpu.memory_space<vmem>>, vector<32x256xbf16>
    %cst_7 = arith.constant dense<0.000000e+00> : vector<128x256xf32>
    %11 = tpu.matmul %9, %10, %cst_7 {dimension_numbers = #tpu.dot_dimension_numbers<[1], [0], [0], [1], [0, 0, 1, 1], [], []>} : vector<128x32xbf16>, vector<32x256xbf16>, vector<128x256xf32> -> vector<128x256xf32>
    %c0_8 = arith.constant 0 : index
    %c0_9 = arith.constant 0 : index
    %12 = vector.load %arg5[%c0_8, %c0_9] : memref<128x256xf32, #tpu.memory_space<vmem>>, vector<128x256xf32>
    tpu.vector_store %arg5[%c0_8, %c0_9], %11 {strides = array<i32>} : memref<128x256xf32, #tpu.memory_space<vmem>>, vector<128x256xf32>,
    return
  }
  func.func @transform_0(%arg0: i32) -> (i32, i32) {
    %c0_i32 = arith.constant 0 : i32
    %c0_i32_0 = arith.constant 0 : i32
    return %arg0, %c0_i32 : i32, i32
  }
  func.func @transform_1(%arg0: i32) -> (i32, i32) {
    %c0_i32 = arith.constant 0 : i32
    %c0_i32_0 = arith.constant 0 : i32
    %c0_i32_1 = arith.constant 0 : i32
    return %c0_i32, %c0_i32_0 : i32, i32
  }
  func.func @transform_2(%arg0: i32) -> (i32, i32) {
    %c0_i32 = arith.constant 0 : i32
    %c0_i32_0 = arith.constant 0 : i32
    %c0_i32_1 = arith.constant 0 : i32
    return %c0_i32, %c0_i32_0 : i32, i32
  }
  func.func @transform_3(%arg0: i32) -> (i32, i32) {
    %c0_i32 = arith.constant 0 : i32
    %c0_i32_0 = arith.constant 0 : i32
    %c0_i32_1 = arith.constant 0 : i32
    return %c0_i32, %c0_i32_0 : i32, i32
  }
  func.func @transform_4(%arg0: i32) -> (i32, i32) {
    %c0_i32 = arith.constant 0 : i32
    %c0_i32_0 = arith.constant 0 : i32
    return %arg0, %c0_i32 : i32, i32
  }
}

module attributes {stable_mosaic.version = 11 : i64} {
  func.func @bn_stats_kernel(%arg0: i32, %arg1: memref<128x32xf32, #tpu.memory_space<vmem>>, %arg2: memref<1x32xf32, #tpu.memory_space<vmem>>, %arg3: memref<1x32xf32, #tpu.memory_space<vmem>>) attributes {dimension_semantics = [#tpu.dimension_semantics<arbitrary>], iteration_bounds = array<i64: 1>, scalar_prefetch = 0 : i64, scratch_operands = 0 : i64, tpu.core_type = #tpu.core_type<tc>, window_params = [{transform_indices = @transform_0, window_bounds = array<i64: 128, 32>}, {pipeline_mode = #tpu.pipeline_mode<synchronous>, transform_indices = @transform_1, window_bounds = array<i64: 1, 32>}, {pipeline_mode = #tpu.pipeline_mode<synchronous>, transform_indices = @transform_2, window_bounds = array<i64: 1, 32>}]} {
    %c0_i32 = arith.constant 0 : i32
    %0 = arith.cmpi eq, %arg0, %c0_i32 : i32
    %1 = arith.extui %0 : i1 to i32
    %c0_i32_0 = arith.constant 0 : i32
    %2 = arith.cmpi ne, %1, %c0_i32_0 : i32
    scf.if %2 {
      %cst_11 = arith.constant 0.000000e+00 : f32
      %15 = vector.broadcast %cst_11 : f32 to vector<1x32xf32>
      %c0_12 = arith.constant 0 : index
      %c0_13 = arith.constant 0 : index
      %16 = vector.load %arg2[%c0_12, %c0_13] : memref<1x32xf32, #tpu.memory_space<vmem>>, vector<1x32xf32>
      tpu.vector_store %arg2[%c0_12, %c0_13], %15 {strides = array<i32>} : memref<1x32xf32, #tpu.memory_space<vmem>>, vector<1x32xf32>,
      %cst_14 = arith.constant 0.000000e+00 : f32
      %17 = vector.broadcast %cst_14 : f32 to vector<1x32xf32>
      %c0_15 = arith.constant 0 : index
      %c0_16 = arith.constant 0 : index
      %18 = vector.load %arg3[%c0_15, %c0_16] : memref<1x32xf32, #tpu.memory_space<vmem>>, vector<1x32xf32>
      tpu.vector_store %arg3[%c0_15, %c0_16], %17 {strides = array<i32>} : memref<1x32xf32, #tpu.memory_space<vmem>>, vector<1x32xf32>,
    } else {
    }
    %c0 = arith.constant 0 : index
    %c0_1 = arith.constant 0 : index
    %3 = vector.load %arg1[%c0, %c0_1] : memref<128x32xf32, #tpu.memory_space<vmem>>, vector<128x32xf32>
    %c0_2 = arith.constant 0 : index
    %c0_3 = arith.constant 0 : index
    %4 = vector.load %arg2[%c0_2, %c0_3] : memref<1x32xf32, #tpu.memory_space<vmem>>, vector<1x32xf32>
    %cst = arith.constant dense<0.000000e+00> : vector<32xf32>
    %5 = vector.multi_reduction <add>, %3, %cst [0] : vector<128x32xf32> to vector<32xf32>
    %6 = vector.shape_cast %5 : vector<32xf32> to vector<1x32xf32>
    %7 = arith.addf %4, %6 : vector<1x32xf32>
    %c0_4 = arith.constant 0 : index
    %c0_5 = arith.constant 0 : index
    %8 = vector.load %arg2[%c0_4, %c0_5] : memref<1x32xf32, #tpu.memory_space<vmem>>, vector<1x32xf32>
    tpu.vector_store %arg2[%c0_4, %c0_5], %7 {strides = array<i32>} : memref<1x32xf32, #tpu.memory_space<vmem>>, vector<1x32xf32>,
    %c0_6 = arith.constant 0 : index
    %c0_7 = arith.constant 0 : index
    %9 = vector.load %arg3[%c0_6, %c0_7] : memref<1x32xf32, #tpu.memory_space<vmem>>, vector<1x32xf32>
    %10 = arith.mulf %3, %3 : vector<128x32xf32>
    %cst_8 = arith.constant dense<0.000000e+00> : vector<32xf32>
    %11 = vector.multi_reduction <add>, %10, %cst_8 [0] : vector<128x32xf32> to vector<32xf32>
    %12 = vector.shape_cast %11 : vector<32xf32> to vector<1x32xf32>
    %13 = arith.addf %9, %12 : vector<1x32xf32>
    %c0_9 = arith.constant 0 : index
    %c0_10 = arith.constant 0 : index
    %14 = vector.load %arg3[%c0_9, %c0_10] : memref<1x32xf32, #tpu.memory_space<vmem>>, vector<1x32xf32>
    tpu.vector_store %arg3[%c0_9, %c0_10], %13 {strides = array<i32>} : memref<1x32xf32, #tpu.memory_space<vmem>>, vector<1x32xf32>,
    return
  }
  func.func @transform_0(%arg0: i32) -> (i32, i32) {
    %c0_i32 = arith.constant 0 : i32
    %c0_i32_0 = arith.constant 0 : i32
    return %arg0, %c0_i32 : i32, i32
  }
  func.func @transform_1(%arg0: i32) -> (i32, i32) {
    %c0_i32 = arith.constant 0 : i32
    %c0_i32_0 = arith.constant 0 : i32
    %c0_i32_1 = arith.constant 0 : i32
    return %c0_i32, %c0_i32_0 : i32, i32
  }
  func.func @transform_2(%arg0: i32) -> (i32, i32) {
    %c0_i32 = arith.constant 0 : i32
    %c0_i32_0 = arith.constant 0 : i32
    %c0_i32_1 = arith.constant 0 : i32
    return %c0_i32, %c0_i32_0 : i32, i32
  }
}

module attributes {stable_mosaic.version = 11 : i64} {
  func.func @bn_stats_kernel(%arg0: i32, %arg1: memref<512x16xf32, #tpu.memory_space<vmem>>, %arg2: memref<1x16xf32, #tpu.memory_space<vmem>>, %arg3: memref<1x16xf32, #tpu.memory_space<vmem>>) attributes {dimension_semantics = [#tpu.dimension_semantics<arbitrary>], iteration_bounds = array<i64: 1>, scalar_prefetch = 0 : i64, scratch_operands = 0 : i64, tpu.core_type = #tpu.core_type<tc>, window_params = [{transform_indices = @transform_0, window_bounds = array<i64: 512, 16>}, {pipeline_mode = #tpu.pipeline_mode<synchronous>, transform_indices = @transform_1, window_bounds = array<i64: 1, 16>}, {pipeline_mode = #tpu.pipeline_mode<synchronous>, transform_indices = @transform_2, window_bounds = array<i64: 1, 16>}]} {
    %c0_i32 = arith.constant 0 : i32
    %0 = arith.cmpi eq, %arg0, %c0_i32 : i32
    %1 = arith.extui %0 : i1 to i32
    %c0_i32_0 = arith.constant 0 : i32
    %2 = arith.cmpi ne, %1, %c0_i32_0 : i32
    scf.if %2 {
      %cst_11 = arith.constant 0.000000e+00 : f32
      %15 = vector.broadcast %cst_11 : f32 to vector<1x16xf32>
      %c0_12 = arith.constant 0 : index
      %c0_13 = arith.constant 0 : index
      %16 = vector.load %arg2[%c0_12, %c0_13] : memref<1x16xf32, #tpu.memory_space<vmem>>, vector<1x16xf32>
      tpu.vector_store %arg2[%c0_12, %c0_13], %15 {strides = array<i32>} : memref<1x16xf32, #tpu.memory_space<vmem>>, vector<1x16xf32>,
      %cst_14 = arith.constant 0.000000e+00 : f32
      %17 = vector.broadcast %cst_14 : f32 to vector<1x16xf32>
      %c0_15 = arith.constant 0 : index
      %c0_16 = arith.constant 0 : index
      %18 = vector.load %arg3[%c0_15, %c0_16] : memref<1x16xf32, #tpu.memory_space<vmem>>, vector<1x16xf32>
      tpu.vector_store %arg3[%c0_15, %c0_16], %17 {strides = array<i32>} : memref<1x16xf32, #tpu.memory_space<vmem>>, vector<1x16xf32>,
    } else {
    }
    %c0 = arith.constant 0 : index
    %c0_1 = arith.constant 0 : index
    %3 = vector.load %arg1[%c0, %c0_1] : memref<512x16xf32, #tpu.memory_space<vmem>>, vector<512x16xf32>
    %c0_2 = arith.constant 0 : index
    %c0_3 = arith.constant 0 : index
    %4 = vector.load %arg2[%c0_2, %c0_3] : memref<1x16xf32, #tpu.memory_space<vmem>>, vector<1x16xf32>
    %cst = arith.constant dense<0.000000e+00> : vector<16xf32>
    %5 = vector.multi_reduction <add>, %3, %cst [0] : vector<512x16xf32> to vector<16xf32>
    %6 = vector.shape_cast %5 : vector<16xf32> to vector<1x16xf32>
    %7 = arith.addf %4, %6 : vector<1x16xf32>
    %c0_4 = arith.constant 0 : index
    %c0_5 = arith.constant 0 : index
    %8 = vector.load %arg2[%c0_4, %c0_5] : memref<1x16xf32, #tpu.memory_space<vmem>>, vector<1x16xf32>
    tpu.vector_store %arg2[%c0_4, %c0_5], %7 {strides = array<i32>} : memref<1x16xf32, #tpu.memory_space<vmem>>, vector<1x16xf32>,
    %c0_6 = arith.constant 0 : index
    %c0_7 = arith.constant 0 : index
    %9 = vector.load %arg3[%c0_6, %c0_7] : memref<1x16xf32, #tpu.memory_space<vmem>>, vector<1x16xf32>
    %10 = arith.mulf %3, %3 : vector<512x16xf32>
    %cst_8 = arith.constant dense<0.000000e+00> : vector<16xf32>
    %11 = vector.multi_reduction <add>, %10, %cst_8 [0] : vector<512x16xf32> to vector<16xf32>
    %12 = vector.shape_cast %11 : vector<16xf32> to vector<1x16xf32>
    %13 = arith.addf %9, %12 : vector<1x16xf32>
    %c0_9 = arith.constant 0 : index
    %c0_10 = arith.constant 0 : index
    %14 = vector.load %arg3[%c0_9, %c0_10] : memref<1x16xf32, #tpu.memory_space<vmem>>, vector<1x16xf32>
    tpu.vector_store %arg3[%c0_9, %c0_10], %13 {strides = array<i32>} : memref<1x16xf32, #tpu.memory_space<vmem>>, vector<1x16xf32>,
    return
  }
  func.func @transform_0(%arg0: i32) -> (i32, i32) {
    %c0_i32 = arith.constant 0 : i32
    %c0_i32_0 = arith.constant 0 : i32
    return %arg0, %c0_i32 : i32, i32
  }
  func.func @transform_1(%arg0: i32) -> (i32, i32) {
    %c0_i32 = arith.constant 0 : i32
    %c0_i32_0 = arith.constant 0 : i32
    %c0_i32_1 = arith.constant 0 : i32
    return %c0_i32, %c0_i32_0 : i32, i32
  }
  func.func @transform_2(%arg0: i32) -> (i32, i32) {
    %c0_i32 = arith.constant 0 : i32
    %c0_i32_0 = arith.constant 0 : i32
    %c0_i32_1 = arith.constant 0 : i32
    return %c0_i32, %c0_i32_0 : i32, i32
  }
}

module attributes {stable_mosaic.version = 11 : i64} {
  func.func @bn_relu_matmul_kernel(%arg0: i32, %arg1: memref<256x16xf32, #tpu.memory_space<vmem>>, %arg2: memref<1x16xf32, #tpu.memory_space<vmem>>, %arg3: memref<1x16xf32, #tpu.memory_space<vmem>>, %arg4: memref<16x128xbf16, #tpu.memory_space<vmem>>, %arg5: memref<256x128xf32, #tpu.memory_space<vmem>>) attributes {dimension_semantics = [#tpu.dimension_semantics<parallel>], iteration_bounds = array<i64: 2>, scalar_prefetch = 0 : i64, scratch_operands = 0 : i64, tpu.core_type = #tpu.core_type<tc>, window_params = [{transform_indices = @transform_0, window_bounds = array<i64: 256, 16>}, {pipeline_mode = #tpu.pipeline_mode<synchronous>, transform_indices = @transform_1, window_bounds = array<i64: 1, 16>}, {pipeline_mode = #tpu.pipeline_mode<synchronous>, transform_indices = @transform_2, window_bounds = array<i64: 1, 16>}, {pipeline_mode = #tpu.pipeline_mode<synchronous>, transform_indices = @transform_3, window_bounds = array<i64: 16, 128>}, {transform_indices = @transform_4, window_bounds = array<i64: 256, 128>}]} {
    %c0 = arith.constant 0 : index
    %c0_0 = arith.constant 0 : index
    %0 = vector.load %arg1[%c0, %c0_0] : memref<256x16xf32, #tpu.memory_space<vmem>>, vector<256x16xf32>
    %c0_1 = arith.constant 0 : index
    %c0_2 = arith.constant 0 : index
    %1 = vector.load %arg2[%c0_1, %c0_2] : memref<1x16xf32, #tpu.memory_space<vmem>>, vector<1x16xf32>
    %2 = vector.broadcast %1 : vector<1x16xf32> to vector<256x16xf32>
    %3 = arith.mulf %0, %2 : vector<256x16xf32>
    %c0_3 = arith.constant 0 : index
    %c0_4 = arith.constant 0 : index
    %4 = vector.load %arg3[%c0_3, %c0_4] : memref<1x16xf32, #tpu.memory_space<vmem>>, vector<1x16xf32>
    %5 = vector.broadcast %4 : vector<1x16xf32> to vector<256x16xf32>
    %6 = arith.addf %3, %5 : vector<256x16xf32>
    %cst = arith.constant 0.000000e+00 : f32
    %7 = vector.broadcast %cst : f32 to vector<256x16xf32>
    %8 = arith.maximumf %6, %7 : vector<256x16xf32>
    %9 = arith.truncf %8 : vector<256x16xf32> to vector<256x16xbf16>
    %c0_5 = arith.constant 0 : index
    %c0_6 = arith.constant 0 : index
    %10 = vector.load %arg4[%c0_5, %c0_6] : memref<16x128xbf16, #tpu.memory_space<vmem>>, vector<16x128xbf16>
    %cst_7 = arith.constant dense<0.000000e+00> : vector<256x128xf32>
    %11 = tpu.matmul %9, %10, %cst_7 {dimension_numbers = #tpu.dot_dimension_numbers<[1], [0], [0], [1], [0, 0, 1, 1], [], []>} : vector<256x16xbf16>, vector<16x128xbf16>, vector<256x128xf32> -> vector<256x128xf32>
    %c0_8 = arith.constant 0 : index
    %c0_9 = arith.constant 0 : index
    %12 = vector.load %arg5[%c0_8, %c0_9] : memref<256x128xf32, #tpu.memory_space<vmem>>, vector<256x128xf32>
    tpu.vector_store %arg5[%c0_8, %c0_9], %11 {strides = array<i32>} : memref<256x128xf32, #tpu.memory_space<vmem>>, vector<256x128xf32>,
    return
  }
  func.func @transform_0(%arg0: i32) -> (i32, i32) {
    %c0_i32 = arith.constant 0 : i32
    %c0_i32_0 = arith.constant 0 : i32
    return %arg0, %c0_i32 : i32, i32
  }
  func.func @transform_1(%arg0: i32) -> (i32, i32) {
    %c0_i32 = arith.constant 0 : i32
    %c0_i32_0 = arith.constant 0 : i32
    %c0_i32_1 = arith.constant 0 : i32
    return %c0_i32, %c0_i32_0 : i32, i32
  }
  func.func @transform_2(%arg0: i32) -> (i32, i32) {
    %c0_i32 = arith.constant 0 : i32
    %c0_i32_0 = arith.constant 0 : i32
    %c0_i32_1 = arith.constant 0 : i32
    return %c0_i32, %c0_i32_0 : i32, i32
  }
  func.func @transform_3(%arg0: i32) -> (i32, i32) {
    %c0_i32 = arith.constant 0 : i32
    %c0_i32_0 = arith.constant 0 : i32
    %c0_i32_1 = arith.constant 0 : i32
    return %c0_i32, %c0_i32_0 : i32, i32
  }
  func.func @transform_4(%arg0: i32) -> (i32, i32) {
    %c0_i32 = arith.constant 0 : i32
    %c0_i32_0 = arith.constant 0 : i32
    return %arg0, %c0_i32 : i32, i32
  }
}

module attributes {stable_mosaic.version = 11 : i64} {
  func.func @bn_stats_kernel(%arg0: i32, %arg1: memref<2048x8xf32, #tpu.memory_space<vmem>>, %arg2: memref<1x8xf32, #tpu.memory_space<vmem>>, %arg3: memref<1x8xf32, #tpu.memory_space<vmem>>) attributes {dimension_semantics = [#tpu.dimension_semantics<arbitrary>], iteration_bounds = array<i64: 1>, scalar_prefetch = 0 : i64, scratch_operands = 0 : i64, tpu.core_type = #tpu.core_type<tc>, window_params = [{transform_indices = @transform_0, window_bounds = array<i64: 2048, 8>}, {pipeline_mode = #tpu.pipeline_mode<synchronous>, transform_indices = @transform_1, window_bounds = array<i64: 1, 8>}, {pipeline_mode = #tpu.pipeline_mode<synchronous>, transform_indices = @transform_2, window_bounds = array<i64: 1, 8>}]} {
    %c0_i32 = arith.constant 0 : i32
    %0 = arith.cmpi eq, %arg0, %c0_i32 : i32
    %1 = arith.extui %0 : i1 to i32
    %c0_i32_0 = arith.constant 0 : i32
    %2 = arith.cmpi ne, %1, %c0_i32_0 : i32
    scf.if %2 {
      %cst_11 = arith.constant 0.000000e+00 : f32
      %15 = vector.broadcast %cst_11 : f32 to vector<1x8xf32>
      %c0_12 = arith.constant 0 : index
      %c0_13 = arith.constant 0 : index
      %16 = vector.load %arg2[%c0_12, %c0_13] : memref<1x8xf32, #tpu.memory_space<vmem>>, vector<1x8xf32>
      tpu.vector_store %arg2[%c0_12, %c0_13], %15 {strides = array<i32>} : memref<1x8xf32, #tpu.memory_space<vmem>>, vector<1x8xf32>,
      %cst_14 = arith.constant 0.000000e+00 : f32
      %17 = vector.broadcast %cst_14 : f32 to vector<1x8xf32>
      %c0_15 = arith.constant 0 : index
      %c0_16 = arith.constant 0 : index
      %18 = vector.load %arg3[%c0_15, %c0_16] : memref<1x8xf32, #tpu.memory_space<vmem>>, vector<1x8xf32>
      tpu.vector_store %arg3[%c0_15, %c0_16], %17 {strides = array<i32>} : memref<1x8xf32, #tpu.memory_space<vmem>>, vector<1x8xf32>,
    } else {
    }
    %c0 = arith.constant 0 : index
    %c0_1 = arith.constant 0 : index
    %3 = vector.load %arg1[%c0, %c0_1] : memref<2048x8xf32, #tpu.memory_space<vmem>>, vector<2048x8xf32>
    %c0_2 = arith.constant 0 : index
    %c0_3 = arith.constant 0 : index
    %4 = vector.load %arg2[%c0_2, %c0_3] : memref<1x8xf32, #tpu.memory_space<vmem>>, vector<1x8xf32>
    %cst = arith.constant dense<0.000000e+00> : vector<8xf32>
    %5 = vector.multi_reduction <add>, %3, %cst [0] : vector<2048x8xf32> to vector<8xf32>
    %6 = vector.shape_cast %5 : vector<8xf32> to vector<1x8xf32>
    %7 = arith.addf %4, %6 : vector<1x8xf32>
    %c0_4 = arith.constant 0 : index
    %c0_5 = arith.constant 0 : index
    %8 = vector.load %arg2[%c0_4, %c0_5] : memref<1x8xf32, #tpu.memory_space<vmem>>, vector<1x8xf32>
    tpu.vector_store %arg2[%c0_4, %c0_5], %7 {strides = array<i32>} : memref<1x8xf32, #tpu.memory_space<vmem>>, vector<1x8xf32>,
    %c0_6 = arith.constant 0 : index
    %c0_7 = arith.constant 0 : index
    %9 = vector.load %arg3[%c0_6, %c0_7] : memref<1x8xf32, #tpu.memory_space<vmem>>, vector<1x8xf32>
    %10 = arith.mulf %3, %3 : vector<2048x8xf32>
    %cst_8 = arith.constant dense<0.000000e+00> : vector<8xf32>
    %11 = vector.multi_reduction <add>, %10, %cst_8 [0] : vector<2048x8xf32> to vector<8xf32>
    %12 = vector.shape_cast %11 : vector<8xf32> to vector<1x8xf32>
    %13 = arith.addf %9, %12 : vector<1x8xf32>
    %c0_9 = arith.constant 0 : index
    %c0_10 = arith.constant 0 : index
    %14 = vector.load %arg3[%c0_9, %c0_10] : memref<1x8xf32, #tpu.memory_space<vmem>>, vector<1x8xf32>
    tpu.vector_store %arg3[%c0_9, %c0_10], %13 {strides = array<i32>} : memref<1x8xf32, #tpu.memory_space<vmem>>, vector<1x8xf32>,
    return
  }
  func.func @transform_0(%arg0: i32) -> (i32, i32) {
    %c0_i32 = arith.constant 0 : i32
    %c0_i32_0 = arith.constant 0 : i32
    return %arg0, %c0_i32 : i32, i32
  }
  func.func @transform_1(%arg0: i32) -> (i32, i32) {
    %c0_i32 = arith.constant 0 : i32
    %c0_i32_0 = arith.constant 0 : i32
    %c0_i32_1 = arith.constant 0 : i32
    return %c0_i32, %c0_i32_0 : i32, i32
  }
  func.func @transform_2(%arg0: i32) -> (i32, i32) {
    %c0_i32 = arith.constant 0 : i32
    %c0_i32_0 = arith.constant 0 : i32
    %c0_i32_1 = arith.constant 0 : i32
    return %c0_i32, %c0_i32_0 : i32, i32
  }
}

module attributes {stable_mosaic.version = 11 : i64} {
  func.func @bn_relu_matmul_kernel(%arg0: i32, %arg1: memref<1024x8xf32, #tpu.memory_space<vmem>>, %arg2: memref<1x8xf32, #tpu.memory_space<vmem>>, %arg3: memref<1x8xf32, #tpu.memory_space<vmem>>, %arg4: memref<8x128xbf16, #tpu.memory_space<vmem>>, %arg5: memref<1024x128xf32, #tpu.memory_space<vmem>>) attributes {dimension_semantics = [#tpu.dimension_semantics<parallel>], iteration_bounds = array<i64: 2>, scalar_prefetch = 0 : i64, scratch_operands = 0 : i64, tpu.core_type = #tpu.core_type<tc>, window_params = [{transform_indices = @transform_0, window_bounds = array<i64: 1024, 8>}, {pipeline_mode = #tpu.pipeline_mode<synchronous>, transform_indices = @transform_1, window_bounds = array<i64: 1, 8>}, {pipeline_mode = #tpu.pipeline_mode<synchronous>, transform_indices = @transform_2, window_bounds = array<i64: 1, 8>}, {pipeline_mode = #tpu.pipeline_mode<synchronous>, transform_indices = @transform_3, window_bounds = array<i64: 8, 128>}, {transform_indices = @transform_4, window_bounds = array<i64: 1024, 128>}]} {
    %c0 = arith.constant 0 : index
    %c0_0 = arith.constant 0 : index
    %0 = vector.load %arg1[%c0, %c0_0] : memref<1024x8xf32, #tpu.memory_space<vmem>>, vector<1024x8xf32>
    %c0_1 = arith.constant 0 : index
    %c0_2 = arith.constant 0 : index
    %1 = vector.load %arg2[%c0_1, %c0_2] : memref<1x8xf32, #tpu.memory_space<vmem>>, vector<1x8xf32>
    %2 = vector.broadcast %1 : vector<1x8xf32> to vector<1024x8xf32>
    %3 = arith.mulf %0, %2 : vector<1024x8xf32>
    %c0_3 = arith.constant 0 : index
    %c0_4 = arith.constant 0 : index
    %4 = vector.load %arg3[%c0_3, %c0_4] : memref<1x8xf32, #tpu.memory_space<vmem>>, vector<1x8xf32>
    %5 = vector.broadcast %4 : vector<1x8xf32> to vector<1024x8xf32>
    %6 = arith.addf %3, %5 : vector<1024x8xf32>
    %cst = arith.constant 0.000000e+00 : f32
    %7 = vector.broadcast %cst : f32 to vector<1024x8xf32>
    %8 = arith.maximumf %6, %7 : vector<1024x8xf32>
    %9 = arith.truncf %8 : vector<1024x8xf32> to vector<1024x8xbf16>
    %c0_5 = arith.constant 0 : index
    %c0_6 = arith.constant 0 : index
    %10 = vector.load %arg4[%c0_5, %c0_6] : memref<8x128xbf16, #tpu.memory_space<vmem>>, vector<8x128xbf16>
    %cst_7 = arith.constant dense<0.000000e+00> : vector<1024x128xf32>
    %11 = tpu.matmul %9, %10, %cst_7 {dimension_numbers = #tpu.dot_dimension_numbers<[1], [0], [0], [1], [0, 0, 1, 1], [], []>} : vector<1024x8xbf16>, vector<8x128xbf16>, vector<1024x128xf32> -> vector<1024x128xf32>
    %c0_8 = arith.constant 0 : index
    %c0_9 = arith.constant 0 : index
    %12 = vector.load %arg5[%c0_8, %c0_9] : memref<1024x128xf32, #tpu.memory_space<vmem>>, vector<1024x128xf32>
    tpu.vector_store %arg5[%c0_8, %c0_9], %11 {strides = array<i32>} : memref<1024x128xf32, #tpu.memory_space<vmem>>, vector<1024x128xf32>,
    return
  }
  func.func @transform_0(%arg0: i32) -> (i32, i32) {
    %c0_i32 = arith.constant 0 : i32
    %c0_i32_0 = arith.constant 0 : i32
    return %arg0, %c0_i32 : i32, i32
  }
  func.func @transform_1(%arg0: i32) -> (i32, i32) {
    %c0_i32 = arith.constant 0 : i32
    %c0_i32_0 = arith.constant 0 : i32
    %c0_i32_1 = arith.constant 0 : i32
    return %c0_i32, %c0_i32_0 : i32, i32
  }
  func.func @transform_2(%arg0: i32) -> (i32, i32) {
    %c0_i32 = arith.constant 0 : i32
    %c0_i32_0 = arith.constant 0 : i32
    %c0_i32_1 = arith.constant 0 : i32
    return %c0_i32, %c0_i32_0 : i32, i32
  }
  func.func @transform_3(%arg0: i32) -> (i32, i32) {
    %c0_i32 = arith.constant 0 : i32
    %c0_i32_0 = arith.constant 0 : i32
    %c0_i32_1 = arith.constant 0 : i32
    return %c0_i32, %c0_i32_0 : i32, i32
  }
  func.func @transform_4(%arg0: i32) -> (i32, i32) {
    %c0_i32 = arith.constant 0 : i32
    %c0_i32_0 = arith.constant 0 : i32
    return %arg0, %c0_i32 : i32, i32
  }
}

module attributes {stable_mosaic.version = 11 : i64} {
  func.func @bias_tanh_kernel(%arg0: i32, %arg1: memref<128x192xf32, #tpu.memory_space<vmem>>, %arg2: memref<1x192xf32, #tpu.memory_space<vmem>>, %arg3: memref<128x192xf32, #tpu.memory_space<vmem>>) attributes {dimension_semantics = [#tpu.dimension_semantics<parallel>], iteration_bounds = array<i64: 1>, scalar_prefetch = 0 : i64, scratch_operands = 0 : i64, tpu.core_type = #tpu.core_type<tc>, window_params = [{transform_indices = @transform_0, window_bounds = array<i64: 128, 192>}, {pipeline_mode = #tpu.pipeline_mode<synchronous>, transform_indices = @transform_1, window_bounds = array<i64: 1, 192>}, {transform_indices = @transform_2, window_bounds = array<i64: 128, 192>}]} {
    %c0 = arith.constant 0 : index
    %c0_0 = arith.constant 0 : index
    %0 = vector.load %arg1[%c0, %c0_0] : memref<128x192xf32, #tpu.memory_space<vmem>>, vector<128x192xf32>
    %c0_1 = arith.constant 0 : index
    %c0_2 = arith.constant 0 : index
    %1 = vector.load %arg2[%c0_1, %c0_2] : memref<1x192xf32, #tpu.memory_space<vmem>>, vector<1x192xf32>
    %2 = vector.broadcast %1 : vector<1x192xf32> to vector<128x192xf32>
    %3 = arith.addf %0, %2 : vector<128x192xf32>
    %4 = math.tanh %3 : vector<128x192xf32>
    %c0_3 = arith.constant 0 : index
    %c0_4 = arith.constant 0 : index
    %5 = vector.load %arg3[%c0_3, %c0_4] : memref<128x192xf32, #tpu.memory_space<vmem>>, vector<128x192xf32>
    tpu.vector_store %arg3[%c0_3, %c0_4], %4 {strides = array<i32>} : memref<128x192xf32, #tpu.memory_space<vmem>>, vector<128x192xf32>,
    return
  }
  func.func @transform_0(%arg0: i32) -> (i32, i32) {
    %c0_i32 = arith.constant 0 : i32
    %c0_i32_0 = arith.constant 0 : i32
    return %arg0, %c0_i32 : i32, i32
  }
  func.func @transform_1(%arg0: i32) -> (i32, i32) {
    %c0_i32 = arith.constant 0 : i32
    %c0_i32_0 = arith.constant 0 : i32
    %c0_i32_1 = arith.constant 0 : i32
    return %c0_i32, %c0_i32_0 : i32, i32
  }
  func.func @transform_2(%arg0: i32) -> (i32, i32) {
    %c0_i32 = arith.constant 0 : i32
    %c0_i32_0 = arith.constant 0 : i32
    return %arg0, %c0_i32 : i32, i32
  }
}

</mosaic_0001>

<llo_original>
// kernel: generator_forward.10
$region0: #{generator_forward.10}
  #allocation0 [shape = 'u32[]', space=smem, size = 0x4, offset = 0x4, fixed_abs, tag = 'smem constant byte address 0x4 - core index']
  #allocation1 [shape = 'u32[144,128]{1,0:T(1,128)}', space=vmem, size = 0x12000, scoped, tag = 'internal scratch']
  %s0 = inlined_call_operand.vmem [shape: bf16[2,8], index: 0, kind: input, shape index: {}]
  %s1 = inlined_call_operand.hbm [shape: bf16[8,1024], index: 1, kind: input, shape index: {}]
  %s2 = inlined_call_operand.vmem [shape: f32[2,1024], index: 2, kind: output, shape index: {}]
  %s3 = sld [smem:[#allocation0]]
  $region22: #{generator_forward.10} parent=0
    _
  %s5 = ssub.s32 1, %s3
  %s6 = scalar_select 0, %s5, %s3
  $region1: #{generator_forward.10} parent=0
    #allocation2 [shape = 'u8[16384]{0}', space=vmem, size = 0x4000, scoped, tag = 'input window, operand 1, single buffered']
    #allocation3 [shape = 's32[1]{0}', space=sflag, size = 0x4, scoped, tag = 'scoped memory for generator_forward.10']
    %7 = vsyncpa [#allocation3], 0
    // Predicated region
    $region2: #{generator_forward.10} parent=1 // pred_check
      _
    $region3: #{generator_forward.10} parent=1 // pred_check_branch
      %9 = sbr.rel (0) target = $region5
    $region4: #{generator_forward.10} parent=1 // pred_region
      _
    $region5: #{generator_forward.10} parent=1 // pred_fallthru
      _
    // Predicated region
    $region6: #{generator_forward.10} parent=1 // pred_check
      _
    $region7: #{generator_forward.10} parent=1 // pred_check_branch
      %11 = sbr.rel (0) target = $region9
    $region8: #{generator_forward.10} parent=1 // pred_region
      %s13 = ssub.s32 512, 512
      %14 = vsyncadd [#allocation3], %s13
      %s16 = sshll.u32 [#allocation2], 4
      %s17 = int_to_ptr.vmem [resolvable:$true] %s16
      %19 = dma.hbm_to_vmem [thread:$0]  %s1, 512, %s17, [#allocation3]
    $region9: #{generator_forward.10} parent=1 // pred_fallthru
      _
    // Predicated region
    $region10: #{generator_forward.10} parent=1 // pred_check
      _
    $region11: #{generator_forward.10} parent=1 // pred_check_branch
      %21 = sbr.rel (0) target = $region13
    $region12: #{generator_forward.10} parent=1 // pred_region
      %22 = dma.done [#allocation3], 512
    $region13: #{generator_forward.10} parent=1 // pred_fallthru
      _
    %v24 = vld [vmem:[%s0] sm:$0x1]
    %v25 = vld [vmem:[#allocation2] sm:$0xff]
    %v26 = vld [vmem:[#allocation2 + $0x8] sm:$0xff]
    %v27 = vld [vmem:[#allocation2 + $0x10] sm:$0xff]
    %v28 = vld [vmem:[#allocation2 + $0x18] sm:$0xff]
    %v33 = vunpack.c.l.b16 %v25
    %v34 = vunpack.c.h.b16 %v25
    %v35 = vunpack.c.l.b16 %v26
    %v36 = vunpack.c.h.b16 %v26
    %v37 = vunpack.c.l.b16 %v27
    %v38 = vunpack.c.h.b16 %v27
    %v39 = vunpack.c.l.b16 %v28
    %v40 = vunpack.c.h.b16 %v28
    %v41 = vpack.c.b16 %v33, %v33
    %v42 = vpack.c.b16 %v34, %v34
    %v43 = vpack.c.b16 %v35, %v35
    %v44 = vpack.c.b16 %v36, %v36
    %v45 = vpack.c.b16 %v37, %v37
    %v46 = vpack.c.b16 %v38, %v38
    %v47 = vpack.c.b16 %v39, %v39
    %v48 = vpack.c.b16 %v40, %v40
    %vm49 = vcmask 64512
    %v51 = vsel %vm49, %v24, 0
    %vm53 = vcmask 1043456
    %v55 = vsel %vm53, %v41, 0
    %v58 = vsel %vm53, %v42, 0
    %v61 = vsel %vm53, %v43, 0
    %v64 = vsel %vm53, %v44, 0
    %v67 = vsel %vm53, %v45, 0
    %v70 = vsel %vm53, %v46, 0
    %v73 = vsel %vm53, %v47, 0
    %v76 = vsel %vm53, %v48, 0
    %78 = vmatprep.subr.bf16.mxu0 %v58
    %79 = vmatpush1.bf16.msra.mxu0 %v55
    %80 = vmatprep.subr.bf16.mxu0 0
    %81 = vmatpush1.bf16.msra.mxu0 0
    %82 = vmatprep.subr.bf16.mxu0 0
    %83 = vmatpush1.bf16.msra.mxu0 0
    %84 = vmatprep.subr.bf16.mxu0 0
    %85 = vmatpush1.bf16.msra.mxu0 0
    %86 = vmatprep.subr.bf16.mxu0 0
    %87 = vmatpush1.bf16.msra.mxu0 0
    %88 = vmatprep.subr.bf16.mxu0 0
    %89 = vmatpush1.bf16.msra.mxu0 0
    %90 = vmatprep.subr.bf16.mxu0 0
    %91 = vmatpush1.bf16.msra.mxu0 0
    %92 = vmatprep.subr.bf16.mxu0 0
    %93 = vmatpush1.bf16.msra.mxu0 0
    %94 = vmatprep.subr.bf16.mxu0 0
    %95 = vmatpush1.bf16.msra.mxu0 0
    %96 = vmatprep.subr.bf16.mxu0 0
    %97 = vmatpush1.bf16.msra.mxu0 0
    %98 = vmatprep.subr.bf16.mxu0 0
    %99 = vmatpush1.bf16.msra.mxu0 0
    %100 = vmatprep.subr.bf16.mxu0 0
    %101 = vmatpush1.bf16.msra.mxu0 0
    %102 = vmatprep.subr.bf16.mxu0 0
    %103 = vmatpush1.bf16.msra.mxu0 0
    %104 = vmatprep.subr.bf16.mxu0 0
    %105 = vmatpush1.bf16.msra.mxu0 0
    %106 = vmatprep.subr.bf16.mxu0 0
    %107 = vmatpush1.bf16.msra.mxu0 0
    %108 = vmatprep.subr.bf16.mxu0 0
    %109 = vmatpush1.bf16.msra.mxu0 0
    %110 = vmatprep.mubr.bf16.mxu0 0
    %111 = vmatmul.mubr.bf16.gmra.mrb[0].mxu0 %v51
    %v112 = vpop.f32.mrb[0].mxu0
    %v113 = vadd.f32 0.0, %v112
    %v114 = vpop.f32.mrb[0].mxu0
    %v115 = vadd.f32 0.0, %v114
    %v116 = vpop.f32.mrb[0].mxu0
    %v117 = vpop.f32.mrb[0].mxu0
    %118 = vdwg.mxu0
    %119 = vmatprep.subr.bf16.mxu0 %v64
    %120 = vmatpush1.bf16.msra.mxu0 %v61
    %121 = vmatprep.subr.bf16.mxu0 0
    %122 = vmatpush1.bf16.msra.mxu0 0
    %123 = vmatprep.subr.bf16.mxu0 0
    %124 = vmatpush1.bf16.msra.mxu0 0
    %125 = vmatprep.subr.bf16.mxu0 0
    %126 = vmatpush1.bf16.msra.mxu0 0
    %127 = vmatprep.subr.bf16.mxu0 0
    %128 = vmatpush1.bf16.msra.mxu0 0
    %129 = vmatprep.subr.bf16.mxu0 0
    %130 = vmatpush1.bf16.msra.mxu0 0
    %131 = vmatprep.subr.bf16.mxu0 0
    %132 = vmatpush1.bf16.msra.mxu0 0
    %133 = vmatprep.subr.bf16.mxu0 0
    %134 = vmatpush1.bf16.msra.mxu0 0
    %135 = vmatprep.subr.bf16.mxu0 0
    %136 = vmatpush1.bf16.msra.mxu0 0
    %137 = vmatprep.subr.bf16.mxu0 0
    %138 = vmatpush1.bf16.msra.mxu0 0
    %139 = vmatprep.subr.bf16.mxu0 0
    %140 = vmatpush1.bf16.msra.mxu0 0
    %141 = vmatprep.subr.bf16.mxu0 0
    %142 = vmatpush1.bf16.msra.mxu0 0
    %143 = vmatprep.subr.bf16.mxu0 0
    %144 = vmatpush1.bf16.msra.mxu0 0
    %145 = vmatprep.subr.bf16.mxu0 0
    %146 = vmatpush1.bf16.msra.mxu0 0
    %147 = vmatprep.subr.bf16.mxu0 0
    %148 = vmatpush1.bf16.msra.mxu0 0
    %149 = vmatprep.subr.bf16.mxu0 0
    %150 = vmatpush1.bf16.msra.mxu0 0
    %151 = vmatprep.mubr.bf16.mxu0 0
    %152 = vmatmul.mubr.bf16.gmra.mrb[0].mxu0 %v51
    %v153 = vpop.f32.mrb[0].mxu0
    %v154 = vadd.f32 0.0, %v153
    %v155 = vpop.f32.mrb[0].mxu0
    %v156 = vadd.f32 0.0, %v155
    %v157 = vpop.f32.mrb[0].mxu0
    %v158 = vpop.f32.mrb[0].mxu0
    %159 = vdwg.mxu0
    %160 = vmatprep.subr.bf16.mxu0 %v70
    %161 = vmatpush1.bf16.msra.mxu0 %v67
    %162 = vmatprep.subr.bf16.mxu0 0
    %163 = vmatpush1.bf16.msra.mxu0 0
    %164 = vmatprep.subr.bf16.mxu0 0
    %165 = vmatpush1.bf16.msra.mxu0 0
    %166 = vmatprep.subr.bf16.mxu0 0
    %167 = vmatpush1.bf16.msra.mxu0 0
    %168 = vmatprep.subr.bf16.mxu0 0
    %169 = vmatpush1.bf16.msra.mxu0 0
    %170 = vmatprep.subr.bf16.mxu0 0
    %171 = vmatpush1.bf16.msra.mxu0 0
    %172 = vmatprep.subr.bf16.mxu0 0
    %173 = vmatpush1.bf16.msra.mxu0 0
    %174 = vmatprep.subr.bf16.mxu0 0
    %175 = vmatpush1.bf16.msra.mxu0 0
    %176 = vmatprep.subr.bf16.mxu0 0
    %177 = vmatpush1.bf16.msra.mxu0 0
    %178 = vmatprep.subr.bf16.mxu0 0
    %179 = vmatpush1.bf16.msra.mxu0 0
    %180 = vmatprep.subr.bf16.mxu0 0
    %181 = vmatpush1.bf16.msra.mxu0 0
    %182 = vmatprep.subr.bf16.mxu0 0
    %183 = vmatpush1.bf16.msra.mxu0 0
    %184 = vmatprep.subr.bf16.mxu0 0
    %185 = vmatpush1.bf16.msra.mxu0 0
    %186 = vmatprep.subr.bf16.mxu0 0
    %187 = vmatpush1.bf16.msra.mxu0 0
    %188 = vmatprep.subr.bf16.mxu0 0
    %189 = vmatpush1.bf16.msra.mxu0 0
    %190 = vmatprep.subr.bf16.mxu0 0
    %191 = vmatpush1.bf16.msra.mxu0 0
    %192 = vmatprep.mubr.bf16.mxu0 0
    %193 = vmatmul.mubr.bf16.gmra.mrb[0].mxu0 %v51
    %v194 = vpop.f32.mrb[0].mxu0
    %v195 = vadd.f32 0.0, %v194
    %v196 = vpop.f32.mrb[0].mxu0
    %v197 = vadd.f32 0.0, %v196
    %v198 = vpop.f32.mrb[0].mxu0
    %v199 = vpop.f32.mrb[0].mxu0
    %200 = vdwg.mxu0
    %201 = vmatprep.subr.bf16.mxu0 %v76
    %202 = vmatpush1.bf16.msra.mxu0 %v73
    %203 = vmatprep.subr.bf16.mxu0 0
    %204 = vmatpush1.bf16.msra.mxu0 0
    %205 = vmatprep.subr.bf16.mxu0 0
    %206 = vmatpush1.bf16.msra.mxu0 0
    %207 = vmatprep.subr.bf16.mxu0 0
    %208 = vmatpush1.bf16.msra.mxu0 0
    %209 = vmatprep.subr.bf16.mxu0 0
    %210 = vmatpush1.bf16.msra.mxu0 0
    %211 = vmatprep.subr.bf16.mxu0 0
    %212 = vmatpush1.bf16.msra.mxu0 0
    %213 = vmatprep.subr.bf16.mxu0 0
    %214 = vmatpush1.bf16.msra.mxu0 0
    %215 = vmatprep.subr.bf16.mxu0 0
    %216 = vmatpush1.bf16.msra.mxu0 0
    %217 = vmatprep.subr.bf16.mxu0 0
    %218 = vmatpush1.bf16.msra.mxu0 0
    %219 = vmatprep.subr.bf16.mxu0 0
    %220 = vmatpush1.bf16.msra.mxu0 0
    %221 = vmatprep.subr.bf16.mxu0 0
    %222 = vmatpush1.bf16.msra.mxu0 0
    %223 = vmatprep.subr.bf16.mxu0 0
    %224 = vmatpush1.bf16.msra.mxu0 0
    %225 = vmatprep.subr.bf16.mxu0 0
    %226 = vmatpush1.bf16.msra.mxu0 0
    %227 = vmatprep.subr.bf16.mxu0 0
    %228 = vmatpush1.bf16.msra.mxu0 0
    %229 = vmatprep.subr.bf16.mxu0 0
    %230 = vmatpush1.bf16.msra.mxu0 0
    %231 = vmatprep.subr.bf16.mxu0 0
    %232 = vmatpush1.bf16.msra.mxu0 0
    %233 = vmatprep.mubr.bf16.mxu0 0
    %234 = vmatmul.mubr.bf16.gmra.mrb[0].mxu0 %v51
    %v235 = vpop.f32.mrb[0].mxu0
    %v236 = vadd.f32 0.0, %v235
    %v237 = vpop.f32.mrb[0].mxu0
    %v238 = vadd.f32 0.0, %v237
    %v239 = vpop.f32.mrb[0].mxu0
    %v240 = vpop.f32.mrb[0].mxu0
    %241 = vdwg.mxu0
    %v250 = vcombine.low %v113, %v115
    %v251 = vcombine.low %v154, %v156
    %v253 = vunpack.c.l.s4 1983009808
    %v254 = vunpack.c.0.s8 %v253
    %v255 = vlaneseq
    %v256 = vshrl.u32 %v255, 7
    %v257 = vsub.s32 %v254, %v256
    %v258 = vrot.slane %v250, %v257
    %v260 = vunpack.c.l.s4 1983009808
    %v261 = vunpack.c.0.s8 %v260
    %v262 = vlaneseq
    %v263 = vshrl.u32 %v262, 7
    %v264 = vsub.s32 %v261, %v263
    %v265 = vrot.slane %v251, %v264
    %v266 = vcombine.low %v258, %v265
    %v267 = vcombine.low %v195, %v197
    %v268 = vcombine.low %v236, %v238
    %v270 = vunpack.c.l.s4 1983009808
    %v271 = vunpack.c.0.s8 %v270
    %v272 = vlaneseq
    %v273 = vshrl.u32 %v272, 7
    %v274 = vsub.s32 %v271, %v273
    %v275 = vrot.slane %v267, %v274
    %v277 = vunpack.c.l.s4 1983009808
    %v278 = vunpack.c.0.s8 %v277
    %v279 = vlaneseq
    %v280 = vshrl.u32 %v279, 7
    %v281 = vsub.s32 %v278, %v280
    %v282 = vrot.slane %v268, %v281
    %v283 = vcombine.low %v275, %v282
    %286 = vst [vmem:[%s2] sm:$0xff] %v266
    %287 = vst [vmem:[%s2 + $0x8] sm:$0xff] %v283
    // Predicated region
    $region14: #{generator_forward.10} parent=1 // pred_check
      _
    $region15: #{generator_forward.10} parent=1 // pred_check_branch
      %289 = sbr.rel (0) target = $region17
    $region16: #{generator_forward.10} parent=1 // pred_region
      _
    $region17: #{generator_forward.10} parent=1 // pred_fallthru
      _
    // Predicated region
    $region18: #{generator_forward.10} parent=1 // pred_check
      _
    $region19: #{generator_forward.10} parent=1 // pred_check_branch
      %291 = sbr.rel (0) target = $region21
    $region20: #{generator_forward.10} parent=1 // pred_region
      _
    $region21: #{generator_forward.10} parent=1 // pred_fallthru
      _
    %292 = vsyncpa [#allocation3], 1

// kernel: generator_forward.11
$region0: #{generator_forward.11}
  #allocation0 [shape = 'u32[]', space=smem, size = 0x4, offset = 0x4, fixed_abs, tag = 'smem constant byte address 0x4 - core index']
  #allocation1 [shape = 'u32[144,128]{1,0:T(1,128)}', space=vmem, size = 0x12000, scoped, tag = 'internal scratch']
  %s0 = inlined_call_operand.vmem [shape: f32[32,64], index: 0, kind: input, shape index: {}]
  %s1 = inlined_call_operand.vmem [shape: f32[1,64], index: 1, kind: output, shape index: {0}]
  %s2 = inlined_call_operand.vmem [shape: f32[1,64], index: 2, kind: output, shape index: {1}]
  %3 = xla_tuple %s1, %s2
  %s4 = sld [smem:[#allocation0]]
  $region26: #{generator_forward.11} parent=0
    _
  %s6 = ssub.s32 1, %s4
  %s7 = scalar_select 0, %s6, %s4
  // Predicated region
  $region2: #{generator_forward.11} parent=0 // pred_check
    _
  $region3: #{generator_forward.11} parent=0 // pred_check_branch
    %9 = sbr.rel (0) target = $region5
  $region4: #{generator_forward.11} parent=0 // pred_region
    _
  $region5: #{generator_forward.11} parent=0 // pred_fallthru
    _
  %p10 = scmp.eq.s32.totalorder 0, 0
  // Predicated region
  $region6: #{generator_forward.11} parent=0 // pred_check
    %p11 = pneg %p10
  $region7: #{generator_forward.11} parent=0 // pred_check_branch
    %13 = sbr.rel (%p11) target = $region9
  $region8: #{generator_forward.11} parent=0 // pred_region
    %vm14 = vcmask 516096
    %15 = vst.msk [vmem:[%s1] sm:$0x1] %vm14, 0.0
    %16 = vst.msk [vmem:[%s2] sm:$0x1] %vm14, 0.0
  $region9: #{generator_forward.11} parent=0 // pred_fallthru
    _
  %v17 = vld [vmem:[%s0] sm:$0xff]
  %v18 = vld [vmem:[%s0 + $0x8] sm:$0xff]
  %v19 = vld [vmem:[%s0 + $0x10] sm:$0xff]
  %v20 = vld [vmem:[%s0 + $0x18] sm:$0xff]
  %v21 = vld [vmem:[%s1] sm:$0x1]
  %vm22 = vcmask 523264
  %v23 = vsel %vm22, %v17, 0.0
  %v24 = vsel %vm22, %v18, 0.0
  %v25 = vadd.f32 %v23, %v24
  %v26 = vsel %vm22, %v19, 0.0
  %v27 = vadd.f32 %v25, %v26
  %v28 = vsel %vm22, %v20, 0.0
  %v29 = vadd.f32 %v27, %v28
  %v30 = vrot.slane %v29, 4
  %v31 = vadd.f32 %v29, %v30
  %v32 = vrot.slane %v31, 2
  %v33 = vadd.f32 %v31, %v32
  %v34 = vrot.slane %v33, 1
  %v35 = vadd.f32 %v33, %v34
  %v36 = vadd.f32 %v21, %v35
  %vm37 = vcmask 516096
  %38 = vst.msk [vmem:[%s1] sm:$0x1] %vm37, %v36
  %v39 = vld [vmem:[%s2] sm:$0x1]
  %v40 = vmul.f32 %v17, %v17
  %v41 = vmul.f32 %v18, %v18
  %v42 = vmul.f32 %v19, %v19
  %v43 = vmul.f32 %v20, %v20
  %v44 = vsel %vm22, %v40, 0.0
  %v45 = vsel %vm22, %v41, 0.0
  %v46 = vadd.f32 %v44, %v45
  %v47 = vsel %vm22, %v42, 0.0
  %v48 = vadd.f32 %v46, %v47
  %v49 = vsel %vm22, %v43, 0.0
  %v50 = vadd.f32 %v48, %v49
  %v51 = vrot.slane %v50, 4
  %v52 = vadd.f32 %v50, %v51
  %v53 = vrot.slane %v52, 2
  %v54 = vadd.f32 %v52, %v53
  %v55 = vrot.slane %v54, 1
  %v56 = vadd.f32 %v54, %v55
  %v57 = vadd.f32 %v39, %v56
  %58 = vst.msk [vmem:[%s2] sm:$0x1] %vm37, %v57
  // Predicated region
  $region10: #{generator_forward.11} parent=0 // pred_check
    _
  $region11: #{generator_forward.11} parent=0 // pred_check_branch
    %60 = sbr.rel (0) target = $region13
  $region12: #{generator_forward.11} parent=0 // pred_region
    _
  $region13: #{generator_forward.11} parent=0 // pred_fallthru
    _
  // Predicated region
  $region14: #{generator_forward.11} parent=0 // pred_check
    _
  $region15: #{generator_forward.11} parent=0 // pred_check_branch
    %62 = sbr.rel (0) target = $region17
  $region16: #{generator_forward.11} parent=0 // pred_region
    _
  $region17: #{generator_forward.11} parent=0 // pred_fallthru
    _
  // Predicated region
  $region18: #{generator_forward.11} parent=0 // pred_check
    _
  $region19: #{generator_forward.11} parent=0 // pred_check_branch
    %64 = sbr.rel (0) target = $region21
  $region20: #{generator_forward.11} parent=0 // pred_region
    _
  $region21: #{generator_forward.11} parent=0 // pred_fallthru
    _
  // Predicated region
  $region22: #{generator_forward.11} parent=0 // pred_check
    _
  $region23: #{generator_forward.11} parent=0 // pred_check_branch
    %66 = sbr.rel (0) target = $region25
  $region24: #{generator_forward.11} parent=0 // pred_region
    _
  $region25: #{generator_forward.11} parent=0 // pred_fallthru
    _

// kernel: generator_forward.12
$region0: #{generator_forward.12}
  #allocation0 [shape = 'u32[]', space=smem, size = 0x4, offset = 0x4, fixed_abs, tag = 'smem constant byte address 0x4 - core index']
  #allocation1 [shape = 'u32[144,128]{1,0:T(1,128)}', space=vmem, size = 0x12000, scoped, tag = 'internal scratch']
  %s0 = inlined_call_operand.vmem [shape: f32[32,64], index: 0, kind: input, shape index: {}]
  %s1 = inlined_call_operand.vmem [shape: f32[1,64], index: 1, kind: input, shape index: {}]
  %s2 = inlined_call_operand.vmem [shape: f32[1,64], index: 2, kind: input, shape index: {}]
  %s3 = inlined_call_operand.vmem [shape: bf16[64,512], index: 3, kind: input, shape index: {}]
  %s4 = inlined_call_operand.vmem [shape: f32[32,512], index: 4, kind: output, shape index: {}]
  %s5 = sld [smem:[#allocation0]]
  $region26: #{generator_forward.12} parent=0
    _
  %s7 = ssub.s32 1, %s5
  %s8 = scalar_select 0, %s7, %s5
  // Predicated region
  $region2: #{generator_forward.12} parent=0 // pred_check
    _
  $region3: #{generator_forward.12} parent=0 // pred_check_branch
    %10 = sbr.rel (0) target = $region5
  $region4: #{generator_forward.12} parent=0 // pred_region
    _
  $region5: #{generator_forward.12} parent=0 // pred_fallthru
    _
  // Predicated region
  $region6: #{generator_forward.12} parent=0 // pred_check
    _
  $region7: #{generator_forward.12} parent=0 // pred_check_branch
    %12 = sbr.rel (0) target = $region9
  $region8: #{generator_forward.12} parent=0 // pred_region
    _
  $region9: #{generator_forward.12} parent=0 // pred_fallthru
    _
  // Predicated region
  $region10: #{generator_forward.12} parent=0 // pred_check
    _
  $region11: #{generator_forward.12} parent=0 // pred_check_branch
    %14 = sbr.rel (0) target = $region13
  $region12: #{generator_forward.12} parent=0 // pred_region
    _
  $region13: #{generator_forward.12} parent=0 // pred_fallthru
    _
  // Predicated region
  $region14: #{generator_forward.12} parent=0 // pred_check
    _
  $region15: #{generator_forward.12} parent=0 // pred_check_branch
    %16 = sbr.rel (0) target = $region17
  $region16: #{generator_forward.12} parent=0 // pred_region
    _
  $region17: #{generator_forward.12} parent=0 // pred_fallthru
    _
  %v18 = vld [vmem:[%s0] sm:$0xff]
  %v19 = vld [vmem:[%s0 + $0x8] sm:$0xff]
  %v20 = vld [vmem:[%s0 + $0x10] sm:$0xff]
  %v21 = vld [vmem:[%s0 + $0x18] sm:$0xff]
  %v22 = vld [vmem:[%s1] sm:$0x1]
  %v24 = vlaneseq
  %v25 = vshrl.u32 %v24, 7
  %v26 = vsub.s32 0, %v25
  %v27 = vrot.slane %v22, %v26
  %v29 = vmul.f32 %v18, %v27
  %v30 = vmul.f32 %v19, %v27
  %v31 = vmul.f32 %v20, %v27
  %v32 = vmul.f32 %v21, %v27
  %v33 = vld [vmem:[%s2] sm:$0x1]
  %v35 = vlaneseq
  %v36 = vshrl.u32 %v35, 7
  %v37 = vsub.s32 0, %v36
  %v38 = vrot.slane %v33, %v37
  %v40 = vadd.f32 %v29, %v38
  %v41 = vadd.f32 %v30, %v38
  %v42 = vadd.f32 %v31, %v38
  %v43 = vadd.f32 %v32, %v38
  %v44 = vmax.f32 %v40, 0.0
  %v45 = vmax.f32 %v41, 0.0
  %v46 = vmax.f32 %v42, 0.0
  %v47 = vmax.f32 %v43, 0.0
  %v48 = vpack.c.bf16 %v45, %v44
  %v49 = vpack.c.bf16 %v47, %v46
  %v50 = vld [vmem:[%s3] sm:$0xff]
  %v51 = vld [vmem:[%s3 + $0x8] sm:$0xff]
  %v52 = vld [vmem:[%s3 + $0x10] sm:$0xff]
  %v53 = vld [vmem:[%s3 + $0x18] sm:$0xff]
  %v54 = vld [vmem:[%s3 + $0x20] sm:$0xff]
  %v55 = vld [vmem:[%s3 + $0x28] sm:$0xff]
  %v56 = vld [vmem:[%s3 + $0x30] sm:$0xff]
  %v57 = vld [vmem:[%s3 + $0x38] sm:$0xff]
  %v58 = vld [vmem:[%s3 + $0x40] sm:$0xff]
  %v59 = vld [vmem:[%s3 + $0x48] sm:$0xff]
  %v60 = vld [vmem:[%s3 + $0x50] sm:$0xff]
  %v61 = vld [vmem:[%s3 + $0x58] sm:$0xff]
  %v62 = vld [vmem:[%s3 + $0x60] sm:$0xff]
  %v63 = vld [vmem:[%s3 + $0x68] sm:$0xff]
  %v64 = vld [vmem:[%s3 + $0x70] sm:$0xff]
  %v65 = vld [vmem:[%s3 + $0x78] sm:$0xff]
  %v82 = vunpack.c.l.b16 %v50
  %v83 = vunpack.c.h.b16 %v50
  %v84 = vunpack.c.l.b16 %v51
  %v85 = vunpack.c.h.b16 %v51
  %v86 = vunpack.c.l.b16 %v52
  %v87 = vunpack.c.h.b16 %v52
  %v88 = vunpack.c.l.b16 %v53
  %v89 = vunpack.c.h.b16 %v53
  %v90 = vunpack.c.l.b16 %v54
  %v91 = vunpack.c.h.b16 %v54
  %v92 = vunpack.c.l.b16 %v55
  %v93 = vunpack.c.h.b16 %v55
  %v94 = vunpack.c.l.b16 %v56
  %v95 = vunpack.c.h.b16 %v56
  %v96 = vunpack.c.l.b16 %v57
  %v97 = vunpack.c.h.b16 %v57
  %v98 = vunpack.c.l.b16 %v58
  %v99 = vunpack.c.h.b16 %v58
  %v100 = vunpack.c.l.b16 %v59
  %v101 = vunpack.c.h.b16 %v59
  %v102 = vunpack.c.l.b16 %v60
  %v103 = vunpack.c.h.b16 %v60
  %v104 = vunpack.c.l.b16 %v61
  %v105 = vunpack.c.h.b16 %v61
  %v106 = vunpack.c.l.b16 %v62
  %v107 = vunpack.c.h.b16 %v62
  %v108 = vunpack.c.l.b16 %v63
  %v109 = vunpack.c.h.b16 %v63
  %v110 = vunpack.c.l.b16 %v64
  %v111 = vunpack.c.h.b16 %v64
  %v112 = vunpack.c.l.b16 %v65
  %v113 = vunpack.c.h.b16 %v65
  %v114 = vpack.c.b16 %v86, %v82
  %v115 = vpack.c.b16 %v87, %v83
  %v116 = vpack.c.b16 %v88, %v84
  %v117 = vpack.c.b16 %v89, %v85
  %v118 = vpack.c.b16 %v94, %v90
  %v119 = vpack.c.b16 %v95, %v91
  %v120 = vpack.c.b16 %v96, %v92
  %v121 = vpack.c.b16 %v97, %v93
  %v122 = vpack.c.b16 %v102, %v98
  %v123 = vpack.c.b16 %v103, %v99
  %v124 = vpack.c.b16 %v104, %v100
  %v125 = vpack.c.b16 %v105, %v101
  %v126 = vpack.c.b16 %v110, %v106
  %v127 = vpack.c.b16 %v111, %v107
  %v128 = vpack.c.b16 %v112, %v108
  %v129 = vpack.c.b16 %v113, %v109
  %vm146 = vcmask 523264
  %v148 = vsel %vm146, %v48, 0
  %v151 = vsel %vm146, %v49, 0
  %153 = vmatprep.subr.bf16.mxu0 %v115
  %154 = vmatpush1.bf16.msra.mxu0 %v114
  %155 = vmatprep.subr.bf16.mxu0 %v119
  %156 = vmatpush1.bf16.msra.mxu0 %v118
  %157 = vmatprep.subr.bf16.mxu0 %v123
  %158 = vmatpush1.bf16.msra.mxu0 %v122
  %159 = vmatprep.subr.bf16.mxu0 %v127
  %160 = vmatpush1.bf16.msra.mxu0 %v126
  %161 = vmatprep.subr.bf16.mxu0 0
  %162 = vmatpush1.bf16.msra.mxu0 0
  %163 = vmatprep.subr.bf16.mxu0 0
  %164 = vmatpush1.bf16.msra.mxu0 0
  %165 = vmatprep.subr.bf16.mxu0 0
  %166 = vmatpush1.bf16.msra.mxu0 0
  %167 = vmatprep.subr.bf16.mxu0 0
  %168 = vmatpush1.bf16.msra.mxu0 0
  %169 = vmatprep.subr.bf16.mxu0 0
  %170 = vmatpush1.bf16.msra.mxu0 0
  %171 = vmatprep.subr.bf16.mxu0 0
  %172 = vmatpush1.bf16.msra.mxu0 0
  %173 = vmatprep.subr.bf16.mxu0 0
  %174 = vmatpush1.bf16.msra.mxu0 0
  %175 = vmatprep.subr.bf16.mxu0 0
  %176 = vmatpush1.bf16.msra.mxu0 0
  %177 = vmatprep.subr.bf16.mxu0 0
  %178 = vmatpush1.bf16.msra.mxu0 0
  %179 = vmatprep.subr.bf16.mxu0 0
  %180 = vmatpush1.bf16.msra.mxu0 0
  %181 = vmatprep.subr.bf16.mxu0 0
  %182 = vmatpush1.bf16.msra.mxu0 0
  %183 = vmatprep.subr.bf16.mxu0 0
  %184 = vmatpush1.bf16.msra.mxu0 0
  %185 = vmatprep.mubr.bf16.mxu0 0
  %186 = vmatmul.mubr.bf16.gmra.mrb[0].mxu0 %v148
  %v187 = vpop.f32.mrb[0].mxu0
  %v188 = vadd.f32 0.0, %v187
  %v189 = vpop.f32.mrb[0].mxu0
  %v190 = vadd.f32 0.0, %v189
  %v191 = vpop.f32.mrb[0].mxu0
  %v192 = vadd.f32 0.0, %v191
  %v193 = vpop.f32.mrb[0].mxu0
  %v194 = vadd.f32 0.0, %v193
  %195 = vmatprep.mubr.bf16.mxu0 0
  %196 = vmatmul.mubr.bf16.gmra.mrb[0].mxu0 %v151
  %v197 = vpop.f32.mrb[0].mxu0
  %v198 = vadd.f32 0.0, %v197
  %v199 = vpop.f32.mrb[0].mxu0
  %v200 = vadd.f32 0.0, %v199
  %v201 = vpop.f32.mrb[0].mxu0
  %v202 = vadd.f32 0.0, %v201
  %v203 = vpop.f32.mrb[0].mxu0
  %v204 = vadd.f32 0.0, %v203
  %205 = vdwg.mxu0
  %206 = vmatprep.subr.bf16.mxu0 %v117
  %207 = vmatpush1.bf16.msra.mxu0 %v116
  %208 = vmatprep.subr.bf16.mxu0 %v121
  %209 = vmatpush1.bf16.msra.mxu0 %v120
  %210 = vmatprep.subr.bf16.mxu0 %v125
  %211 = vmatpush1.bf16.msra.mxu0 %v124
  %212 = vmatprep.subr.bf16.mxu0 %v129
  %213 = vmatpush1.bf16.msra.mxu0 %v128
  %214 = vmatprep.subr.bf16.mxu0 0
  %215 = vmatpush1.bf16.msra.mxu0 0
  %216 = vmatprep.subr.bf16.mxu0 0
  %217 = vmatpush1.bf16.msra.mxu0 0
  %218 = vmatprep.subr.bf16.mxu0 0
  %219 = vmatpush1.bf16.msra.mxu0 0
  %220 = vmatprep.subr.bf16.mxu0 0
  %221 = vmatpush1.bf16.msra.mxu0 0
  %222 = vmatprep.subr.bf16.mxu0 0
  %223 = vmatpush1.bf16.msra.mxu0 0
  %224 = vmatprep.subr.bf16.mxu0 0
  %225 = vmatpush1.bf16.msra.mxu0 0
  %226 = vmatprep.subr.bf16.mxu0 0
  %227 = vmatpush1.bf16.msra.mxu0 0
  %228 = vmatprep.subr.bf16.mxu0 0
  %229 = vmatpush1.bf16.msra.mxu0 0
  %230 = vmatprep.subr.bf16.mxu0 0
  %231 = vmatpush1.bf16.msra.mxu0 0
  %232 = vmatprep.subr.bf16.mxu0 0
  %233 = vmatpush1.bf16.msra.mxu0 0
  %234 = vmatprep.subr.bf16.mxu0 0
  %235 = vmatpush1.bf16.msra.mxu0 0
  %236 = vmatprep.subr.bf16.mxu0 0
  %237 = vmatpush1.bf16.msra.mxu0 0
  %238 = vmatprep.mubr.bf16.mxu0 0
  %239 = vmatmul.mubr.bf16.gmra.mrb[0].mxu0 %v148
  %v240 = vpop.f32.mrb[0].mxu0
  %v241 = vadd.f32 0.0, %v240
  %v242 = vpop.f32.mrb[0].mxu0
  %v243 = vadd.f32 0.0, %v242
  %v244 = vpop.f32.mrb[0].mxu0
  %v245 = vadd.f32 0.0, %v244
  %v246 = vpop.f32.mrb[0].mxu0
  %v247 = vadd.f32 0.0, %v246
  %248 = vmatprep.mubr.bf16.mxu0 0
  %249 = vmatmul.mubr.bf16.gmra.mrb[0].mxu0 %v151
  %v250 = vpop.f32.mrb[0].mxu0
  %v251 = vadd.f32 0.0, %v250
  %v252 = vpop.f32.mrb[0].mxu0
  %v253 = vadd.f32 0.0, %v252
  %v254 = vpop.f32.mrb[0].mxu0
  %v255 = vadd.f32 0.0, %v254
  %v256 = vpop.f32.mrb[0].mxu0
  %v257 = vadd.f32 0.0, %v256
  %258 = vdwg.mxu0
  %259 = vst [vmem:[%s4] sm:$0xff] %v188
  %260 = vst [vmem:[%s4 + $0x8] sm:$0xff] %v190
  %261 = vst [vmem:[%s4 + $0x10] sm:$0xff] %v241
  %262 = vst [vmem:[%s4 + $0x18] sm:$0xff] %v243
  %263 = vst [vmem:[%s4 + $0x20] sm:$0xff] %v192
  %264 = vst [vmem:[%s4 + $0x28] sm:$0xff] %v194
  %265 = vst [vmem:[%s4 + $0x30] sm:$0xff] %v245
  %266 = vst [vmem:[%s4 + $0x38] sm:$0xff] %v247
  %267 = vst [vmem:[%s4 + $0x40] sm:$0xff] %v198
  %268 = vst [vmem:[%s4 + $0x48] sm:$0xff] %v200
  %269 = vst [vmem:[%s4 + $0x50] sm:$0xff] %v251
  %270 = vst [vmem:[%s4 + $0x58] sm:$0xff] %v253
  %271 = vst [vmem:[%s4 + $0x60] sm:$0xff] %v202
  %272 = vst [vmem:[%s4 + $0x68] sm:$0xff] %v204
  %273 = vst [vmem:[%s4 + $0x70] sm:$0xff] %v255
  %274 = vst [vmem:[%s4 + $0x78] sm:$0xff] %v257
  // Predicated region
  $region18: #{generator_forward.12} parent=0 // pred_check
    _
  $region19: #{generator_forward.12} parent=0 // pred_check_branch
    %276 = sbr.rel (0) target = $region21
  $region20: #{generator_forward.12} parent=0 // pred_region
    _
  $region21: #{generator_forward.12} parent=0 // pred_fallthru
    _
  // Predicated region
  $region22: #{generator_forward.12} parent=0 // pred_check
    _
  $region23: #{generator_forward.12} parent=0 // pred_check_branch
    %278 = sbr.rel (0) target = $region25
  $region24: #{generator_forward.12} parent=0 // pred_region
    _
  $region25: #{generator_forward.12} parent=0 // pred_fallthru
    _

// kernel: generator_forward.14
$region0: #{generator_forward.14}
  #allocation0 [shape = 'u32[]', space=smem, size = 0x4, offset = 0x4, fixed_abs, tag = 'smem constant byte address 0x4 - core index']
  #allocation1 [shape = 'u32[144,128]{1,0:T(1,128)}', space=vmem, size = 0x12000, scoped, tag = 'internal scratch']
  %s0 = inlined_call_operand.vmem [shape: f32[128,32], index: 0, kind: input, shape index: {}]
  %s1 = inlined_call_operand.vmem [shape: f32[1,32], index: 1, kind: input, shape index: {}]
  %s2 = inlined_call_operand.vmem [shape: f32[1,32], index: 2, kind: input, shape index: {}]
  %s3 = inlined_call_operand.vmem [shape: bf16[32,256], index: 3, kind: input, shape index: {}]
  %s4 = inlined_call_operand.vmem [shape: f32[128,256], index: 4, kind: output, shape index: {}]
  %s5 = sld [smem:[#allocation0]]
  $region26: #{generator_forward.14} parent=0
    _
  %s7 = ssub.s32 1, %s5
  %s8 = scalar_select 0, %s7, %s5
  // Predicated region
  $region2: #{generator_forward.14} parent=0 // pred_check
    _
  $region3: #{generator_forward.14} parent=0 // pred_check_branch
    %10 = sbr.rel (0) target = $region5
  $region4: #{generator_forward.14} parent=0 // pred_region
    _
  $region5: #{generator_forward.14} parent=0 // pred_fallthru
    _
  // Predicated region
  $region6: #{generator_forward.14} parent=0 // pred_check
    _
  $region7: #{generator_forward.14} parent=0 // pred_check_branch
    %12 = sbr.rel (0) target = $region9
  $region8: #{generator_forward.14} parent=0 // pred_region
    _
  $region9: #{generator_forward.14} parent=0 // pred_fallthru
    _
  // Predicated region
  $region10: #{generator_forward.14} parent=0 // pred_check
    _
  $region11: #{generator_forward.14} parent=0 // pred_check_branch
    %14 = sbr.rel (0) target = $region13
  $region12: #{generator_forward.14} parent=0 // pred_region
    _
  $region13: #{generator_forward.14} parent=0 // pred_fallthru
    _
  // Predicated region
  $region14: #{generator_forward.14} parent=0 // pred_check
    _
  $region15: #{generator_forward.14} parent=0 // pred_check_branch
    %16 = sbr.rel (0) target = $region17
  $region16: #{generator_forward.14} parent=0 // pred_region
    _
  $region17: #{generator_forward.14} parent=0 // pred_fallthru
    _
  %v18 = vld [vmem:[%s0] sm:$0xff]
  %v19 = vld [vmem:[%s0 + $0x8] sm:$0xff]
  %v20 = vld [vmem:[%s0 + $0x10] sm:$0xff]
  %v21 = vld [vmem:[%s0 + $0x18] sm:$0xff]
  %v22 = vld [vmem:[%s0 + $0x20] sm:$0xff]
  %v23 = vld [vmem:[%s0 + $0x28] sm:$0xff]
  %v24 = vld [vmem:[%s0 + $0x30] sm:$0xff]
  %v25 = vld [vmem:[%s0 + $0x38] sm:$0xff]
  %v26 = vld [vmem:[%s0 + $0x40] sm:$0xff]
  %v27 = vld [vmem:[%s0 + $0x48] sm:$0xff]
  %v28 = vld [vmem:[%s0 + $0x50] sm:$0xff]
  %v29 = vld [vmem:[%s0 + $0x58] sm:$0xff]
  %v30 = vld [vmem:[%s0 + $0x60] sm:$0xff]
  %v31 = vld [vmem:[%s0 + $0x68] sm:$0xff]
  %v32 = vld [vmem:[%s0 + $0x70] sm:$0xff]
  %v33 = vld [vmem:[%s0 + $0x78] sm:$0xff]
  %v34 = vld [vmem:[%s1] sm:$0x1]
  %v36 = vlaneseq
  %v37 = vshrl.u32 %v36, 7
  %v38 = vsub.s32 0, %v37
  %v39 = vrot.slane %v34, %v38
  %v41 = vmul.f32 %v18, %v39
  %v42 = vmul.f32 %v19, %v39
  %v43 = vmul.f32 %v20, %v39
  %v44 = vmul.f32 %v21, %v39
  %v45 = vmul.f32 %v22, %v39
  %v46 = vmul.f32 %v23, %v39
  %v47 = vmul.f32 %v24, %v39
  %v48 = vmul.f32 %v25, %v39
  %v49 = vmul.f32 %v26, %v39
  %v50 = vmul.f32 %v27, %v39
  %v51 = vmul.f32 %v28, %v39
  %v52 = vmul.f32 %v29, %v39
  %v53 = vmul.f32 %v30, %v39
  %v54 = vmul.f32 %v31, %v39
  %v55 = vmul.f32 %v32, %v39
  %v56 = vmul.f32 %v33, %v39
  %v57 = vld [vmem:[%s2] sm:$0x1]
  %v59 = vlaneseq
  %v60 = vshrl.u32 %v59, 7
  %v61 = vsub.s32 0, %v60
  %v62 = vrot.slane %v57, %v61
  %v64 = vadd.f32 %v41, %v62
  %v65 = vadd.f32 %v42, %v62
  %v66 = vadd.f32 %v43, %v62
  %v67 = vadd.f32 %v44, %v62
  %v68 = vadd.f32 %v45, %v62
  %v69 = vadd.f32 %v46, %v62
  %v70 = vadd.f32 %v47, %v62
  %v71 = vadd.f32 %v48, %v62
  %v72 = vadd.f32 %v49, %v62
  %v73 = vadd.f32 %v50, %v62
  %v74 = vadd.f32 %v51, %v62
  %v75 = vadd.f32 %v52, %v62
  %v76 = vadd.f32 %v53, %v62
  %v77 = vadd.f32 %v54, %v62
  %v78 = vadd.f32 %v55, %v62
  %v79 = vadd.f32 %v56, %v62
  %v80 = vmax.f32 %v64, 0.0
  %v81 = vmax.f32 %v65, 0.0
  %v82 = vmax.f32 %v66, 0.0
  %v83 = vmax.f32 %v67, 0.0
  %v84 = vmax.f32 %v68, 0.0
  %v85 = vmax.f32 %v69, 0.0
  %v86 = vmax.f32 %v70, 0.0
  %v87 = vmax.f32 %v71, 0.0
  %v88 = vmax.f32 %v72, 0.0
  %v89 = vmax.f32 %v73, 0.0
  %v90 = vmax.f32 %v74, 0.0
  %v91 = vmax.f32 %v75, 0.0
  %v92 = vmax.f32 %v76, 0.0
  %v93 = vmax.f32 %v77, 0.0
  %v94 = vmax.f32 %v78, 0.0
  %v95 = vmax.f32 %v79, 0.0
  %v96 = vpack.c.bf16 %v81, %v80
  %v97 = vpack.c.bf16 %v83, %v82
  %v98 = vpack.c.bf16 %v85, %v84
  %v99 = vpack.c.bf16 %v87, %v86
  %v100 = vpack.c.bf16 %v89, %v88
  %v101 = vpack.c.bf16 %v91, %v90
  %v102 = vpack.c.bf16 %v93, %v92
  %v103 = vpack.c.bf16 %v95, %v94
  %v104 = vld [vmem:[%s3] sm:$0xff]
  %v105 = vld [vmem:[%s3 + $0x8] sm:$0xff]
  %v106 = vld [vmem:[%s3 + $0x10] sm:$0xff]
  %v107 = vld [vmem:[%s3 + $0x18] sm:$0xff]
  %v112 = vunpack.c.l.b16 %v104
  %v113 = vunpack.c.h.b16 %v104
  %v114 = vunpack.c.l.b16 %v105
  %v115 = vunpack.c.h.b16 %v105
  %v116 = vunpack.c.l.b16 %v106
  %v117 = vunpack.c.h.b16 %v106
  %v118 = vunpack.c.l.b16 %v107
  %v119 = vunpack.c.h.b16 %v107
  %v120 = vpack.c.b16 %v114, %v112
  %v121 = vpack.c.b16 %v115, %v113
  %v122 = vpack.c.b16 %v118, %v116
  %v123 = vpack.c.b16 %v119, %v117
  %vm128 = vcmask 261120
  %v130 = vsel %vm128, %v96, 0
  %v133 = vsel %vm128, %v97, 0
  %v136 = vsel %vm128, %v98, 0
  %v139 = vsel %vm128, %v99, 0
  %v142 = vsel %vm128, %v100, 0
  %v145 = vsel %vm128, %v101, 0
  %v148 = vsel %vm128, %v102, 0
  %v151 = vsel %vm128, %v103, 0
  %153 = vmatprep.subr.bf16.mxu0 %v121
  %154 = vmatpush1.bf16.msra.mxu0 %v120
  %155 = vmatprep.subr.bf16.mxu0 %v123
  %156 = vmatpush1.bf16.msra.mxu0 %v122
  %157 = vmatprep.subr.bf16.mxu0 0
  %158 = vmatpush1.bf16.msra.mxu0 0
  %159 = vmatprep.subr.bf16.mxu0 0
  %160 = vmatpush1.bf16.msra.mxu0 0
  %161 = vmatprep.subr.bf16.mxu0 0
  %162 = vmatpush1.bf16.msra.mxu0 0
  %163 = vmatprep.subr.bf16.mxu0 0
  %164 = vmatpush1.bf16.msra.mxu0 0
  %165 = vmatprep.subr.bf16.mxu0 0
  %166 = vmatpush1.bf16.msra.mxu0 0
  %167 = vmatprep.subr.bf16.mxu0 0
  %168 = vmatpush1.bf16.msra.mxu0 0
  %169 = vmatprep.subr.bf16.mxu0 0
  %170 = vmatpush1.bf16.msra.mxu0 0
  %171 = vmatprep.subr.bf16.mxu0 0
  %172 = vmatpush1.bf16.msra.mxu0 0
  %173 = vmatprep.subr.bf16.mxu0 0
  %174 = vmatpush1.bf16.msra.mxu0 0
  %175 = vmatprep.subr.bf16.mxu0 0
  %176 = vmatpush1.bf16.msra.mxu0 0
  %177 = vmatprep.subr.bf16.mxu0 0
  %178 = vmatpush1.bf16.msra.mxu0 0
  %179 = vmatprep.subr.bf16.mxu0 0
  %180 = vmatpush1.bf16.msra.mxu0 0
  %181 = vmatprep.subr.bf16.mxu0 0
  %182 = vmatpush1.bf16.msra.mxu0 0
  %183 = vmatprep.subr.bf16.mxu0 0
  %184 = vmatpush1.bf16.msra.mxu0 0
  %185 = vmatprep.mubr.bf16.mxu0 0
  %186 = vmatmul.mubr.bf16.gmra.mrb[0].mxu0 %v130
  %v187 = vpop.f32.mrb[0].mxu0
  %v188 = vadd.f32 0.0, %v187
  %v189 = vpop.f32.mrb[0].mxu0
  %v190 = vadd.f32 0.0, %v189
  %v191 = vpop.f32.mrb[0].mxu0
  %v192 = vadd.f32 0.0, %v191
  %v193 = vpop.f32.mrb[0].mxu0
  %v194 = vadd.f32 0.0, %v193
  %195 = vmatprep.mubr.bf16.mxu0 0
  %196 = vmatmul.mubr.bf16.gmra.mrb[0].mxu0 %v133
  %v197 = vpop.f32.mrb[0].mxu0
  %v198 = vadd.f32 0.0, %v197
  %v199 = vpop.f32.mrb[0].mxu0
  %v200 = vadd.f32 0.0, %v199
  %v201 = vpop.f32.mrb[0].mxu0
  %v202 = vadd.f32 0.0, %v201
  %v203 = vpop.f32.mrb[0].mxu0
  %v204 = vadd.f32 0.0, %v203
  %205 = vmatprep.mubr.bf16.mxu0 0
  %206 = vmatmul.mubr.bf16.gmra.mrb[0].mxu0 %v136
  %v207 = vpop.f32.mrb[0].mxu0
  %v208 = vadd.f32 0.0, %v207
  %v209 = vpop.f32.mrb[0].mxu0
  %v210 = vadd.f32 0.0, %v209
  %v211 = vpop.f32.mrb[0].mxu0
  %v212 = vadd.f32 0.0, %v211
  %v213 = vpop.f32.mrb[0].mxu0
  %v214 = vadd.f32 0.0, %v213
  %215 = vmatprep.mubr.bf16.mxu0 0
  %216 = vmatmul.mubr.bf16.gmra.mrb[0].mxu0 %v139
  %v217 = vpop.f32.mrb[0].mxu0
  %v218 = vadd.f32 0.0, %v217
  %v219 = vpop.f32.mrb[0].mxu0
  %v220 = vadd.f32 0.0, %v219
  %v221 = vpop.f32.mrb[0].mxu0
  %v222 = vadd.f32 0.0, %v221
  %v223 = vpop.f32.mrb[0].mxu0
  %v224 = vadd.f32 0.0, %v223
  %225 = vmatprep.mubr.bf16.mxu0 0
  %226 = vmatmul.mubr.bf16.gmra.mrb[0].mxu0 %v142
  %v227 = vpop.f32.mrb[0].mxu0
  %v228 = vadd.f32 0.0, %v227
  %v229 = vpop.f32.mrb[0].mxu0
  %v230 = vadd.f32 0.0, %v229
  %v231 = vpop.f32.mrb[0].mxu0
  %v232 = vadd.f32 0.0, %v231
  %v233 = vpop.f32.mrb[0].mxu0
  %v234 = vadd.f32 0.0, %v233
  %235 = vmatprep.mubr.bf16.mxu0 0
  %236 = vmatmul.mubr.bf16.gmra.mrb[0].mxu0 %v145
  %v237 = vpop.f32.mrb[0].mxu0
  %v238 = vadd.f32 0.0, %v237
  %v239 = vpop.f32.mrb[0].mxu0
  %v240 = vadd.f32 0.0, %v239
  %v241 = vpop.f32.mrb[0].mxu0
  %v242 = vadd.f32 0.0, %v241
  %v243 = vpop.f32.mrb[0].mxu0
  %v244 = vadd.f32 0.0, %v243
  %245 = vmatprep.mubr.bf16.mxu0 0
  %246 = vmatmul.mubr.bf16.gmra.mrb[0].mxu0 %v148
  %v247 = vpop.f32.mrb[0].mxu0
  %v248 = vadd.f32 0.0, %v247
  %v249 = vpop.f32.mrb[0].mxu0
  %v250 = vadd.f32 0.0, %v249
  %v251 = vpop.f32.mrb[0].mxu0
  %v252 = vadd.f32 0.0, %v251
  %v253 = vpop.f32.mrb[0].mxu0
  %v254 = vadd.f32 0.0, %v253
  %255 = vmatprep.mubr.bf16.mxu0 0
  %256 = vmatmul.mubr.bf16.gmra.mrb[0].mxu0 %v151
  %v257 = vpop.f32.mrb[0].mxu0
  %v258 = vadd.f32 0.0, %v257
  %v259 = vpop.f32.mrb[0].mxu0
  %v260 = vadd.f32 0.0, %v259
  %v261 = vpop.f32.mrb[0].mxu0
  %v262 = vadd.f32 0.0, %v261
  %v263 = vpop.f32.mrb[0].mxu0
  %v264 = vadd.f32 0.0, %v263
  %265 = vdwg.mxu0
  %266 = vst [vmem:[%s4] sm:$0xff] %v188
  %267 = vst [vmem:[%s4 + $0x8] sm:$0xff] %v190
  %268 = vst [vmem:[%s4 + $0x10] sm:$0xff] %v192
  %269 = vst [vmem:[%s4 + $0x18] sm:$0xff] %v194
  %270 = vst [vmem:[%s4 + $0x20] sm:$0xff] %v198
  %271 = vst [vmem:[%s4 + $0x28] sm:$0xff] %v200
  %272 = vst [vmem:[%s4 + $0x30] sm:$0xff] %v202
  %273 = vst [vmem:[%s4 + $0x38] sm:$0xff] %v204
  %274 = vst [vmem:[%s4 + $0x40] sm:$0xff] %v208
  %275 = vst [vmem:[%s4 + $0x48] sm:$0xff] %v210
  %276 = vst [vmem:[%s4 + $0x50] sm:$0xff] %v212
  %277 = vst [vmem:[%s4 + $0x58] sm:$0xff] %v214
  %278 = vst [vmem:[%s4 + $0x60] sm:$0xff] %v218
  %279 = vst [vmem:[%s4 + $0x68] sm:$0xff] %v220
  %280 = vst [vmem:[%s4 + $0x70] sm:$0xff] %v222
  %281 = vst [vmem:[%s4 + $0x78] sm:$0xff] %v224
  %282 = vst [vmem:[%s4 + $0x80] sm:$0xff] %v228
  %283 = vst [vmem:[%s4 + $0x88] sm:$0xff] %v230
  %284 = vst [vmem:[%s4 + $0x90] sm:$0xff] %v232
  %285 = vst [vmem:[%s4 + $0x98] sm:$0xff] %v234
  %286 = vst [vmem:[%s4 + $0xa0] sm:$0xff] %v238
  %287 = vst [vmem:[%s4 + $0xa8] sm:$0xff] %v240
  %288 = vst [vmem:[%s4 + $0xb0] sm:$0xff] %v242
  %289 = vst [vmem:[%s4 + $0xb8] sm:$0xff] %v244
  %290 = vst [vmem:[%s4 + $0xc0] sm:$0xff] %v248
  %291 = vst [vmem:[%s4 + $0xc8] sm:$0xff] %v250
  %292 = vst [vmem:[%s4 + $0xd0] sm:$0xff] %v252
  %293 = vst [vmem:[%s4 + $0xd8] sm:$0xff] %v254
  %294 = vst [vmem:[%s4 + $0xe0] sm:$0xff] %v258
  %295 = vst [vmem:[%s4 + $0xe8] sm:$0xff] %v260
  %296 = vst [vmem:[%s4 + $0xf0] sm:$0xff] %v262
  %297 = vst [vmem:[%s4 + $0xf8] sm:$0xff] %v264
  // Predicated region
  $region18: #{generator_forward.14} parent=0 // pred_check
    _
  $region19: #{generator_forward.14} parent=0 // pred_check_branch
    %299 = sbr.rel (0) target = $region21
  $region20: #{generator_forward.14} parent=0 // pred_region
    _
  $region21: #{generator_forward.14} parent=0 // pred_fallthru
    _
  // Predicated region
  $region22: #{generator_forward.14} parent=0 // pred_check
    _
  $region23: #{generator_forward.14} parent=0 // pred_check_branch
    %301 = sbr.rel (0) target = $region25
  $region24: #{generator_forward.14} parent=0 // pred_region
    _
  $region25: #{generator_forward.14} parent=0 // pred_fallthru
    _

// kernel: generator_forward.13
$region0: #{generator_forward.13}
  #allocation0 [shape = 'u32[]', space=smem, size = 0x4, offset = 0x4, fixed_abs, tag = 'smem constant byte address 0x4 - core index']
  #allocation1 [shape = 'u32[144,128]{1,0:T(1,128)}', space=vmem, size = 0x12000, scoped, tag = 'internal scratch']
  %s0 = inlined_call_operand.vmem [shape: f32[128,32], index: 0, kind: input, shape index: {}]
  %s1 = inlined_call_operand.vmem [shape: f32[1,32], index: 1, kind: output, shape index: {0}]
  %s2 = inlined_call_operand.vmem [shape: f32[1,32], index: 2, kind: output, shape index: {1}]
  %3 = xla_tuple %s1, %s2
  %s4 = sld [smem:[#allocation0]]
  $region26: #{generator_forward.13} parent=0
    _
  %s6 = ssub.s32 1, %s4
  %s7 = scalar_select 0, %s6, %s4
  // Predicated region
  $region2: #{generator_forward.13} parent=0 // pred_check
    _
  $region3: #{generator_forward.13} parent=0 // pred_check_branch
    %9 = sbr.rel (0) target = $region5
  $region4: #{generator_forward.13} parent=0 // pred_region
    _
  $region5: #{generator_forward.13} parent=0 // pred_fallthru
    _
  %p10 = scmp.eq.s32.totalorder 0, 0
  // Predicated region
  $region6: #{generator_forward.13} parent=0 // pred_check
    %p11 = pneg %p10
  $region7: #{generator_forward.13} parent=0 // pred_check_branch
    %13 = sbr.rel (%p11) target = $region9
  $region8: #{generator_forward.13} parent=0 // pred_region
    %vm14 = vcmask 253952
    %15 = vst.msk [vmem:[%s1] sm:$0x1] %vm14, 0.0
    %16 = vst.msk [vmem:[%s2] sm:$0x1] %vm14, 0.0
  $region9: #{generator_forward.13} parent=0 // pred_fallthru
    _
  %v17 = vld [vmem:[%s0] sm:$0xff]
  %v18 = vld [vmem:[%s0 + $0x8] sm:$0xff]
  %v19 = vld [vmem:[%s0 + $0x10] sm:$0xff]
  %v20 = vld [vmem:[%s0 + $0x18] sm:$0xff]
  %v21 = vld [vmem:[%s0 + $0x20] sm:$0xff]
  %v22 = vld [vmem:[%s0 + $0x28] sm:$0xff]
  %v23 = vld [vmem:[%s0 + $0x30] sm:$0xff]
  %v24 = vld [vmem:[%s0 + $0x38] sm:$0xff]
  %v25 = vld [vmem:[%s0 + $0x40] sm:$0xff]
  %v26 = vld [vmem:[%s0 + $0x48] sm:$0xff]
  %v27 = vld [vmem:[%s0 + $0x50] sm:$0xff]
  %v28 = vld [vmem:[%s0 + $0x58] sm:$0xff]
  %v29 = vld [vmem:[%s0 + $0x60] sm:$0xff]
  %v30 = vld [vmem:[%s0 + $0x68] sm:$0xff]
  %v31 = vld [vmem:[%s0 + $0x70] sm:$0xff]
  %v32 = vld [vmem:[%s0 + $0x78] sm:$0xff]
  %v33 = vld [vmem:[%s1] sm:$0x1]
  %vm34 = vcmask 261120
  %v35 = vsel %vm34, %v17, 0.0
  %v36 = vsel %vm34, %v18, 0.0
  %v37 = vadd.f32 %v35, %v36
  %v38 = vsel %vm34, %v19, 0.0
  %v39 = vadd.f32 %v37, %v38
  %v40 = vsel %vm34, %v20, 0.0
  %v41 = vadd.f32 %v39, %v40
  %v42 = vsel %vm34, %v21, 0.0
  %v43 = vadd.f32 %v41, %v42
  %v44 = vsel %vm34, %v22, 0.0
  %v45 = vadd.f32 %v43, %v44
  %v46 = vsel %vm34, %v23, 0.0
  %v47 = vadd.f32 %v45, %v46
  %v48 = vsel %vm34, %v24, 0.0
  %v49 = vadd.f32 %v47, %v48
  %v50 = vsel %vm34, %v25, 0.0
  %v51 = vadd.f32 %v49, %v50
  %v52 = vsel %vm34, %v26, 0.0
  %v53 = vadd.f32 %v51, %v52
  %v54 = vsel %vm34, %v27, 0.0
  %v55 = vadd.f32 %v53, %v54
  %v56 = vsel %vm34, %v28, 0.0
  %v57 = vadd.f32 %v55, %v56
  %v58 = vsel %vm34, %v29, 0.0
  %v59 = vadd.f32 %v57, %v58
  %v60 = vsel %vm34, %v30, 0.0
  %v61 = vadd.f32 %v59, %v60
  %v62 = vsel %vm34, %v31, 0.0
  %v63 = vadd.f32 %v61, %v62
  %v64 = vsel %vm34, %v32, 0.0
  %v65 = vadd.f32 %v63, %v64
  %v66 = vrot.slane %v65, 4
  %v67 = vadd.f32 %v65, %v66
  %v68 = vrot.slane %v67, 2
  %v69 = vadd.f32 %v67, %v68
  %v70 = vrot.slane %v69, 1
  %v71 = vadd.f32 %v69, %v70
  %v72 = vadd.f32 %v33, %v71
  %vm73 = vcmask 253952
  %74 = vst.msk [vmem:[%s1] sm:$0x1] %vm73, %v72
  %v75 = vld [vmem:[%s2] sm:$0x1]
  %v76 = vmul.f32 %v17, %v17
  %v77 = vmul.f32 %v18, %v18
  %v78 = vmul.f32 %v19, %v19
  %v79 = vmul.f32 %v20, %v20
  %v80 = vmul.f32 %v21, %v21
  %v81 = vmul.f32 %v22, %v22
  %v82 = vmul.f32 %v23, %v23
  %v83 = vmul.f32 %v24, %v24
  %v84 = vmul.f32 %v25, %v25
  %v85 = vmul.f32 %v26, %v26
  %v86 = vmul.f32 %v27, %v27
  %v87 = vmul.f32 %v28, %v28
  %v88 = vmul.f32 %v29, %v29
  %v89 = vmul.f32 %v30, %v30
  %v90 = vmul.f32 %v31, %v31
  %v91 = vmul.f32 %v32, %v32
  %v92 = vsel %vm34, %v76, 0.0
  %v93 = vsel %vm34, %v77, 0.0
  %v94 = vadd.f32 %v92, %v93
  %v95 = vsel %vm34, %v78, 0.0
  %v96 = vadd.f32 %v94, %v95
  %v97 = vsel %vm34, %v79, 0.0
  %v98 = vadd.f32 %v96, %v97
  %v99 = vsel %vm34, %v80, 0.0
  %v100 = vadd.f32 %v98, %v99
  %v101 = vsel %vm34, %v81, 0.0
  %v102 = vadd.f32 %v100, %v101
  %v103 = vsel %vm34, %v82, 0.0
  %v104 = vadd.f32 %v102, %v103
  %v105 = vsel %vm34, %v83, 0.0
  %v106 = vadd.f32 %v104, %v105
  %v107 = vsel %vm34, %v84, 0.0
  %v108 = vadd.f32 %v106, %v107
  %v109 = vsel %vm34, %v85, 0.0
  %v110 = vadd.f32 %v108, %v109
  %v111 = vsel %vm34, %v86, 0.0
  %v112 = vadd.f32 %v110, %v111
  %v113 = vsel %vm34, %v87, 0.0
  %v114 = vadd.f32 %v112, %v113
  %v115 = vsel %vm34, %v88, 0.0
  %v116 = vadd.f32 %v114, %v115
  %v117 = vsel %vm34, %v89, 0.0
  %v118 = vadd.f32 %v116, %v117
  %v119 = vsel %vm34, %v90, 0.0
  %v120 = vadd.f32 %v118, %v119
  %v121 = vsel %vm34, %v91, 0.0
  %v122 = vadd.f32 %v120, %v121
  %v123 = vrot.slane %v122, 4
  %v124 = vadd.f32 %v122, %v123
  %v125 = vrot.slane %v124, 2
  %v126 = vadd.f32 %v124, %v125
  %v127 = vrot.slane %v126, 1
  %v128 = vadd.f32 %v126, %v127
  %v129 = vadd.f32 %v75, %v128
  %130 = vst.msk [vmem:[%s2] sm:$0x1] %vm73, %v129
  // Predicated region
  $region10: #{generator_forward.13} parent=0 // pred_check
    _
  $region11: #{generator_forward.13} parent=0 // pred_check_branch
    %132 = sbr.rel (0) target = $region13
  $region12: #{generator_forward.13} parent=0 // pred_region
    _
  $region13: #{generator_forward.13} parent=0 // pred_fallthru
    _
  // Predicated region
  $region14: #{generator_forward.13} parent=0 // pred_check
    _
  $region15: #{generator_forward.13} parent=0 // pred_check_branch
    %134 = sbr.rel (0) target = $region17
  $region16: #{generator_forward.13} parent=0 // pred_region
    _
  $region17: #{generator_forward.13} parent=0 // pred_fallthru
    _
  // Predicated region
  $region18: #{generator_forward.13} parent=0 // pred_check
    _
  $region19: #{generator_forward.13} parent=0 // pred_check_branch
    %136 = sbr.rel (0) target = $region21
  $region20: #{generator_forward.13} parent=0 // pred_region
    _
  $region21: #{generator_forward.13} parent=0 // pred_fallthru
    _
  // Predicated region
  $region22: #{generator_forward.13} parent=0 // pred_check
    _
  $region23: #{generator_forward.13} parent=0 // pred_check_branch
    %138 = sbr.rel (0) target = $region25
  $region24: #{generator_forward.13} parent=0 // pred_region
    _
  $region25: #{generator_forward.13} parent=0 // pred_fallthru
    _

// kernel: generator_forward.15
$region0: #{generator_forward.15}
  #allocation0 [shape = 'u32[]', space=smem, size = 0x4, offset = 0x4, fixed_abs, tag = 'smem constant byte address 0x4 - core index']
  #allocation1 [shape = 'u32[144,128]{1,0:T(1,128)}', space=vmem, size = 0x12000, scoped, tag = 'internal scratch']
  %s0 = inlined_call_operand.vmem [shape: f32[512,16], index: 0, kind: input, shape index: {}]
  %s1 = inlined_call_operand.vmem [shape: f32[1,16], index: 1, kind: output, shape index: {0}]
  %s2 = inlined_call_operand.vmem [shape: f32[1,16], index: 2, kind: output, shape index: {1}]
  %3 = xla_tuple %s1, %s2
  %s4 = sld [smem:[#allocation0]]
  $region26: #{generator_forward.15} parent=0
    _
  %s6 = ssub.s32 1, %s4
  %s7 = scalar_select 0, %s6, %s4
  // Predicated region
  $region2: #{generator_forward.15} parent=0 // pred_check
    _
  $region3: #{generator_forward.15} parent=0 // pred_check_branch
    %9 = sbr.rel (0) target = $region5
  $region4: #{generator_forward.15} parent=0 // pred_region
    _
  $region5: #{generator_forward.15} parent=0 // pred_fallthru
    _
  %p10 = scmp.eq.s32.totalorder 0, 0
  // Predicated region
  $region6: #{generator_forward.15} parent=0 // pred_check
    %p11 = pneg %p10
  $region7: #{generator_forward.15} parent=0 // pred_check_branch
    %13 = sbr.rel (%p11) target = $region9
  $region8: #{generator_forward.15} parent=0 // pred_region
    %vm14 = vcmask 122880
    %15 = vst.msk [vmem:[%s1] sm:$0x1] %vm14, 0.0
    %16 = vst.msk [vmem:[%s2] sm:$0x1] %vm14, 0.0
  $region9: #{generator_forward.15} parent=0 // pred_fallthru
    _
  %v17 = vld [vmem:[%s0] sm:$0xff]
  %v18 = vld [vmem:[%s0 + $0x8] sm:$0xff]
  %v19 = vld [vmem:[%s0 + $0x10] sm:$0xff]
  %v20 = vld [vmem:[%s0 + $0x18] sm:$0xff]
  %v21 = vld [vmem:[%s0 + $0x20] sm:$0xff]
  %v22 = vld [vmem:[%s0 + $0x28] sm:$0xff]
  %v23 = vld [vmem:[%s0 + $0x30] sm:$0xff]
  %v24 = vld [vmem:[%s0 + $0x38] sm:$0xff]
  %v25 = vld [vmem:[%s0 + $0x40] sm:$0xff]
  %v26 = vld [vmem:[%s0 + $0x48] sm:$0xff]
  %v27 = vld [vmem:[%s0 + $0x50] sm:$0xff]
  %v28 = vld [vmem:[%s0 + $0x58] sm:$0xff]
  %v29 = vld [vmem:[%s0 + $0x60] sm:$0xff]
  %v30 = vld [vmem:[%s0 + $0x68] sm:$0xff]
  %v31 = vld [vmem:[%s0 + $0x70] sm:$0xff]
  %v32 = vld [vmem:[%s0 + $0x78] sm:$0xff]
  %v33 = vld [vmem:[%s0 + $0x80] sm:$0xff]
  %v34 = vld [vmem:[%s0 + $0x88] sm:$0xff]
  %v35 = vld [vmem:[%s0 + $0x90] sm:$0xff]
  %v36 = vld [vmem:[%s0 + $0x98] sm:$0xff]
  %v37 = vld [vmem:[%s0 + $0xa0] sm:$0xff]
  %v38 = vld [vmem:[%s0 + $0xa8] sm:$0xff]
  %v39 = vld [vmem:[%s0 + $0xb0] sm:$0xff]
  %v40 = vld [vmem:[%s0 + $0xb8] sm:$0xff]
  %v41 = vld [vmem:[%s0 + $0xc0] sm:$0xff]
  %v42 = vld [vmem:[%s0 + $0xc8] sm:$0xff]
  %v43 = vld [vmem:[%s0 + $0xd0] sm:$0xff]
  %v44 = vld [vmem:[%s0 + $0xd8] sm:$0xff]
  %v45 = vld [vmem:[%s0 + $0xe0] sm:$0xff]
  %v46 = vld [vmem:[%s0 + $0xe8] sm:$0xff]
  %v47 = vld [vmem:[%s0 + $0xf0] sm:$0xff]
  %v48 = vld [vmem:[%s0 + $0xf8] sm:$0xff]
  %v49 = vld [vmem:[%s0 + $0x100] sm:$0xff]
  %v50 = vld [vmem:[%s0 + $0x108] sm:$0xff]
  %v51 = vld [vmem:[%s0 + $0x110] sm:$0xff]
  %v52 = vld [vmem:[%s0 + $0x118] sm:$0xff]
  %v53 = vld [vmem:[%s0 + $0x120] sm:$0xff]
  %v54 = vld [vmem:[%s0 + $0x128] sm:$0xff]
  %v55 = vld [vmem:[%s0 + $0x130] sm:$0xff]
  %v56 = vld [vmem:[%s0 + $0x138] sm:$0xff]
  %v57 = vld [vmem:[%s0 + $0x140] sm:$0xff]
  %v58 = vld [vmem:[%s0 + $0x148] sm:$0xff]
  %v59 = vld [vmem:[%s0 + $0x150] sm:$0xff]
  %v60 = vld [vmem:[%s0 + $0x158] sm:$0xff]
  %v61 = vld [vmem:[%s0 + $0x160] sm:$0xff]
  %v62 = vld [vmem:[%s0 + $0x168] sm:$0xff]
  %v63 = vld [vmem:[%s0 + $0x170] sm:$0xff]
  %v64 = vld [vmem:[%s0 + $0x178] sm:$0xff]
  %v65 = vld [vmem:[%s0 + $0x180] sm:$0xff]
  %v66 = vld [vmem:[%s0 + $0x188] sm:$0xff]
  %v67 = vld [vmem:[%s0 + $0x190] sm:$0xff]
  %v68 = vld [vmem:[%s0 + $0x198] sm:$0xff]
  %v69 = vld [vmem:[%s0 + $0x1a0] sm:$0xff]
  %v70 = vld [vmem:[%s0 + $0x1a8] sm:$0xff]
  %v71 = vld [vmem:[%s0 + $0x1b0] sm:$0xff]
  %v72 = vld [vmem:[%s0 + $0x1b8] sm:$0xff]
  %v73 = vld [vmem:[%s0 + $0x1c0] sm:$0xff]
  %v74 = vld [vmem:[%s0 + $0x1c8] sm:$0xff]
  %v75 = vld [vmem:[%s0 + $0x1d0] sm:$0xff]
  %v76 = vld [vmem:[%s0 + $0x1d8] sm:$0xff]
  %v77 = vld [vmem:[%s0 + $0x1e0] sm:$0xff]
  %v78 = vld [vmem:[%s0 + $0x1e8] sm:$0xff]
  %v79 = vld [vmem:[%s0 + $0x1f0] sm:$0xff]
  %v80 = vld [vmem:[%s0 + $0x1f8] sm:$0xff]
  %v81 = vld [vmem:[%s1] sm:$0x1]
  %vm82 = vcmask 130048
  %v83 = vsel %vm82, %v17, 0.0
  %v84 = vsel %vm82, %v18, 0.0
  %v85 = vadd.f32 %v83, %v84
  %v86 = vsel %vm82, %v19, 0.0
  %v87 = vadd.f32 %v85, %v86
  %v88 = vsel %vm82, %v20, 0.0
  %v89 = vadd.f32 %v87, %v88
  %v90 = vsel %vm82, %v21, 0.0
  %v91 = vadd.f32 %v89, %v90
  %v92 = vsel %vm82, %v22, 0.0
  %v93 = vadd.f32 %v91, %v92
  %v94 = vsel %vm82, %v23, 0.0
  %v95 = vadd.f32 %v93, %v94
  %v96 = vsel %vm82, %v24, 0.0
  %v97 = vadd.f32 %v95, %v96
  %v98 = vsel %vm82, %v25, 0.0
  %v99 = vadd.f32 %v97, %v98
  %v100 = vsel %vm82, %v26, 0.0
  %v101 = vadd.f32 %v99, %v100
  %v102 = vsel %vm82, %v27, 0.0
  %v103 = vadd.f32 %v101, %v102
  %v104 = vsel %vm82, %v28, 0.0
  %v105 = vadd.f32 %v103, %v104
  %v106 = vsel %vm82, %v29, 0.0
  %v107 = vadd.f32 %v105, %v106
  %v108 = vsel %vm82, %v30, 0.0
  %v109 = vadd.f32 %v107, %v108
  %v110 = vsel %vm82, %v31, 0.0
  %v111 = vadd.f32 %v109, %v110
  %v112 = vsel %vm82, %v32, 0.0
  %v113 = vadd.f32 %v111, %v112
  %v114 = vsel %vm82, %v33, 0.0
  %v115 = vadd.f32 %v113, %v114
  %v116 = vsel %vm82, %v34, 0.0
  %v117 = vadd.f32 %v115, %v116
  %v118 = vsel %vm82, %v35, 0.0
  %v119 = vadd.f32 %v117, %v118
  %v120 = vsel %vm82, %v36, 0.0
  %v121 = vadd.f32 %v119, %v120
  %v122 = vsel %vm82, %v37, 0.0
  %v123 = vadd.f32 %v121, %v122
  %v124 = vsel %vm82, %v38, 0.0
  %v125 = vadd.f32 %v123, %v124
  %v126 = vsel %vm82, %v39, 0.0
  %v127 = vadd.f32 %v125, %v126
  %v128 = vsel %vm82, %v40, 0.0
  %v129 = vadd.f32 %v127, %v128
  %v130 = vsel %vm82, %v41, 0.0
  %v131 = vadd.f32 %v129, %v130
  %v132 = vsel %vm82, %v42, 0.0
  %v133 = vadd.f32 %v131, %v132
  %v134 = vsel %vm82, %v43, 0.0
  %v135 = vadd.f32 %v133, %v134
  %v136 = vsel %vm82, %v44, 0.0
  %v137 = vadd.f32 %v135, %v136
  %v138 = vsel %vm82, %v45, 0.0
  %v139 = vadd.f32 %v137, %v138
  %v140 = vsel %vm82, %v46, 0.0
  %v141 = vadd.f32 %v139, %v140
  %v142 = vsel %vm82, %v47, 0.0
  %v143 = vadd.f32 %v141, %v142
  %v144 = vsel %vm82, %v48, 0.0
  %v145 = vadd.f32 %v143, %v144
  %v146 = vsel %vm82, %v49, 0.0
  %v147 = vadd.f32 %v145, %v146
  %v148 = vsel %vm82, %v50, 0.0
  %v149 = vadd.f32 %v147, %v148
  %v150 = vsel %vm82, %v51, 0.0
  %v151 = vadd.f32 %v149, %v150
  %v152 = vsel %vm82, %v52, 0.0
  %v153 = vadd.f32 %v151, %v152
  %v154 = vsel %vm82, %v53, 0.0
  %v155 = vadd.f32 %v153, %v154
  %v156 = vsel %vm82, %v54, 0.0
  %v157 = vadd.f32 %v155, %v156
  %v158 = vsel %vm82, %v55, 0.0
  %v159 = vadd.f32 %v157, %v158
  %v160 = vsel %vm82, %v56, 0.0
  %v161 = vadd.f32 %v159, %v160
  %v162 = vsel %vm82, %v57, 0.0
  %v163 = vadd.f32 %v161, %v162
  %v164 = vsel %vm82, %v58, 0.0
  %v165 = vadd.f32 %v163, %v164
  %v166 = vsel %vm82, %v59, 0.0
  %v167 = vadd.f32 %v165, %v166
  %v168 = vsel %vm82, %v60, 0.0
  %v169 = vadd.f32 %v167, %v168
  %v170 = vsel %vm82, %v61, 0.0
  %v171 = vadd.f32 %v169, %v170
  %v172 = vsel %vm82, %v62, 0.0
  %v173 = vadd.f32 %v171, %v172
  %v174 = vsel %vm82, %v63, 0.0
  %v175 = vadd.f32 %v173, %v174
  %v176 = vsel %vm82, %v64, 0.0
  %v177 = vadd.f32 %v175, %v176
  %v178 = vsel %vm82, %v65, 0.0
  %v179 = vadd.f32 %v177, %v178
  %v180 = vsel %vm82, %v66, 0.0
  %v181 = vadd.f32 %v179, %v180
  %v182 = vsel %vm82, %v67, 0.0
  %v183 = vadd.f32 %v181, %v182
  %v184 = vsel %vm82, %v68, 0.0
  %v185 = vadd.f32 %v183, %v184
  %v186 = vsel %vm82, %v69, 0.0
  %v187 = vadd.f32 %v185, %v186
  %v188 = vsel %vm82, %v70, 0.0
  %v189 = vadd.f32 %v187, %v188
  %v190 = vsel %vm82, %v71, 0.0
  %v191 = vadd.f32 %v189, %v190
  %v192 = vsel %vm82, %v72, 0.0
  %v193 = vadd.f32 %v191, %v192
  %v194 = vsel %vm82, %v73, 0.0
  %v195 = vadd.f32 %v193, %v194
  %v196 = vsel %vm82, %v74, 0.0
  %v197 = vadd.f32 %v195, %v196
  %v198 = vsel %vm82, %v75, 0.0
  %v199 = vadd.f32 %v197, %v198
  %v200 = vsel %vm82, %v76, 0.0
  %v201 = vadd.f32 %v199, %v200
  %v202 = vsel %vm82, %v77, 0.0
  %v203 = vadd.f32 %v201, %v202
  %v204 = vsel %vm82, %v78, 0.0
  %v205 = vadd.f32 %v203, %v204
  %v206 = vsel %vm82, %v79, 0.0
  %v207 = vadd.f32 %v205, %v206
  %v208 = vsel %vm82, %v80, 0.0
  %v209 = vadd.f32 %v207, %v208
  %v210 = vrot.slane %v209, 4
  %v211 = vadd.f32 %v209, %v210
  %v212 = vrot.slane %v211, 2
  %v213 = vadd.f32 %v211, %v212
  %v214 = vrot.slane %v213, 1
  %v215 = vadd.f32 %v213, %v214
  %v216 = vadd.f32 %v81, %v215
  %vm217 = vcmask 122880
  %218 = vst.msk [vmem:[%s1] sm:$0x1] %vm217, %v216
  %v219 = vld [vmem:[%s2] sm:$0x1]
  %v220 = vmul.f32 %v17, %v17
  %v221 = vmul.f32 %v18, %v18
  %v222 = vmul.f32 %v19, %v19
  %v223 = vmul.f32 %v20, %v20
  %v224 = vmul.f32 %v21, %v21
  %v225 = vmul.f32 %v22, %v22
  %v226 = vmul.f32 %v23, %v23
  %v227 = vmul.f32 %v24, %v24
  %v228 = vmul.f32 %v25, %v25
  %v229 = vmul.f32 %v26, %v26
  %v230 = vmul.f32 %v27, %v27
  %v231 = vmul.f32 %v28, %v28
  %v232 = vmul.f32 %v29, %v29
  %v233 = vmul.f32 %v30, %v30
  %v234 = vmul.f32 %v31, %v31
  %v235 = vmul.f32 %v32, %v32
  %v236 = vmul.f32 %v33, %v33
  %v237 = vmul.f32 %v34, %v34
  %v238 = vmul.f32 %v35, %v35
  %v239 = vmul.f32 %v36, %v36
  %v240 = vmul.f32 %v37, %v37
  %v241 = vmul.f32 %v38, %v38
  %v242 = vmul.f32 %v39, %v39
  %v243 = vmul.f32 %v40, %v40
  %v244 = vmul.f32 %v41, %v41
  %v245 = vmul.f32 %v42, %v42
  %v246 = vmul.f32 %v43, %v43
  %v247 = vmul.f32 %v44, %v44
  %v248 = vmul.f32 %v45, %v45
  %v249 = vmul.f32 %v46, %v46
  %v250 = vmul.f32 %v47, %v47
  %v251 = vmul.f32 %v48, %v48
  %v252 = vmul.f32 %v49, %v49
  %v253 = vmul.f32 %v50, %v50
  %v254 = vmul.f32 %v51, %v51
  %v255 = vmul.f32 %v52, %v52
  %v256 = vmul.f32 %v53, %v53
  %v257 = vmul.f32 %v54, %v54
  %v258 = vmul.f32 %v55, %v55
  %v259 = vmul.f32 %v56, %v56
  %v260 = vmul.f32 %v57, %v57
  %v261 = vmul.f32 %v58, %v58
  %v262 = vmul.f32 %v59, %v59
  %v263 = vmul.f32 %v60, %v60
  %v264 = vmul.f32 %v61, %v61
  %v265 = vmul.f32 %v62, %v62
  %v266 = vmul.f32 %v63, %v63
  %v267 = vmul.f32 %v64, %v64
  %v268 = vmul.f32 %v65, %v65
  %v269 = vmul.f32 %v66, %v66
  %v270 = vmul.f32 %v67, %v67
  %v271 = vmul.f32 %v68, %v68
  %v272 = vmul.f32 %v69, %v69
  %v273 = vmul.f32 %v70, %v70
  %v274 = vmul.f32 %v71, %v71
  %v275 = vmul.f32 %v72, %v72
  %v276 = vmul.f32 %v73, %v73
  %v277 = vmul.f32 %v74, %v74
  %v278 = vmul.f32 %v75, %v75
  %v279 = vmul.f32 %v76, %v76
  %v280 = vmul.f32 %v77, %v77
  %v281 = vmul.f32 %v78, %v78
  %v282 = vmul.f32 %v79, %v79
  %v283 = vmul.f32 %v80, %v80
  %v284 = vsel %vm82, %v220, 0.0
  %v285 = vsel %vm82, %v221, 0.0
  %v286 = vadd.f32 %v284, %v285
  %v287 = vsel %vm82, %v222, 0.0
  %v288 = vadd.f32 %v286, %v287
  %v289 = vsel %vm82, %v223, 0.0
  %v290 = vadd.f32 %v288, %v289
  %v291 = vsel %vm82, %v224, 0.0
  %v292 = vadd.f32 %v290, %v291
  %v293 = vsel %vm82, %v225, 0.0
  %v294 = vadd.f32 %v292, %v293
  %v295 = vsel %vm82, %v226, 0.0
  %v296 = vadd.f32 %v294, %v295
  %v297 = vsel %vm82, %v227, 0.0
  %v298 = vadd.f32 %v296, %v297
  %v299 = vsel %vm82, %v228, 0.0
  %v300 = vadd.f32 %v298, %v299
  %v301 = vsel %vm82, %v229, 0.0
  %v302 = vadd.f32 %v300, %v301
  %v303 = vsel %vm82, %v230, 0.0
  %v304 = vadd.f32 %v302, %v303
  %v305 = vsel %vm82, %v231, 0.0
  %v306 = vadd.f32 %v304, %v305
  %v307 = vsel %vm82, %v232, 0.0
  %v308 = vadd.f32 %v306, %v307
  %v309 = vsel %vm82, %v233, 0.0
  %v310 = vadd.f32 %v308, %v309
  %v311 = vsel %vm82, %v234, 0.0
  %v312 = vadd.f32 %v310, %v311
  %v313 = vsel %vm82, %v235, 0.0
  %v314 = vadd.f32 %v312, %v313
  %v315 = vsel %vm82, %v236, 0.0
  %v316 = vadd.f32 %v314, %v315
  %v317 = vsel %vm82, %v237, 0.0
  %v318 = vadd.f32 %v316, %v317
  %v319 = vsel %vm82, %v238, 0.0
  %v320 = vadd.f32 %v318, %v319
  %v321 = vsel %vm82, %v239, 0.0
  %v322 = vadd.f32 %v320, %v321
  %v323 = vsel %vm82, %v240, 0.0
  %v324 = vadd.f32 %v322, %v323
  %v325 = vsel %vm82, %v241, 0.0
  %v326 = vadd.f32 %v324, %v325
  %v327 = vsel %vm82, %v242, 0.0
  %v328 = vadd.f32 %v326, %v327
  %v329 = vsel %vm82, %v243, 0.0
  %v330 = vadd.f32 %v328, %v329
  %v331 = vsel %vm82, %v244, 0.0
  %v332 = vadd.f32 %v330, %v331
  %v333 = vsel %vm82, %v245, 0.0
  %v334 = vadd.f32 %v332, %v333
  %v335 = vsel %vm82, %v246, 0.0
  %v336 = vadd.f32 %v334, %v335
  %v337 = vsel %vm82, %v247, 0.0
  %v338 = vadd.f32 %v336, %v337
  %v339 = vsel %vm82, %v248, 0.0
  %v340 = vadd.f32 %v338, %v339
  %v341 = vsel %vm82, %v249, 0.0
  %v342 = vadd.f32 %v340, %v341
  %v343 = vsel %vm82, %v250, 0.0
  %v344 = vadd.f32 %v342, %v343
  %v345 = vsel %vm82, %v251, 0.0
  %v346 = vadd.f32 %v344, %v345
  %v347 = vsel %vm82, %v252, 0.0
  %v348 = vadd.f32 %v346, %v347
  %v349 = vsel %vm82, %v253, 0.0
  %v350 = vadd.f32 %v348, %v349
  %v351 = vsel %vm82, %v254, 0.0
  %v352 = vadd.f32 %v350, %v351
  %v353 = vsel %vm82, %v255, 0.0
  %v354 = vadd.f32 %v352, %v353
  %v355 = vsel %vm82, %v256, 0.0
  %v356 = vadd.f32 %v354, %v355
  %v357 = vsel %vm82, %v257, 0.0
  %v358 = vadd.f32 %v356, %v357
  %v359 = vsel %vm82, %v258, 0.0
  %v360 = vadd.f32 %v358, %v359
  %v361 = vsel %vm82, %v259, 0.0
  %v362 = vadd.f32 %v360, %v361
  %v363 = vsel %vm82, %v260, 0.0
  %v364 = vadd.f32 %v362, %v363
  %v365 = vsel %vm82, %v261, 0.0
  %v366 = vadd.f32 %v364, %v365
  %v367 = vsel %vm82, %v262, 0.0
  %v368 = vadd.f32 %v366, %v367
  %v369 = vsel %vm82, %v263, 0.0
  %v370 = vadd.f32 %v368, %v369
  %v371 = vsel %vm82, %v264, 0.0
  %v372 = vadd.f32 %v370, %v371
  %v373 = vsel %vm82, %v265, 0.0
  %v374 = vadd.f32 %v372, %v373
  %v375 = vsel %vm82, %v266, 0.0
  %v376 = vadd.f32 %v374, %v375
  %v377 = vsel %vm82, %v267, 0.0
  %v378 = vadd.f32 %v376, %v377
  %v379 = vsel %vm82, %v268, 0.0
  %v380 = vadd.f32 %v378, %v379
  %v381 = vsel %vm82, %v269, 0.0
  %v382 = vadd.f32 %v380, %v381
  %v383 = vsel %vm82, %v270, 0.0
  %v384 = vadd.f32 %v382, %v383
  %v385 = vsel %vm82, %v271, 0.0
  %v386 = vadd.f32 %v384, %v385
  %v387 = vsel %vm82, %v272, 0.0
  %v388 = vadd.f32 %v386, %v387
  %v389 = vsel %vm82, %v273, 0.0
  %v390 = vadd.f32 %v388, %v389
  %v391 = vsel %vm82, %v274, 0.0
  %v392 = vadd.f32 %v390, %v391
  %v393 = vsel %vm82, %v275, 0.0
  %v394 = vadd.f32 %v392, %v393
  %v395 = vsel %vm82, %v276, 0.0
  %v396 = vadd.f32 %v394, %v395
  %v397 = vsel %vm82, %v277, 0.0
  %v398 = vadd.f32 %v396, %v397
  %v399 = vsel %vm82, %v278, 0.0
  %v400 = vadd.f32 %v398, %v399
  %v401 = vsel %vm82, %v279, 0.0
  %v402 = vadd.f32 %v400, %v401
  %v403 = vsel %vm82, %v280, 0.0
  %v404 = vadd.f32 %v402, %v403
  %v405 = vsel %vm82, %v281, 0.0
  %v406 = vadd.f32 %v404, %v405
  %v407 = vsel %vm82, %v282, 0.0
  %v408 = vadd.f32 %v406, %v407
  %v409 = vsel %vm82, %v283, 0.0
  %v410 = vadd.f32 %v408, %v409
  %v411 = vrot.slane %v410, 4
  %v412 = vadd.f32 %v410, %v411
  %v413 = vrot.slane %v412, 2
  %v414 = vadd.f32 %v412, %v413
  %v415 = vrot.slane %v414, 1
  %v416 = vadd.f32 %v414, %v415
  %v417 = vadd.f32 %v219, %v416
  %418 = vst.msk [vmem:[%s2] sm:$0x1] %vm217, %v417
  // Predicated region
  $region10: #{generator_forward.15} parent=0 // pred_check
    _
  $region11: #{generator_forward.15} parent=0 // pred_check_branch
    %420 = sbr.rel (0) target = $region13
  $region12: #{generator_forward.15} parent=0 // pred_region
    _
  $region13: #{generator_forward.15} parent=0 // pred_fallthru
    _
  // Predicated region
  $region14: #{generator_forward.15} parent=0 // pred_check
    _
  $region15: #{generator_forward.15} parent=0 // pred_check_branch
    %422 = sbr.rel (0) target = $region17
  $region16: #{generator_forward.15} parent=0 // pred_region
    _
  $region17: #{generator_forward.15} parent=0 // pred_fallthru
    _
  // Predicated region
  $region18: #{generator_forward.15} parent=0 // pred_check
    _
  $region19: #{generator_forward.15} parent=0 // pred_check_branch
    %424 = sbr.rel (0) target = $region21
  $region20: #{generator_forward.15} parent=0 // pred_region
    _
  $region21: #{generator_forward.15} parent=0 // pred_fallthru
    _
  // Predicated region
  $region22: #{generator_forward.15} parent=0 // pred_check
    _
  $region23: #{generator_forward.15} parent=0 // pred_check_branch
    %426 = sbr.rel (0) target = $region25
  $region24: #{generator_forward.15} parent=0 // pred_region
    _
  $region25: #{generator_forward.15} parent=0 // pred_fallthru
    _

// kernel: generator_forward.16
$region0: #{generator_forward.16}
  #allocation0 [shape = 'u32[]', space=smem, size = 0x4, offset = 0x4, fixed_abs, tag = 'smem constant byte address 0x4 - core index']
  #allocation1 [shape = 'u32[144,128]{1,0:T(1,128)}', space=vmem, size = 0x12000, scoped, tag = 'internal scratch']
  %s0 = inlined_call_operand.vmem [shape: f32[512,16], index: 0, kind: input, shape index: {}]
  %s1 = inlined_call_operand.vmem [shape: f32[1,16], index: 1, kind: input, shape index: {}]
  %s2 = inlined_call_operand.vmem [shape: f32[1,16], index: 2, kind: input, shape index: {}]
  %s3 = inlined_call_operand.vmem [shape: bf16[16,128], index: 3, kind: input, shape index: {}]
  %s4 = inlined_call_operand.vmem [shape: f32[512,128], index: 4, kind: output, shape index: {}]
  %s5 = sld [smem:[#allocation0]]
  $region49: #{generator_forward.16} parent=0
    _
  %s7 = ssub.s32 1, %s5
  %s8 = scalar_select 0, %s7, %s5
  loop: start=0, step=1, limit=4
  $region2: #{generator_forward.16} parent=0 // loop_pre_header
    _
  $region3: #{generator_forward.16} parent=0 // loop_header
    %s10 = sphi 0, %s14
    %p11 = scmp.ge.s32.totalorder %s10, 4
    %s20 = sphi 0, %s22
    %s23 = sphi 0, %s20
    %s24 = sphi 0, %s23
    %s40 = sphi 0, %s24
    %s44 = sphi 0, %s44
    %s46 = sphi 0, %s44
    %s47 = sphi 0, %s46
    %s61 = sphi 0, %s47
    %s65 = sphi 0, %s65
    %s67 = sphi 0, %s65
    %s68 = sphi 0, %s67
    %s82 = sphi 0, %s68
    %s86 = sphi 0, %s86
    %s88 = sphi 0, %s86
    %s89 = sphi 0, %s88
    %s103 = sphi 0, %s89
    %s109 = sphi 0, %s111
    %s112 = sphi 0, %s109
    %s113 = sphi 0, %s112
    %s129 = sphi 0, %s113
  $region4: #{generator_forward.16} parent=0 // loop_header_branch
    %13 = sbr.rel (%p11) target = $region8
  $region5: #{generator_forward.16} parent=0 // loop_body
    %s15 = ssub.s32 %s10, 1
    %s16 = ssub.s32 %s10, 2
    %s17 = sadd.s32 %s10, 1
    %s18 = ssub.s32 %s10, %s17
    %p19 = scmp.eq.s32.totalorder %s18, 0
    %s21 = sadd.s32 %s20, 1
    %s22 = scalar_select %p19, %s20, %s21
    %p25 = pneg %p19
    %p26 = scmp.eq.s32.totalorder %s10, 1
    %p27 = por %p25, %p26
    %p28 = scmp.ne.s32.totalorder %s20, %s23
    %p29 = scmp.eq.s32.totalorder %s10, 0
    %p30 = por %p28, %p29
    %p31 = scmp.ne.s32.totalorder %s20, %s23
    %p32 = scmp.eq.s32.totalorder %s15, 1
    %p33 = por %p31, %p32
    %p34 = scmp.ne.s32.totalorder %s23, %s24
    %p35 = scmp.eq.s32.totalorder %s15, 0
    %p36 = por %p34, %p35
    %p37 = scmp.ne.s32.totalorder %s23, %s24
    %p38 = scmp.eq.s32.totalorder %s16, 1
    %p39 = por %p37, %p38
    %p41 = scmp.ne.s32.totalorder %s24, %s40
    %p42 = scmp.eq.s32.totalorder %s16, 0
    %p43 = por %p41, %p42
    %s45 = sadd.s32 %s44, 1
    %p48 = scmp.eq.s32.totalorder %s10, 1
    %p49 = scmp.ne.s32.totalorder %s44, %s46
    %p50 = scmp.eq.s32.totalorder %s10, 0
    %p51 = por %p49, %p50
    %p52 = scmp.ne.s32.totalorder %s44, %s46
    %p53 = scmp.eq.s32.totalorder %s15, 1
    %p54 = por %p52, %p53
    %p55 = scmp.ne.s32.totalorder %s46, %s47
    %p56 = scmp.eq.s32.totalorder %s15, 0
    %p57 = por %p55, %p56
    %p58 = scmp.ne.s32.totalorder %s46, %s47
    %p59 = scmp.eq.s32.totalorder %s16, 1
    %p60 = por %p58, %p59
    %p62 = scmp.ne.s32.totalorder %s47, %s61
    %p63 = scmp.eq.s32.totalorder %s16, 0
    %p64 = por %p62, %p63
    %s66 = sadd.s32 %s65, 1
    %p69 = scmp.eq.s32.totalorder %s10, 1
    %p70 = scmp.ne.s32.totalorder %s65, %s67
    %p71 = scmp.eq.s32.totalorder %s10, 0
    %p72 = por %p70, %p71
    %p73 = scmp.ne.s32.totalorder %s65, %s67
    %p74 = scmp.eq.s32.totalorder %s15, 1
    %p75 = por %p73, %p74
    %p76 = scmp.ne.s32.totalorder %s67, %s68
    %p77 = scmp.eq.s32.totalorder %s15, 0
    %p78 = por %p76, %p77
    %p79 = scmp.ne.s32.totalorder %s67, %s68
    %p80 = scmp.eq.s32.totalorder %s16, 1
    %p81 = por %p79, %p80
    %p83 = scmp.ne.s32.totalorder %s68, %s82
    %p84 = scmp.eq.s32.totalorder %s16, 0
    %p85 = por %p83, %p84
    %s87 = sadd.s32 %s86, 1
    %p90 = scmp.eq.s32.totalorder %s10, 1
    %p91 = scmp.ne.s32.totalorder %s86, %s88
    %p92 = scmp.eq.s32.totalorder %s10, 0
    %p93 = por %p91, %p92
    %p94 = scmp.ne.s32.totalorder %s86, %s88
    %p95 = scmp.eq.s32.totalorder %s15, 1
    %p96 = por %p94, %p95
    %p97 = scmp.ne.s32.totalorder %s88, %s89
    %p98 = scmp.eq.s32.totalorder %s15, 0
    %p99 = por %p97, %p98
    %p100 = scmp.ne.s32.totalorder %s88, %s89
    %p101 = scmp.eq.s32.totalorder %s16, 1
    %p102 = por %p100, %p101
    %p104 = scmp.ne.s32.totalorder %s89, %s103
    %p105 = scmp.eq.s32.totalorder %s16, 0
    %p106 = por %p104, %p105
    %s107 = ssub.s32 %s10, %s17
    %p108 = scmp.eq.s32.totalorder %s107, 0
    %s110 = sadd.s32 %s109, 1
    %s111 = scalar_select %p108, %s109, %s110
    %p114 = pneg %p108
    %p115 = scmp.eq.s32.totalorder %s10, 1
    %p116 = por %p114, %p115
    %p117 = scmp.ne.s32.totalorder %s109, %s112
    %p118 = scmp.eq.s32.totalorder %s10, 0
    %p119 = por %p117, %p118
    %p120 = scmp.ne.s32.totalorder %s109, %s112
    %p121 = scmp.eq.s32.totalorder %s15, 1
    %p122 = por %p120, %p121
    %p123 = scmp.ne.s32.totalorder %s112, %s113
    %p124 = scmp.eq.s32.totalorder %s15, 0
    %p125 = por %p123, %p124
    %p126 = scmp.ne.s32.totalorder %s112, %s113
    %p127 = scmp.eq.s32.totalorder %s16, 1
    %p128 = por %p126, %p127
    %p130 = scmp.ne.s32.totalorder %s113, %s129
    %p131 = scmp.eq.s32.totalorder %s16, 0
    %p132 = por %p130, %p131
    %p133 = scmp.le.s32.totalorder 1, %s10
    %p134 = scmp.lt.s32.totalorder %s10, 3
    %p135 = pnand %p133, %p134
    %p136 = pneg %p135
    // Predicated region
    $region9: #{generator_forward.16} parent=5 // pred_check
      _
    $region10: #{generator_forward.16} parent=5 // pred_check_branch
      %138 = sbr.rel (%p135) target = $region12
    $region11: #{generator_forward.16} parent=5 // pred_region
      %s139 = ssub.s32 %s10, 1
      // Predicated region
      $region13: #{generator_forward.16} parent=11 // pred_check
        %p140 = pneg %p57
      $region14: #{generator_forward.16} parent=11 // pred_check_branch
        %142 = sbr.rel (%p140) target = $region16
      $region15: #{generator_forward.16} parent=11 // pred_region
        _
      $region16: #{generator_forward.16} parent=11 // pred_fallthru
        _
      // Predicated region
      $region17: #{generator_forward.16} parent=11 // pred_check
        %p143 = pneg %p78
      $region18: #{generator_forward.16} parent=11 // pred_check_branch
        %145 = sbr.rel (%p143) target = $region20
      $region19: #{generator_forward.16} parent=11 // pred_region
        _
      $region20: #{generator_forward.16} parent=11 // pred_fallthru
        _
      // Predicated region
      $region21: #{generator_forward.16} parent=11 // pred_check
        %p146 = pneg %p99
      $region22: #{generator_forward.16} parent=11 // pred_check_branch
        %148 = sbr.rel (%p146) target = $region24
      $region23: #{generator_forward.16} parent=11 // pred_region
        _
      $region24: #{generator_forward.16} parent=11 // pred_fallthru
        _
    $region12: #{generator_forward.16} parent=5 // pred_fallthru
      _
    %p149 = scmp.lt.s32.totalorder %s10, 2
    // Predicated region
    $region25: #{generator_forward.16} parent=5 // pred_check
      %p150 = pneg %p149
    $region26: #{generator_forward.16} parent=5 // pred_check_branch
      %152 = sbr.rel (%p150) target = $region28
    $region27: #{generator_forward.16} parent=5 // pred_region
      // Predicated region
      $region29: #{generator_forward.16} parent=27 // pred_check
        %p153 = pneg %p30
      $region30: #{generator_forward.16} parent=27 // pred_check_branch
        %155 = sbr.rel (%p153) target = $region32
      $region31: #{generator_forward.16} parent=27 // pred_region
        %s156 = smul.u32 32, %s10
        %p157 = scmp.lt.s32.totalorder %s156, 63
        %s158 = scalar_select %p157, %s156, 63
        %s159 = smul.addr %s158, 8
        %s160 = scalar_lea.vmem %s0, %s159
        %s161 = smul.u32 32, %s10
      $region32: #{generator_forward.16} parent=27 // pred_fallthru
        _
    $region28: #{generator_forward.16} parent=5 // pred_fallthru
      _
    %p162 = scmp.le.s32.totalorder 1, %s10
    %p163 = scmp.lt.s32.totalorder %s10, 3
    %p164 = pnand %p162, %p163
    %p165 = pneg %p164
    // Predicated region
    $region33: #{generator_forward.16} parent=5 // pred_check
      _
    $region34: #{generator_forward.16} parent=5 // pred_check_branch
      %167 = sbr.rel (%p164) target = $region36
    $region35: #{generator_forward.16} parent=5 // pred_region
      %s168 = ssub.s32 %s10, 1
      %s169 = smul.u32 32, %s15
      %p170 = scmp.lt.s32.totalorder %s169, 63
      %s171 = scalar_select %p170, %s169, 63
      %s172 = smul.addr %s171, 8
      %s173 = scalar_lea.vmem %s0, %s172
      %p174 = pneg %p36
      %p175 = pneg %p33
      %p176 = pneg %p57
      %p177 = pneg %p54
      %p178 = pneg %p78
      %p179 = pneg %p75
      %p180 = pneg %p99
      %p181 = pneg %p96
      %p182 = pneg %p125
      %p183 = pneg %p122
      %s184 = smul.u32 32, %s15
      %p185 = scmp.lt.s32.totalorder %s184, 63
      %s186 = scalar_select %p185, %s184, 63
      %s187 = smul.addr %s186, 8
      %s188 = scalar_lea.vmem %s4, %s187
      %s189 = smul.u32 32, %s15
      %p190 = scmp.lt.s32.totalorder %s189, 63
      %s191 = scalar_select %p190, %s189, 63
      %s192 = smul.addr %s191, 8
      %s193 = scalar_lea.vmem %s0, %s192
      %s194 = smul.u32 32, %s15
      %s195 = smul.u32 32, %s15
      %p196 = scmp.lt.s32.totalorder %s195, 63
      %s197 = scalar_select %p196, %s195, 63
      %s198 = smul.addr %s197, 8
      %s199 = scalar_lea.vmem %s4, %s198
      %s200 = smul.u32 32, %s15
      %v202 = vld [vmem:[%s193] sm:$0xff]
      %v203 = vld [vmem:[%s193 + $0x8] sm:$0xff]
      %v204 = vld [vmem:[%s193 + $0x10] sm:$0xff]
      %v205 = vld [vmem:[%s193 + $0x18] sm:$0xff]
      %v206 = vld [vmem:[%s193 + $0x20] sm:$0xff]
      %v207 = vld [vmem:[%s193 + $0x28] sm:$0xff]
      %v208 = vld [vmem:[%s193 + $0x30] sm:$0xff]
      %v209 = vld [vmem:[%s193 + $0x38] sm:$0xff]
      %v210 = vld [vmem:[%s193 + $0x40] sm:$0xff]
      %v211 = vld [vmem:[%s193 + $0x48] sm:$0xff]
      %v212 = vld [vmem:[%s193 + $0x50] sm:$0xff]
      %v213 = vld [vmem:[%s193 + $0x58] sm:$0xff]
      %v214 = vld [vmem:[%s193 + $0x60] sm:$0xff]
      %v215 = vld [vmem:[%s193 + $0x68] sm:$0xff]
      %v216 = vld [vmem:[%s193 + $0x70] sm:$0xff]
      %v217 = vld [vmem:[%s193 + $0x78] sm:$0xff]
      %v218 = vld [vmem:[%s193 + $0x80] sm:$0xff]
      %v219 = vld [vmem:[%s193 + $0x88] sm:$0xff]
      %v220 = vld [vmem:[%s193 + $0x90] sm:$0xff]
      %v221 = vld [vmem:[%s193 + $0x98] sm:$0xff]
      %v222 = vld [vmem:[%s193 + $0xa0] sm:$0xff]
      %v223 = vld [vmem:[%s193 + $0xa8] sm:$0xff]
      %v224 = vld [vmem:[%s193 + $0xb0] sm:$0xff]
      %v225 = vld [vmem:[%s193 + $0xb8] sm:$0xff]
      %v226 = vld [vmem:[%s193 + $0xc0] sm:$0xff]
      %v227 = vld [vmem:[%s193 + $0xc8] sm:$0xff]
      %v228 = vld [vmem:[%s193 + $0xd0] sm:$0xff]
      %v229 = vld [vmem:[%s193 + $0xd8] sm:$0xff]
      %v230 = vld [vmem:[%s193 + $0xe0] sm:$0xff]
      %v231 = vld [vmem:[%s193 + $0xe8] sm:$0xff]
      %v232 = vld [vmem:[%s193 + $0xf0] sm:$0xff]
      %v233 = vld [vmem:[%s193 + $0xf8] sm:$0xff]
      %v234 = vld [vmem:[%s1] sm:$0x1]
      %v236 = vlaneseq
      %v237 = vshrl.u32 %v236, 7
      %v238 = vsub.s32 0, %v237
      %v239 = vrot.slane %v234, %v238
      %v241 = vmul.f32 %v202, %v239
      %v242 = vmul.f32 %v203, %v239
      %v243 = vmul.f32 %v204, %v239
      %v244 = vmul.f32 %v205, %v239
      %v245 = vmul.f32 %v206, %v239
      %v246 = vmul.f32 %v207, %v239
      %v247 = vmul.f32 %v208, %v239
      %v248 = vmul.f32 %v209, %v239
      %v249 = vmul.f32 %v210, %v239
      %v250 = vmul.f32 %v211, %v239
      %v251 = vmul.f32 %v212, %v239
      %v252 = vmul.f32 %v213, %v239
      %v253 = vmul.f32 %v214, %v239
      %v254 = vmul.f32 %v215, %v239
      %v255 = vmul.f32 %v216, %v239
      %v256 = vmul.f32 %v217, %v239
      %v257 = vmul.f32 %v218, %v239
      %v258 = vmul.f32 %v219, %v239
      %v259 = vmul.f32 %v220, %v239
      %v260 = vmul.f32 %v221, %v239
      %v261 = vmul.f32 %v222, %v239
      %v262 = vmul.f32 %v223, %v239
      %v263 = vmul.f32 %v224, %v239
      %v264 = vmul.f32 %v225, %v239
      %v265 = vmul.f32 %v226, %v239
      %v266 = vmul.f32 %v227, %v239
      %v267 = vmul.f32 %v228, %v239
      %v268 = vmul.f32 %v229, %v239
      %v269 = vmul.f32 %v230, %v239
      %v270 = vmul.f32 %v231, %v239
      %v271 = vmul.f32 %v232, %v239
      %v272 = vmul.f32 %v233, %v239
      %v273 = vld [vmem:[%s2] sm:$0x1]
      %v275 = vlaneseq
      %v276 = vshrl.u32 %v275, 7
      %v277 = vsub.s32 0, %v276
      %v278 = vrot.slane %v273, %v277
      %v280 = vadd.f32 %v241, %v278
      %v281 = vadd.f32 %v242, %v278
      %v282 = vadd.f32 %v243, %v278
      %v283 = vadd.f32 %v244, %v278
      %v284 = vadd.f32 %v245, %v278
      %v285 = vadd.f32 %v246, %v278
      %v286 = vadd.f32 %v247, %v278
      %v287 = vadd.f32 %v248, %v278
      %v288 = vadd.f32 %v249, %v278
      %v289 = vadd.f32 %v250, %v278
      %v290 = vadd.f32 %v251, %v278
      %v291 = vadd.f32 %v252, %v278
      %v292 = vadd.f32 %v253, %v278
      %v293 = vadd.f32 %v254, %v278
      %v294 = vadd.f32 %v255, %v278
      %v295 = vadd.f32 %v256, %v278
      %v296 = vadd.f32 %v257, %v278
      %v297 = vadd.f32 %v258, %v278
      %v298 = vadd.f32 %v259, %v278
      %v299 = vadd.f32 %v260, %v278
      %v300 = vadd.f32 %v261, %v278
      %v301 = vadd.f32 %v262, %v278
      %v302 = vadd.f32 %v263, %v278
      %v303 = vadd.f32 %v264, %v278
      %v304 = vadd.f32 %v265, %v278
      %v305 = vadd.f32 %v266, %v278
      %v306 = vadd.f32 %v267, %v278
      %v307 = vadd.f32 %v268, %v278
      %v308 = vadd.f32 %v269, %v278
      %v309 = vadd.f32 %v270, %v278
      %v310 = vadd.f32 %v271, %v278
      %v311 = vadd.f32 %v272, %v278
      %v312 = vmax.f32 %v280, 0.0
      %v313 = vmax.f32 %v281, 0.0
      %v314 = vmax.f32 %v282, 0.0
      %v315 = vmax.f32 %v283, 0.0
      %v316 = vmax.f32 %v284, 0.0
      %v317 = vmax.f32 %v285, 0.0
      %v318 = vmax.f32 %v286, 0.0
      %v319 = vmax.f32 %v287, 0.0
      %v320 = vmax.f32 %v288, 0.0
      %v321 = vmax.f32 %v289, 0.0
      %v322 = vmax.f32 %v290, 0.0
      %v323 = vmax.f32 %v291, 0.0
      %v324 = vmax.f32 %v292, 0.0
      %v325 = vmax.f32 %v293, 0.0
      %v326 = vmax.f32 %v294, 0.0
      %v327 = vmax.f32 %v295, 0.0
      %v328 = vmax.f32 %v296, 0.0
      %v329 = vmax.f32 %v297, 0.0
      %v330 = vmax.f32 %v298, 0.0
      %v331 = vmax.f32 %v299, 0.0
      %v332 = vmax.f32 %v300, 0.0
      %v333 = vmax.f32 %v301, 0.0
      %v334 = vmax.f32 %v302, 0.0
      %v335 = vmax.f32 %v303, 0.0
      %v336 = vmax.f32 %v304, 0.0
      %v337 = vmax.f32 %v305, 0.0
      %v338 = vmax.f32 %v306, 0.0
      %v339 = vmax.f32 %v307, 0.0
      %v340 = vmax.f32 %v308, 0.0
      %v341 = vmax.f32 %v309, 0.0
      %v342 = vmax.f32 %v310, 0.0
      %v343 = vmax.f32 %v311, 0.0
      %v344 = vpack.c.bf16 %v313, %v312
      %v345 = vpack.c.bf16 %v315, %v314
      %v346 = vpack.c.bf16 %v317, %v316
      %v347 = vpack.c.bf16 %v319, %v318
      %v348 = vpack.c.bf16 %v321, %v320
      %v349 = vpack.c.bf16 %v323, %v322
      %v350 = vpack.c.bf16 %v325, %v324
      %v351 = vpack.c.bf16 %v327, %v326
      %v352 = vpack.c.bf16 %v329, %v328
      %v353 = vpack.c.bf16 %v331, %v330
      %v354 = vpack.c.bf16 %v333, %v332
      %v355 = vpack.c.bf16 %v335, %v334
      %v356 = vpack.c.bf16 %v337, %v336
      %v357 = vpack.c.bf16 %v339, %v338
      %v358 = vpack.c.bf16 %v341, %v340
      %v359 = vpack.c.bf16 %v343, %v342
      %v360 = vld [vmem:[%s3] sm:$0xf]
      %v361 = vld [vmem:[%s3 + $0x4] sm:$0xf]
      %v364 = vunpack.c.l.b16 %v360
      %v365 = vunpack.c.l.b16 %v361
      %v366 = vpack.c.b16 %v365, %v364
      %vm368 = vcmask 130048
      %v370 = vsel %vm368, %v344, 0
      %v373 = vsel %vm368, %v345, 0
      %v376 = vsel %vm368, %v346, 0
      %v379 = vsel %vm368, %v347, 0
      %v382 = vsel %vm368, %v348, 0
      %v385 = vsel %vm368, %v349, 0
      %v388 = vsel %vm368, %v350, 0
      %v391 = vsel %vm368, %v351, 0
      %v394 = vsel %vm368, %v352, 0
      %v397 = vsel %vm368, %v353, 0
      %v400 = vsel %vm368, %v354, 0
      %v403 = vsel %vm368, %v355, 0
      %v406 = vsel %vm368, %v356, 0
      %v409 = vsel %vm368, %v357, 0
      %v412 = vsel %vm368, %v358, 0
      %v415 = vsel %vm368, %v359, 0
      %417 = vmatprep.subr.bf16.mxu0 0
      %418 = vmatpush1.bf16.msra.mxu0 %v366
      %419 = vmatprep.subr.bf16.mxu0 0
      %420 = vmatpush1.bf16.msra.mxu0 0
      %421 = vmatprep.subr.bf16.mxu0 0
      %422 = vmatpush1.bf16.msra.mxu0 0
      %423 = vmatprep.subr.bf16.mxu0 0
      %424 = vmatpush1.bf16.msra.mxu0 0
      %425 = vmatprep.subr.bf16.mxu0 0
      %426 = vmatpush1.bf16.msra.mxu0 0
      %427 = vmatprep.subr.bf16.mxu0 0
      %428 = vmatpush1.bf16.msra.mxu0 0
      %429 = vmatprep.subr.bf16.mxu0 0
      %430 = vmatpush1.bf16.msra.mxu0 0
      %431 = vmatprep.subr.bf16.mxu0 0
      %432 = vmatpush1.bf16.msra.mxu0 0
      %433 = vmatprep.subr.bf16.mxu0 0
      %434 = vmatpush1.bf16.msra.mxu0 0
      %435 = vmatprep.subr.bf16.mxu0 0
      %436 = vmatpush1.bf16.msra.mxu0 0
      %437 = vmatprep.subr.bf16.mxu0 0
      %438 = vmatpush1.bf16.msra.mxu0 0
      %439 = vmatprep.subr.bf16.mxu0 0
      %440 = vmatpush1.bf16.msra.mxu0 0
      %441 = vmatprep.subr.bf16.mxu0 0
      %442 = vmatpush1.bf16.msra.mxu0 0
      %443 = vmatprep.subr.bf16.mxu0 0
      %444 = vmatpush1.bf16.msra.mxu0 0
      %445 = vmatprep.subr.bf16.mxu0 0
      %446 = vmatpush1.bf16.msra.mxu0 0
      %447 = vmatprep.subr.bf16.mxu0 0
      %448 = vmatpush1.bf16.msra.mxu0 0
      %449 = vmatprep.mubr.bf16.mxu0 0
      %450 = vmatmul.mubr.bf16.gmra.mrb[0].mxu0 %v370
      %v451 = vpop.f32.mrb[0].mxu0
      %v452 = vadd.f32 0.0, %v451
      %v453 = vpop.f32.mrb[0].mxu0
      %v454 = vpop.f32.mrb[0].mxu0
      %v455 = vadd.f32 0.0, %v454
      %v456 = vpop.f32.mrb[0].mxu0
      %457 = vmatprep.mubr.bf16.mxu0 0
      %458 = vmatmul.mubr.bf16.gmra.mrb[0].mxu0 %v373
      %v459 = vpop.f32.mrb[0].mxu0
      %v460 = vadd.f32 0.0, %v459
      %v461 = vpop.f32.mrb[0].mxu0
      %v462 = vpop.f32.mrb[0].mxu0
      %v463 = vadd.f32 0.0, %v462
      %v464 = vpop.f32.mrb[0].mxu0
      %465 = vmatprep.mubr.bf16.mxu0 0
      %466 = vmatmul.mubr.bf16.gmra.mrb[0].mxu0 %v376
      %v467 = vpop.f32.mrb[0].mxu0
      %v468 = vadd.f32 0.0, %v467
      %v469 = vpop.f32.mrb[0].mxu0
      %v470 = vpop.f32.mrb[0].mxu0
      %v471 = vadd.f32 0.0, %v470
      %v472 = vpop.f32.mrb[0].mxu0
      %473 = vmatprep.mubr.bf16.mxu0 0
      %474 = vmatmul.mubr.bf16.gmra.mrb[0].mxu0 %v379
      %v475 = vpop.f32.mrb[0].mxu0
      %v476 = vadd.f32 0.0, %v475
      %v477 = vpop.f32.mrb[0].mxu0
      %v478 = vpop.f32.mrb[0].mxu0
      %v479 = vadd.f32 0.0, %v478
      %v480 = vpop.f32.mrb[0].mxu0
      %481 = vmatprep.mubr.bf16.mxu0 0
      %482 = vmatmul.mubr.bf16.gmra.mrb[0].mxu0 %v382
      %v483 = vpop.f32.mrb[0].mxu0
      %v484 = vadd.f32 0.0, %v483
      %v485 = vpop.f32.mrb[0].mxu0
      %v486 = vpop.f32.mrb[0].mxu0
      %v487 = vadd.f32 0.0, %v486
      %v488 = vpop.f32.mrb[0].mxu0
      %489 = vmatprep.mubr.bf16.mxu0 0
      %490 = vmatmul.mubr.bf16.gmra.mrb[0].mxu0 %v385
      %v491 = vpop.f32.mrb[0].mxu0
      %v492 = vadd.f32 0.0, %v491
      %v493 = vpop.f32.mrb[0].mxu0
      %v494 = vpop.f32.mrb[0].mxu0
      %v495 = vadd.f32 0.0, %v494
      %v496 = vpop.f32.mrb[0].mxu0
      %497 = vmatprep.mubr.bf16.mxu0 0
      %498 = vmatmul.mubr.bf16.gmra.mrb[0].mxu0 %v388
      %v499 = vpop.f32.mrb[0].mxu0
      %v500 = vadd.f32 0.0, %v499
      %v501 = vpop.f32.mrb[0].mxu0
      %v502 = vpop.f32.mrb[0].mxu0
      %v503 = vadd.f32 0.0, %v502
      %v504 = vpop.f32.mrb[0].mxu0
      %505 = vmatprep.mubr.bf16.mxu0 0
      %506 = vmatmul.mubr.bf16.gmra.mrb[0].mxu0 %v391
      %v507 = vpop.f32.mrb[0].mxu0
      %v508 = vadd.f32 0.0, %v507
      %v509 = vpop.f32.mrb[0].mxu0
      %v510 = vpop.f32.mrb[0].mxu0
      %v511 = vadd.f32 0.0, %v510
      %v512 = vpop.f32.mrb[0].mxu0
      %513 = vmatprep.mubr.bf16.mxu0 0
      %514 = vmatmul.mubr.bf16.gmra.mrb[0].mxu0 %v394
      %v515 = vpop.f32.mrb[0].mxu0
      %v516 = vadd.f32 0.0, %v515
      %v517 = vpop.f32.mrb[0].mxu0
      %v518 = vpop.f32.mrb[0].mxu0
      %v519 = vadd.f32 0.0, %v518
      %v520 = vpop.f32.mrb[0].mxu0
      %521 = vmatprep.mubr.bf16.mxu0 0
      %522 = vmatmul.mubr.bf16.gmra.mrb[0].mxu0 %v397
      %v523 = vpop.f32.mrb[0].mxu0
      %v524 = vadd.f32 0.0, %v523
      %v525 = vpop.f32.mrb[0].mxu0
      %v526 = vpop.f32.mrb[0].mxu0
      %v527 = vadd.f32 0.0, %v526
      %v528 = vpop.f32.mrb[0].mxu0
      %529 = vmatprep.mubr.bf16.mxu0 0
      %530 = vmatmul.mubr.bf16.gmra.mrb[0].mxu0 %v400
      %v531 = vpop.f32.mrb[0].mxu0
      %v532 = vadd.f32 0.0, %v531
      %v533 = vpop.f32.mrb[0].mxu0
      %v534 = vpop.f32.mrb[0].mxu0
      %v535 = vadd.f32 0.0, %v534
      %v536 = vpop.f32.mrb[0].mxu0
      %537 = vmatprep.mubr.bf16.mxu0 0
      %538 = vmatmul.mubr.bf16.gmra.mrb[0].mxu0 %v403
      %v539 = vpop.f32.mrb[0].mxu0
      %v540 = vadd.f32 0.0, %v539
      %v541 = vpop.f32.mrb[0].mxu0
      %v542 = vpop.f32.mrb[0].mxu0
      %v543 = vadd.f32 0.0, %v542
      %v544 = vpop.f32.mrb[0].mxu0
      %545 = vmatprep.mubr.bf16.mxu0 0
      %546 = vmatmul.mubr.bf16.gmra.mrb[0].mxu0 %v406
      %v547 = vpop.f32.mrb[0].mxu0
      %v548 = vadd.f32 0.0, %v547
      %v549 = vpop.f32.mrb[0].mxu0
      %v550 = vpop.f32.mrb[0].mxu0
      %v551 = vadd.f32 0.0, %v550
      %v552 = vpop.f32.mrb[0].mxu0
      %553 = vmatprep.mubr.bf16.mxu0 0
      %554 = vmatmul.mubr.bf16.gmra.mrb[0].mxu0 %v409
      %v555 = vpop.f32.mrb[0].mxu0
      %v556 = vadd.f32 0.0, %v555
      %v557 = vpop.f32.mrb[0].mxu0
      %v558 = vpop.f32.mrb[0].mxu0
      %v559 = vadd.f32 0.0, %v558
      %v560 = vpop.f32.mrb[0].mxu0
      %561 = vmatprep.mubr.bf16.mxu0 0
      %562 = vmatmul.mubr.bf16.gmra.mrb[0].mxu0 %v412
      %v563 = vpop.f32.mrb[0].mxu0
      %v564 = vadd.f32 0.0, %v563
      %v565 = vpop.f32.mrb[0].mxu0
      %v566 = vpop.f32.mrb[0].mxu0
      %v567 = vadd.f32 0.0, %v566
      %v568 = vpop.f32.mrb[0].mxu0
      %569 = vmatprep.mubr.bf16.mxu0 0
      %570 = vmatmul.mubr.bf16.gmra.mrb[0].mxu0 %v415
      %v571 = vpop.f32.mrb[0].mxu0
      %v572 = vadd.f32 0.0, %v571
      %v573 = vpop.f32.mrb[0].mxu0
      %v574 = vpop.f32.mrb[0].mxu0
      %v575 = vadd.f32 0.0, %v574
      %v576 = vpop.f32.mrb[0].mxu0
      %577 = vdwg.mxu0
      %578 = vst [vmem:[%s199] sm:$0xff] %v452
      %579 = vst [vmem:[%s199 + $0x8] sm:$0xff] %v455
      %580 = vst [vmem:[%s199 + $0x10] sm:$0xff] %v460
      %581 = vst [vmem:[%s199 + $0x18] sm:$0xff] %v463
      %582 = vst [vmem:[%s199 + $0x20] sm:$0xff] %v468
      %583 = vst [vmem:[%s199 + $0x28] sm:$0xff] %v471
      %584 = vst [vmem:[%s199 + $0x30] sm:$0xff] %v476
      %585 = vst [vmem:[%s199 + $0x38] sm:$0xff] %v479
      %586 = vst [vmem:[%s199 + $0x40] sm:$0xff] %v484
      %587 = vst [vmem:[%s199 + $0x48] sm:$0xff] %v487
      %588 = vst [vmem:[%s199 + $0x50] sm:$0xff] %v492
      %589 = vst [vmem:[%s199 + $0x58] sm:$0xff] %v495
      %590 = vst [vmem:[%s199 + $0x60] sm:$0xff] %v500
      %591 = vst [vmem:[%s199 + $0x68] sm:$0xff] %v503
      %592 = vst [vmem:[%s199 + $0x70] sm:$0xff] %v508
      %593 = vst [vmem:[%s199 + $0x78] sm:$0xff] %v511
      %594 = vst [vmem:[%s199 + $0x80] sm:$0xff] %v516
      %595 = vst [vmem:[%s199 + $0x88] sm:$0xff] %v519
      %596 = vst [vmem:[%s199 + $0x90] sm:$0xff] %v524
      %597 = vst [vmem:[%s199 + $0x98] sm:$0xff] %v527
      %598 = vst [vmem:[%s199 + $0xa0] sm:$0xff] %v532
      %599 = vst [vmem:[%s199 + $0xa8] sm:$0xff] %v535
      %600 = vst [vmem:[%s199 + $0xb0] sm:$0xff] %v540
      %601 = vst [vmem:[%s199 + $0xb8] sm:$0xff] %v543
      %602 = vst [vmem:[%s199 + $0xc0] sm:$0xff] %v548
      %603 = vst [vmem:[%s199 + $0xc8] sm:$0xff] %v551
      %604 = vst [vmem:[%s199 + $0xd0] sm:$0xff] %v556
      %605 = vst [vmem:[%s199 + $0xd8] sm:$0xff] %v559
      %606 = vst [vmem:[%s199 + $0xe0] sm:$0xff] %v564
      %607 = vst [vmem:[%s199 + $0xe8] sm:$0xff] %v567
      %608 = vst [vmem:[%s199 + $0xf0] sm:$0xff] %v572
      %609 = vst [vmem:[%s199 + $0xf8] sm:$0xff] %v575
      %s610 = smul.u32 32, %s15
      %p611 = scmp.lt.s32.totalorder %s610, 63
      %s612 = scalar_select %p611, %s610, 63
      %s613 = smul.addr %s612, 8
      %s614 = scalar_lea.vmem %s4, %s613
      // Predicated region
      $region37: #{generator_forward.16} parent=35 // pred_check
        %p615 = pneg %p122
      $region38: #{generator_forward.16} parent=35 // pred_check_branch
        %617 = sbr.rel (%p615) target = $region40
      $region39: #{generator_forward.16} parent=35 // pred_region
        %s618 = smul.u32 32, %s15
      $region40: #{generator_forward.16} parent=35 // pred_fallthru
        _
    $region36: #{generator_forward.16} parent=5 // pred_fallthru
      _
    %p619 = scmp.le.s32.totalorder 2, %s10
    // Predicated region
    $region41: #{generator_forward.16} parent=5 // pred_check
      %p620 = pneg %p619
    $region42: #{generator_forward.16} parent=5 // pred_check_branch
      %622 = sbr.rel (%p620) target = $region44
    $region43: #{generator_forward.16} parent=5 // pred_region
      %s623 = ssub.s32 %s10, 2
      // Predicated region
      $region45: #{generator_forward.16} parent=43 // pred_check
        %p624 = pneg %p128
      $region46: #{generator_forward.16} parent=43 // pred_check_branch
        %626 = sbr.rel (%p624) target = $region48
      $region47: #{generator_forward.16} parent=43 // pred_region
        %s627 = smul.u32 32, %s16
        %p628 = scmp.lt.s32.totalorder %s627, 63
        %s629 = scalar_select %p628, %s627, 63
        %s630 = smul.addr %s629, 8
        %s631 = scalar_lea.vmem %s4, %s630
      $region48: #{generator_forward.16} parent=43 // pred_fallthru
        _
    $region44: #{generator_forward.16} parent=5 // pred_fallthru
      _
  $region6: #{generator_forward.16} parent=0 // loop_footer
    %s14 = sadd.s32 1, %s10
  $region7: #{generator_forward.16} parent=0 // loop_footer_branch
    %9 = sbr.rel target = $region3
  $region8: #{generator_forward.16} parent=0 // loop_exit
    _

// kernel: generator_forward.18
$region0: #{generator_forward.18}
  #allocation0 [shape = 'u32[]', space=smem, size = 0x4, offset = 0x4, fixed_abs, tag = 'smem constant byte address 0x4 - core index']
  #allocation1 [shape = 'u32[144,128]{1,0:T(1,128)}', space=vmem, size = 0x12000, scoped, tag = 'internal scratch']
  %s0 = inlined_call_operand.vmem [shape: f32[2048,8], index: 0, kind: input, shape index: {}]
  %s1 = inlined_call_operand.vmem [shape: f32[1,8], index: 1, kind: input, shape index: {}]
  %s2 = inlined_call_operand.vmem [shape: f32[1,8], index: 2, kind: input, shape index: {}]
  %s3 = inlined_call_operand.vmem [shape: bf16[8,128], index: 3, kind: input, shape index: {}]
  %s4 = inlined_call_operand.vmem [shape: f32[2048,128], index: 4, kind: output, shape index: {}]
  %s5 = sld [smem:[#allocation0]]
  $region49: #{generator_forward.18} parent=0
    _
  %s7 = ssub.s32 1, %s5
  %s8 = scalar_select 0, %s7, %s5
  loop: start=0, step=1, limit=4
  $region2: #{generator_forward.18} parent=0 // loop_pre_header
    _
  $region3: #{generator_forward.18} parent=0 // loop_header
    %s10 = sphi 0, %s14
    %p11 = scmp.ge.s32.totalorder %s10, 4
    %s20 = sphi 0, %s22
    %s23 = sphi 0, %s20
    %s24 = sphi 0, %s23
    %s40 = sphi 0, %s24
    %s44 = sphi 0, %s44
    %s46 = sphi 0, %s44
    %s47 = sphi 0, %s46
    %s61 = sphi 0, %s47
    %s65 = sphi 0, %s65
    %s67 = sphi 0, %s65
    %s68 = sphi 0, %s67
    %s82 = sphi 0, %s68
    %s86 = sphi 0, %s86
    %s88 = sphi 0, %s86
    %s89 = sphi 0, %s88
    %s103 = sphi 0, %s89
    %s109 = sphi 0, %s111
    %s112 = sphi 0, %s109
    %s113 = sphi 0, %s112
    %s129 = sphi 0, %s113
  $region4: #{generator_forward.18} parent=0 // loop_header_branch
    %13 = sbr.rel (%p11) target = $region8
  $region5: #{generator_forward.18} parent=0 // loop_body
    %s15 = ssub.s32 %s10, 1
    %s16 = ssub.s32 %s10, 2
    %s17 = sadd.s32 %s10, 1
    %s18 = ssub.s32 %s10, %s17
    %p19 = scmp.eq.s32.totalorder %s18, 0
    %s21 = sadd.s32 %s20, 1
    %s22 = scalar_select %p19, %s20, %s21
    %p25 = pneg %p19
    %p26 = scmp.eq.s32.totalorder %s10, 1
    %p27 = por %p25, %p26
    %p28 = scmp.ne.s32.totalorder %s20, %s23
    %p29 = scmp.eq.s32.totalorder %s10, 0
    %p30 = por %p28, %p29
    %p31 = scmp.ne.s32.totalorder %s20, %s23
    %p32 = scmp.eq.s32.totalorder %s15, 1
    %p33 = por %p31, %p32
    %p34 = scmp.ne.s32.totalorder %s23, %s24
    %p35 = scmp.eq.s32.totalorder %s15, 0
    %p36 = por %p34, %p35
    %p37 = scmp.ne.s32.totalorder %s23, %s24
    %p38 = scmp.eq.s32.totalorder %s16, 1
    %p39 = por %p37, %p38
    %p41 = scmp.ne.s32.totalorder %s24, %s40
    %p42 = scmp.eq.s32.totalorder %s16, 0
    %p43 = por %p41, %p42
    %s45 = sadd.s32 %s44, 1
    %p48 = scmp.eq.s32.totalorder %s10, 1
    %p49 = scmp.ne.s32.totalorder %s44, %s46
    %p50 = scmp.eq.s32.totalorder %s10, 0
    %p51 = por %p49, %p50
    %p52 = scmp.ne.s32.totalorder %s44, %s46
    %p53 = scmp.eq.s32.totalorder %s15, 1
    %p54 = por %p52, %p53
    %p55 = scmp.ne.s32.totalorder %s46, %s47
    %p56 = scmp.eq.s32.totalorder %s15, 0
    %p57 = por %p55, %p56
    %p58 = scmp.ne.s32.totalorder %s46, %s47
    %p59 = scmp.eq.s32.totalorder %s16, 1
    %p60 = por %p58, %p59
    %p62 = scmp.ne.s32.totalorder %s47, %s61
    %p63 = scmp.eq.s32.totalorder %s16, 0
    %p64 = por %p62, %p63
    %s66 = sadd.s32 %s65, 1
    %p69 = scmp.eq.s32.totalorder %s10, 1
    %p70 = scmp.ne.s32.totalorder %s65, %s67
    %p71 = scmp.eq.s32.totalorder %s10, 0
    %p72 = por %p70, %p71
    %p73 = scmp.ne.s32.totalorder %s65, %s67
    %p74 = scmp.eq.s32.totalorder %s15, 1
    %p75 = por %p73, %p74
    %p76 = scmp.ne.s32.totalorder %s67, %s68
    %p77 = scmp.eq.s32.totalorder %s15, 0
    %p78 = por %p76, %p77
    %p79 = scmp.ne.s32.totalorder %s67, %s68
    %p80 = scmp.eq.s32.totalorder %s16, 1
    %p81 = por %p79, %p80
    %p83 = scmp.ne.s32.totalorder %s68, %s82
    %p84 = scmp.eq.s32.totalorder %s16, 0
    %p85 = por %p83, %p84
    %s87 = sadd.s32 %s86, 1
    %p90 = scmp.eq.s32.totalorder %s10, 1
    %p91 = scmp.ne.s32.totalorder %s86, %s88
    %p92 = scmp.eq.s32.totalorder %s10, 0
    %p93 = por %p91, %p92
    %p94 = scmp.ne.s32.totalorder %s86, %s88
    %p95 = scmp.eq.s32.totalorder %s15, 1
    %p96 = por %p94, %p95
    %p97 = scmp.ne.s32.totalorder %s88, %s89
    %p98 = scmp.eq.s32.totalorder %s15, 0
    %p99 = por %p97, %p98
    %p100 = scmp.ne.s32.totalorder %s88, %s89
    %p101 = scmp.eq.s32.totalorder %s16, 1
    %p102 = por %p100, %p101
    %p104 = scmp.ne.s32.totalorder %s89, %s103
    %p105 = scmp.eq.s32.totalorder %s16, 0
    %p106 = por %p104, %p105
    %s107 = ssub.s32 %s10, %s17
    %p108 = scmp.eq.s32.totalorder %s107, 0
    %s110 = sadd.s32 %s109, 1
    %s111 = scalar_select %p108, %s109, %s110
    %p114 = pneg %p108
    %p115 = scmp.eq.s32.totalorder %s10, 1
    %p116 = por %p114, %p115
    %p117 = scmp.ne.s32.totalorder %s109, %s112
    %p118 = scmp.eq.s32.totalorder %s10, 0
    %p119 = por %p117, %p118
    %p120 = scmp.ne.s32.totalorder %s109, %s112
    %p121 = scmp.eq.s32.totalorder %s15, 1
    %p122 = por %p120, %p121
    %p123 = scmp.ne.s32.totalorder %s112, %s113
    %p124 = scmp.eq.s32.totalorder %s15, 0
    %p125 = por %p123, %p124
    %p126 = scmp.ne.s32.totalorder %s112, %s113
    %p127 = scmp.eq.s32.totalorder %s16, 1
    %p128 = por %p126, %p127
    %p130 = scmp.ne.s32.totalorder %s113, %s129
    %p131 = scmp.eq.s32.totalorder %s16, 0
    %p132 = por %p130, %p131
    %p133 = scmp.le.s32.totalorder 1, %s10
    %p134 = scmp.lt.s32.totalorder %s10, 3
    %p135 = pnand %p133, %p134
    %p136 = pneg %p135
    // Predicated region
    $region9: #{generator_forward.18} parent=5 // pred_check
      _
    $region10: #{generator_forward.18} parent=5 // pred_check_branch
      %138 = sbr.rel (%p135) target = $region12
    $region11: #{generator_forward.18} parent=5 // pred_region
      %s139 = ssub.s32 %s10, 1
      // Predicated region
      $region13: #{generator_forward.18} parent=11 // pred_check
        %p140 = pneg %p57
      $region14: #{generator_forward.18} parent=11 // pred_check_branch
        %142 = sbr.rel (%p140) target = $region16
      $region15: #{generator_forward.18} parent=11 // pred_region
        _
      $region16: #{generator_forward.18} parent=11 // pred_fallthru
        _
      // Predicated region
      $region17: #{generator_forward.18} parent=11 // pred_check
        %p143 = pneg %p78
      $region18: #{generator_forward.18} parent=11 // pred_check_branch
        %145 = sbr.rel (%p143) target = $region20
      $region19: #{generator_forward.18} parent=11 // pred_region
        _
      $region20: #{generator_forward.18} parent=11 // pred_fallthru
        _
      // Predicated region
      $region21: #{generator_forward.18} parent=11 // pred_check
        %p146 = pneg %p99
      $region22: #{generator_forward.18} parent=11 // pred_check_branch
        %148 = sbr.rel (%p146) target = $region24
      $region23: #{generator_forward.18} parent=11 // pred_region
        _
      $region24: #{generator_forward.18} parent=11 // pred_fallthru
        _
    $region12: #{generator_forward.18} parent=5 // pred_fallthru
      _
    %p149 = scmp.lt.s32.totalorder %s10, 2
    // Predicated region
    $region25: #{generator_forward.18} parent=5 // pred_check
      %p150 = pneg %p149
    $region26: #{generator_forward.18} parent=5 // pred_check_branch
      %152 = sbr.rel (%p150) target = $region28
    $region27: #{generator_forward.18} parent=5 // pred_region
      // Predicated region
      $region29: #{generator_forward.18} parent=27 // pred_check
        %p153 = pneg %p30
      $region30: #{generator_forward.18} parent=27 // pred_check_branch
        %155 = sbr.rel (%p153) target = $region32
      $region31: #{generator_forward.18} parent=27 // pred_region
        %s156 = smul.u32 128, %s10
        %p157 = scmp.lt.s32.totalorder %s156, 255
        %s158 = scalar_select %p157, %s156, 255
        %s159 = smul.addr %s158, 8
        %s160 = scalar_lea.vmem %s0, %s159
        %s161 = smul.u32 128, %s10
      $region32: #{generator_forward.18} parent=27 // pred_fallthru
        _
    $region28: #{generator_forward.18} parent=5 // pred_fallthru
      _
    %p162 = scmp.le.s32.totalorder 1, %s10
    %p163 = scmp.lt.s32.totalorder %s10, 3
    %p164 = pnand %p162, %p163
    %p165 = pneg %p164
    // Predicated region
    $region33: #{generator_forward.18} parent=5 // pred_check
      _
    $region34: #{generator_forward.18} parent=5 // pred_check_branch
      %167 = sbr.rel (%p164) target = $region36
    $region35: #{generator_forward.18} parent=5 // pred_region
      %s168 = ssub.s32 %s10, 1
      %s169 = smul.u32 128, %s15
      %p170 = scmp.lt.s32.totalorder %s169, 255
      %s171 = scalar_select %p170, %s169, 255
      %s172 = smul.addr %s171, 8
      %s173 = scalar_lea.vmem %s0, %s172
      %p174 = pneg %p36
      %p175 = pneg %p33
      %p176 = pneg %p57
      %p177 = pneg %p54
      %p178 = pneg %p78
      %p179 = pneg %p75
      %p180 = pneg %p99
      %p181 = pneg %p96
      %p182 = pneg %p125
      %p183 = pneg %p122
      %s184 = smul.u32 128, %s15
      %p185 = scmp.lt.s32.totalorder %s184, 255
      %s186 = scalar_select %p185, %s184, 255
      %s187 = smul.addr %s186, 8
      %s188 = scalar_lea.vmem %s4, %s187
      %s189 = smul.u32 128, %s15
      %p190 = scmp.lt.s32.totalorder %s189, 255
      %s191 = scalar_select %p190, %s189, 255
      %s192 = smul.addr %s191, 8
      %s193 = scalar_lea.vmem %s0, %s192
      %s194 = smul.u32 128, %s15
      %s195 = smul.u32 128, %s15
      %p196 = scmp.lt.s32.totalorder %s195, 255
      %s197 = scalar_select %p196, %s195, 255
      %s198 = smul.addr %s197, 8
      %s199 = scalar_lea.vmem %s4, %s198
      %s200 = smul.u32 128, %s15
      %v202 = vld [vmem:[%s193] sm:$0xff]
      %v203 = vld [vmem:[%s193 + $0x8] sm:$0xff]
      %v204 = vld [vmem:[%s193 + $0x10] sm:$0xff]
      %v205 = vld [vmem:[%s193 + $0x18] sm:$0xff]
      %v206 = vld [vmem:[%s193 + $0x20] sm:$0xff]
      %v207 = vld [vmem:[%s193 + $0x28] sm:$0xff]
      %v208 = vld [vmem:[%s193 + $0x30] sm:$0xff]
      %v209 = vld [vmem:[%s193 + $0x38] sm:$0xff]
      %v210 = vld [vmem:[%s193 + $0x40] sm:$0xff]
      %v211 = vld [vmem:[%s193 + $0x48] sm:$0xff]
      %v212 = vld [vmem:[%s193 + $0x50] sm:$0xff]
      %v213 = vld [vmem:[%s193 + $0x58] sm:$0xff]
      %v214 = vld [vmem:[%s193 + $0x60] sm:$0xff]
      %v215 = vld [vmem:[%s193 + $0x68] sm:$0xff]
      %v216 = vld [vmem:[%s193 + $0x70] sm:$0xff]
      %v217 = vld [vmem:[%s193 + $0x78] sm:$0xff]
      %v218 = vld [vmem:[%s193 + $0x80] sm:$0xff]
      %v219 = vld [vmem:[%s193 + $0x88] sm:$0xff]
      %v220 = vld [vmem:[%s193 + $0x90] sm:$0xff]
      %v221 = vld [vmem:[%s193 + $0x98] sm:$0xff]
      %v222 = vld [vmem:[%s193 + $0xa0] sm:$0xff]
      %v223 = vld [vmem:[%s193 + $0xa8] sm:$0xff]
      %v224 = vld [vmem:[%s193 + $0xb0] sm:$0xff]
      %v225 = vld [vmem:[%s193 + $0xb8] sm:$0xff]
      %v226 = vld [vmem:[%s193 + $0xc0] sm:$0xff]
      %v227 = vld [vmem:[%s193 + $0xc8] sm:$0xff]
      %v228 = vld [vmem:[%s193 + $0xd0] sm:$0xff]
      %v229 = vld [vmem:[%s193 + $0xd8] sm:$0xff]
      %v230 = vld [vmem:[%s193 + $0xe0] sm:$0xff]
      %v231 = vld [vmem:[%s193 + $0xe8] sm:$0xff]
      %v232 = vld [vmem:[%s193 + $0xf0] sm:$0xff]
      %v233 = vld [vmem:[%s193 + $0xf8] sm:$0xff]
      %v234 = vld [vmem:[%s193 + $0x100] sm:$0xff]
      %v235 = vld [vmem:[%s193 + $0x108] sm:$0xff]
      %v236 = vld [vmem:[%s193 + $0x110] sm:$0xff]
      %v237 = vld [vmem:[%s193 + $0x118] sm:$0xff]
      %v238 = vld [vmem:[%s193 + $0x120] sm:$0xff]
      %v239 = vld [vmem:[%s193 + $0x128] sm:$0xff]
      %v240 = vld [vmem:[%s193 + $0x130] sm:$0xff]
      %v241 = vld [vmem:[%s193 + $0x138] sm:$0xff]
      %v242 = vld [vmem:[%s193 + $0x140] sm:$0xff]
      %v243 = vld [vmem:[%s193 + $0x148] sm:$0xff]
      %v244 = vld [vmem:[%s193 + $0x150] sm:$0xff]
      %v245 = vld [vmem:[%s193 + $0x158] sm:$0xff]
      %v246 = vld [vmem:[%s193 + $0x160] sm:$0xff]
      %v247 = vld [vmem:[%s193 + $0x168] sm:$0xff]
      %v248 = vld [vmem:[%s193 + $0x170] sm:$0xff]
      %v249 = vld [vmem:[%s193 + $0x178] sm:$0xff]
      %v250 = vld [vmem:[%s193 + $0x180] sm:$0xff]
      %v251 = vld [vmem:[%s193 + $0x188] sm:$0xff]
      %v252 = vld [vmem:[%s193 + $0x190] sm:$0xff]
      %v253 = vld [vmem:[%s193 + $0x198] sm:$0xff]
      %v254 = vld [vmem:[%s193 + $0x1a0] sm:$0xff]
      %v255 = vld [vmem:[%s193 + $0x1a8] sm:$0xff]
      %v256 = vld [vmem:[%s193 + $0x1b0] sm:$0xff]
      %v257 = vld [vmem:[%s193 + $0x1b8] sm:$0xff]
      %v258 = vld [vmem:[%s193 + $0x1c0] sm:$0xff]
      %v259 = vld [vmem:[%s193 + $0x1c8] sm:$0xff]
      %v260 = vld [vmem:[%s193 + $0x1d0] sm:$0xff]
      %v261 = vld [vmem:[%s193 + $0x1d8] sm:$0xff]
      %v262 = vld [vmem:[%s193 + $0x1e0] sm:$0xff]
      %v263 = vld [vmem:[%s193 + $0x1e8] sm:$0xff]
      %v264 = vld [vmem:[%s193 + $0x1f0] sm:$0xff]
      %v265 = vld [vmem:[%s193 + $0x1f8] sm:$0xff]
      %v266 = vld [vmem:[%s193 + $0x200] sm:$0xff]
      %v267 = vld [vmem:[%s193 + $0x208] sm:$0xff]
      %v268 = vld [vmem:[%s193 + $0x210] sm:$0xff]
      %v269 = vld [vmem:[%s193 + $0x218] sm:$0xff]
      %v270 = vld [vmem:[%s193 + $0x220] sm:$0xff]
      %v271 = vld [vmem:[%s193 + $0x228] sm:$0xff]
      %v272 = vld [vmem:[%s193 + $0x230] sm:$0xff]
      %v273 = vld [vmem:[%s193 + $0x238] sm:$0xff]
      %v274 = vld [vmem:[%s193 + $0x240] sm:$0xff]
      %v275 = vld [vmem:[%s193 + $0x248] sm:$0xff]
      %v276 = vld [vmem:[%s193 + $0x250] sm:$0xff]
      %v277 = vld [vmem:[%s193 + $0x258] sm:$0xff]
      %v278 = vld [vmem:[%s193 + $0x260] sm:$0xff]
      %v279 = vld [vmem:[%s193 + $0x268] sm:$0xff]
      %v280 = vld [vmem:[%s193 + $0x270] sm:$0xff]
      %v281 = vld [vmem:[%s193 + $0x278] sm:$0xff]
      %v282 = vld [vmem:[%s193 + $0x280] sm:$0xff]
      %v283 = vld [vmem:[%s193 + $0x288] sm:$0xff]
      %v284 = vld [vmem:[%s193 + $0x290] sm:$0xff]
      %v285 = vld [vmem:[%s193 + $0x298] sm:$0xff]
      %v286 = vld [vmem:[%s193 + $0x2a0] sm:$0xff]
      %v287 = vld [vmem:[%s193 + $0x2a8] sm:$0xff]
      %v288 = vld [vmem:[%s193 + $0x2b0] sm:$0xff]
      %v289 = vld [vmem:[%s193 + $0x2b8] sm:$0xff]
      %v290 = vld [vmem:[%s193 + $0x2c0] sm:$0xff]
      %v291 = vld [vmem:[%s193 + $0x2c8] sm:$0xff]
      %v292 = vld [vmem:[%s193 + $0x2d0] sm:$0xff]
      %v293 = vld [vmem:[%s193 + $0x2d8] sm:$0xff]
      %v294 = vld [vmem:[%s193 + $0x2e0] sm:$0xff]
      %v295 = vld [vmem:[%s193 + $0x2e8] sm:$0xff]
      %v296 = vld [vmem:[%s193 + $0x2f0] sm:$0xff]
      %v297 = vld [vmem:[%s193 + $0x2f8] sm:$0xff]
      %v298 = vld [vmem:[%s193 + $0x300] sm:$0xff]
      %v299 = vld [vmem:[%s193 + $0x308] sm:$0xff]
      %v300 = vld [vmem:[%s193 + $0x310] sm:$0xff]
      %v301 = vld [vmem:[%s193 + $0x318] sm:$0xff]
      %v302 = vld [vmem:[%s193 + $0x320] sm:$0xff]
      %v303 = vld [vmem:[%s193 + $0x328] sm:$0xff]
      %v304 = vld [vmem:[%s193 + $0x330] sm:$0xff]
      %v305 = vld [vmem:[%s193 + $0x338] sm:$0xff]
      %v306 = vld [vmem:[%s193 + $0x340] sm:$0xff]
      %v307 = vld [vmem:[%s193 + $0x348] sm:$0xff]
      %v308 = vld [vmem:[%s193 + $0x350] sm:$0xff]
      %v309 = vld [vmem:[%s193 + $0x358] sm:$0xff]
      %v310 = vld [vmem:[%s193 + $0x360] sm:$0xff]
      %v311 = vld [vmem:[%s193 + $0x368] sm:$0xff]
      %v312 = vld [vmem:[%s193 + $0x370] sm:$0xff]
      %v313 = vld [vmem:[%s193 + $0x378] sm:$0xff]
      %v314 = vld [vmem:[%s193 + $0x380] sm:$0xff]
      %v315 = vld [vmem:[%s193 + $0x388] sm:$0xff]
      %v316 = vld [vmem:[%s193 + $0x390] sm:$0xff]
      %v317 = vld [vmem:[%s193 + $0x398] sm:$0xff]
      %v318 = vld [vmem:[%s193 + $0x3a0] sm:$0xff]
      %v319 = vld [vmem:[%s193 + $0x3a8] sm:$0xff]
      %v320 = vld [vmem:[%s193 + $0x3b0] sm:$0xff]
      %v321 = vld [vmem:[%s193 + $0x3b8] sm:$0xff]
      %v322 = vld [vmem:[%s193 + $0x3c0] sm:$0xff]
      %v323 = vld [vmem:[%s193 + $0x3c8] sm:$0xff]
      %v324 = vld [vmem:[%s193 + $0x3d0] sm:$0xff]
      %v325 = vld [vmem:[%s193 + $0x3d8] sm:$0xff]
      %v326 = vld [vmem:[%s193 + $0x3e0] sm:$0xff]
      %v327 = vld [vmem:[%s193 + $0x3e8] sm:$0xff]
      %v328 = vld [vmem:[%s193 + $0x3f0] sm:$0xff]
      %v329 = vld [vmem:[%s193 + $0x3f8] sm:$0xff]
      %v330 = vld [vmem:[%s1] sm:$0x1]
      %v332 = vlaneseq
      %v333 = vshrl.u32 %v332, 7
      %v334 = vsub.s32 0, %v333
      %v335 = vrot.slane %v330, %v334
      %v337 = vmul.f32 %v202, %v335
      %v338 = vmul.f32 %v203, %v335
      %v339 = vmul.f32 %v204, %v335
      %v340 = vmul.f32 %v205, %v335
      %v341 = vmul.f32 %v206, %v335
      %v342 = vmul.f32 %v207, %v335
      %v343 = vmul.f32 %v208, %v335
      %v344 = vmul.f32 %v209, %v335
      %v345 = vmul.f32 %v210, %v335
      %v346 = vmul.f32 %v211, %v335
      %v347 = vmul.f32 %v212, %v335
      %v348 = vmul.f32 %v213, %v335
      %v349 = vmul.f32 %v214, %v335
      %v350 = vmul.f32 %v215, %v335
      %v351 = vmul.f32 %v216, %v335
      %v352 = vmul.f32 %v217, %v335
      %v353 = vmul.f32 %v218, %v335
      %v354 = vmul.f32 %v219, %v335
      %v355 = vmul.f32 %v220, %v335
      %v356 = vmul.f32 %v221, %v335
      %v357 = vmul.f32 %v222, %v335
      %v358 = vmul.f32 %v223, %v335
      %v359 = vmul.f32 %v224, %v335
      %v360 = vmul.f32 %v225, %v335
      %v361 = vmul.f32 %v226, %v335
      %v362 = vmul.f32 %v227, %v335
      %v363 = vmul.f32 %v228, %v335
      %v364 = vmul.f32 %v229, %v335
      %v365 = vmul.f32 %v230, %v335
      %v366 = vmul.f32 %v231, %v335
      %v367 = vmul.f32 %v232, %v335
      %v368 = vmul.f32 %v233, %v335
      %v369 = vmul.f32 %v234, %v335
      %v370 = vmul.f32 %v235, %v335
      %v371 = vmul.f32 %v236, %v335
      %v372 = vmul.f32 %v237, %v335
      %v373 = vmul.f32 %v238, %v335
      %v374 = vmul.f32 %v239, %v335
      %v375 = vmul.f32 %v240, %v335
      %v376 = vmul.f32 %v241, %v335
      %v377 = vmul.f32 %v242, %v335
      %v378 = vmul.f32 %v243, %v335
      %v379 = vmul.f32 %v244, %v335
      %v380 = vmul.f32 %v245, %v335
      %v381 = vmul.f32 %v246, %v335
      %v382 = vmul.f32 %v247, %v335
      %v383 = vmul.f32 %v248, %v335
      %v384 = vmul.f32 %v249, %v335
      %v385 = vmul.f32 %v250, %v335
      %v386 = vmul.f32 %v251, %v335
      %v387 = vmul.f32 %v252, %v335
      %v388 = vmul.f32 %v253, %v335
      %v389 = vmul.f32 %v254, %v335
      %v390 = vmul.f32 %v255, %v335
      %v391 = vmul.f32 %v256, %v335
      %v392 = vmul.f32 %v257, %v335
      %v393 = vmul.f32 %v258, %v335
      %v394 = vmul.f32 %v259, %v335
      %v395 = vmul.f32 %v260, %v335
      %v396 = vmul.f32 %v261, %v335
      %v397 = vmul.f32 %v262, %v335
      %v398 = vmul.f32 %v263, %v335
      %v399 = vmul.f32 %v264, %v335
      %v400 = vmul.f32 %v265, %v335
      %v401 = vmul.f32 %v266, %v335
      %v402 = vmul.f32 %v267, %v335
      %v403 = vmul.f32 %v268, %v335
      %v404 = vmul.f32 %v269, %v335
      %v405 = vmul.f32 %v270, %v335
      %v406 = vmul.f32 %v271, %v335
      %v407 = vmul.f32 %v272, %v335
      %v408 = vmul.f32 %v273, %v335
      %v409 = vmul.f32 %v274, %v335
      %v410 = vmul.f32 %v275, %v335
      %v411 = vmul.f32 %v276, %v335
      %v412 = vmul.f32 %v277, %v335
      %v413 = vmul.f32 %v278, %v335
      %v414 = vmul.f32 %v279, %v335
      %v415 = vmul.f32 %v280, %v335
      %v416 = vmul.f32 %v281, %v335
      %v417 = vmul.f32 %v282, %v335
      %v418 = vmul.f32 %v283, %v335
      %v419 = vmul.f32 %v284, %v335
      %v420 = vmul.f32 %v285, %v335
      %v421 = vmul.f32 %v286, %v335
      %v422 = vmul.f32 %v287, %v335
      %v423 = vmul.f32 %v288, %v335
      %v424 = vmul.f32 %v289, %v335
      %v425 = vmul.f32 %v290, %v335
      %v426 = vmul.f32 %v291, %v335
      %v427 = vmul.f32 %v292, %v335
      %v428 = vmul.f32 %v293, %v335
      %v429 = vmul.f32 %v294, %v335
      %v430 = vmul.f32 %v295, %v335
      %v431 = vmul.f32 %v296, %v335
      %v432 = vmul.f32 %v297, %v335
      %v433 = vmul.f32 %v298, %v335
      %v434 = vmul.f32 %v299, %v335
      %v435 = vmul.f32 %v300, %v335
      %v436 = vmul.f32 %v301, %v335
      %v437 = vmul.f32 %v302, %v335
      %v438 = vmul.f32 %v303, %v335
      %v439 = vmul.f32 %v304, %v335
      %v440 = vmul.f32 %v305, %v335
      %v441 = vmul.f32 %v306, %v335
      %v442 = vmul.f32 %v307, %v335
      %v443 = vmul.f32 %v308, %v335
      %v444 = vmul.f32 %v309, %v335
      %v445 = vmul.f32 %v310, %v335
      %v446 = vmul.f32 %v311, %v335
      %v447 = vmul.f32 %v312, %v335
      %v448 = vmul.f32 %v313, %v335
      %v449 = vmul.f32 %v314, %v335
      %v450 = vmul.f32 %v315, %v335
      %v451 = vmul.f32 %v316, %v335
      %v452 = vmul.f32 %v317, %v335
      %v453 = vmul.f32 %v318, %v335
      %v454 = vmul.f32 %v319, %v335
      %v455 = vmul.f32 %v320, %v335
      %v456 = vmul.f32 %v321, %v335
      %v457 = vmul.f32 %v322, %v335
      %v458 = vmul.f32 %v323, %v335
      %v459 = vmul.f32 %v324, %v335
      %v460 = vmul.f32 %v325, %v335
      %v461 = vmul.f32 %v326, %v335
      %v462 = vmul.f32 %v327, %v335
      %v463 = vmul.f32 %v328, %v335
      %v464 = vmul.f32 %v329, %v335
      %v465 = vld [vmem:[%s2] sm:$0x1]
      %v467 = vlaneseq
      %v468 = vshrl.u32 %v467, 7
      %v469 = vsub.s32 0, %v468
      %v470 = vrot.slane %v465, %v469
      %v472 = vadd.f32 %v337, %v470
      %v473 = vadd.f32 %v338, %v470
      %v474 = vadd.f32 %v339, %v470
      %v475 = vadd.f32 %v340, %v470
      %v476 = vadd.f32 %v341, %v470
      %v477 = vadd.f32 %v342, %v470
      %v478 = vadd.f32 %v343, %v470
      %v479 = vadd.f32 %v344, %v470
      %v480 = vadd.f32 %v345, %v470
      %v481 = vadd.f32 %v346, %v470
      %v482 = vadd.f32 %v347, %v470
      %v483 = vadd.f32 %v348, %v470
      %v484 = vadd.f32 %v349, %v470
      %v485 = vadd.f32 %v350, %v470
      %v486 = vadd.f32 %v351, %v470
      %v487 = vadd.f32 %v352, %v470
      %v488 = vadd.f32 %v353, %v470
      %v489 = vadd.f32 %v354, %v470
      %v490 = vadd.f32 %v355, %v470
      %v491 = vadd.f32 %v356, %v470
      %v492 = vadd.f32 %v357, %v470
      %v493 = vadd.f32 %v358, %v470
      %v494 = vadd.f32 %v359, %v470
      %v495 = vadd.f32 %v360, %v470
      %v496 = vadd.f32 %v361, %v470
      %v497 = vadd.f32 %v362, %v470
      %v498 = vadd.f32 %v363, %v470
      %v499 = vadd.f32 %v364, %v470
      %v500 = vadd.f32 %v365, %v470
      %v501 = vadd.f32 %v366, %v470
      %v502 = vadd.f32 %v367, %v470
      %v503 = vadd.f32 %v368, %v470
      %v504 = vadd.f32 %v369, %v470
      %v505 = vadd.f32 %v370, %v470
      %v506 = vadd.f32 %v371, %v470
      %v507 = vadd.f32 %v372, %v470
      %v508 = vadd.f32 %v373, %v470
      %v509 = vadd.f32 %v374, %v470
      %v510 = vadd.f32 %v375, %v470
      %v511 = vadd.f32 %v376, %v470
      %v512 = vadd.f32 %v377, %v470
      %v513 = vadd.f32 %v378, %v470
      %v514 = vadd.f32 %v379, %v470
      %v515 = vadd.f32 %v380, %v470
      %v516 = vadd.f32 %v381, %v470
      %v517 = vadd.f32 %v382, %v470
      %v518 = vadd.f32 %v383, %v470
      %v519 = vadd.f32 %v384, %v470
      %v520 = vadd.f32 %v385, %v470
      %v521 = vadd.f32 %v386, %v470
      %v522 = vadd.f32 %v387, %v470
      %v523 = vadd.f32 %v388, %v470
      %v524 = vadd.f32 %v389, %v470
      %v525 = vadd.f32 %v390, %v470
      %v526 = vadd.f32 %v391, %v470
      %v527 = vadd.f32 %v392, %v470
      %v528 = vadd.f32 %v393, %v470
      %v529 = vadd.f32 %v394, %v470
      %v530 = vadd.f32 %v395, %v470
      %v531 = vadd.f32 %v396, %v470
      %v532 = vadd.f32 %v397, %v470
      %v533 = vadd.f32 %v398, %v470
      %v534 = vadd.f32 %v399, %v470
      %v535 = vadd.f32 %v400, %v470
      %v536 = vadd.f32 %v401, %v470
      %v537 = vadd.f32 %v402, %v470
      %v538 = vadd.f32 %v403, %v470
      %v539 = vadd.f32 %v404, %v470
      %v540 = vadd.f32 %v405, %v470
      %v541 = vadd.f32 %v406, %v470
      %v542 = vadd.f32 %v407, %v470
      %v543 = vadd.f32 %v408, %v470
      %v544 = vadd.f32 %v409, %v470
      %v545 = vadd.f32 %v410, %v470
      %v546 = vadd.f32 %v411, %v470
      %v547 = vadd.f32 %v412, %v470
      %v548 = vadd.f32 %v413, %v470
      %v549 = vadd.f32 %v414, %v470
      %v550 = vadd.f32 %v415, %v470
      %v551 = vadd.f32 %v416, %v470
      %v552 = vadd.f32 %v417, %v470
      %v553 = vadd.f32 %v418, %v470
      %v554 = vadd.f32 %v419, %v470
      %v555 = vadd.f32 %v420, %v470
      %v556 = vadd.f32 %v421, %v470
      %v557 = vadd.f32 %v422, %v470
      %v558 = vadd.f32 %v423, %v470
      %v559 = vadd.f32 %v424, %v470
      %v560 = vadd.f32 %v425, %v470
      %v561 = vadd.f32 %v426, %v470
      %v562 = vadd.f32 %v427, %v470
      %v563 = vadd.f32 %v428, %v470
      %v564 = vadd.f32 %v429, %v470
      %v565 = vadd.f32 %v430, %v470
      %v566 = vadd.f32 %v431, %v470
      %v567 = vadd.f32 %v432, %v470
      %v568 = vadd.f32 %v433, %v470
      %v569 = vadd.f32 %v434, %v470
      %v570 = vadd.f32 %v435, %v470
      %v571 = vadd.f32 %v436, %v470
      %v572 = vadd.f32 %v437, %v470
      %v573 = vadd.f32 %v438, %v470
      %v574 = vadd.f32 %v439, %v470
      %v575 = vadd.f32 %v440, %v470
      %v576 = vadd.f32 %v441, %v470
      %v577 = vadd.f32 %v442, %v470
      %v578 = vadd.f32 %v443, %v470
      %v579 = vadd.f32 %v444, %v470
      %v580 = vadd.f32 %v445, %v470
      %v581 = vadd.f32 %v446, %v470
      %v582 = vadd.f32 %v447, %v470
      %v583 = vadd.f32 %v448, %v470
      %v584 = vadd.f32 %v449, %v470
      %v585 = vadd.f32 %v450, %v470
      %v586 = vadd.f32 %v451, %v470
      %v587 = vadd.f32 %v452, %v470
      %v588 = vadd.f32 %v453, %v470
      %v589 = vadd.f32 %v454, %v470
      %v590 = vadd.f32 %v455, %v470
      %v591 = vadd.f32 %v456, %v470
      %v592 = vadd.f32 %v457, %v470
      %v593 = vadd.f32 %v458, %v470
      %v594 = vadd.f32 %v459, %v470
      %v595 = vadd.f32 %v460, %v470
      %v596 = vadd.f32 %v461, %v470
      %v597 = vadd.f32 %v462, %v470
      %v598 = vadd.f32 %v463, %v470
      %v599 = vadd.f32 %v464, %v470
      %v600 = vmax.f32 %v472, 0.0
      %v601 = vmax.f32 %v473, 0.0
      %v602 = vmax.f32 %v474, 0.0
      %v603 = vmax.f32 %v475, 0.0
      %v604 = vmax.f32 %v476, 0.0
      %v605 = vmax.f32 %v477, 0.0
      %v606 = vmax.f32 %v478, 0.0
      %v607 = vmax.f32 %v479, 0.0
      %v608 = vmax.f32 %v480, 0.0
      %v609 = vmax.f32 %v481, 0.0
      %v610 = vmax.f32 %v482, 0.0
      %v611 = vmax.f32 %v483, 0.0
      %v612 = vmax.f32 %v484, 0.0
      %v613 = vmax.f32 %v485, 0.0
      %v614 = vmax.f32 %v486, 0.0
      %v615 = vmax.f32 %v487, 0.0
      %v616 = vmax.f32 %v488, 0.0
      %v617 = vmax.f32 %v489, 0.0
      %v618 = vmax.f32 %v490, 0.0
      %v619 = vmax.f32 %v491, 0.0
      %v620 = vmax.f32 %v492, 0.0
      %v621 = vmax.f32 %v493, 0.0
      %v622 = vmax.f32 %v494, 0.0
      %v623 = vmax.f32 %v495, 0.0
      %v624 = vmax.f32 %v496, 0.0
      %v625 = vmax.f32 %v497, 0.0
      %v626 = vmax.f32 %v498, 0.0
      %v627 = vmax.f32 %v499, 0.0
      %v628 = vmax.f32 %v500, 0.0
      %v629 = vmax.f32 %v501, 0.0
      %v630 = vmax.f32 %v502, 0.0
      %v631 = vmax.f32 %v503, 0.0
      %v632 = vmax.f32 %v504, 0.0
      %v633 = vmax.f32 %v505, 0.0
      %v634 = vmax.f32 %v506, 0.0
      %v635 = vmax.f32 %v507, 0.0
      %v636 = vmax.f32 %v508, 0.0
      %v637 = vmax.f32 %v509, 0.0
      %v638 = vmax.f32 %v510, 0.0
      %v639 = vmax.f32 %v511, 0.0
      %v640 = vmax.f32 %v512, 0.0
      %v641 = vmax.f32 %v513, 0.0
      %v642 = vmax.f32 %v514, 0.0
      %v643 = vmax.f32 %v515, 0.0
      %v644 = vmax.f32 %v516, 0.0
      %v645 = vmax.f32 %v517, 0.0
      %v646 = vmax.f32 %v518, 0.0
      %v647 = vmax.f32 %v519, 0.0
      %v648 = vmax.f32 %v520, 0.0
      %v649 = vmax.f32 %v521, 0.0
      %v650 = vmax.f32 %v522, 0.0
      %v651 = vmax.f32 %v523, 0.0
      %v652 = vmax.f32 %v524, 0.0
      %v653 = vmax.f32 %v525, 0.0
      %v654 = vmax.f32 %v526, 0.0
      %v655 = vmax.f32 %v527, 0.0
      %v656 = vmax.f32 %v528, 0.0
      %v657 = vmax.f32 %v529, 0.0
      %v658 = vmax.f32 %v530, 0.0
      %v659 = vmax.f32 %v531, 0.0
      %v660 = vmax.f32 %v532, 0.0
      %v661 = vmax.f32 %v533, 0.0
      %v662 = vmax.f32 %v534, 0.0
      %v663 = vmax.f32 %v535, 0.0
      %v664 = vmax.f32 %v536, 0.0
      %v665 = vmax.f32 %v537, 0.0
      %v666 = vmax.f32 %v538, 0.0
      %v667 = vmax.f32 %v539, 0.0
      %v668 = vmax.f32 %v540, 0.0
      %v669 = vmax.f32 %v541, 0.0
      %v670 = vmax.f32 %v542, 0.0
      %v671 = vmax.f32 %v543, 0.0
      %v672 = vmax.f32 %v544, 0.0
      %v673 = vmax.f32 %v545, 0.0
      %v674 = vmax.f32 %v546, 0.0
      %v675 = vmax.f32 %v547, 0.0
      %v676 = vmax.f32 %v548, 0.0
      %v677 = vmax.f32 %v549, 0.0
      %v678 = vmax.f32 %v550, 0.0
      %v679 = vmax.f32 %v551, 0.0
      %v680 = vmax.f32 %v552, 0.0
      %v681 = vmax.f32 %v553, 0.0
      %v682 = vmax.f32 %v554, 0.0
      %v683 = vmax.f32 %v555, 0.0
      %v684 = vmax.f32 %v556, 0.0
      %v685 = vmax.f32 %v557, 0.0
      %v686 = vmax.f32 %v558, 0.0
      %v687 = vmax.f32 %v559, 0.0
      %v688 = vmax.f32 %v560, 0.0
      %v689 = vmax.f32 %v561, 0.0
      %v690 = vmax.f32 %v562, 0.0
      %v691 = vmax.f32 %v563, 0.0
      %v692 = vmax.f32 %v564, 0.0
      %v693 = vmax.f32 %v565, 0.0
      %v694 = vmax.f32 %v566, 0.0
      %v695 = vmax.f32 %v567, 0.0
      %v696 = vmax.f32 %v568, 0.0
      %v697 = vmax.f32 %v569, 0.0
      %v698 = vmax.f32 %v570, 0.0
      %v699 = vmax.f32 %v571, 0.0
      %v700 = vmax.f32 %v572, 0.0
      %v701 = vmax.f32 %v573, 0.0
      %v702 = vmax.f32 %v574, 0.0
      %v703 = vmax.f32 %v575, 0.0
      %v704 = vmax.f32 %v576, 0.0
      %v705 = vmax.f32 %v577, 0.0
      %v706 = vmax.f32 %v578, 0.0
      %v707 = vmax.f32 %v579, 0.0
      %v708 = vmax.f32 %v580, 0.0
      %v709 = vmax.f32 %v581, 0.0
      %v710 = vmax.f32 %v582, 0.0
      %v711 = vmax.f32 %v583, 0.0
      %v712 = vmax.f32 %v584, 0.0
      %v713 = vmax.f32 %v585, 0.0
      %v714 = vmax.f32 %v586, 0.0
      %v715 = vmax.f32 %v587, 0.0
      %v716 = vmax.f32 %v588, 0.0
      %v717 = vmax.f32 %v589, 0.0
      %v718 = vmax.f32 %v590, 0.0
      %v719 = vmax.f32 %v591, 0.0
      %v720 = vmax.f32 %v592, 0.0
      %v721 = vmax.f32 %v593, 0.0
      %v722 = vmax.f32 %v594, 0.0
      %v723 = vmax.f32 %v595, 0.0
      %v724 = vmax.f32 %v596, 0.0
      %v725 = vmax.f32 %v597, 0.0
      %v726 = vmax.f32 %v598, 0.0
      %v727 = vmax.f32 %v599, 0.0
      %v728 = vpack.c.bf16 %v601, %v600
      %v729 = vpack.c.bf16 %v603, %v602
      %v730 = vpack.c.bf16 %v605, %v604
      %v731 = vpack.c.bf16 %v607, %v606
      %v732 = vpack.c.bf16 %v609, %v608
      %v733 = vpack.c.bf16 %v611, %v610
      %v734 = vpack.c.bf16 %v613, %v612
      %v735 = vpack.c.bf16 %v615, %v614
      %v736 = vpack.c.bf16 %v617, %v616
      %v737 = vpack.c.bf16 %v619, %v618
      %v738 = vpack.c.bf16 %v621, %v620
      %v739 = vpack.c.bf16 %v623, %v622
      %v740 = vpack.c.bf16 %v625, %v624
      %v741 = vpack.c.bf16 %v627, %v626
      %v742 = vpack.c.bf16 %v629, %v628
      %v743 = vpack.c.bf16 %v631, %v630
      %v744 = vpack.c.bf16 %v633, %v632
      %v745 = vpack.c.bf16 %v635, %v634
      %v746 = vpack.c.bf16 %v637, %v636
      %v747 = vpack.c.bf16 %v639, %v638
      %v748 = vpack.c.bf16 %v641, %v640
      %v749 = vpack.c.bf16 %v643, %v642
      %v750 = vpack.c.bf16 %v645, %v644
      %v751 = vpack.c.bf16 %v647, %v646
      %v752 = vpack.c.bf16 %v649, %v648
      %v753 = vpack.c.bf16 %v651, %v650
      %v754 = vpack.c.bf16 %v653, %v652
      %v755 = vpack.c.bf16 %v655, %v654
      %v756 = vpack.c.bf16 %v657, %v656
      %v757 = vpack.c.bf16 %v659, %v658
      %v758 = vpack.c.bf16 %v661, %v660
      %v759 = vpack.c.bf16 %v663, %v662
      %v760 = vpack.c.bf16 %v665, %v664
      %v761 = vpack.c.bf16 %v667, %v666
      %v762 = vpack.c.bf16 %v669, %v668
      %v763 = vpack.c.bf16 %v671, %v670
      %v764 = vpack.c.bf16 %v673, %v672
      %v765 = vpack.c.bf16 %v675, %v674
      %v766 = vpack.c.bf16 %v677, %v676
      %v767 = vpack.c.bf16 %v679, %v678
      %v768 = vpack.c.bf16 %v681, %v680
      %v769 = vpack.c.bf16 %v683, %v682
      %v770 = vpack.c.bf16 %v685, %v684
      %v771 = vpack.c.bf16 %v687, %v686
      %v772 = vpack.c.bf16 %v689, %v688
      %v773 = vpack.c.bf16 %v691, %v690
      %v774 = vpack.c.bf16 %v693, %v692
      %v775 = vpack.c.bf16 %v695, %v694
      %v776 = vpack.c.bf16 %v697, %v696
      %v777 = vpack.c.bf16 %v699, %v698
      %v778 = vpack.c.bf16 %v701, %v700
      %v779 = vpack.c.bf16 %v703, %v702
      %v780 = vpack.c.bf16 %v705, %v704
      %v781 = vpack.c.bf16 %v707, %v706
      %v782 = vpack.c.bf16 %v709, %v708
      %v783 = vpack.c.bf16 %v711, %v710
      %v784 = vpack.c.bf16 %v713, %v712
      %v785 = vpack.c.bf16 %v715, %v714
      %v786 = vpack.c.bf16 %v717, %v716
      %v787 = vpack.c.bf16 %v719, %v718
      %v788 = vpack.c.bf16 %v721, %v720
      %v789 = vpack.c.bf16 %v723, %v722
      %v790 = vpack.c.bf16 %v725, %v724
      %v791 = vpack.c.bf16 %v727, %v726
      %v792 = vld [vmem:[%s3] sm:$0xf]
      %vm793 = vcmask 64512
      %v795 = vsel %vm793, %v728, 0
      %v798 = vsel %vm793, %v729, 0
      %v801 = vsel %vm793, %v730, 0
      %v804 = vsel %vm793, %v731, 0
      %v807 = vsel %vm793, %v732, 0
      %v810 = vsel %vm793, %v733, 0
      %v813 = vsel %vm793, %v734, 0
      %v816 = vsel %vm793, %v735, 0
      %v819 = vsel %vm793, %v736, 0
      %v822 = vsel %vm793, %v737, 0
      %v825 = vsel %vm793, %v738, 0
      %v828 = vsel %vm793, %v739, 0
      %v831 = vsel %vm793, %v740, 0
      %v834 = vsel %vm793, %v741, 0
      %v837 = vsel %vm793, %v742, 0
      %v840 = vsel %vm793, %v743, 0
      %v843 = vsel %vm793, %v744, 0
      %v846 = vsel %vm793, %v745, 0
      %v849 = vsel %vm793, %v746, 0
      %v852 = vsel %vm793, %v747, 0
      %v855 = vsel %vm793, %v748, 0
      %v858 = vsel %vm793, %v749, 0
      %v861 = vsel %vm793, %v750, 0
      %v864 = vsel %vm793, %v751, 0
      %v867 = vsel %vm793, %v752, 0
      %v870 = vsel %vm793, %v753, 0
      %v873 = vsel %vm793, %v754, 0
      %v876 = vsel %vm793, %v755, 0
      %v879 = vsel %vm793, %v756, 0
      %v882 = vsel %vm793, %v757, 0
      %v885 = vsel %vm793, %v758, 0
      %v888 = vsel %vm793, %v759, 0
      %v891 = vsel %vm793, %v760, 0
      %v894 = vsel %vm793, %v761, 0
      %v897 = vsel %vm793, %v762, 0
      %v900 = vsel %vm793, %v763, 0
      %v903 = vsel %vm793, %v764, 0
      %v906 = vsel %vm793, %v765, 0
      %v909 = vsel %vm793, %v766, 0
      %v912 = vsel %vm793, %v767, 0
      %v915 = vsel %vm793, %v768, 0
      %v918 = vsel %vm793, %v769, 0
      %v921 = vsel %vm793, %v770, 0
      %v924 = vsel %vm793, %v771, 0
      %v927 = vsel %vm793, %v772, 0
      %v930 = vsel %vm793, %v773, 0
      %v933 = vsel %vm793, %v774, 0
      %v936 = vsel %vm793, %v775, 0
      %v939 = vsel %vm793, %v776, 0
      %v942 = vsel %vm793, %v777, 0
      %v945 = vsel %vm793, %v778, 0
      %v948 = vsel %vm793, %v779, 0
      %v951 = vsel %vm793, %v780, 0
      %v954 = vsel %vm793, %v781, 0
      %v957 = vsel %vm793, %v782, 0
      %v960 = vsel %vm793, %v783, 0
      %v963 = vsel %vm793, %v784, 0
      %v966 = vsel %vm793, %v785, 0
      %v969 = vsel %vm793, %v786, 0
      %v972 = vsel %vm793, %v787, 0
      %v975 = vsel %vm793, %v788, 0
      %v978 = vsel %vm793, %v789, 0
      %v981 = vsel %vm793, %v790, 0
      %v984 = vsel %vm793, %v791, 0
      %vm986 = vcmask 1043456
      %v988 = vsel %vm986, %v792, 0
      %990 = vmatprep.subr.bf16.mxu0 0
      %991 = vmatpush1.bf16.msra.mxu0 %v988
      %992 = vmatprep.subr.bf16.mxu0 0
      %993 = vmatpush1.bf16.msra.mxu0 0
      %994 = vmatprep.subr.bf16.mxu0 0
      %995 = vmatpush1.bf16.msra.mxu0 0
      %996 = vmatprep.subr.bf16.mxu0 0
      %997 = vmatpush1.bf16.msra.mxu0 0
      %998 = vmatprep.subr.bf16.mxu0 0
      %999 = vmatpush1.bf16.msra.mxu0 0
      %1000 = vmatprep.subr.bf16.mxu0 0
      %1001 = vmatpush1.bf16.msra.mxu0 0
      %1002 = vmatprep.subr.bf16.mxu0 0
      %1003 = vmatpush1.bf16.msra.mxu0 0
      %1004 = vmatprep.subr.bf16.mxu0 0
      %1005 = vmatpush1.bf16.msra.mxu0 0
      %1006 = vmatprep.subr.bf16.mxu0 0
      %1007 = vmatpush1.bf16.msra.mxu0 0
      %1008 = vmatprep.subr.bf16.mxu0 0
      %1009 = vmatpush1.bf16.msra.mxu0 0
      %1010 = vmatprep.subr.bf16.mxu0 0
      %1011 = vmatpush1.bf16.msra.mxu0 0
      %1012 = vmatprep.subr.bf16.mxu0 0
      %1013 = vmatpush1.bf16.msra.mxu0 0
      %1014 = vmatprep.subr.bf16.mxu0 0
      %1015 = vmatpush1.bf16.msra.mxu0 0
      %1016 = vmatprep.subr.bf16.mxu0 0
      %1017 = vmatpush1.bf16.msra.mxu0 0
      %1018 = vmatprep.subr.bf16.mxu0 0
      %1019 = vmatpush1.bf16.msra.mxu0 0
      %1020 = vmatprep.subr.bf16.mxu0 0
      %1021 = vmatpush1.bf16.msra.mxu0 0
      %1022 = vmatprep.mubr.bf16.mxu0 0
      %1023 = vmatmul.mubr.bf16.gmra.mrb[0].mxu0 %v795
      %v1024 = vpop.f32.mrb[0].mxu0
      %v1025 = vadd.f32 0.0, %v1024
      %v1026 = vpop.f32.mrb[0].mxu0
      %v1027 = vpop.f32.mrb[0].mxu0
      %v1028 = vadd.f32 0.0, %v1027
      %v1029 = vpop.f32.mrb[0].mxu0
      %1030 = vmatprep.mubr.bf16.mxu0 0
      %1031 = vmatmul.mubr.bf16.gmra.mrb[0].mxu0 %v798
      %v1032 = vpop.f32.mrb[0].mxu0
      %v1033 = vadd.f32 0.0, %v1032
      %v1034 = vpop.f32.mrb[0].mxu0
      %v1035 = vpop.f32.mrb[0].mxu0
      %v1036 = vadd.f32 0.0, %v1035
      %v1037 = vpop.f32.mrb[0].mxu0
      %1038 = vmatprep.mubr.bf16.mxu0 0
      %1039 = vmatmul.mubr.bf16.gmra.mrb[0].mxu0 %v801
      %v1040 = vpop.f32.mrb[0].mxu0
      %v1041 = vadd.f32 0.0, %v1040
      %v1042 = vpop.f32.mrb[0].mxu0
      %v1043 = vpop.f32.mrb[0].mxu0
      %v1044 = vadd.f32 0.0, %v1043
      %v1045 = vpop.f32.mrb[0].mxu0
      %1046 = vmatprep.mubr.bf16.mxu0 0
      %1047 = vmatmul.mubr.bf16.gmra.mrb[0].mxu0 %v804
      %v1048 = vpop.f32.mrb[0].mxu0
      %v1049 = vadd.f32 0.0, %v1048
      %v1050 = vpop.f32.mrb[0].mxu0
      %v1051 = vpop.f32.mrb[0].mxu0
      %v1052 = vadd.f32 0.0, %v1051
      %v1053 = vpop.f32.mrb[0].mxu0
      %1054 = vmatprep.mubr.bf16.mxu0 0
      %1055 = vmatmul.mubr.bf16.gmra.mrb[0].mxu0 %v807
      %v1056 = vpop.f32.mrb[0].mxu0
      %v1057 = vadd.f32 0.0, %v1056
      %v1058 = vpop.f32.mrb[0].mxu0
      %v1059 = vpop.f32.mrb[0].mxu0
      %v1060 = vadd.f32 0.0, %v1059
      %v1061 = vpop.f32.mrb[0].mxu0
      %1062 = vmatprep.mubr.bf16.mxu0 0
      %1063 = vmatmul.mubr.bf16.gmra.mrb[0].mxu0 %v810
      %v1064 = vpop.f32.mrb[0].mxu0
      %v1065 = vadd.f32 0.0, %v1064
      %v1066 = vpop.f32.mrb[0].mxu0
      %v1067 = vpop.f32.mrb[0].mxu0
      %v1068 = vadd.f32 0.0, %v1067
      %v1069 = vpop.f32.mrb[0].mxu0
      %1070 = vmatprep.mubr.bf16.mxu0 0
      %1071 = vmatmul.mubr.bf16.gmra.mrb[0].mxu0 %v813
      %v1072 = vpop.f32.mrb[0].mxu0
      %v1073 = vadd.f32 0.0, %v1072
      %v1074 = vpop.f32.mrb[0].mxu0
      %v1075 = vpop.f32.mrb[0].mxu0
      %v1076 = vadd.f32 0.0, %v1075
      %v1077 = vpop.f32.mrb[0].mxu0
      %1078 = vmatprep.mubr.bf16.mxu0 0
      %1079 = vmatmul.mubr.bf16.gmra.mrb[0].mxu0 %v816
      %v1080 = vpop.f32.mrb[0].mxu0
      %v1081 = vadd.f32 0.0, %v1080
      %v1082 = vpop.f32.mrb[0].mxu0
      %v1083 = vpop.f32.mrb[0].mxu0
      %v1084 = vadd.f32 0.0, %v1083
      %v1085 = vpop.f32.mrb[0].mxu0
      %1086 = vmatprep.mubr.bf16.mxu0 0
      %1087 = vmatmul.mubr.bf16.gmra.mrb[0].mxu0 %v819
      %v1088 = vpop.f32.mrb[0].mxu0
      %v1089 = vadd.f32 0.0, %v1088
      %v1090 = vpop.f32.mrb[0].mxu0
      %v1091 = vpop.f32.mrb[0].mxu0
      %v1092 = vadd.f32 0.0, %v1091
      %v1093 = vpop.f32.mrb[0].mxu0
      %1094 = vmatprep.mubr.bf16.mxu0 0
      %1095 = vmatmul.mubr.bf16.gmra.mrb[0].mxu0 %v822
      %v1096 = vpop.f32.mrb[0].mxu0
      %v1097 = vadd.f32 0.0, %v1096
      %v1098 = vpop.f32.mrb[0].mxu0
      %v1099 = vpop.f32.mrb[0].mxu0
      %v1100 = vadd.f32 0.0, %v1099
      %v1101 = vpop.f32.mrb[0].mxu0
      %1102 = vmatprep.mubr.bf16.mxu0 0
      %1103 = vmatmul.mubr.bf16.gmra.mrb[0].mxu0 %v825
      %v1104 = vpop.f32.mrb[0].mxu0
      %v1105 = vadd.f32 0.0, %v1104
      %v1106 = vpop.f32.mrb[0].mxu0
      %v1107 = vpop.f32.mrb[0].mxu0
      %v1108 = vadd.f32 0.0, %v1107
      %v1109 = vpop.f32.mrb[0].mxu0
      %1110 = vmatprep.mubr.bf16.mxu0 0
      %1111 = vmatmul.mubr.bf16.gmra.mrb[0].mxu0 %v828
      %v1112 = vpop.f32.mrb[0].mxu0
      %v1113 = vadd.f32 0.0, %v1112
      %v1114 = vpop.f32.mrb[0].mxu0
      %v1115 = vpop.f32.mrb[0].mxu0
      %v1116 = vadd.f32 0.0, %v1115
      %v1117 = vpop.f32.mrb[0].mxu0
      %1118 = vmatprep.mubr.bf16.mxu0 0
      %1119 = vmatmul.mubr.bf16.gmra.mrb[0].mxu0 %v831
      %v1120 = vpop.f32.mrb[0].mxu0
      %v1121 = vadd.f32 0.0, %v1120
      %v1122 = vpop.f32.mrb[0].mxu0
      %v1123 = vpop.f32.mrb[0].mxu0
      %v1124 = vadd.f32 0.0, %v1123
      %v1125 = vpop.f32.mrb[0].mxu0
      %1126 = vmatprep.mubr.bf16.mxu0 0
      %1127 = vmatmul.mubr.bf16.gmra.mrb[0].mxu0 %v834
      %v1128 = vpop.f32.mrb[0].mxu0
      %v1129 = vadd.f32 0.0, %v1128
      %v1130 = vpop.f32.mrb[0].mxu0
      %v1131 = vpop.f32.mrb[0].mxu0
      %v1132 = vadd.f32 0.0, %v1131
      %v1133 = vpop.f32.mrb[0].mxu0
      %1134 = vmatprep.mubr.bf16.mxu0 0
      %1135 = vmatmul.mubr.bf16.gmra.mrb[0].mxu0 %v837
      %v1136 = vpop.f32.mrb[0].mxu0
      %v1137 = vadd.f32 0.0, %v1136
      %v1138 = vpop.f32.mrb[0].mxu0
      %v1139 = vpop.f32.mrb[0].mxu0
      %v1140 = vadd.f32 0.0, %v1139
      %v1141 = vpop.f32.mrb[0].mxu0
      %1142 = vmatprep.mubr.bf16.mxu0 0
      %1143 = vmatmul.mubr.bf16.gmra.mrb[0].mxu0 %v840
      %v1144 = vpop.f32.mrb[0].mxu0
      %v1145 = vadd.f32 0.0, %v1144
      %v1146 = vpop.f32.mrb[0].mxu0
      %v1147 = vpop.f32.mrb[0].mxu0
      %v1148 = vadd.f32 0.0, %v1147
      %v1149 = vpop.f32.mrb[0].mxu0
      %1150 = vmatprep.mubr.bf16.mxu0 0
      %1151 = vmatmul.mubr.bf16.gmra.mrb[0].mxu0 %v843
      %v1152 = vpop.f32.mrb[0].mxu0
      %v1153 = vadd.f32 0.0, %v1152
      %v1154 = vpop.f32.mrb[0].mxu0
      %v1155 = vpop.f32.mrb[0].mxu0
      %v1156 = vadd.f32 0.0, %v1155
      %v1157 = vpop.f32.mrb[0].mxu0
      %1158 = vmatprep.mubr.bf16.mxu0 0
      %1159 = vmatmul.mubr.bf16.gmra.mrb[0].mxu0 %v846
      %v1160 = vpop.f32.mrb[0].mxu0
      %v1161 = vadd.f32 0.0, %v1160
      %v1162 = vpop.f32.mrb[0].mxu0
      %v1163 = vpop.f32.mrb[0].mxu0
      %v1164 = vadd.f32 0.0, %v1163
      %v1165 = vpop.f32.mrb[0].mxu0
      %1166 = vmatprep.mubr.bf16.mxu0 0
      %1167 = vmatmul.mubr.bf16.gmra.mrb[0].mxu0 %v849
      %v1168 = vpop.f32.mrb[0].mxu0
      %v1169 = vadd.f32 0.0, %v1168
      %v1170 = vpop.f32.mrb[0].mxu0
      %v1171 = vpop.f32.mrb[0].mxu0
      %v1172 = vadd.f32 0.0, %v1171
      %v1173 = vpop.f32.mrb[0].mxu0
      %1174 = vmatprep.mubr.bf16.mxu0 0
      %1175 = vmatmul.mubr.bf16.gmra.mrb[0].mxu0 %v852
      %v1176 = vpop.f32.mrb[0].mxu0
      %v1177 = vadd.f32 0.0, %v1176
      %v1178 = vpop.f32.mrb[0].mxu0
      %v1179 = vpop.f32.mrb[0].mxu0
      %v1180 = vadd.f32 0.0, %v1179
      %v1181 = vpop.f32.mrb[0].mxu0
      %1182 = vmatprep.mubr.bf16.mxu0 0
      %1183 = vmatmul.mubr.bf16.gmra.mrb[0].mxu0 %v855
      %v1184 = vpop.f32.mrb[0].mxu0
      %v1185 = vadd.f32 0.0, %v1184
      %v1186 = vpop.f32.mrb[0].mxu0
      %v1187 = vpop.f32.mrb[0].mxu0
      %v1188 = vadd.f32 0.0, %v1187
      %v1189 = vpop.f32.mrb[0].mxu0
      %1190 = vmatprep.mubr.bf16.mxu0 0
      %1191 = vmatmul.mubr.bf16.gmra.mrb[0].mxu0 %v858
      %v1192 = vpop.f32.mrb[0].mxu0
      %v1193 = vadd.f32 0.0, %v1192
      %v1194 = vpop.f32.mrb[0].mxu0
      %v1195 = vpop.f32.mrb[0].mxu0
      %v1196 = vadd.f32 0.0, %v1195
      %v1197 = vpop.f32.mrb[0].mxu0
      %1198 = vmatprep.mubr.bf16.mxu0 0
      %1199 = vmatmul.mubr.bf16.gmra.mrb[0].mxu0 %v861
      %v1200 = vpop.f32.mrb[0].mxu0
      %v1201 = vadd.f32 0.0, %v1200
      %v1202 = vpop.f32.mrb[0].mxu0
      %v1203 = vpop.f32.mrb[0].mxu0
      %v1204 = vadd.f32 0.0, %v1203
      %v1205 = vpop.f32.mrb[0].mxu0
      %1206 = vmatprep.mubr.bf16.mxu0 0
      %1207 = vmatmul.mubr.bf16.gmra.mrb[0].mxu0 %v864
      %v1208 = vpop.f32.mrb[0].mxu0
      %v1209 = vadd.f32 0.0, %v1208
      %v1210 = vpop.f32.mrb[0].mxu0
      %v1211 = vpop.f32.mrb[0].mxu0
      %v1212 = vadd.f32 0.0, %v1211
      %v1213 = vpop.f32.mrb[0].mxu0
      %1214 = vmatprep.mubr.bf16.mxu0 0
      %1215 = vmatmul.mubr.bf16.gmra.mrb[0].mxu0 %v867
      %v1216 = vpop.f32.mrb[0].mxu0
      %v1217 = vadd.f32 0.0, %v1216
      %v1218 = vpop.f32.mrb[0].mxu0
      %v1219 = vpop.f32.mrb[0].mxu0
      %v1220 = vadd.f32 0.0, %v1219
      %v1221 = vpop.f32.mrb[0].mxu0
      %1222 = vmatprep.mubr.bf16.mxu0 0
      %1223 = vmatmul.mubr.bf16.gmra.mrb[0].mxu0 %v870
      %v1224 = vpop.f32.mrb[0].mxu0
      %v1225 = vadd.f32 0.0, %v1224
      %v1226 = vpop.f32.mrb[0].mxu0
      %v1227 = vpop.f32.mrb[0].mxu0
      %v1228 = vadd.f32 0.0, %v1227
      %v1229 = vpop.f32.mrb[0].mxu0
      %1230 = vmatprep.mubr.bf16.mxu0 0
      %1231 = vmatmul.mubr.bf16.gmra.mrb[0].mxu0 %v873
      %v1232 = vpop.f32.mrb[0].mxu0
      %v1233 = vadd.f32 0.0, %v1232
      %v1234 = vpop.f32.mrb[0].mxu0
      %v1235 = vpop.f32.mrb[0].mxu0
      %v1236 = vadd.f32 0.0, %v1235
      %v1237 = vpop.f32.mrb[0].mxu0
      %1238 = vmatprep.mubr.bf16.mxu0 0
      %1239 = vmatmul.mubr.bf16.gmra.mrb[0].mxu0 %v876
      %v1240 = vpop.f32.mrb[0].mxu0
      %v1241 = vadd.f32 0.0, %v1240
      %v1242 = vpop.f32.mrb[0].mxu0
      %v1243 = vpop.f32.mrb[0].mxu0
      %v1244 = vadd.f32 0.0, %v1243
      %v1245 = vpop.f32.mrb[0].mxu0
      %1246 = vmatprep.mubr.bf16.mxu0 0
      %1247 = vmatmul.mubr.bf16.gmra.mrb[0].mxu0 %v879
      %v1248 = vpop.f32.mrb[0].mxu0
      %v1249 = vadd.f32 0.0, %v1248
      %v1250 = vpop.f32.mrb[0].mxu0
      %v1251 = vpop.f32.mrb[0].mxu0
      %v1252 = vadd.f32 0.0, %v1251
      %v1253 = vpop.f32.mrb[0].mxu0
      %1254 = vmatprep.mubr.bf16.mxu0 0
      %1255 = vmatmul.mubr.bf16.gmra.mrb[0].mxu0 %v882
      %v1256 = vpop.f32.mrb[0].mxu0
      %v1257 = vadd.f32 0.0, %v1256
      %v1258 = vpop.f32.mrb[0].mxu0
      %v1259 = vpop.f32.mrb[0].mxu0
      %v1260 = vadd.f32 0.0, %v1259
      %v1261 = vpop.f32.mrb[0].mxu0
      %1262 = vmatprep.mubr.bf16.mxu0 0
      %1263 = vmatmul.mubr.bf16.gmra.mrb[0].mxu0 %v885
      %v1264 = vpop.f32.mrb[0].mxu0
      %v1265 = vadd.f32 0.0, %v1264
      %v1266 = vpop.f32.mrb[0].mxu0
      %v1267 = vpop.f32.mrb[0].mxu0
      %v1268 = vadd.f32 0.0, %v1267
      %v1269 = vpop.f32.mrb[0].mxu0
      %1270 = vmatprep.mubr.bf16.mxu0 0
      %1271 = vmatmul.mubr.bf16.gmra.mrb[0].mxu0 %v888
      %v1272 = vpop.f32.mrb[0].mxu0
      %v1273 = vadd.f32 0.0, %v1272
      %v1274 = vpop.f32.mrb[0].mxu0
      %v1275 = vpop.f32.mrb[0].mxu0
      %v1276 = vadd.f32 0.0, %v1275
      %v1277 = vpop.f32.mrb[0].mxu0
      %1278 = vmatprep.mubr.bf16.mxu0 0
      %1279 = vmatmul.mubr.bf16.gmra.mrb[0].mxu0 %v891
      %v1280 = vpop.f32.mrb[0].mxu0
      %v1281 = vadd.f32 0.0, %v1280
      %v1282 = vpop.f32.mrb[0].mxu0
      %v1283 = vpop.f32.mrb[0].mxu0
      %v1284 = vadd.f32 0.0, %v1283
      %v1285 = vpop.f32.mrb[0].mxu0
      %1286 = vmatprep.mubr.bf16.mxu0 0
      %1287 = vmatmul.mubr.bf16.gmra.mrb[0].mxu0 %v894
      %v1288 = vpop.f32.mrb[0].mxu0
      %v1289 = vadd.f32 0.0, %v1288
      %v1290 = vpop.f32.mrb[0].mxu0
      %v1291 = vpop.f32.mrb[0].mxu0
      %v1292 = vadd.f32 0.0, %v1291
      %v1293 = vpop.f32.mrb[0].mxu0
      %1294 = vmatprep.mubr.bf16.mxu0 0
      %1295 = vmatmul.mubr.bf16.gmra.mrb[0].mxu0 %v897
      %v1296 = vpop.f32.mrb[0].mxu0
      %v1297 = vadd.f32 0.0, %v1296
      %v1298 = vpop.f32.mrb[0].mxu0
      %v1299 = vpop.f32.mrb[0].mxu0
      %v1300 = vadd.f32 0.0, %v1299
      %v1301 = vpop.f32.mrb[0].mxu0
      %1302 = vmatprep.mubr.bf16.mxu0 0
      %1303 = vmatmul.mubr.bf16.gmra.mrb[0].mxu0 %v900
      %v1304 = vpop.f32.mrb[0].mxu0
      %v1305 = vadd.f32 0.0, %v1304
      %v1306 = vpop.f32.mrb[0].mxu0
      %v1307 = vpop.f32.mrb[0].mxu0
      %v1308 = vadd.f32 0.0, %v1307
      %v1309 = vpop.f32.mrb[0].mxu0
      %1310 = vmatprep.mubr.bf16.mxu0 0
      %1311 = vmatmul.mubr.bf16.gmra.mrb[0].mxu0 %v903
      %v1312 = vpop.f32.mrb[0].mxu0
      %v1313 = vadd.f32 0.0, %v1312
      %v1314 = vpop.f32.mrb[0].mxu0
      %v1315 = vpop.f32.mrb[0].mxu0
      %v1316 = vadd.f32 0.0, %v1315
      %v1317 = vpop.f32.mrb[0].mxu0
      %1318 = vmatprep.mubr.bf16.mxu0 0
      %1319 = vmatmul.mubr.bf16.gmra.mrb[0].mxu0 %v906
      %v1320 = vpop.f32.mrb[0].mxu0
      %v1321 = vadd.f32 0.0, %v1320
      %v1322 = vpop.f32.mrb[0].mxu0
      %v1323 = vpop.f32.mrb[0].mxu0
      %v1324 = vadd.f32 0.0, %v1323
      %v1325 = vpop.f32.mrb[0].mxu0
      %1326 = vmatprep.mubr.bf16.mxu0 0
      %1327 = vmatmul.mubr.bf16.gmra.mrb[0].mxu0 %v909
      %v1328 = vpop.f32.mrb[0].mxu0
      %v1329 = vadd.f32 0.0, %v1328
      %v1330 = vpop.f32.mrb[0].mxu0
      %v1331 = vpop.f32.mrb[0].mxu0
      %v1332 = vadd.f32 0.0, %v1331
      %v1333 = vpop.f32.mrb[0].mxu0
      %1334 = vmatprep.mubr.bf16.mxu0 0
      %1335 = vmatmul.mubr.bf16.gmra.mrb[0].mxu0 %v912
      %v1336 = vpop.f32.mrb[0].mxu0
      %v1337 = vadd.f32 0.0, %v1336
      %v1338 = vpop.f32.mrb[0].mxu0
      %v1339 = vpop.f32.mrb[0].mxu0
      %v1340 = vadd.f32 0.0, %v1339
      %v1341 = vpop.f32.mrb[0].mxu0
      %1342 = vmatprep.mubr.bf16.mxu0 0
      %1343 = vmatmul.mubr.bf16.gmra.mrb[0].mxu0 %v915
      %v1344 = vpop.f32.mrb[0].mxu0
      %v1345 = vadd.f32 0.0, %v1344
      %v1346 = vpop.f32.mrb[0].mxu0
      %v1347 = vpop.f32.mrb[0].mxu0
      %v1348 = vadd.f32 0.0, %v1347
      %v1349 = vpop.f32.mrb[0].mxu0
      %1350 = vmatprep.mubr.bf16.mxu0 0
      %1351 = vmatmul.mubr.bf16.gmra.mrb[0].mxu0 %v918
      %v1352 = vpop.f32.mrb[0].mxu0
      %v1353 = vadd.f32 0.0, %v1352
      %v1354 = vpop.f32.mrb[0].mxu0
      %v1355 = vpop.f32.mrb[0].mxu0
      %v1356 = vadd.f32 0.0, %v1355
      %v1357 = vpop.f32.mrb[0].mxu0
      %1358 = vmatprep.mubr.bf16.mxu0 0
      %1359 = vmatmul.mubr.bf16.gmra.mrb[0].mxu0 %v921
      %v1360 = vpop.f32.mrb[0].mxu0
      %v1361 = vadd.f32 0.0, %v1360
      %v1362 = vpop.f32.mrb[0].mxu0
      %v1363 = vpop.f32.mrb[0].mxu0
      %v1364 = vadd.f32 0.0, %v1363
      %v1365 = vpop.f32.mrb[0].mxu0
      %1366 = vmatprep.mubr.bf16.mxu0 0
      %1367 = vmatmul.mubr.bf16.gmra.mrb[0].mxu0 %v924
      %v1368 = vpop.f32.mrb[0].mxu0
      %v1369 = vadd.f32 0.0, %v1368
      %v1370 = vpop.f32.mrb[0].mxu0
      %v1371 = vpop.f32.mrb[0].mxu0
      %v1372 = vadd.f32 0.0, %v1371
      %v1373 = vpop.f32.mrb[0].mxu0
      %1374 = vmatprep.mubr.bf16.mxu0 0
      %1375 = vmatmul.mubr.bf16.gmra.mrb[0].mxu0 %v927
      %v1376 = vpop.f32.mrb[0].mxu0
      %v1377 = vadd.f32 0.0, %v1376
      %v1378 = vpop.f32.mrb[0].mxu0
      %v1379 = vpop.f32.mrb[0].mxu0
      %v1380 = vadd.f32 0.0, %v1379
      %v1381 = vpop.f32.mrb[0].mxu0
      %1382 = vmatprep.mubr.bf16.mxu0 0
      %1383 = vmatmul.mubr.bf16.gmra.mrb[0].mxu0 %v930
      %v1384 = vpop.f32.mrb[0].mxu0
      %v1385 = vadd.f32 0.0, %v1384
      %v1386 = vpop.f32.mrb[0].mxu0
      %v1387 = vpop.f32.mrb[0].mxu0
      %v1388 = vadd.f32 0.0, %v1387
      %v1389 = vpop.f32.mrb[0].mxu0
      %1390 = vmatprep.mubr.bf16.mxu0 0
      %1391 = vmatmul.mubr.bf16.gmra.mrb[0].mxu0 %v933
      %v1392 = vpop.f32.mrb[0].mxu0
      %v1393 = vadd.f32 0.0, %v1392
      %v1394 = vpop.f32.mrb[0].mxu0
      %v1395 = vpop.f32.mrb[0].mxu0
      %v1396 = vadd.f32 0.0, %v1395
      %v1397 = vpop.f32.mrb[0].mxu0
      %1398 = vmatprep.mubr.bf16.mxu0 0
      %1399 = vmatmul.mubr.bf16.gmra.mrb[0].mxu0 %v936
      %v1400 = vpop.f32.mrb[0].mxu0
      %v1401 = vadd.f32 0.0, %v1400
      %v1402 = vpop.f32.mrb[0].mxu0
      %v1403 = vpop.f32.mrb[0].mxu0
      %v1404 = vadd.f32 0.0, %v1403
      %v1405 = vpop.f32.mrb[0].mxu0
      %1406 = vmatprep.mubr.bf16.mxu0 0
      %1407 = vmatmul.mubr.bf16.gmra.mrb[0].mxu0 %v939
      %v1408 = vpop.f32.mrb[0].mxu0
      %v1409 = vadd.f32 0.0, %v1408
      %v1410 = vpop.f32.mrb[0].mxu0
      %v1411 = vpop.f32.mrb[0].mxu0
      %v1412 = vadd.f32 0.0, %v1411
      %v1413 = vpop.f32.mrb[0].mxu0
      %1414 = vmatprep.mubr.bf16.mxu0 0
      %1415 = vmatmul.mubr.bf16.gmra.mrb[0].mxu0 %v942
      %v1416 = vpop.f32.mrb[0].mxu0
      %v1417 = vadd.f32 0.0, %v1416
      %v1418 = vpop.f32.mrb[0].mxu0
      %v1419 = vpop.f32.mrb[0].mxu0
      %v1420 = vadd.f32 0.0, %v1419
      %v1421 = vpop.f32.mrb[0].mxu0
      %1422 = vmatprep.mubr.bf16.mxu0 0
      %1423 = vmatmul.mubr.bf16.gmra.mrb[0].mxu0 %v945
      %v1424 = vpop.f32.mrb[0].mxu0
      %v1425 = vadd.f32 0.0, %v1424
      %v1426 = vpop.f32.mrb[0].mxu0
      %v1427 = vpop.f32.mrb[0].mxu0
      %v1428 = vadd.f32 0.0, %v1427
      %v1429 = vpop.f32.mrb[0].mxu0
      %1430 = vmatprep.mubr.bf16.mxu0 0
      %1431 = vmatmul.mubr.bf16.gmra.mrb[0].mxu0 %v948
      %v1432 = vpop.f32.mrb[0].mxu0
      %v1433 = vadd.f32 0.0, %v1432
      %v1434 = vpop.f32.mrb[0].mxu0
      %v1435 = vpop.f32.mrb[0].mxu0
      %v1436 = vadd.f32 0.0, %v1435
      %v1437 = vpop.f32.mrb[0].mxu0
      %1438 = vmatprep.mubr.bf16.mxu0 0
      %1439 = vmatmul.mubr.bf16.gmra.mrb[0].mxu0 %v951
      %v1440 = vpop.f32.mrb[0].mxu0
      %v1441 = vadd.f32 0.0, %v1440
      %v1442 = vpop.f32.mrb[0].mxu0
      %v1443 = vpop.f32.mrb[0].mxu0
      %v1444 = vadd.f32 0.0, %v1443
      %v1445 = vpop.f32.mrb[0].mxu0
      %1446 = vmatprep.mubr.bf16.mxu0 0
      %1447 = vmatmul.mubr.bf16.gmra.mrb[0].mxu0 %v954
      %v1448 = vpop.f32.mrb[0].mxu0
      %v1449 = vadd.f32 0.0, %v1448
      %v1450 = vpop.f32.mrb[0].mxu0
      %v1451 = vpop.f32.mrb[0].mxu0
      %v1452 = vadd.f32 0.0, %v1451
      %v1453 = vpop.f32.mrb[0].mxu0
      %1454 = vmatprep.mubr.bf16.mxu0 0
      %1455 = vmatmul.mubr.bf16.gmra.mrb[0].mxu0 %v957
      %v1456 = vpop.f32.mrb[0].mxu0
      %v1457 = vadd.f32 0.0, %v1456
      %v1458 = vpop.f32.mrb[0].mxu0
      %v1459 = vpop.f32.mrb[0].mxu0
      %v1460 = vadd.f32 0.0, %v1459
      %v1461 = vpop.f32.mrb[0].mxu0
      %1462 = vmatprep.mubr.bf16.mxu0 0
      %1463 = vmatmul.mubr.bf16.gmra.mrb[0].mxu0 %v960
      %v1464 = vpop.f32.mrb[0].mxu0
      %v1465 = vadd.f32 0.0, %v1464
      %v1466 = vpop.f32.mrb[0].mxu0
      %v1467 = vpop.f32.mrb[0].mxu0
      %v1468 = vadd.f32 0.0, %v1467
      %v1469 = vpop.f32.mrb[0].mxu0
      %1470 = vmatprep.mubr.bf16.mxu0 0
      %1471 = vmatmul.mubr.bf16.gmra.mrb[0].mxu0 %v963
      %v1472 = vpop.f32.mrb[0].mxu0
      %v1473 = vadd.f32 0.0, %v1472
      %v1474 = vpop.f32.mrb[0].mxu0
      %v1475 = vpop.f32.mrb[0].mxu0
      %v1476 = vadd.f32 0.0, %v1475
      %v1477 = vpop.f32.mrb[0].mxu0
      %1478 = vmatprep.mubr.bf16.mxu0 0
      %1479 = vmatmul.mubr.bf16.gmra.mrb[0].mxu0 %v966
      %v1480 = vpop.f32.mrb[0].mxu0
      %v1481 = vadd.f32 0.0, %v1480
      %v1482 = vpop.f32.mrb[0].mxu0
      %v1483 = vpop.f32.mrb[0].mxu0
      %v1484 = vadd.f32 0.0, %v1483
      %v1485 = vpop.f32.mrb[0].mxu0
      %1486 = vmatprep.mubr.bf16.mxu0 0
      %1487 = vmatmul.mubr.bf16.gmra.mrb[0].mxu0 %v969
      %v1488 = vpop.f32.mrb[0].mxu0
      %v1489 = vadd.f32 0.0, %v1488
      %v1490 = vpop.f32.mrb[0].mxu0
      %v1491 = vpop.f32.mrb[0].mxu0
      %v1492 = vadd.f32 0.0, %v1491
      %v1493 = vpop.f32.mrb[0].mxu0
      %1494 = vmatprep.mubr.bf16.mxu0 0
      %1495 = vmatmul.mubr.bf16.gmra.mrb[0].mxu0 %v972
      %v1496 = vpop.f32.mrb[0].mxu0
      %v1497 = vadd.f32 0.0, %v1496
      %v1498 = vpop.f32.mrb[0].mxu0
      %v1499 = vpop.f32.mrb[0].mxu0
      %v1500 = vadd.f32 0.0, %v1499
      %v1501 = vpop.f32.mrb[0].mxu0
      %1502 = vmatprep.mubr.bf16.mxu0 0
      %1503 = vmatmul.mubr.bf16.gmra.mrb[0].mxu0 %v975
      %v1504 = vpop.f32.mrb[0].mxu0
      %v1505 = vadd.f32 0.0, %v1504
      %v1506 = vpop.f32.mrb[0].mxu0
      %v1507 = vpop.f32.mrb[0].mxu0
      %v1508 = vadd.f32 0.0, %v1507
      %v1509 = vpop.f32.mrb[0].mxu0
      %1510 = vmatprep.mubr.bf16.mxu0 0
      %1511 = vmatmul.mubr.bf16.gmra.mrb[0].mxu0 %v978
      %v1512 = vpop.f32.mrb[0].mxu0
      %v1513 = vadd.f32 0.0, %v1512
      %v1514 = vpop.f32.mrb[0].mxu0
      %v1515 = vpop.f32.mrb[0].mxu0
      %v1516 = vadd.f32 0.0, %v1515
      %v1517 = vpop.f32.mrb[0].mxu0
      %1518 = vmatprep.mubr.bf16.mxu0 0
      %1519 = vmatmul.mubr.bf16.gmra.mrb[0].mxu0 %v981
      %v1520 = vpop.f32.mrb[0].mxu0
      %v1521 = vadd.f32 0.0, %v1520
      %v1522 = vpop.f32.mrb[0].mxu0
      %v1523 = vpop.f32.mrb[0].mxu0
      %v1524 = vadd.f32 0.0, %v1523
      %v1525 = vpop.f32.mrb[0].mxu0
      %1526 = vmatprep.mubr.bf16.mxu0 0
      %1527 = vmatmul.mubr.bf16.gmra.mrb[0].mxu0 %v984
      %v1528 = vpop.f32.mrb[0].mxu0
      %v1529 = vadd.f32 0.0, %v1528
      %v1530 = vpop.f32.mrb[0].mxu0
      %v1531 = vpop.f32.mrb[0].mxu0
      %v1532 = vadd.f32 0.0, %v1531
      %v1533 = vpop.f32.mrb[0].mxu0
      %1534 = vdwg.mxu0
      %1535 = vst [vmem:[%s199] sm:$0xff] %v1025
      %1536 = vst [vmem:[%s199 + $0x8] sm:$0xff] %v1028
      %1537 = vst [vmem:[%s199 + $0x10] sm:$0xff] %v1033
      %1538 = vst [vmem:[%s199 + $0x18] sm:$0xff] %v1036
      %1539 = vst [vmem:[%s199 + $0x20] sm:$0xff] %v1041
      %1540 = vst [vmem:[%s199 + $0x28] sm:$0xff] %v1044
      %1541 = vst [vmem:[%s199 + $0x30] sm:$0xff] %v1049
      %1542 = vst [vmem:[%s199 + $0x38] sm:$0xff] %v1052
      %1543 = vst [vmem:[%s199 + $0x40] sm:$0xff] %v1057
      %1544 = vst [vmem:[%s199 + $0x48] sm:$0xff] %v1060
      %1545 = vst [vmem:[%s199 + $0x50] sm:$0xff] %v1065
      %1546 = vst [vmem:[%s199 + $0x58] sm:$0xff] %v1068
      %1547 = vst [vmem:[%s199 + $0x60] sm:$0xff] %v1073
      %1548 = vst [vmem:[%s199 + $0x68] sm:$0xff] %v1076
      %1549 = vst [vmem:[%s199 + $0x70] sm:$0xff] %v1081
      %1550 = vst [vmem:[%s199 + $0x78] sm:$0xff] %v1084
      %1551 = vst [vmem:[%s199 + $0x80] sm:$0xff] %v1089
      %1552 = vst [vmem:[%s199 + $0x88] sm:$0xff] %v1092
      %1553 = vst [vmem:[%s199 + $0x90] sm:$0xff] %v1097
      %1554 = vst [vmem:[%s199 + $0x98] sm:$0xff] %v1100
      %1555 = vst [vmem:[%s199 + $0xa0] sm:$0xff] %v1105
      %1556 = vst [vmem:[%s199 + $0xa8] sm:$0xff] %v1108
      %1557 = vst [vmem:[%s199 + $0xb0] sm:$0xff] %v1113
      %1558 = vst [vmem:[%s199 + $0xb8] sm:$0xff] %v1116
      %1559 = vst [vmem:[%s199 + $0xc0] sm:$0xff] %v1121
      %1560 = vst [vmem:[%s199 + $0xc8] sm:$0xff] %v1124
      %1561 = vst [vmem:[%s199 + $0xd0] sm:$0xff] %v1129
      %1562 = vst [vmem:[%s199 + $0xd8] sm:$0xff] %v1132
      %1563 = vst [vmem:[%s199 + $0xe0] sm:$0xff] %v1137
      %1564 = vst [vmem:[%s199 + $0xe8] sm:$0xff] %v1140
      %1565 = vst [vmem:[%s199 + $0xf0] sm:$0xff] %v1145
      %1566 = vst [vmem:[%s199 + $0xf8] sm:$0xff] %v1148
      %1567 = vst [vmem:[%s199 + $0x100] sm:$0xff] %v1153
      %1568 = vst [vmem:[%s199 + $0x108] sm:$0xff] %v1156
      %1569 = vst [vmem:[%s199 + $0x110] sm:$0xff] %v1161
      %1570 = vst [vmem:[%s199 + $0x118] sm:$0xff] %v1164
      %1571 = vst [vmem:[%s199 + $0x120] sm:$0xff] %v1169
      %1572 = vst [vmem:[%s199 + $0x128] sm:$0xff] %v1172
      %1573 = vst [vmem:[%s199 + $0x130] sm:$0xff] %v1177
      %1574 = vst [vmem:[%s199 + $0x138] sm:$0xff] %v1180
      %1575 = vst [vmem:[%s199 + $0x140] sm:$0xff] %v1185
      %1576 = vst [vmem:[%s199 + $0x148] sm:$0xff] %v1188
      %1577 = vst [vmem:[%s199 + $0x150] sm:$0xff] %v1193
      %1578 = vst [vmem:[%s199 + $0x158] sm:$0xff] %v1196
      %1579 = vst [vmem:[%s199 + $0x160] sm:$0xff] %v1201
      %1580 = vst [vmem:[%s199 + $0x168] sm:$0xff] %v1204
      %1581 = vst [vmem:[%s199 + $0x170] sm:$0xff] %v1209
      %1582 = vst [vmem:[%s199 + $0x178] sm:$0xff] %v1212
      %1583 = vst [vmem:[%s199 + $0x180] sm:$0xff] %v1217
      %1584 = vst [vmem:[%s199 + $0x188] sm:$0xff] %v1220
      %1585 = vst [vmem:[%s199 + $0x190] sm:$0xff] %v1225
      %1586 = vst [vmem:[%s199 + $0x198] sm:$0xff] %v1228
      %1587 = vst [vmem:[%s199 + $0x1a0] sm:$0xff] %v1233
      %1588 = vst [vmem:[%s199 + $0x1a8] sm:$0xff] %v1236
      %1589 = vst [vmem:[%s199 + $0x1b0] sm:$0xff] %v1241
      %1590 = vst [vmem:[%s199 + $0x1b8] sm:$0xff] %v1244
      %1591 = vst [vmem:[%s199 + $0x1c0] sm:$0xff] %v1249
      %1592 = vst [vmem:[%s199 + $0x1c8] sm:$0xff] %v1252
      %1593 = vst [vmem:[%s199 + $0x1d0] sm:$0xff] %v1257
      %1594 = vst [vmem:[%s199 + $0x1d8] sm:$0xff] %v1260
      %1595 = vst [vmem:[%s199 + $0x1e0] sm:$0xff] %v1265
      %1596 = vst [vmem:[%s199 + $0x1e8] sm:$0xff] %v1268
      %1597 = vst [vmem:[%s199 + $0x1f0] sm:$0xff] %v1273
      %1598 = vst [vmem:[%s199 + $0x1f8] sm:$0xff] %v1276
      %1599 = vst [vmem:[%s199 + $0x200] sm:$0xff] %v1281
      %1600 = vst [vmem:[%s199 + $0x208] sm:$0xff] %v1284
      %1601 = vst [vmem:[%s199 + $0x210] sm:$0xff] %v1289
      %1602 = vst [vmem:[%s199 + $0x218] sm:$0xff] %v1292
      %1603 = vst [vmem:[%s199 + $0x220] sm:$0xff] %v1297
      %1604 = vst [vmem:[%s199 + $0x228] sm:$0xff] %v1300
      %1605 = vst [vmem:[%s199 + $0x230] sm:$0xff] %v1305
      %1606 = vst [vmem:[%s199 + $0x238] sm:$0xff] %v1308
      %1607 = vst [vmem:[%s199 + $0x240] sm:$0xff] %v1313
      %1608 = vst [vmem:[%s199 + $0x248] sm:$0xff] %v1316
      %1609 = vst [vmem:[%s199 + $0x250] sm:$0xff] %v1321
      %1610 = vst [vmem:[%s199 + $0x258] sm:$0xff] %v1324
      %1611 = vst [vmem:[%s199 + $0x260] sm:$0xff] %v1329
      %1612 = vst [vmem:[%s199 + $0x268] sm:$0xff] %v1332
      %1613 = vst [vmem:[%s199 + $0x270] sm:$0xff] %v1337
      %1614 = vst [vmem:[%s199 + $0x278] sm:$0xff] %v1340
      %1615 = vst [vmem:[%s199 + $0x280] sm:$0xff] %v1345
      %1616 = vst [vmem:[%s199 + $0x288] sm:$0xff] %v1348
      %1617 = vst [vmem:[%s199 + $0x290] sm:$0xff] %v1353
      %1618 = vst [vmem:[%s199 + $0x298] sm:$0xff] %v1356
      %1619 = vst [vmem:[%s199 + $0x2a0] sm:$0xff] %v1361
      %1620 = vst [vmem:[%s199 + $0x2a8] sm:$0xff] %v1364
      %1621 = vst [vmem:[%s199 + $0x2b0] sm:$0xff] %v1369
      %1622 = vst [vmem:[%s199 + $0x2b8] sm:$0xff] %v1372
      %1623 = vst [vmem:[%s199 + $0x2c0] sm:$0xff] %v1377
      %1624 = vst [vmem:[%s199 + $0x2c8] sm:$0xff] %v1380
      %1625 = vst [vmem:[%s199 + $0x2d0] sm:$0xff] %v1385
      %1626 = vst [vmem:[%s199 + $0x2d8] sm:$0xff] %v1388
      %1627 = vst [vmem:[%s199 + $0x2e0] sm:$0xff] %v1393
      %1628 = vst [vmem:[%s199 + $0x2e8] sm:$0xff] %v1396
      %1629 = vst [vmem:[%s199 + $0x2f0] sm:$0xff] %v1401
      %1630 = vst [vmem:[%s199 + $0x2f8] sm:$0xff] %v1404
      %1631 = vst [vmem:[%s199 + $0x300] sm:$0xff] %v1409
      %1632 = vst [vmem:[%s199 + $0x308] sm:$0xff] %v1412
      %1633 = vst [vmem:[%s199 + $0x310] sm:$0xff] %v1417
      %1634 = vst [vmem:[%s199 + $0x318] sm:$0xff] %v1420
      %1635 = vst [vmem:[%s199 + $0x320] sm:$0xff] %v1425
      %1636 = vst [vmem:[%s199 + $0x328] sm:$0xff] %v1428
      %1637 = vst [vmem:[%s199 + $0x330] sm:$0xff] %v1433
      %1638 = vst [vmem:[%s199 + $0x338] sm:$0xff] %v1436
      %1639 = vst [vmem:[%s199 + $0x340] sm:$0xff] %v1441
      %1640 = vst [vmem:[%s199 + $0x348] sm:$0xff] %v1444
      %1641 = vst [vmem:[%s199 + $0x350] sm:$0xff] %v1449
      %1642 = vst [vmem:[%s199 + $0x358] sm:$0xff] %v1452
      %1643 = vst [vmem:[%s199 + $0x360] sm:$0xff] %v1457
      %1644 = vst [vmem:[%s199 + $0x368] sm:$0xff] %v1460
      %1645 = vst [vmem:[%s199 + $0x370] sm:$0xff] %v1465
      %1646 = vst [vmem:[%s199 + $0x378] sm:$0xff] %v1468
      %1647 = vst [vmem:[%s199 + $0x380] sm:$0xff] %v1473
      %1648 = vst [vmem:[%s199 + $0x388] sm:$0xff] %v1476
      %1649 = vst [vmem:[%s199 + $0x390] sm:$0xff] %v1481
      %1650 = vst [vmem:[%s199 + $0x398] sm:$0xff] %v1484
      %1651 = vst [vmem:[%s199 + $0x3a0] sm:$0xff] %v1489
      %1652 = vst [vmem:[%s199 + $0x3a8] sm:$0xff] %v1492
      %1653 = vst [vmem:[%s199 + $0x3b0] sm:$0xff] %v1497
      %1654 = vst [vmem:[%s199 + $0x3b8] sm:$0xff] %v1500
      %1655 = vst [vmem:[%s199 + $0x3c0] sm:$0xff] %v1505
      %1656 = vst [vmem:[%s199 + $0x3c8] sm:$0xff] %v1508
      %1657 = vst [vmem:[%s199 + $0x3d0] sm:$0xff] %v1513
      %1658 = vst [vmem:[%s199 + $0x3d8] sm:$0xff] %v1516
      %1659 = vst [vmem:[%s199 + $0x3e0] sm:$0xff] %v1521
      %1660 = vst [vmem:[%s199 + $0x3e8] sm:$0xff] %v1524
      %1661 = vst [vmem:[%s199 + $0x3f0] sm:$0xff] %v1529
      %1662 = vst [vmem:[%s199 + $0x3f8] sm:$0xff] %v1532
      %s1663 = smul.u32 128, %s15
      %p1664 = scmp.lt.s32.totalorder %s1663, 255
      %s1665 = scalar_select %p1664, %s1663, 255
      %s1666 = smul.addr %s1665, 8
      %s1667 = scalar_lea.vmem %s4, %s1666
      // Predicated region
      $region37: #{generator_forward.18} parent=35 // pred_check
        %p1668 = pneg %p122
      $region38: #{generator_forward.18} parent=35 // pred_check_branch
        %1670 = sbr.rel (%p1668) target = $region40
      $region39: #{generator_forward.18} parent=35 // pred_region
        %s1671 = smul.u32 128, %s15
      $region40: #{generator_forward.18} parent=35 // pred_fallthru
        _
    $region36: #{generator_forward.18} parent=5 // pred_fallthru
      _
    %p1672 = scmp.le.s32.totalorder 2, %s10
    // Predicated region
    $region41: #{generator_forward.18} parent=5 // pred_check
      %p1673 = pneg %p1672
    $region42: #{generator_forward.18} parent=5 // pred_check_branch
      %1675 = sbr.rel (%p1673) target = $region44
    $region43: #{generator_forward.18} parent=5 // pred_region
      %s1676 = ssub.s32 %s10, 2
      // Predicated region
      $region45: #{generator_forward.18} parent=43 // pred_check
        %p1677 = pneg %p128
      $region46: #{generator_forward.18} parent=43 // pred_check_branch
        %1679 = sbr.rel (%p1677) target = $region48
      $region47: #{generator_forward.18} parent=43 // pred_region
        %s1680 = smul.u32 128, %s16
        %p1681 = scmp.lt.s32.totalorder %s1680, 255
        %s1682 = scalar_select %p1681, %s1680, 255
        %s1683 = smul.addr %s1682, 8
        %s1684 = scalar_lea.vmem %s4, %s1683
      $region48: #{generator_forward.18} parent=43 // pred_fallthru
        _
    $region44: #{generator_forward.18} parent=5 // pred_fallthru
      _
  $region6: #{generator_forward.18} parent=0 // loop_footer
    %s14 = sadd.s32 1, %s10
  $region7: #{generator_forward.18} parent=0 // loop_footer_branch
    %9 = sbr.rel target = $region3
  $region8: #{generator_forward.18} parent=0 // loop_exit
    _

// kernel: generator_forward.17
$region0: #{generator_forward.17}
  #allocation0 [shape = 'u32[]', space=smem, size = 0x4, offset = 0x4, fixed_abs, tag = 'smem constant byte address 0x4 - core index']
  #allocation1 [shape = 'u32[144,128]{1,0:T(1,128)}', space=vmem, size = 0x12000, scoped, tag = 'internal scratch']
  %s0 = inlined_call_operand.vmem [shape: f32[2048,8], index: 0, kind: input, shape index: {}]
  %s1 = inlined_call_operand.vmem [shape: f32[1,8], index: 1, kind: output, shape index: {0}]
  %s2 = inlined_call_operand.vmem [shape: f32[1,8], index: 2, kind: output, shape index: {1}]
  %3 = xla_tuple %s1, %s2
  %s4 = sld [smem:[#allocation0]]
  $region26: #{generator_forward.17} parent=0
    _
  %s6 = ssub.s32 1, %s4
  %s7 = scalar_select 0, %s6, %s4
  // Predicated region
  $region2: #{generator_forward.17} parent=0 // pred_check
    _
  $region3: #{generator_forward.17} parent=0 // pred_check_branch
    %9 = sbr.rel (0) target = $region5
  $region4: #{generator_forward.17} parent=0 // pred_region
    _
  $region5: #{generator_forward.17} parent=0 // pred_fallthru
    _
  %p10 = scmp.eq.s32.totalorder 0, 0
  // Predicated region
  $region6: #{generator_forward.17} parent=0 // pred_check
    %p11 = pneg %p10
  $region7: #{generator_forward.17} parent=0 // pred_check_branch
    %13 = sbr.rel (%p11) target = $region9
  $region8: #{generator_forward.17} parent=0 // pred_region
    %vm14 = vcmask 57344
    %15 = vst.msk [vmem:[%s1] sm:$0x1] %vm14, 0.0
    %16 = vst.msk [vmem:[%s2] sm:$0x1] %vm14, 0.0
  $region9: #{generator_forward.17} parent=0 // pred_fallthru
    _
  %v17 = vld [vmem:[%s0] sm:$0xff]
  %v18 = vld [vmem:[%s0 + $0x8] sm:$0xff]
  %v19 = vld [vmem:[%s0 + $0x10] sm:$0xff]
  %v20 = vld [vmem:[%s0 + $0x18] sm:$0xff]
  %v21 = vld [vmem:[%s0 + $0x20] sm:$0xff]
  %v22 = vld [vmem:[%s0 + $0x28] sm:$0xff]
  %v23 = vld [vmem:[%s0 + $0x30] sm:$0xff]
  %v24 = vld [vmem:[%s0 + $0x38] sm:$0xff]
  %v25 = vld [vmem:[%s0 + $0x40] sm:$0xff]
  %v26 = vld [vmem:[%s0 + $0x48] sm:$0xff]
  %v27 = vld [vmem:[%s0 + $0x50] sm:$0xff]
  %v28 = vld [vmem:[%s0 + $0x58] sm:$0xff]
  %v29 = vld [vmem:[%s0 + $0x60] sm:$0xff]
  %v30 = vld [vmem:[%s0 + $0x68] sm:$0xff]
  %v31 = vld [vmem:[%s0 + $0x70] sm:$0xff]
  %v32 = vld [vmem:[%s0 + $0x78] sm:$0xff]
  %v33 = vld [vmem:[%s0 + $0x80] sm:$0xff]
  %v34 = vld [vmem:[%s0 + $0x88] sm:$0xff]
  %v35 = vld [vmem:[%s0 + $0x90] sm:$0xff]
  %v36 = vld [vmem:[%s0 + $0x98] sm:$0xff]
  %v37 = vld [vmem:[%s0 + $0xa0] sm:$0xff]
  %v38 = vld [vmem:[%s0 + $0xa8] sm:$0xff]
  %v39 = vld [vmem:[%s0 + $0xb0] sm:$0xff]
  %v40 = vld [vmem:[%s0 + $0xb8] sm:$0xff]
  %v41 = vld [vmem:[%s0 + $0xc0] sm:$0xff]
  %v42 = vld [vmem:[%s0 + $0xc8] sm:$0xff]
  %v43 = vld [vmem:[%s0 + $0xd0] sm:$0xff]
  %v44 = vld [vmem:[%s0 + $0xd8] sm:$0xff]
  %v45 = vld [vmem:[%s0 + $0xe0] sm:$0xff]
  %v46 = vld [vmem:[%s0 + $0xe8] sm:$0xff]
  %v47 = vld [vmem:[%s0 + $0xf0] sm:$0xff]
  %v48 = vld [vmem:[%s0 + $0xf8] sm:$0xff]
  %v49 = vld [vmem:[%s0 + $0x100] sm:$0xff]
  %v50 = vld [vmem:[%s0 + $0x108] sm:$0xff]
  %v51 = vld [vmem:[%s0 + $0x110] sm:$0xff]
  %v52 = vld [vmem:[%s0 + $0x118] sm:$0xff]
  %v53 = vld [vmem:[%s0 + $0x120] sm:$0xff]
  %v54 = vld [vmem:[%s0 + $0x128] sm:$0xff]
  %v55 = vld [vmem:[%s0 + $0x130] sm:$0xff]
  %v56 = vld [vmem:[%s0 + $0x138] sm:$0xff]
  %v57 = vld [vmem:[%s0 + $0x140] sm:$0xff]
  %v58 = vld [vmem:[%s0 + $0x148] sm:$0xff]
  %v59 = vld [vmem:[%s0 + $0x150] sm:$0xff]
  %v60 = vld [vmem:[%s0 + $0x158] sm:$0xff]
  %v61 = vld [vmem:[%s0 + $0x160] sm:$0xff]
  %v62 = vld [vmem:[%s0 + $0x168] sm:$0xff]
  %v63 = vld [vmem:[%s0 + $0x170] sm:$0xff]
  %v64 = vld [vmem:[%s0 + $0x178] sm:$0xff]
  %v65 = vld [vmem:[%s0 + $0x180] sm:$0xff]
  %v66 = vld [vmem:[%s0 + $0x188] sm:$0xff]
  %v67 = vld [vmem:[%s0 + $0x190] sm:$0xff]
  %v68 = vld [vmem:[%s0 + $0x198] sm:$0xff]
  %v69 = vld [vmem:[%s0 + $0x1a0] sm:$0xff]
  %v70 = vld [vmem:[%s0 + $0x1a8] sm:$0xff]
  %v71 = vld [vmem:[%s0 + $0x1b0] sm:$0xff]
  %v72 = vld [vmem:[%s0 + $0x1b8] sm:$0xff]
  %v73 = vld [vmem:[%s0 + $0x1c0] sm:$0xff]
  %v74 = vld [vmem:[%s0 + $0x1c8] sm:$0xff]
  %v75 = vld [vmem:[%s0 + $0x1d0] sm:$0xff]
  %v76 = vld [vmem:[%s0 + $0x1d8] sm:$0xff]
  %v77 = vld [vmem:[%s0 + $0x1e0] sm:$0xff]
  %v78 = vld [vmem:[%s0 + $0x1e8] sm:$0xff]
  %v79 = vld [vmem:[%s0 + $0x1f0] sm:$0xff]
  %v80 = vld [vmem:[%s0 + $0x1f8] sm:$0xff]
  %v81 = vld [vmem:[%s0 + $0x200] sm:$0xff]
  %v82 = vld [vmem:[%s0 + $0x208] sm:$0xff]
  %v83 = vld [vmem:[%s0 + $0x210] sm:$0xff]
  %v84 = vld [vmem:[%s0 + $0x218] sm:$0xff]
  %v85 = vld [vmem:[%s0 + $0x220] sm:$0xff]
  %v86 = vld [vmem:[%s0 + $0x228] sm:$0xff]
  %v87 = vld [vmem:[%s0 + $0x230] sm:$0xff]
  %v88 = vld [vmem:[%s0 + $0x238] sm:$0xff]
  %v89 = vld [vmem:[%s0 + $0x240] sm:$0xff]
  %v90 = vld [vmem:[%s0 + $0x248] sm:$0xff]
  %v91 = vld [vmem:[%s0 + $0x250] sm:$0xff]
  %v92 = vld [vmem:[%s0 + $0x258] sm:$0xff]
  %v93 = vld [vmem:[%s0 + $0x260] sm:$0xff]
  %v94 = vld [vmem:[%s0 + $0x268] sm:$0xff]
  %v95 = vld [vmem:[%s0 + $0x270] sm:$0xff]
  %v96 = vld [vmem:[%s0 + $0x278] sm:$0xff]
  %v97 = vld [vmem:[%s0 + $0x280] sm:$0xff]
  %v98 = vld [vmem:[%s0 + $0x288] sm:$0xff]
  %v99 = vld [vmem:[%s0 + $0x290] sm:$0xff]
  %v100 = vld [vmem:[%s0 + $0x298] sm:$0xff]
  %v101 = vld [vmem:[%s0 + $0x2a0] sm:$0xff]
  %v102 = vld [vmem:[%s0 + $0x2a8] sm:$0xff]
  %v103 = vld [vmem:[%s0 + $0x2b0] sm:$0xff]
  %v104 = vld [vmem:[%s0 + $0x2b8] sm:$0xff]
  %v105 = vld [vmem:[%s0 + $0x2c0] sm:$0xff]
  %v106 = vld [vmem:[%s0 + $0x2c8] sm:$0xff]
  %v107 = vld [vmem:[%s0 + $0x2d0] sm:$0xff]
  %v108 = vld [vmem:[%s0 + $0x2d8] sm:$0xff]
  %v109 = vld [vmem:[%s0 + $0x2e0] sm:$0xff]
  %v110 = vld [vmem:[%s0 + $0x2e8] sm:$0xff]
  %v111 = vld [vmem:[%s0 + $0x2f0] sm:$0xff]
  %v112 = vld [vmem:[%s0 + $0x2f8] sm:$0xff]
  %v113 = vld [vmem:[%s0 + $0x300] sm:$0xff]
  %v114 = vld [vmem:[%s0 + $0x308] sm:$0xff]
  %v115 = vld [vmem:[%s0 + $0x310] sm:$0xff]
  %v116 = vld [vmem:[%s0 + $0x318] sm:$0xff]
  %v117 = vld [vmem:[%s0 + $0x320] sm:$0xff]
  %v118 = vld [vmem:[%s0 + $0x328] sm:$0xff]
  %v119 = vld [vmem:[%s0 + $0x330] sm:$0xff]
  %v120 = vld [vmem:[%s0 + $0x338] sm:$0xff]
  %v121 = vld [vmem:[%s0 + $0x340] sm:$0xff]
  %v122 = vld [vmem:[%s0 + $0x348] sm:$0xff]
  %v123 = vld [vmem:[%s0 + $0x350] sm:$0xff]
  %v124 = vld [vmem:[%s0 + $0x358] sm:$0xff]
  %v125 = vld [vmem:[%s0 + $0x360] sm:$0xff]
  %v126 = vld [vmem:[%s0 + $0x368] sm:$0xff]
  %v127 = vld [vmem:[%s0 + $0x370] sm:$0xff]
  %v128 = vld [vmem:[%s0 + $0x378] sm:$0xff]
  %v129 = vld [vmem:[%s0 + $0x380] sm:$0xff]
  %v130 = vld [vmem:[%s0 + $0x388] sm:$0xff]
  %v131 = vld [vmem:[%s0 + $0x390] sm:$0xff]
  %v132 = vld [vmem:[%s0 + $0x398] sm:$0xff]
  %v133 = vld [vmem:[%s0 + $0x3a0] sm:$0xff]
  %v134 = vld [vmem:[%s0 + $0x3a8] sm:$0xff]
  %v135 = vld [vmem:[%s0 + $0x3b0] sm:$0xff]
  %v136 = vld [vmem:[%s0 + $0x3b8] sm:$0xff]
  %v137 = vld [vmem:[%s0 + $0x3c0] sm:$0xff]
  %v138 = vld [vmem:[%s0 + $0x3c8] sm:$0xff]
  %v139 = vld [vmem:[%s0 + $0x3d0] sm:$0xff]
  %v140 = vld [vmem:[%s0 + $0x3d8] sm:$0xff]
  %v141 = vld [vmem:[%s0 + $0x3e0] sm:$0xff]
  %v142 = vld [vmem:[%s0 + $0x3e8] sm:$0xff]
  %v143 = vld [vmem:[%s0 + $0x3f0] sm:$0xff]
  %v144 = vld [vmem:[%s0 + $0x3f8] sm:$0xff]
  %v145 = vld [vmem:[%s0 + $0x400] sm:$0xff]
  %v146 = vld [vmem:[%s0 + $0x408] sm:$0xff]
  %v147 = vld [vmem:[%s0 + $0x410] sm:$0xff]
  %v148 = vld [vmem:[%s0 + $0x418] sm:$0xff]
  %v149 = vld [vmem:[%s0 + $0x420] sm:$0xff]
  %v150 = vld [vmem:[%s0 + $0x428] sm:$0xff]
  %v151 = vld [vmem:[%s0 + $0x430] sm:$0xff]
  %v152 = vld [vmem:[%s0 + $0x438] sm:$0xff]
  %v153 = vld [vmem:[%s0 + $0x440] sm:$0xff]
  %v154 = vld [vmem:[%s0 + $0x448] sm:$0xff]
  %v155 = vld [vmem:[%s0 + $0x450] sm:$0xff]
  %v156 = vld [vmem:[%s0 + $0x458] sm:$0xff]
  %v157 = vld [vmem:[%s0 + $0x460] sm:$0xff]
  %v158 = vld [vmem:[%s0 + $0x468] sm:$0xff]
  %v159 = vld [vmem:[%s0 + $0x470] sm:$0xff]
  %v160 = vld [vmem:[%s0 + $0x478] sm:$0xff]
  %v161 = vld [vmem:[%s0 + $0x480] sm:$0xff]
  %v162 = vld [vmem:[%s0 + $0x488] sm:$0xff]
  %v163 = vld [vmem:[%s0 + $0x490] sm:$0xff]
  %v164 = vld [vmem:[%s0 + $0x498] sm:$0xff]
  %v165 = vld [vmem:[%s0 + $0x4a0] sm:$0xff]
  %v166 = vld [vmem:[%s0 + $0x4a8] sm:$0xff]
  %v167 = vld [vmem:[%s0 + $0x4b0] sm:$0xff]
  %v168 = vld [vmem:[%s0 + $0x4b8] sm:$0xff]
  %v169 = vld [vmem:[%s0 + $0x4c0] sm:$0xff]
  %v170 = vld [vmem:[%s0 + $0x4c8] sm:$0xff]
  %v171 = vld [vmem:[%s0 + $0x4d0] sm:$0xff]
  %v172 = vld [vmem:[%s0 + $0x4d8] sm:$0xff]
  %v173 = vld [vmem:[%s0 + $0x4e0] sm:$0xff]
  %v174 = vld [vmem:[%s0 + $0x4e8] sm:$0xff]
  %v175 = vld [vmem:[%s0 + $0x4f0] sm:$0xff]
  %v176 = vld [vmem:[%s0 + $0x4f8] sm:$0xff]
  %v177 = vld [vmem:[%s0 + $0x500] sm:$0xff]
  %v178 = vld [vmem:[%s0 + $0x508] sm:$0xff]
  %v179 = vld [vmem:[%s0 + $0x510] sm:$0xff]
  %v180 = vld [vmem:[%s0 + $0x518] sm:$0xff]
  %v181 = vld [vmem:[%s0 + $0x520] sm:$0xff]
  %v182 = vld [vmem:[%s0 + $0x528] sm:$0xff]
  %v183 = vld [vmem:[%s0 + $0x530] sm:$0xff]
  %v184 = vld [vmem:[%s0 + $0x538] sm:$0xff]
  %v185 = vld [vmem:[%s0 + $0x540] sm:$0xff]
  %v186 = vld [vmem:[%s0 + $0x548] sm:$0xff]
  %v187 = vld [vmem:[%s0 + $0x550] sm:$0xff]
  %v188 = vld [vmem:[%s0 + $0x558] sm:$0xff]
  %v189 = vld [vmem:[%s0 + $0x560] sm:$0xff]
  %v190 = vld [vmem:[%s0 + $0x568] sm:$0xff]
  %v191 = vld [vmem:[%s0 + $0x570] sm:$0xff]
  %v192 = vld [vmem:[%s0 + $0x578] sm:$0xff]
  %v193 = vld [vmem:[%s0 + $0x580] sm:$0xff]
  %v194 = vld [vmem:[%s0 + $0x588] sm:$0xff]
  %v195 = vld [vmem:[%s0 + $0x590] sm:$0xff]
  %v196 = vld [vmem:[%s0 + $0x598] sm:$0xff]
  %v197 = vld [vmem:[%s0 + $0x5a0] sm:$0xff]
  %v198 = vld [vmem:[%s0 + $0x5a8] sm:$0xff]
  %v199 = vld [vmem:[%s0 + $0x5b0] sm:$0xff]
  %v200 = vld [vmem:[%s0 + $0x5b8] sm:$0xff]
  %v201 = vld [vmem:[%s0 + $0x5c0] sm:$0xff]
  %v202 = vld [vmem:[%s0 + $0x5c8] sm:$0xff]
  %v203 = vld [vmem:[%s0 + $0x5d0] sm:$0xff]
  %v204 = vld [vmem:[%s0 + $0x5d8] sm:$0xff]
  %v205 = vld [vmem:[%s0 + $0x5e0] sm:$0xff]
  %v206 = vld [vmem:[%s0 + $0x5e8] sm:$0xff]
  %v207 = vld [vmem:[%s0 + $0x5f0] sm:$0xff]
  %v208 = vld [vmem:[%s0 + $0x5f8] sm:$0xff]
  %v209 = vld [vmem:[%s0 + $0x600] sm:$0xff]
  %v210 = vld [vmem:[%s0 + $0x608] sm:$0xff]
  %v211 = vld [vmem:[%s0 + $0x610] sm:$0xff]
  %v212 = vld [vmem:[%s0 + $0x618] sm:$0xff]
  %v213 = vld [vmem:[%s0 + $0x620] sm:$0xff]
  %v214 = vld [vmem:[%s0 + $0x628] sm:$0xff]
  %v215 = vld [vmem:[%s0 + $0x630] sm:$0xff]
  %v216 = vld [vmem:[%s0 + $0x638] sm:$0xff]
  %v217 = vld [vmem:[%s0 + $0x640] sm:$0xff]
  %v218 = vld [vmem:[%s0 + $0x648] sm:$0xff]
  %v219 = vld [vmem:[%s0 + $0x650] sm:$0xff]
  %v220 = vld [vmem:[%s0 + $0x658] sm:$0xff]
  %v221 = vld [vmem:[%s0 + $0x660] sm:$0xff]
  %v222 = vld [vmem:[%s0 + $0x668] sm:$0xff]
  %v223 = vld [vmem:[%s0 + $0x670] sm:$0xff]
  %v224 = vld [vmem:[%s0 + $0x678] sm:$0xff]
  %v225 = vld [vmem:[%s0 + $0x680] sm:$0xff]
  %v226 = vld [vmem:[%s0 + $0x688] sm:$0xff]
  %v227 = vld [vmem:[%s0 + $0x690] sm:$0xff]
  %v228 = vld [vmem:[%s0 + $0x698] sm:$0xff]
  %v229 = vld [vmem:[%s0 + $0x6a0] sm:$0xff]
  %v230 = vld [vmem:[%s0 + $0x6a8] sm:$0xff]
  %v231 = vld [vmem:[%s0 + $0x6b0] sm:$0xff]
  %v232 = vld [vmem:[%s0 + $0x6b8] sm:$0xff]
  %v233 = vld [vmem:[%s0 + $0x6c0] sm:$0xff]
  %v234 = vld [vmem:[%s0 + $0x6c8] sm:$0xff]
  %v235 = vld [vmem:[%s0 + $0x6d0] sm:$0xff]
  %v236 = vld [vmem:[%s0 + $0x6d8] sm:$0xff]
  %v237 = vld [vmem:[%s0 + $0x6e0] sm:$0xff]
  %v238 = vld [vmem:[%s0 + $0x6e8] sm:$0xff]
  %v239 = vld [vmem:[%s0 + $0x6f0] sm:$0xff]
  %v240 = vld [vmem:[%s0 + $0x6f8] sm:$0xff]
  %v241 = vld [vmem:[%s0 + $0x700] sm:$0xff]
  %v242 = vld [vmem:[%s0 + $0x708] sm:$0xff]
  %v243 = vld [vmem:[%s0 + $0x710] sm:$0xff]
  %v244 = vld [vmem:[%s0 + $0x718] sm:$0xff]
  %v245 = vld [vmem:[%s0 + $0x720] sm:$0xff]
  %v246 = vld [vmem:[%s0 + $0x728] sm:$0xff]
  %v247 = vld [vmem:[%s0 + $0x730] sm:$0xff]
  %v248 = vld [vmem:[%s0 + $0x738] sm:$0xff]
  %v249 = vld [vmem:[%s0 + $0x740] sm:$0xff]
  %v250 = vld [vmem:[%s0 + $0x748] sm:$0xff]
  %v251 = vld [vmem:[%s0 + $0x750] sm:$0xff]
  %v252 = vld [vmem:[%s0 + $0x758] sm:$0xff]
  %v253 = vld [vmem:[%s0 + $0x760] sm:$0xff]
  %v254 = vld [vmem:[%s0 + $0x768] sm:$0xff]
  %v255 = vld [vmem:[%s0 + $0x770] sm:$0xff]
  %v256 = vld [vmem:[%s0 + $0x778] sm:$0xff]
  %v257 = vld [vmem:[%s0 + $0x780] sm:$0xff]
  %v258 = vld [vmem:[%s0 + $0x788] sm:$0xff]
  %v259 = vld [vmem:[%s0 + $0x790] sm:$0xff]
  %v260 = vld [vmem:[%s0 + $0x798] sm:$0xff]
  %v261 = vld [vmem:[%s0 + $0x7a0] sm:$0xff]
  %v262 = vld [vmem:[%s0 + $0x7a8] sm:$0xff]
  %v263 = vld [vmem:[%s0 + $0x7b0] sm:$0xff]
  %v264 = vld [vmem:[%s0 + $0x7b8] sm:$0xff]
  %v265 = vld [vmem:[%s0 + $0x7c0] sm:$0xff]
  %v266 = vld [vmem:[%s0 + $0x7c8] sm:$0xff]
  %v267 = vld [vmem:[%s0 + $0x7d0] sm:$0xff]
  %v268 = vld [vmem:[%s0 + $0x7d8] sm:$0xff]
  %v269 = vld [vmem:[%s0 + $0x7e0] sm:$0xff]
  %v270 = vld [vmem:[%s0 + $0x7e8] sm:$0xff]
  %v271 = vld [vmem:[%s0 + $0x7f0] sm:$0xff]
  %v272 = vld [vmem:[%s0 + $0x7f8] sm:$0xff]
  %v273 = vld [vmem:[%s1] sm:$0x1]
  %vm274 = vcmask 64512
  %v275 = vsel %vm274, %v17, 0.0
  %v276 = vsel %vm274, %v18, 0.0
  %v277 = vadd.f32 %v275, %v276
  %v278 = vsel %vm274, %v19, 0.0
  %v279 = vadd.f32 %v277, %v278
  %v280 = vsel %vm274, %v20, 0.0
  %v281 = vadd.f32 %v279, %v280
  %v282 = vsel %vm274, %v21, 0.0
  %v283 = vadd.f32 %v281, %v282
  %v284 = vsel %vm274, %v22, 0.0
  %v285 = vadd.f32 %v283, %v284
  %v286 = vsel %vm274, %v23, 0.0
  %v287 = vadd.f32 %v285, %v286
  %v288 = vsel %vm274, %v24, 0.0
  %v289 = vadd.f32 %v287, %v288
  %v290 = vsel %vm274, %v25, 0.0
  %v291 = vadd.f32 %v289, %v290
  %v292 = vsel %vm274, %v26, 0.0
  %v293 = vadd.f32 %v291, %v292
  %v294 = vsel %vm274, %v27, 0.0
  %v295 = vadd.f32 %v293, %v294
  %v296 = vsel %vm274, %v28, 0.0
  %v297 = vadd.f32 %v295, %v296
  %v298 = vsel %vm274, %v29, 0.0
  %v299 = vadd.f32 %v297, %v298
  %v300 = vsel %vm274, %v30, 0.0
  %v301 = vadd.f32 %v299, %v300
  %v302 = vsel %vm274, %v31, 0.0
  %v303 = vadd.f32 %v301, %v302
  %v304 = vsel %vm274, %v32, 0.0
  %v305 = vadd.f32 %v303, %v304
  %v306 = vsel %vm274, %v33, 0.0
  %v307 = vadd.f32 %v305, %v306
  %v308 = vsel %vm274, %v34, 0.0
  %v309 = vadd.f32 %v307, %v308
  %v310 = vsel %vm274, %v35, 0.0
  %v311 = vadd.f32 %v309, %v310
  %v312 = vsel %vm274, %v36, 0.0
  %v313 = vadd.f32 %v311, %v312
  %v314 = vsel %vm274, %v37, 0.0
  %v315 = vadd.f32 %v313, %v314
  %v316 = vsel %vm274, %v38, 0.0
  %v317 = vadd.f32 %v315, %v316
  %v318 = vsel %vm274, %v39, 0.0
  %v319 = vadd.f32 %v317, %v318
  %v320 = vsel %vm274, %v40, 0.0
  %v321 = vadd.f32 %v319, %v320
  %v322 = vsel %vm274, %v41, 0.0
  %v323 = vadd.f32 %v321, %v322
  %v324 = vsel %vm274, %v42, 0.0
  %v325 = vadd.f32 %v323, %v324
  %v326 = vsel %vm274, %v43, 0.0
  %v327 = vadd.f32 %v325, %v326
  %v328 = vsel %vm274, %v44, 0.0
  %v329 = vadd.f32 %v327, %v328
  %v330 = vsel %vm274, %v45, 0.0
  %v331 = vadd.f32 %v329, %v330
  %v332 = vsel %vm274, %v46, 0.0
  %v333 = vadd.f32 %v331, %v332
  %v334 = vsel %vm274, %v47, 0.0
  %v335 = vadd.f32 %v333, %v334
  %v336 = vsel %vm274, %v48, 0.0
  %v337 = vadd.f32 %v335, %v336
  %v338 = vsel %vm274, %v49, 0.0
  %v339 = vadd.f32 %v337, %v338
  %v340 = vsel %vm274, %v50, 0.0
  %v341 = vadd.f32 %v339, %v340
  %v342 = vsel %vm274, %v51, 0.0
  %v343 = vadd.f32 %v341, %v342
  %v344 = vsel %vm274, %v52, 0.0
  %v345 = vadd.f32 %v343, %v344
  %v346 = vsel %vm274, %v53, 0.0
  %v347 = vadd.f32 %v345, %v346
  %v348 = vsel %vm274, %v54, 0.0
  %v349 = vadd.f32 %v347, %v348
  %v350 = vsel %vm274, %v55, 0.0
  %v351 = vadd.f32 %v349, %v350
  %v352 = vsel %vm274, %v56, 0.0
  %v353 = vadd.f32 %v351, %v352
  %v354 = vsel %vm274, %v57, 0.0
  %v355 = vadd.f32 %v353, %v354
  %v356 = vsel %vm274, %v58, 0.0
  %v357 = vadd.f32 %v355, %v356
  %v358 = vsel %vm274, %v59, 0.0
  %v359 = vadd.f32 %v357, %v358
  %v360 = vsel %vm274, %v60, 0.0
  %v361 = vadd.f32 %v359, %v360
  %v362 = vsel %vm274, %v61, 0.0
  %v363 = vadd.f32 %v361, %v362
  %v364 = vsel %vm274, %v62, 0.0
  %v365 = vadd.f32 %v363, %v364
  %v366 = vsel %vm274, %v63, 0.0
  %v367 = vadd.f32 %v365, %v366
  %v368 = vsel %vm274, %v64, 0.0
  %v369 = vadd.f32 %v367, %v368
  %v370 = vsel %vm274, %v65, 0.0
  %v371 = vadd.f32 %v369, %v370
  %v372 = vsel %vm274, %v66, 0.0
  %v373 = vadd.f32 %v371, %v372
  %v374 = vsel %vm274, %v67, 0.0
  %v375 = vadd.f32 %v373, %v374
  %v376 = vsel %vm274, %v68, 0.0
  %v377 = vadd.f32 %v375, %v376
  %v378 = vsel %vm274, %v69, 0.0
  %v379 = vadd.f32 %v377, %v378
  %v380 = vsel %vm274, %v70, 0.0
  %v381 = vadd.f32 %v379, %v380
  %v382 = vsel %vm274, %v71, 0.0
  %v383 = vadd.f32 %v381, %v382
  %v384 = vsel %vm274, %v72, 0.0
  %v385 = vadd.f32 %v383, %v384
  %v386 = vsel %vm274, %v73, 0.0
  %v387 = vadd.f32 %v385, %v386
  %v388 = vsel %vm274, %v74, 0.0
  %v389 = vadd.f32 %v387, %v388
  %v390 = vsel %vm274, %v75, 0.0
  %v391 = vadd.f32 %v389, %v390
  %v392 = vsel %vm274, %v76, 0.0
  %v393 = vadd.f32 %v391, %v392
  %v394 = vsel %vm274, %v77, 0.0
  %v395 = vadd.f32 %v393, %v394
  %v396 = vsel %vm274, %v78, 0.0
  %v397 = vadd.f32 %v395, %v396
  %v398 = vsel %vm274, %v79, 0.0
  %v399 = vadd.f32 %v397, %v398
  %v400 = vsel %vm274, %v80, 0.0
  %v401 = vadd.f32 %v399, %v400
  %v402 = vsel %vm274, %v81, 0.0
  %v403 = vadd.f32 %v401, %v402
  %v404 = vsel %vm274, %v82, 0.0
  %v405 = vadd.f32 %v403, %v404
  %v406 = vsel %vm274, %v83, 0.0
  %v407 = vadd.f32 %v405, %v406
  %v408 = vsel %vm274, %v84, 0.0
  %v409 = vadd.f32 %v407, %v408
  %v410 = vsel %vm274, %v85, 0.0
  %v411 = vadd.f32 %v409, %v410
  %v412 = vsel %vm274, %v86, 0.0
  %v413 = vadd.f32 %v411, %v412
  %v414 = vsel %vm274, %v87, 0.0
  %v415 = vadd.f32 %v413, %v414
  %v416 = vsel %vm274, %v88, 0.0
  %v417 = vadd.f32 %v415, %v416
  %v418 = vsel %vm274, %v89, 0.0
  %v419 = vadd.f32 %v417, %v418
  %v420 = vsel %vm274, %v90, 0.0
  %v421 = vadd.f32 %v419, %v420
  %v422 = vsel %vm274, %v91, 0.0
  %v423 = vadd.f32 %v421, %v422
  %v424 = vsel %vm274, %v92, 0.0
  %v425 = vadd.f32 %v423, %v424
  %v426 = vsel %vm274, %v93, 0.0
  %v427 = vadd.f32 %v425, %v426
  %v428 = vsel %vm274, %v94, 0.0
  %v429 = vadd.f32 %v427, %v428
  %v430 = vsel %vm274, %v95, 0.0
  %v431 = vadd.f32 %v429, %v430
  %v432 = vsel %vm274, %v96, 0.0
  %v433 = vadd.f32 %v431, %v432
  %v434 = vsel %vm274, %v97, 0.0
  %v435 = vadd.f32 %v433, %v434
  %v436 = vsel %vm274, %v98, 0.0
  %v437 = vadd.f32 %v435, %v436
  %v438 = vsel %vm274, %v99, 0.0
  %v439 = vadd.f32 %v437, %v438
  %v440 = vsel %vm274, %v100, 0.0
  %v441 = vadd.f32 %v439, %v440
  %v442 = vsel %vm274, %v101, 0.0
  %v443 = vadd.f32 %v441, %v442
  %v444 = vsel %vm274, %v102, 0.0
  %v445 = vadd.f32 %v443, %v444
  %v446 = vsel %vm274, %v103, 0.0
  %v447 = vadd.f32 %v445, %v446
  %v448 = vsel %vm274, %v104, 0.0
  %v449 = vadd.f32 %v447, %v448
  %v450 = vsel %vm274, %v105, 0.0
  %v451 = vadd.f32 %v449, %v450
  %v452 = vsel %vm274, %v106, 0.0
  %v453 = vadd.f32 %v451, %v452
  %v454 = vsel %vm274, %v107, 0.0
  %v455 = vadd.f32 %v453, %v454
  %v456 = vsel %vm274, %v108, 0.0
  %v457 = vadd.f32 %v455, %v456
  %v458 = vsel %vm274, %v109, 0.0
  %v459 = vadd.f32 %v457, %v458
  %v460 = vsel %vm274, %v110, 0.0
  %v461 = vadd.f32 %v459, %v460
  %v462 = vsel %vm274, %v111, 0.0
  %v463 = vadd.f32 %v461, %v462
  %v464 = vsel %vm274, %v112, 0.0
  %v465 = vadd.f32 %v463, %v464
  %v466 = vsel %vm274, %v113, 0.0
  %v467 = vadd.f32 %v465, %v466
  %v468 = vsel %vm274, %v114, 0.0
  %v469 = vadd.f32 %v467, %v468
  %v470 = vsel %vm274, %v115, 0.0
  %v471 = vadd.f32 %v469, %v470
  %v472 = vsel %vm274, %v116, 0.0
  %v473 = vadd.f32 %v471, %v472
  %v474 = vsel %vm274, %v117, 0.0
  %v475 = vadd.f32 %v473, %v474
  %v476 = vsel %vm274, %v118, 0.0
  %v477 = vadd.f32 %v475, %v476
  %v478 = vsel %vm274, %v119, 0.0
  %v479 = vadd.f32 %v477, %v478
  %v480 = vsel %vm274, %v120, 0.0
  %v481 = vadd.f32 %v479, %v480
  %v482 = vsel %vm274, %v121, 0.0
  %v483 = vadd.f32 %v481, %v482
  %v484 = vsel %vm274, %v122, 0.0
  %v485 = vadd.f32 %v483, %v484
  %v486 = vsel %vm274, %v123, 0.0
  %v487 = vadd.f32 %v485, %v486
  %v488 = vsel %vm274, %v124, 0.0
  %v489 = vadd.f32 %v487, %v488
  %v490 = vsel %vm274, %v125, 0.0
  %v491 = vadd.f32 %v489, %v490
  %v492 = vsel %vm274, %v126, 0.0
  %v493 = vadd.f32 %v491, %v492
  %v494 = vsel %vm274, %v127, 0.0
  %v495 = vadd.f32 %v493, %v494
  %v496 = vsel %vm274, %v128, 0.0
  %v497 = vadd.f32 %v495, %v496
  %v498 = vsel %vm274, %v129, 0.0
  %v499 = vadd.f32 %v497, %v498
  %v500 = vsel %vm274, %v130, 0.0
  %v501 = vadd.f32 %v499, %v500
  %v502 = vsel %vm274, %v131, 0.0
  %v503 = vadd.f32 %v501, %v502
  %v504 = vsel %vm274, %v132, 0.0
  %v505 = vadd.f32 %v503, %v504
  %v506 = vsel %vm274, %v133, 0.0
  %v507 = vadd.f32 %v505, %v506
  %v508 = vsel %vm274, %v134, 0.0
  %v509 = vadd.f32 %v507, %v508
  %v510 = vsel %vm274, %v135, 0.0
  %v511 = vadd.f32 %v509, %v510
  %v512 = vsel %vm274, %v136, 0.0
  %v513 = vadd.f32 %v511, %v512
  %v514 = vsel %vm274, %v137, 0.0
  %v515 = vadd.f32 %v513, %v514
  %v516 = vsel %vm274, %v138, 0.0
  %v517 = vadd.f32 %v515, %v516
  %v518 = vsel %vm274, %v139, 0.0
  %v519 = vadd.f32 %v517, %v518
  %v520 = vsel %vm274, %v140, 0.0
  %v521 = vadd.f32 %v519, %v520
  %v522 = vsel %vm274, %v141, 0.0
  %v523 = vadd.f32 %v521, %v522
  %v524 = vsel %vm274, %v142, 0.0
  %v525 = vadd.f32 %v523, %v524
  %v526 = vsel %vm274, %v143, 0.0
  %v527 = vadd.f32 %v525, %v526
  %v528 = vsel %vm274, %v144, 0.0
  %v529 = vadd.f32 %v527, %v528
  %v530 = vsel %vm274, %v145, 0.0
  %v531 = vadd.f32 %v529, %v530
  %v532 = vsel %vm274, %v146, 0.0
  %v533 = vadd.f32 %v531, %v532
  %v534 = vsel %vm274, %v147, 0.0
  %v535 = vadd.f32 %v533, %v534
  %v536 = vsel %vm274, %v148, 0.0
  %v537 = vadd.f32 %v535, %v536
  %v538 = vsel %vm274, %v149, 0.0
  %v539 = vadd.f32 %v537, %v538
  %v540 = vsel %vm274, %v150, 0.0
  %v541 = vadd.f32 %v539, %v540
  %v542 = vsel %vm274, %v151, 0.0
  %v543 = vadd.f32 %v541, %v542
  %v544 = vsel %vm274, %v152, 0.0
  %v545 = vadd.f32 %v543, %v544
  %v546 = vsel %vm274, %v153, 0.0
  %v547 = vadd.f32 %v545, %v546
  %v548 = vsel %vm274, %v154, 0.0
  %v549 = vadd.f32 %v547, %v548
  %v550 = vsel %vm274, %v155, 0.0
  %v551 = vadd.f32 %v549, %v550
  %v552 = vsel %vm274, %v156, 0.0
  %v553 = vadd.f32 %v551, %v552
  %v554 = vsel %vm274, %v157, 0.0
  %v555 = vadd.f32 %v553, %v554
  %v556 = vsel %vm274, %v158, 0.0
  %v557 = vadd.f32 %v555, %v556
  %v558 = vsel %vm274, %v159, 0.0
  %v559 = vadd.f32 %v557, %v558
  %v560 = vsel %vm274, %v160, 0.0
  %v561 = vadd.f32 %v559, %v560
  %v562 = vsel %vm274, %v161, 0.0
  %v563 = vadd.f32 %v561, %v562
  %v564 = vsel %vm274, %v162, 0.0
  %v565 = vadd.f32 %v563, %v564
  %v566 = vsel %vm274, %v163, 0.0
  %v567 = vadd.f32 %v565, %v566
  %v568 = vsel %vm274, %v164, 0.0
  %v569 = vadd.f32 %v567, %v568
  %v570 = vsel %vm274, %v165, 0.0
  %v571 = vadd.f32 %v569, %v570
  %v572 = vsel %vm274, %v166, 0.0
  %v573 = vadd.f32 %v571, %v572
  %v574 = vsel %vm274, %v167, 0.0
  %v575 = vadd.f32 %v573, %v574
  %v576 = vsel %vm274, %v168, 0.0
  %v577 = vadd.f32 %v575, %v576
  %v578 = vsel %vm274, %v169, 0.0
  %v579 = vadd.f32 %v577, %v578
  %v580 = vsel %vm274, %v170, 0.0
  %v581 = vadd.f32 %v579, %v580
  %v582 = vsel %vm274, %v171, 0.0
  %v583 = vadd.f32 %v581, %v582
  %v584 = vsel %vm274, %v172, 0.0
  %v585 = vadd.f32 %v583, %v584
  %v586 = vsel %vm274, %v173, 0.0
  %v587 = vadd.f32 %v585, %v586
  %v588 = vsel %vm274, %v174, 0.0
  %v589 = vadd.f32 %v587, %v588
  %v590 = vsel %vm274, %v175, 0.0
  %v591 = vadd.f32 %v589, %v590
  %v592 = vsel %vm274, %v176, 0.0
  %v593 = vadd.f32 %v591, %v592
  %v594 = vsel %vm274, %v177, 0.0
  %v595 = vadd.f32 %v593, %v594
  %v596 = vsel %vm274, %v178, 0.0
  %v597 = vadd.f32 %v595, %v596
  %v598 = vsel %vm274, %v179, 0.0
  %v599 = vadd.f32 %v597, %v598
  %v600 = vsel %vm274, %v180, 0.0
  %v601 = vadd.f32 %v599, %v600
  %v602 = vsel %vm274, %v181, 0.0
  %v603 = vadd.f32 %v601, %v602
  %v604 = vsel %vm274, %v182, 0.0
  %v605 = vadd.f32 %v603, %v604
  %v606 = vsel %vm274, %v183, 0.0
  %v607 = vadd.f32 %v605, %v606
  %v608 = vsel %vm274, %v184, 0.0
  %v609 = vadd.f32 %v607, %v608
  %v610 = vsel %vm274, %v185, 0.0
  %v611 = vadd.f32 %v609, %v610
  %v612 = vsel %vm274, %v186, 0.0
  %v613 = vadd.f32 %v611, %v612
  %v614 = vsel %vm274, %v187, 0.0
  %v615 = vadd.f32 %v613, %v614
  %v616 = vsel %vm274, %v188, 0.0
  %v617 = vadd.f32 %v615, %v616
  %v618 = vsel %vm274, %v189, 0.0
  %v619 = vadd.f32 %v617, %v618
  %v620 = vsel %vm274, %v190, 0.0
  %v621 = vadd.f32 %v619, %v620
  %v622 = vsel %vm274, %v191, 0.0
  %v623 = vadd.f32 %v621, %v622
  %v624 = vsel %vm274, %v192, 0.0
  %v625 = vadd.f32 %v623, %v624
  %v626 = vsel %vm274, %v193, 0.0
  %v627 = vadd.f32 %v625, %v626
  %v628 = vsel %vm274, %v194, 0.0
  %v629 = vadd.f32 %v627, %v628
  %v630 = vsel %vm274, %v195, 0.0
  %v631 = vadd.f32 %v629, %v630
  %v632 = vsel %vm274, %v196, 0.0
  %v633 = vadd.f32 %v631, %v632
  %v634 = vsel %vm274, %v197, 0.0
  %v635 = vadd.f32 %v633, %v634
  %v636 = vsel %vm274, %v198, 0.0
  %v637 = vadd.f32 %v635, %v636
  %v638 = vsel %vm274, %v199, 0.0
  %v639 = vadd.f32 %v637, %v638
  %v640 = vsel %vm274, %v200, 0.0
  %v641 = vadd.f32 %v639, %v640
  %v642 = vsel %vm274, %v201, 0.0
  %v643 = vadd.f32 %v641, %v642
  %v644 = vsel %vm274, %v202, 0.0
  %v645 = vadd.f32 %v643, %v644
  %v646 = vsel %vm274, %v203, 0.0
  %v647 = vadd.f32 %v645, %v646
  %v648 = vsel %vm274, %v204, 0.0
  %v649 = vadd.f32 %v647, %v648
  %v650 = vsel %vm274, %v205, 0.0
  %v651 = vadd.f32 %v649, %v650
  %v652 = vsel %vm274, %v206, 0.0
  %v653 = vadd.f32 %v651, %v652
  %v654 = vsel %vm274, %v207, 0.0
  %v655 = vadd.f32 %v653, %v654
  %v656 = vsel %vm274, %v208, 0.0
  %v657 = vadd.f32 %v655, %v656
  %v658 = vsel %vm274, %v209, 0.0
  %v659 = vadd.f32 %v657, %v658
  %v660 = vsel %vm274, %v210, 0.0
  %v661 = vadd.f32 %v659, %v660
  %v662 = vsel %vm274, %v211, 0.0
  %v663 = vadd.f32 %v661, %v662
  %v664 = vsel %vm274, %v212, 0.0
  %v665 = vadd.f32 %v663, %v664
  %v666 = vsel %vm274, %v213, 0.0
  %v667 = vadd.f32 %v665, %v666
  %v668 = vsel %vm274, %v214, 0.0
  %v669 = vadd.f32 %v667, %v668
  %v670 = vsel %vm274, %v215, 0.0
  %v671 = vadd.f32 %v669, %v670
  %v672 = vsel %vm274, %v216, 0.0
  %v673 = vadd.f32 %v671, %v672
  %v674 = vsel %vm274, %v217, 0.0
  %v675 = vadd.f32 %v673, %v674
  %v676 = vsel %vm274, %v218, 0.0
  %v677 = vadd.f32 %v675, %v676
  %v678 = vsel %vm274, %v219, 0.0
  %v679 = vadd.f32 %v677, %v678
  %v680 = vsel %vm274, %v220, 0.0
  %v681 = vadd.f32 %v679, %v680
  %v682 = vsel %vm274, %v221, 0.0
  %v683 = vadd.f32 %v681, %v682
  %v684 = vsel %vm274, %v222, 0.0
  %v685 = vadd.f32 %v683, %v684
  %v686 = vsel %vm274, %v223, 0.0
  %v687 = vadd.f32 %v685, %v686
  %v688 = vsel %vm274, %v224, 0.0
  %v689 = vadd.f32 %v687, %v688
  %v690 = vsel %vm274, %v225, 0.0
  %v691 = vadd.f32 %v689, %v690
  %v692 = vsel %vm274, %v226, 0.0
  %v693 = vadd.f32 %v691, %v692
  %v694 = vsel %vm274, %v227, 0.0
  %v695 = vadd.f32 %v693, %v694
  %v696 = vsel %vm274, %v228, 0.0
  %v697 = vadd.f32 %v695, %v696
  %v698 = vsel %vm274, %v229, 0.0
  %v699 = vadd.f32 %v697, %v698
  %v700 = vsel %vm274, %v230, 0.0
  %v701 = vadd.f32 %v699, %v700
  %v702 = vsel %vm274, %v231, 0.0
  %v703 = vadd.f32 %v701, %v702
  %v704 = vsel %vm274, %v232, 0.0
  %v705 = vadd.f32 %v703, %v704
  %v706 = vsel %vm274, %v233, 0.0
  %v707 = vadd.f32 %v705, %v706
  %v708 = vsel %vm274, %v234, 0.0
  %v709 = vadd.f32 %v707, %v708
  %v710 = vsel %vm274, %v235, 0.0
  %v711 = vadd.f32 %v709, %v710
  %v712 = vsel %vm274, %v236, 0.0
  %v713 = vadd.f32 %v711, %v712
  %v714 = vsel %vm274, %v237, 0.0
  %v715 = vadd.f32 %v713, %v714
  %v716 = vsel %vm274, %v238, 0.0
  %v717 = vadd.f32 %v715, %v716
  %v718 = vsel %vm274, %v239, 0.0
  %v719 = vadd.f32 %v717, %v718
  %v720 = vsel %vm274, %v240, 0.0
  %v721 = vadd.f32 %v719, %v720
  %v722 = vsel %vm274, %v241, 0.0
  %v723 = vadd.f32 %v721, %v722
  %v724 = vsel %vm274, %v242, 0.0
  %v725 = vadd.f32 %v723, %v724
  %v726 = vsel %vm274, %v243, 0.0
  %v727 = vadd.f32 %v725, %v726
  %v728 = vsel %vm274, %v244, 0.0
  %v729 = vadd.f32 %v727, %v728
  %v730 = vsel %vm274, %v245, 0.0
  %v731 = vadd.f32 %v729, %v730
  %v732 = vsel %vm274, %v246, 0.0
  %v733 = vadd.f32 %v731, %v732
  %v734 = vsel %vm274, %v247, 0.0
  %v735 = vadd.f32 %v733, %v734
  %v736 = vsel %vm274, %v248, 0.0
  %v737 = vadd.f32 %v735, %v736
  %v738 = vsel %vm274, %v249, 0.0
  %v739 = vadd.f32 %v737, %v738
  %v740 = vsel %vm274, %v250, 0.0
  %v741 = vadd.f32 %v739, %v740
  %v742 = vsel %vm274, %v251, 0.0
  %v743 = vadd.f32 %v741, %v742
  %v744 = vsel %vm274, %v252, 0.0
  %v745 = vadd.f32 %v743, %v744
  %v746 = vsel %vm274, %v253, 0.0
  %v747 = vadd.f32 %v745, %v746
  %v748 = vsel %vm274, %v254, 0.0
  %v749 = vadd.f32 %v747, %v748
  %v750 = vsel %vm274, %v255, 0.0
  %v751 = vadd.f32 %v749, %v750
  %v752 = vsel %vm274, %v256, 0.0
  %v753 = vadd.f32 %v751, %v752
  %v754 = vsel %vm274, %v257, 0.0
  %v755 = vadd.f32 %v753, %v754
  %v756 = vsel %vm274, %v258, 0.0
  %v757 = vadd.f32 %v755, %v756
  %v758 = vsel %vm274, %v259, 0.0
  %v759 = vadd.f32 %v757, %v758
  %v760 = vsel %vm274, %v260, 0.0
  %v761 = vadd.f32 %v759, %v760
  %v762 = vsel %vm274, %v261, 0.0
  %v763 = vadd.f32 %v761, %v762
  %v764 = vsel %vm274, %v262, 0.0
  %v765 = vadd.f32 %v763, %v764
  %v766 = vsel %vm274, %v263, 0.0
  %v767 = vadd.f32 %v765, %v766
  %v768 = vsel %vm274, %v264, 0.0
  %v769 = vadd.f32 %v767, %v768
  %v770 = vsel %vm274, %v265, 0.0
  %v771 = vadd.f32 %v769, %v770
  %v772 = vsel %vm274, %v266, 0.0
  %v773 = vadd.f32 %v771, %v772
  %v774 = vsel %vm274, %v267, 0.0
  %v775 = vadd.f32 %v773, %v774
  %v776 = vsel %vm274, %v268, 0.0
  %v777 = vadd.f32 %v775, %v776
  %v778 = vsel %vm274, %v269, 0.0
  %v779 = vadd.f32 %v777, %v778
  %v780 = vsel %vm274, %v270, 0.0
  %v781 = vadd.f32 %v779, %v780
  %v782 = vsel %vm274, %v271, 0.0
  %v783 = vadd.f32 %v781, %v782
  %v784 = vsel %vm274, %v272, 0.0
  %v785 = vadd.f32 %v783, %v784
  %v786 = vrot.slane %v785, 4
  %v787 = vadd.f32 %v785, %v786
  %v788 = vrot.slane %v787, 2
  %v789 = vadd.f32 %v787, %v788
  %v790 = vrot.slane %v789, 1
  %v791 = vadd.f32 %v789, %v790
  %v792 = vadd.f32 %v273, %v791
  %vm793 = vcmask 57344
  %794 = vst.msk [vmem:[%s1] sm:$0x1] %vm793, %v792
  %v795 = vld [vmem:[%s2] sm:$0x1]
  %v796 = vmul.f32 %v17, %v17
  %v797 = vmul.f32 %v18, %v18
  %v798 = vmul.f32 %v19, %v19
  %v799 = vmul.f32 %v20, %v20
  %v800 = vmul.f32 %v21, %v21
  %v801 = vmul.f32 %v22, %v22
  %v802 = vmul.f32 %v23, %v23
  %v803 = vmul.f32 %v24, %v24
  %v804 = vmul.f32 %v25, %v25
  %v805 = vmul.f32 %v26, %v26
  %v806 = vmul.f32 %v27, %v27
  %v807 = vmul.f32 %v28, %v28
  %v808 = vmul.f32 %v29, %v29
  %v809 = vmul.f32 %v30, %v30
  %v810 = vmul.f32 %v31, %v31
  %v811 = vmul.f32 %v32, %v32
  %v812 = vmul.f32 %v33, %v33
  %v813 = vmul.f32 %v34, %v34
  %v814 = vmul.f32 %v35, %v35
  %v815 = vmul.f32 %v36, %v36
  %v816 = vmul.f32 %v37, %v37
  %v817 = vmul.f32 %v38, %v38
  %v818 = vmul.f32 %v39, %v39
  %v819 = vmul.f32 %v40, %v40
  %v820 = vmul.f32 %v41, %v41
  %v821 = vmul.f32 %v42, %v42
  %v822 = vmul.f32 %v43, %v43
  %v823 = vmul.f32 %v44, %v44
  %v824 = vmul.f32 %v45, %v45
  %v825 = vmul.f32 %v46, %v46
  %v826 = vmul.f32 %v47, %v47
  %v827 = vmul.f32 %v48, %v48
  %v828 = vmul.f32 %v49, %v49
  %v829 = vmul.f32 %v50, %v50
  %v830 = vmul.f32 %v51, %v51
  %v831 = vmul.f32 %v52, %v52
  %v832 = vmul.f32 %v53, %v53
  %v833 = vmul.f32 %v54, %v54
  %v834 = vmul.f32 %v55, %v55
  %v835 = vmul.f32 %v56, %v56
  %v836 = vmul.f32 %v57, %v57
  %v837 = vmul.f32 %v58, %v58
  %v838 = vmul.f32 %v59, %v59
  %v839 = vmul.f32 %v60, %v60
  %v840 = vmul.f32 %v61, %v61
  %v841 = vmul.f32 %v62, %v62
  %v842 = vmul.f32 %v63, %v63
  %v843 = vmul.f32 %v64, %v64
  %v844 = vmul.f32 %v65, %v65
  %v845 = vmul.f32 %v66, %v66
  %v846 = vmul.f32 %v67, %v67
  %v847 = vmul.f32 %v68, %v68
  %v848 = vmul.f32 %v69, %v69
  %v849 = vmul.f32 %v70, %v70
  %v850 = vmul.f32 %v71, %v71
  %v851 = vmul.f32 %v72, %v72
  %v852 = vmul.f32 %v73, %v73
  %v853 = vmul.f32 %v74, %v74
  %v854 = vmul.f32 %v75, %v75
  %v855 = vmul.f32 %v76, %v76
  %v856 = vmul.f32 %v77, %v77
  %v857 = vmul.f32 %v78, %v78
  %v858 = vmul.f32 %v79, %v79
  %v859 = vmul.f32 %v80, %v80
  %v860 = vmul.f32 %v81, %v81
  %v861 = vmul.f32 %v82, %v82
  %v862 = vmul.f32 %v83, %v83
  %v863 = vmul.f32 %v84, %v84
  %v864 = vmul.f32 %v85, %v85
  %v865 = vmul.f32 %v86, %v86
  %v866 = vmul.f32 %v87, %v87
  %v867 = vmul.f32 %v88, %v88
  %v868 = vmul.f32 %v89, %v89
  %v869 = vmul.f32 %v90, %v90
  %v870 = vmul.f32 %v91, %v91
  %v871 = vmul.f32 %v92, %v92
  %v872 = vmul.f32 %v93, %v93
  %v873 = vmul.f32 %v94, %v94
  %v874 = vmul.f32 %v95, %v95
  %v875 = vmul.f32 %v96, %v96
  %v876 = vmul.f32 %v97, %v97
  %v877 = vmul.f32 %v98, %v98
  %v878 = vmul.f32 %v99, %v99
  %v879 = vmul.f32 %v100, %v100
  %v880 = vmul.f32 %v101, %v101
  %v881 = vmul.f32 %v102, %v102
  %v882 = vmul.f32 %v103, %v103
  %v883 = vmul.f32 %v104, %v104
  %v884 = vmul.f32 %v105, %v105
  %v885 = vmul.f32 %v106, %v106
  %v886 = vmul.f32 %v107, %v107
  %v887 = vmul.f32 %v108, %v108
  %v888 = vmul.f32 %v109, %v109
  %v889 = vmul.f32 %v110, %v110
  %v890 = vmul.f32 %v111, %v111
  %v891 = vmul.f32 %v112, %v112
  %v892 = vmul.f32 %v113, %v113
  %v893 = vmul.f32 %v114, %v114
  %v894 = vmul.f32 %v115, %v115
  %v895 = vmul.f32 %v116, %v116
  %v896 = vmul.f32 %v117, %v117
  %v897 = vmul.f32 %v118, %v118
  %v898 = vmul.f32 %v119, %v119
  %v899 = vmul.f32 %v120, %v120
  %v900 = vmul.f32 %v121, %v121
  %v901 = vmul.f32 %v122, %v122
  %v902 = vmul.f32 %v123, %v123
  %v903 = vmul.f32 %v124, %v124
  %v904 = vmul.f32 %v125, %v125
  %v905 = vmul.f32 %v126, %v126
  %v906 = vmul.f32 %v127, %v127
  %v907 = vmul.f32 %v128, %v128
  %v908 = vmul.f32 %v129, %v129
  %v909 = vmul.f32 %v130, %v130
  %v910 = vmul.f32 %v131, %v131
  %v911 = vmul.f32 %v132, %v132
  %v912 = vmul.f32 %v133, %v133
  %v913 = vmul.f32 %v134, %v134
  %v914 = vmul.f32 %v135, %v135
  %v915 = vmul.f32 %v136, %v136
  %v916 = vmul.f32 %v137, %v137
  %v917 = vmul.f32 %v138, %v138
  %v918 = vmul.f32 %v139, %v139
  %v919 = vmul.f32 %v140, %v140
  %v920 = vmul.f32 %v141, %v141
  %v921 = vmul.f32 %v142, %v142
  %v922 = vmul.f32 %v143, %v143
  %v923 = vmul.f32 %v144, %v144
  %v924 = vmul.f32 %v145, %v145
  %v925 = vmul.f32 %v146, %v146
  %v926 = vmul.f32 %v147, %v147
  %v927 = vmul.f32 %v148, %v148
  %v928 = vmul.f32 %v149, %v149
  %v929 = vmul.f32 %v150, %v150
  %v930 = vmul.f32 %v151, %v151
  %v931 = vmul.f32 %v152, %v152
  %v932 = vmul.f32 %v153, %v153
  %v933 = vmul.f32 %v154, %v154
  %v934 = vmul.f32 %v155, %v155
  %v935 = vmul.f32 %v156, %v156
  %v936 = vmul.f32 %v157, %v157
  %v937 = vmul.f32 %v158, %v158
  %v938 = vmul.f32 %v159, %v159
  %v939 = vmul.f32 %v160, %v160
  %v940 = vmul.f32 %v161, %v161
  %v941 = vmul.f32 %v162, %v162
  %v942 = vmul.f32 %v163, %v163
  %v943 = vmul.f32 %v164, %v164
  %v944 = vmul.f32 %v165, %v165
  %v945 = vmul.f32 %v166, %v166
  %v946 = vmul.f32 %v167, %v167
  %v947 = vmul.f32 %v168, %v168
  %v948 = vmul.f32 %v169, %v169
  %v949 = vmul.f32 %v170, %v170
  %v950 = vmul.f32 %v171, %v171
  %v951 = vmul.f32 %v172, %v172
  %v952 = vmul.f32 %v173, %v173
  %v953 = vmul.f32 %v174, %v174
  %v954 = vmul.f32 %v175, %v175
  %v955 = vmul.f32 %v176, %v176
  %v956 = vmul.f32 %v177, %v177
  %v957 = vmul.f32 %v178, %v178
  %v958 = vmul.f32 %v179, %v179
  %v959 = vmul.f32 %v180, %v180
  %v960 = vmul.f32 %v181, %v181
  %v961 = vmul.f32 %v182, %v182
  %v962 = vmul.f32 %v183, %v183
  %v963 = vmul.f32 %v184, %v184
  %v964 = vmul.f32 %v185, %v185
  %v965 = vmul.f32 %v186, %v186
  %v966 = vmul.f32 %v187, %v187
  %v967 = vmul.f32 %v188, %v188
  %v968 = vmul.f32 %v189, %v189
  %v969 = vmul.f32 %v190, %v190
  %v970 = vmul.f32 %v191, %v191
  %v971 = vmul.f32 %v192, %v192
  %v972 = vmul.f32 %v193, %v193
  %v973 = vmul.f32 %v194, %v194
  %v974 = vmul.f32 %v195, %v195
  %v975 = vmul.f32 %v196, %v196
  %v976 = vmul.f32 %v197, %v197
  %v977 = vmul.f32 %v198, %v198
  %v978 = vmul.f32 %v199, %v199
  %v979 = vmul.f32 %v200, %v200
  %v980 = vmul.f32 %v201, %v201
  %v981 = vmul.f32 %v202, %v202
  %v982 = vmul.f32 %v203, %v203
  %v983 = vmul.f32 %v204, %v204
  %v984 = vmul.f32 %v205, %v205
  %v985 = vmul.f32 %v206, %v206
  %v986 = vmul.f32 %v207, %v207
  %v987 = vmul.f32 %v208, %v208
  %v988 = vmul.f32 %v209, %v209
  %v989 = vmul.f32 %v210, %v210
  %v990 = vmul.f32 %v211, %v211
  %v991 = vmul.f32 %v212, %v212
  %v992 = vmul.f32 %v213, %v213
  %v993 = vmul.f32 %v214, %v214
  %v994 = vmul.f32 %v215, %v215
  %v995 = vmul.f32 %v216, %v216
  %v996 = vmul.f32 %v217, %v217
  %v997 = vmul.f32 %v218, %v218
  %v998 = vmul.f32 %v219, %v219
  %v999 = vmul.f32 %v220, %v220
  %v1000 = vmul.f32 %v221, %v221
  %v1001 = vmul.f32 %v222, %v222
  %v1002 = vmul.f32 %v223, %v223
  %v1003 = vmul.f32 %v224, %v224
  %v1004 = vmul.f32 %v225, %v225
  %v1005 = vmul.f32 %v226, %v226
  %v1006 = vmul.f32 %v227, %v227
  %v1007 = vmul.f32 %v228, %v228
  %v1008 = vmul.f32 %v229, %v229
  %v1009 = vmul.f32 %v230, %v230
  %v1010 = vmul.f32 %v231, %v231
  %v1011 = vmul.f32 %v232, %v232
  %v1012 = vmul.f32 %v233, %v233
  %v1013 = vmul.f32 %v234, %v234
  %v1014 = vmul.f32 %v235, %v235
  %v1015 = vmul.f32 %v236, %v236
  %v1016 = vmul.f32 %v237, %v237
  %v1017 = vmul.f32 %v238, %v238
  %v1018 = vmul.f32 %v239, %v239
  %v1019 = vmul.f32 %v240, %v240
  %v1020 = vmul.f32 %v241, %v241
  %v1021 = vmul.f32 %v242, %v242
  %v1022 = vmul.f32 %v243, %v243
  %v1023 = vmul.f32 %v244, %v244
  %v1024 = vmul.f32 %v245, %v245
  %v1025 = vmul.f32 %v246, %v246
  %v1026 = vmul.f32 %v247, %v247
  %v1027 = vmul.f32 %v248, %v248
  %v1028 = vmul.f32 %v249, %v249
  %v1029 = vmul.f32 %v250, %v250
  %v1030 = vmul.f32 %v251, %v251
  %v1031 = vmul.f32 %v252, %v252
  %v1032 = vmul.f32 %v253, %v253
  %v1033 = vmul.f32 %v254, %v254
  %v1034 = vmul.f32 %v255, %v255
  %v1035 = vmul.f32 %v256, %v256
  %v1036 = vmul.f32 %v257, %v257
  %v1037 = vmul.f32 %v258, %v258
  %v1038 = vmul.f32 %v259, %v259
  %v1039 = vmul.f32 %v260, %v260
  %v1040 = vmul.f32 %v261, %v261
  %v1041 = vmul.f32 %v262, %v262
  %v1042 = vmul.f32 %v263, %v263
  %v1043 = vmul.f32 %v264, %v264
  %v1044 = vmul.f32 %v265, %v265
  %v1045 = vmul.f32 %v266, %v266
  %v1046 = vmul.f32 %v267, %v267
  %v1047 = vmul.f32 %v268, %v268
  %v1048 = vmul.f32 %v269, %v269
  %v1049 = vmul.f32 %v270, %v270
  %v1050 = vmul.f32 %v271, %v271
  %v1051 = vmul.f32 %v272, %v272
  %v1052 = vsel %vm274, %v796, 0.0
  %v1053 = vsel %vm274, %v797, 0.0
  %v1054 = vadd.f32 %v1052, %v1053
  %v1055 = vsel %vm274, %v798, 0.0
  %v1056 = vadd.f32 %v1054, %v1055
  %v1057 = vsel %vm274, %v799, 0.0
  %v1058 = vadd.f32 %v1056, %v1057
  %v1059 = vsel %vm274, %v800, 0.0
  %v1060 = vadd.f32 %v1058, %v1059
  %v1061 = vsel %vm274, %v801, 0.0
  %v1062 = vadd.f32 %v1060, %v1061
  %v1063 = vsel %vm274, %v802, 0.0
  %v1064 = vadd.f32 %v1062, %v1063
  %v1065 = vsel %vm274, %v803, 0.0
  %v1066 = vadd.f32 %v1064, %v1065
  %v1067 = vsel %vm274, %v804, 0.0
  %v1068 = vadd.f32 %v1066, %v1067
  %v1069 = vsel %vm274, %v805, 0.0
  %v1070 = vadd.f32 %v1068, %v1069
  %v1071 = vsel %vm274, %v806, 0.0
  %v1072 = vadd.f32 %v1070, %v1071
  %v1073 = vsel %vm274, %v807, 0.0
  %v1074 = vadd.f32 %v1072, %v1073
  %v1075 = vsel %vm274, %v808, 0.0
  %v1076 = vadd.f32 %v1074, %v1075
  %v1077 = vsel %vm274, %v809, 0.0
  %v1078 = vadd.f32 %v1076, %v1077
  %v1079 = vsel %vm274, %v810, 0.0
  %v1080 = vadd.f32 %v1078, %v1079
  %v1081 = vsel %vm274, %v811, 0.0
  %v1082 = vadd.f32 %v1080, %v1081
  %v1083 = vsel %vm274, %v812, 0.0
  %v1084 = vadd.f32 %v1082, %v1083
  %v1085 = vsel %vm274, %v813, 0.0
  %v1086 = vadd.f32 %v1084, %v1085
  %v1087 = vsel %vm274, %v814, 0.0
  %v1088 = vadd.f32 %v1086, %v1087
  %v1089 = vsel %vm274, %v815, 0.0
  %v1090 = vadd.f32 %v1088, %v1089
  %v1091 = vsel %vm274, %v816, 0.0
  %v1092 = vadd.f32 %v1090, %v1091
  %v1093 = vsel %vm274, %v817, 0.0
  %v1094 = vadd.f32 %v1092, %v1093
  %v1095 = vsel %vm274, %v818, 0.0
  %v1096 = vadd.f32 %v1094, %v1095
  %v1097 = vsel %vm274, %v819, 0.0
  %v1098 = vadd.f32 %v1096, %v1097
  %v1099 = vsel %vm274, %v820, 0.0
  %v1100 = vadd.f32 %v1098, %v1099
  %v1101 = vsel %vm274, %v821, 0.0
  %v1102 = vadd.f32 %v1100, %v1101
  %v1103 = vsel %vm274, %v822, 0.0
  %v1104 = vadd.f32 %v1102, %v1103
  %v1105 = vsel %vm274, %v823, 0.0
  %v1106 = vadd.f32 %v1104, %v1105
  %v1107 = vsel %vm274, %v824, 0.0
  %v1108 = vadd.f32 %v1106, %v1107
  %v1109 = vsel %vm274, %v825, 0.0
  %v1110 = vadd.f32 %v1108, %v1109
  %v1111 = vsel %vm274, %v826, 0.0
  %v1112 = vadd.f32 %v1110, %v1111
  %v1113 = vsel %vm274, %v827, 0.0
  %v1114 = vadd.f32 %v1112, %v1113
  %v1115 = vsel %vm274, %v828, 0.0
  %v1116 = vadd.f32 %v1114, %v1115
  %v1117 = vsel %vm274, %v829, 0.0
  %v1118 = vadd.f32 %v1116, %v1117
  %v1119 = vsel %vm274, %v830, 0.0
  %v1120 = vadd.f32 %v1118, %v1119
  %v1121 = vsel %vm274, %v831, 0.0
  %v1122 = vadd.f32 %v1120, %v1121
  %v1123 = vsel %vm274, %v832, 0.0
  %v1124 = vadd.f32 %v1122, %v1123
  %v1125 = vsel %vm274, %v833, 0.0
  %v1126 = vadd.f32 %v1124, %v1125
  %v1127 = vsel %vm274, %v834, 0.0
  %v1128 = vadd.f32 %v1126, %v1127
  %v1129 = vsel %vm274, %v835, 0.0
  %v1130 = vadd.f32 %v1128, %v1129
  %v1131 = vsel %vm274, %v836, 0.0
  %v1132 = vadd.f32 %v1130, %v1131
  %v1133 = vsel %vm274, %v837, 0.0
  %v1134 = vadd.f32 %v1132, %v1133
  %v1135 = vsel %vm274, %v838, 0.0
  %v1136 = vadd.f32 %v1134, %v1135
  %v1137 = vsel %vm274, %v839, 0.0
  %v1138 = vadd.f32 %v1136, %v1137
  %v1139 = vsel %vm274, %v840, 0.0
  %v1140 = vadd.f32 %v1138, %v1139
  %v1141 = vsel %vm274, %v841, 0.0
  %v1142 = vadd.f32 %v1140, %v1141
  %v1143 = vsel %vm274, %v842, 0.0
  %v1144 = vadd.f32 %v1142, %v1143
  %v1145 = vsel %vm274, %v843, 0.0
  %v1146 = vadd.f32 %v1144, %v1145
  %v1147 = vsel %vm274, %v844, 0.0
  %v1148 = vadd.f32 %v1146, %v1147
  %v1149 = vsel %vm274, %v845, 0.0
  %v1150 = vadd.f32 %v1148, %v1149
  %v1151 = vsel %vm274, %v846, 0.0
  %v1152 = vadd.f32 %v1150, %v1151
  %v1153 = vsel %vm274, %v847, 0.0
  %v1154 = vadd.f32 %v1152, %v1153
  %v1155 = vsel %vm274, %v848, 0.0
  %v1156 = vadd.f32 %v1154, %v1155
  %v1157 = vsel %vm274, %v849, 0.0
  %v1158 = vadd.f32 %v1156, %v1157
  %v1159 = vsel %vm274, %v850, 0.0
  %v1160 = vadd.f32 %v1158, %v1159
  %v1161 = vsel %vm274, %v851, 0.0
  %v1162 = vadd.f32 %v1160, %v1161
  %v1163 = vsel %vm274, %v852, 0.0
  %v1164 = vadd.f32 %v1162, %v1163
  %v1165 = vsel %vm274, %v853, 0.0
  %v1166 = vadd.f32 %v1164, %v1165
  %v1167 = vsel %vm274, %v854, 0.0
  %v1168 = vadd.f32 %v1166, %v1167
  %v1169 = vsel %vm274, %v855, 0.0
  %v1170 = vadd.f32 %v1168, %v1169
  %v1171 = vsel %vm274, %v856, 0.0
  %v1172 = vadd.f32 %v1170, %v1171
  %v1173 = vsel %vm274, %v857, 0.0
  %v1174 = vadd.f32 %v1172, %v1173
  %v1175 = vsel %vm274, %v858, 0.0
  %v1176 = vadd.f32 %v1174, %v1175
  %v1177 = vsel %vm274, %v859, 0.0
  %v1178 = vadd.f32 %v1176, %v1177
  %v1179 = vsel %vm274, %v860, 0.0
  %v1180 = vadd.f32 %v1178, %v1179
  %v1181 = vsel %vm274, %v861, 0.0
  %v1182 = vadd.f32 %v1180, %v1181
  %v1183 = vsel %vm274, %v862, 0.0
  %v1184 = vadd.f32 %v1182, %v1183
  %v1185 = vsel %vm274, %v863, 0.0
  %v1186 = vadd.f32 %v1184, %v1185
  %v1187 = vsel %vm274, %v864, 0.0
  %v1188 = vadd.f32 %v1186, %v1187
  %v1189 = vsel %vm274, %v865, 0.0
  %v1190 = vadd.f32 %v1188, %v1189
  %v1191 = vsel %vm274, %v866, 0.0
  %v1192 = vadd.f32 %v1190, %v1191
  %v1193 = vsel %vm274, %v867, 0.0
  %v1194 = vadd.f32 %v1192, %v1193
  %v1195 = vsel %vm274, %v868, 0.0
  %v1196 = vadd.f32 %v1194, %v1195
  %v1197 = vsel %vm274, %v869, 0.0
  %v1198 = vadd.f32 %v1196, %v1197
  %v1199 = vsel %vm274, %v870, 0.0
  %v1200 = vadd.f32 %v1198, %v1199
  %v1201 = vsel %vm274, %v871, 0.0
  %v1202 = vadd.f32 %v1200, %v1201
  %v1203 = vsel %vm274, %v872, 0.0
  %v1204 = vadd.f32 %v1202, %v1203
  %v1205 = vsel %vm274, %v873, 0.0
  %v1206 = vadd.f32 %v1204, %v1205
  %v1207 = vsel %vm274, %v874, 0.0
  %v1208 = vadd.f32 %v1206, %v1207
  %v1209 = vsel %vm274, %v875, 0.0
  %v1210 = vadd.f32 %v1208, %v1209
  %v1211 = vsel %vm274, %v876, 0.0
  %v1212 = vadd.f32 %v1210, %v1211
  %v1213 = vsel %vm274, %v877, 0.0
  %v1214 = vadd.f32 %v1212, %v1213
  %v1215 = vsel %vm274, %v878, 0.0
  %v1216 = vadd.f32 %v1214, %v1215
  %v1217 = vsel %vm274, %v879, 0.0
  %v1218 = vadd.f32 %v1216, %v1217
  %v1219 = vsel %vm274, %v880, 0.0
  %v1220 = vadd.f32 %v1218, %v1219
  %v1221 = vsel %vm274, %v881, 0.0
  %v1222 = vadd.f32 %v1220, %v1221
  %v1223 = vsel %vm274, %v882, 0.0
  %v1224 = vadd.f32 %v1222, %v1223
  %v1225 = vsel %vm274, %v883, 0.0
  %v1226 = vadd.f32 %v1224, %v1225
  %v1227 = vsel %vm274, %v884, 0.0
  %v1228 = vadd.f32 %v1226, %v1227
  %v1229 = vsel %vm274, %v885, 0.0
  %v1230 = vadd.f32 %v1228, %v1229
  %v1231 = vsel %vm274, %v886, 0.0
  %v1232 = vadd.f32 %v1230, %v1231
  %v1233 = vsel %vm274, %v887, 0.0
  %v1234 = vadd.f32 %v1232, %v1233
  %v1235 = vsel %vm274, %v888, 0.0
  %v1236 = vadd.f32 %v1234, %v1235
  %v1237 = vsel %vm274, %v889, 0.0
  %v1238 = vadd.f32 %v1236, %v1237
  %v1239 = vsel %vm274, %v890, 0.0
  %v1240 = vadd.f32 %v1238, %v1239
  %v1241 = vsel %vm274, %v891, 0.0
  %v1242 = vadd.f32 %v1240, %v1241
  %v1243 = vsel %vm274, %v892, 0.0
  %v1244 = vadd.f32 %v1242, %v1243
  %v1245 = vsel %vm274, %v893, 0.0
  %v1246 = vadd.f32 %v1244, %v1245
  %v1247 = vsel %vm274, %v894, 0.0
  %v1248 = vadd.f32 %v1246, %v1247
  %v1249 = vsel %vm274, %v895, 0.0
  %v1250 = vadd.f32 %v1248, %v1249
  %v1251 = vsel %vm274, %v896, 0.0
  %v1252 = vadd.f32 %v1250, %v1251
  %v1253 = vsel %vm274, %v897, 0.0
  %v1254 = vadd.f32 %v1252, %v1253
  %v1255 = vsel %vm274, %v898, 0.0
  %v1256 = vadd.f32 %v1254, %v1255
  %v1257 = vsel %vm274, %v899, 0.0
  %v1258 = vadd.f32 %v1256, %v1257
  %v1259 = vsel %vm274, %v900, 0.0
  %v1260 = vadd.f32 %v1258, %v1259
  %v1261 = vsel %vm274, %v901, 0.0
  %v1262 = vadd.f32 %v1260, %v1261
  %v1263 = vsel %vm274, %v902, 0.0
  %v1264 = vadd.f32 %v1262, %v1263
  %v1265 = vsel %vm274, %v903, 0.0
  %v1266 = vadd.f32 %v1264, %v1265
  %v1267 = vsel %vm274, %v904, 0.0
  %v1268 = vadd.f32 %v1266, %v1267
  %v1269 = vsel %vm274, %v905, 0.0
  %v1270 = vadd.f32 %v1268, %v1269
  %v1271 = vsel %vm274, %v906, 0.0
  %v1272 = vadd.f32 %v1270, %v1271
  %v1273 = vsel %vm274, %v907, 0.0
  %v1274 = vadd.f32 %v1272, %v1273
  %v1275 = vsel %vm274, %v908, 0.0
  %v1276 = vadd.f32 %v1274, %v1275
  %v1277 = vsel %vm274, %v909, 0.0
  %v1278 = vadd.f32 %v1276, %v1277
  %v1279 = vsel %vm274, %v910, 0.0
  %v1280 = vadd.f32 %v1278, %v1279
  %v1281 = vsel %vm274, %v911, 0.0
  %v1282 = vadd.f32 %v1280, %v1281
  %v1283 = vsel %vm274, %v912, 0.0
  %v1284 = vadd.f32 %v1282, %v1283
  %v1285 = vsel %vm274, %v913, 0.0
  %v1286 = vadd.f32 %v1284, %v1285
  %v1287 = vsel %vm274, %v914, 0.0
  %v1288 = vadd.f32 %v1286, %v1287
  %v1289 = vsel %vm274, %v915, 0.0
  %v1290 = vadd.f32 %v1288, %v1289
  %v1291 = vsel %vm274, %v916, 0.0
  %v1292 = vadd.f32 %v1290, %v1291
  %v1293 = vsel %vm274, %v917, 0.0
  %v1294 = vadd.f32 %v1292, %v1293
  %v1295 = vsel %vm274, %v918, 0.0
  %v1296 = vadd.f32 %v1294, %v1295
  %v1297 = vsel %vm274, %v919, 0.0
  %v1298 = vadd.f32 %v1296, %v1297
  %v1299 = vsel %vm274, %v920, 0.0
  %v1300 = vadd.f32 %v1298, %v1299
  %v1301 = vsel %vm274, %v921, 0.0
  %v1302 = vadd.f32 %v1300, %v1301
  %v1303 = vsel %vm274, %v922, 0.0
  %v1304 = vadd.f32 %v1302, %v1303
  %v1305 = vsel %vm274, %v923, 0.0
  %v1306 = vadd.f32 %v1304, %v1305
  %v1307 = vsel %vm274, %v924, 0.0
  %v1308 = vadd.f32 %v1306, %v1307
  %v1309 = vsel %vm274, %v925, 0.0
  %v1310 = vadd.f32 %v1308, %v1309
  %v1311 = vsel %vm274, %v926, 0.0
  %v1312 = vadd.f32 %v1310, %v1311
  %v1313 = vsel %vm274, %v927, 0.0
  %v1314 = vadd.f32 %v1312, %v1313
  %v1315 = vsel %vm274, %v928, 0.0
  %v1316 = vadd.f32 %v1314, %v1315
  %v1317 = vsel %vm274, %v929, 0.0
  %v1318 = vadd.f32 %v1316, %v1317
  %v1319 = vsel %vm274, %v930, 0.0
  %v1320 = vadd.f32 %v1318, %v1319
  %v1321 = vsel %vm274, %v931, 0.0
  %v1322 = vadd.f32 %v1320, %v1321
  %v1323 = vsel %vm274, %v932, 0.0
  %v1324 = vadd.f32 %v1322, %v1323
  %v1325 = vsel %vm274, %v933, 0.0
  %v1326 = vadd.f32 %v1324, %v1325
  %v1327 = vsel %vm274, %v934, 0.0
  %v1328 = vadd.f32 %v1326, %v1327
  %v1329 = vsel %vm274, %v935, 0.0
  %v1330 = vadd.f32 %v1328, %v1329
  %v1331 = vsel %vm274, %v936, 0.0
  %v1332 = vadd.f32 %v1330, %v1331
  %v1333 = vsel %vm274, %v937, 0.0
  %v1334 = vadd.f32 %v1332, %v1333
  %v1335 = vsel %vm274, %v938, 0.0
  %v1336 = vadd.f32 %v1334, %v1335
  %v1337 = vsel %vm274, %v939, 0.0
  %v1338 = vadd.f32 %v1336, %v1337
  %v1339 = vsel %vm274, %v940, 0.0
  %v1340 = vadd.f32 %v1338, %v1339
  %v1341 = vsel %vm274, %v941, 0.0
  %v1342 = vadd.f32 %v1340, %v1341
  %v1343 = vsel %vm274, %v942, 0.0
  %v1344 = vadd.f32 %v1342, %v1343
  %v1345 = vsel %vm274, %v943, 0.0
  %v1346 = vadd.f32 %v1344, %v1345
  %v1347 = vsel %vm274, %v944, 0.0
  %v1348 = vadd.f32 %v1346, %v1347
  %v1349 = vsel %vm274, %v945, 0.0
  %v1350 = vadd.f32 %v1348, %v1349
  %v1351 = vsel %vm274, %v946, 0.0
  %v1352 = vadd.f32 %v1350, %v1351
  %v1353 = vsel %vm274, %v947, 0.0
  %v1354 = vadd.f32 %v1352, %v1353
  %v1355 = vsel %vm274, %v948, 0.0
  %v1356 = vadd.f32 %v1354, %v1355
  %v1357 = vsel %vm274, %v949, 0.0
  %v1358 = vadd.f32 %v1356, %v1357
  %v1359 = vsel %vm274, %v950, 0.0
  %v1360 = vadd.f32 %v1358, %v1359
  %v1361 = vsel %vm274, %v951, 0.0
  %v1362 = vadd.f32 %v1360, %v1361
  %v1363 = vsel %vm274, %v952, 0.0
  %v1364 = vadd.f32 %v1362, %v1363
  %v1365 = vsel %vm274, %v953, 0.0
  %v1366 = vadd.f32 %v1364, %v1365
  %v1367 = vsel %vm274, %v954, 0.0
  %v1368 = vadd.f32 %v1366, %v1367
  %v1369 = vsel %vm274, %v955, 0.0
  %v1370 = vadd.f32 %v1368, %v1369
  %v1371 = vsel %vm274, %v956, 0.0
  %v1372 = vadd.f32 %v1370, %v1371
  %v1373 = vsel %vm274, %v957, 0.0
  %v1374 = vadd.f32 %v1372, %v1373
  %v1375 = vsel %vm274, %v958, 0.0
  %v1376 = vadd.f32 %v1374, %v1375
  %v1377 = vsel %vm274, %v959, 0.0
  %v1378 = vadd.f32 %v1376, %v1377
  %v1379 = vsel %vm274, %v960, 0.0
  %v1380 = vadd.f32 %v1378, %v1379
  %v1381 = vsel %vm274, %v961, 0.0
  %v1382 = vadd.f32 %v1380, %v1381
  %v1383 = vsel %vm274, %v962, 0.0
  %v1384 = vadd.f32 %v1382, %v1383
  %v1385 = vsel %vm274, %v963, 0.0
  %v1386 = vadd.f32 %v1384, %v1385
  %v1387 = vsel %vm274, %v964, 0.0
  %v1388 = vadd.f32 %v1386, %v1387
  %v1389 = vsel %vm274, %v965, 0.0
  %v1390 = vadd.f32 %v1388, %v1389
  %v1391 = vsel %vm274, %v966, 0.0
  %v1392 = vadd.f32 %v1390, %v1391
  %v1393 = vsel %vm274, %v967, 0.0
  %v1394 = vadd.f32 %v1392, %v1393
  %v1395 = vsel %vm274, %v968, 0.0
  %v1396 = vadd.f32 %v1394, %v1395
  %v1397 = vsel %vm274, %v969, 0.0
  %v1398 = vadd.f32 %v1396, %v1397
  %v1399 = vsel %vm274, %v970, 0.0
  %v1400 = vadd.f32 %v1398, %v1399
  %v1401 = vsel %vm274, %v971, 0.0
  %v1402 = vadd.f32 %v1400, %v1401
  %v1403 = vsel %vm274, %v972, 0.0
  %v1404 = vadd.f32 %v1402, %v1403
  %v1405 = vsel %vm274, %v973, 0.0
  %v1406 = vadd.f32 %v1404, %v1405
  %v1407 = vsel %vm274, %v974, 0.0
  %v1408 = vadd.f32 %v1406, %v1407
  %v1409 = vsel %vm274, %v975, 0.0
  %v1410 = vadd.f32 %v1408, %v1409
  %v1411 = vsel %vm274, %v976, 0.0
  %v1412 = vadd.f32 %v1410, %v1411
  %v1413 = vsel %vm274, %v977, 0.0
  %v1414 = vadd.f32 %v1412, %v1413
  %v1415 = vsel %vm274, %v978, 0.0
  %v1416 = vadd.f32 %v1414, %v1415
  %v1417 = vsel %vm274, %v979, 0.0
  %v1418 = vadd.f32 %v1416, %v1417
  %v1419 = vsel %vm274, %v980, 0.0
  %v1420 = vadd.f32 %v1418, %v1419
  %v1421 = vsel %vm274, %v981, 0.0
  %v1422 = vadd.f32 %v1420, %v1421
  %v1423 = vsel %vm274, %v982, 0.0
  %v1424 = vadd.f32 %v1422, %v1423
  %v1425 = vsel %vm274, %v983, 0.0
  %v1426 = vadd.f32 %v1424, %v1425
  %v1427 = vsel %vm274, %v984, 0.0
  %v1428 = vadd.f32 %v1426, %v1427
  %v1429 = vsel %vm274, %v985, 0.0
  %v1430 = vadd.f32 %v1428, %v1429
  %v1431 = vsel %vm274, %v986, 0.0
  %v1432 = vadd.f32 %v1430, %v1431
  %v1433 = vsel %vm274, %v987, 0.0
  %v1434 = vadd.f32 %v1432, %v1433
  %v1435 = vsel %vm274, %v988, 0.0
  %v1436 = vadd.f32 %v1434, %v1435
  %v1437 = vsel %vm274, %v989, 0.0
  %v1438 = vadd.f32 %v1436, %v1437
  %v1439 = vsel %vm274, %v990, 0.0
  %v1440 = vadd.f32 %v1438, %v1439
  %v1441 = vsel %vm274, %v991, 0.0
  %v1442 = vadd.f32 %v1440, %v1441
  %v1443 = vsel %vm274, %v992, 0.0
  %v1444 = vadd.f32 %v1442, %v1443
  %v1445 = vsel %vm274, %v993, 0.0
  %v1446 = vadd.f32 %v1444, %v1445
  %v1447 = vsel %vm274, %v994, 0.0
  %v1448 = vadd.f32 %v1446, %v1447
  %v1449 = vsel %vm274, %v995, 0.0
  %v1450 = vadd.f32 %v1448, %v1449
  %v1451 = vsel %vm274, %v996, 0.0
  %v1452 = vadd.f32 %v1450, %v1451
  %v1453 = vsel %vm274, %v997, 0.0
  %v1454 = vadd.f32 %v1452, %v1453
  %v1455 = vsel %vm274, %v998, 0.0
  %v1456 = vadd.f32 %v1454, %v1455
  %v1457 = vsel %vm274, %v999, 0.0
  %v1458 = vadd.f32 %v1456, %v1457
  %v1459 = vsel %vm274, %v1000, 0.0
  %v1460 = vadd.f32 %v1458, %v1459
  %v1461 = vsel %vm274, %v1001, 0.0
  %v1462 = vadd.f32 %v1460, %v1461
  %v1463 = vsel %vm274, %v1002, 0.0
  %v1464 = vadd.f32 %v1462, %v1463
  %v1465 = vsel %vm274, %v1003, 0.0
  %v1466 = vadd.f32 %v1464, %v1465
  %v1467 = vsel %vm274, %v1004, 0.0
  %v1468 = vadd.f32 %v1466, %v1467
  %v1469 = vsel %vm274, %v1005, 0.0
  %v1470 = vadd.f32 %v1468, %v1469
  %v1471 = vsel %vm274, %v1006, 0.0
  %v1472 = vadd.f32 %v1470, %v1471
  %v1473 = vsel %vm274, %v1007, 0.0
  %v1474 = vadd.f32 %v1472, %v1473
  %v1475 = vsel %vm274, %v1008, 0.0
  %v1476 = vadd.f32 %v1474, %v1475
  %v1477 = vsel %vm274, %v1009, 0.0
  %v1478 = vadd.f32 %v1476, %v1477
  %v1479 = vsel %vm274, %v1010, 0.0
  %v1480 = vadd.f32 %v1478, %v1479
  %v1481 = vsel %vm274, %v1011, 0.0
  %v1482 = vadd.f32 %v1480, %v1481
  %v1483 = vsel %vm274, %v1012, 0.0
  %v1484 = vadd.f32 %v1482, %v1483
  %v1485 = vsel %vm274, %v1013, 0.0
  %v1486 = vadd.f32 %v1484, %v1485
  %v1487 = vsel %vm274, %v1014, 0.0
  %v1488 = vadd.f32 %v1486, %v1487
  %v1489 = vsel %vm274, %v1015, 0.0
  %v1490 = vadd.f32 %v1488, %v1489
  %v1491 = vsel %vm274, %v1016, 0.0
  %v1492 = vadd.f32 %v1490, %v1491
  %v1493 = vsel %vm274, %v1017, 0.0
  %v1494 = vadd.f32 %v1492, %v1493
  %v1495 = vsel %vm274, %v1018, 0.0
  %v1496 = vadd.f32 %v1494, %v1495
  %v1497 = vsel %vm274, %v1019, 0.0
  %v1498 = vadd.f32 %v1496, %v1497
  %v1499 = vsel %vm274, %v1020, 0.0
  %v1500 = vadd.f32 %v1498, %v1499
  %v1501 = vsel %vm274, %v1021, 0.0
  %v1502 = vadd.f32 %v1500, %v1501
  %v1503 = vsel %vm274, %v1022, 0.0
  %v1504 = vadd.f32 %v1502, %v1503
  %v1505 = vsel %vm274, %v1023, 0.0
  %v1506 = vadd.f32 %v1504, %v1505
  %v1507 = vsel %vm274, %v1024, 0.0
  %v1508 = vadd.f32 %v1506, %v1507
  %v1509 = vsel %vm274, %v1025, 0.0
  %v1510 = vadd.f32 %v1508, %v1509
  %v1511 = vsel %vm274, %v1026, 0.0
  %v1512 = vadd.f32 %v1510, %v1511
  %v1513 = vsel %vm274, %v1027, 0.0
  %v1514 = vadd.f32 %v1512, %v1513
  %v1515 = vsel %vm274, %v1028, 0.0
  %v1516 = vadd.f32 %v1514, %v1515
  %v1517 = vsel %vm274, %v1029, 0.0
  %v1518 = vadd.f32 %v1516, %v1517
  %v1519 = vsel %vm274, %v1030, 0.0
  %v1520 = vadd.f32 %v1518, %v1519
  %v1521 = vsel %vm274, %v1031, 0.0
  %v1522 = vadd.f32 %v1520, %v1521
  %v1523 = vsel %vm274, %v1032, 0.0
  %v1524 = vadd.f32 %v1522, %v1523
  %v1525 = vsel %vm274, %v1033, 0.0
  %v1526 = vadd.f32 %v1524, %v1525
  %v1527 = vsel %vm274, %v1034, 0.0
  %v1528 = vadd.f32 %v1526, %v1527
  %v1529 = vsel %vm274, %v1035, 0.0
  %v1530 = vadd.f32 %v1528, %v1529
  %v1531 = vsel %vm274, %v1036, 0.0
  %v1532 = vadd.f32 %v1530, %v1531
  %v1533 = vsel %vm274, %v1037, 0.0
  %v1534 = vadd.f32 %v1532, %v1533
  %v1535 = vsel %vm274, %v1038, 0.0
  %v1536 = vadd.f32 %v1534, %v1535
  %v1537 = vsel %vm274, %v1039, 0.0
  %v1538 = vadd.f32 %v1536, %v1537
  %v1539 = vsel %vm274, %v1040, 0.0
  %v1540 = vadd.f32 %v1538, %v1539
  %v1541 = vsel %vm274, %v1041, 0.0
  %v1542 = vadd.f32 %v1540, %v1541
  %v1543 = vsel %vm274, %v1042, 0.0
  %v1544 = vadd.f32 %v1542, %v1543
  %v1545 = vsel %vm274, %v1043, 0.0
  %v1546 = vadd.f32 %v1544, %v1545
  %v1547 = vsel %vm274, %v1044, 0.0
  %v1548 = vadd.f32 %v1546, %v1547
  %v1549 = vsel %vm274, %v1045, 0.0
  %v1550 = vadd.f32 %v1548, %v1549
  %v1551 = vsel %vm274, %v1046, 0.0
  %v1552 = vadd.f32 %v1550, %v1551
  %v1553 = vsel %vm274, %v1047, 0.0
  %v1554 = vadd.f32 %v1552, %v1553
  %v1555 = vsel %vm274, %v1048, 0.0
  %v1556 = vadd.f32 %v1554, %v1555
  %v1557 = vsel %vm274, %v1049, 0.0
  %v1558 = vadd.f32 %v1556, %v1557
  %v1559 = vsel %vm274, %v1050, 0.0
  %v1560 = vadd.f32 %v1558, %v1559
  %v1561 = vsel %vm274, %v1051, 0.0
  %v1562 = vadd.f32 %v1560, %v1561
  %v1563 = vrot.slane %v1562, 4
  %v1564 = vadd.f32 %v1562, %v1563
  %v1565 = vrot.slane %v1564, 2
  %v1566 = vadd.f32 %v1564, %v1565
  %v1567 = vrot.slane %v1566, 1
  %v1568 = vadd.f32 %v1566, %v1567
  %v1569 = vadd.f32 %v795, %v1568
  %1570 = vst.msk [vmem:[%s2] sm:$0x1] %vm793, %v1569
  // Predicated region
  $region10: #{generator_forward.17} parent=0 // pred_check
    _
  $region11: #{generator_forward.17} parent=0 // pred_check_branch
    %1572 = sbr.rel (0) target = $region13
  $region12: #{generator_forward.17} parent=0 // pred_region
    _
  $region13: #{generator_forward.17} parent=0 // pred_fallthru
    _
  // Predicated region
  $region14: #{generator_forward.17} parent=0 // pred_check
    _
  $region15: #{generator_forward.17} parent=0 // pred_check_branch
    %1574 = sbr.rel (0) target = $region17
  $region16: #{generator_forward.17} parent=0 // pred_region
    _
  $region17: #{generator_forward.17} parent=0 // pred_fallthru
    _
  // Predicated region
  $region18: #{generator_forward.17} parent=0 // pred_check
    _
  $region19: #{generator_forward.17} parent=0 // pred_check_branch
    %1576 = sbr.rel (0) target = $region21
  $region20: #{generator_forward.17} parent=0 // pred_region
    _
  $region21: #{generator_forward.17} parent=0 // pred_fallthru
    _
  // Predicated region
  $region22: #{generator_forward.17} parent=0 // pred_check
    _
  $region23: #{generator_forward.17} parent=0 // pred_check_branch
    %1578 = sbr.rel (0) target = $region25
  $region24: #{generator_forward.17} parent=0 // pred_region
    _
  $region25: #{generator_forward.17} parent=0 // pred_fallthru
    _

// kernel: tile.6
$region0: #{tile.6}
  #allocation0 [shape = 's32[1]{0}', space=sflag, size = 0x4, scoped, tag = 'scoped memory for tile.6']
  %s0 = inlined_call_operand.vmem [shape: f32[3], index: 0, kind: input, shape index: {}]
  %s1 = inlined_call_operand.vmem [shape: f32[64,3], index: 1, kind: output, shape index: {}]
  // Predicated region
  $region2: #{tile.6} parent=0 // pred_check
    _
  $region3: #{tile.6} parent=0 // pred_check_branch
    %3 = sbr.rel (0) target = $region5
  $region4: #{tile.6} parent=0 // pred_region
    _
  $region5: #{tile.6} parent=0 // pred_fallthru
    _
  %v4 = vld [vmem:[%s0] ss:$0 sm:$0xff]
  %5 = vst [vmem:[%s1] sm:$0xff] %v4
  %s6 = scalar_lea.vmem %s1, 8
  %7 = vst [vmem:[%s6] sm:$0xff] %v4
  %s8 = scalar_lea.vmem %s1, 16
  %9 = vst [vmem:[%s8] sm:$0xff] %v4
  %s10 = scalar_lea.vmem %s1, 24
  %11 = vst [vmem:[%s10] sm:$0xff] %v4
  %s12 = scalar_lea.vmem %s1, 32
  %13 = vst [vmem:[%s12] sm:$0xff] %v4
  %s14 = scalar_lea.vmem %s1, 40
  %15 = vst [vmem:[%s14] sm:$0xff] %v4
  %s16 = scalar_lea.vmem %s1, 48
  %17 = vst [vmem:[%s16] sm:$0xff] %v4
  %s18 = scalar_lea.vmem %s1, 56
  %19 = vst [vmem:[%s18] sm:$0xff] %v4

// kernel: tile.7
$region0: #{tile.7}
  %s0 = inlined_call_operand.vmem [shape: f32[64,3], index: 0, kind: input, shape index: {}]
  %s1 = inlined_call_operand.vmem [shape: f32[1,192], index: 1, kind: output, shape index: {}]
  $region1: #{tile.7} parent=0
    #allocation0 [shape = 'u8[8192]{0}', space=vmem, size = 0x2000, scoped, tag = 'scoped mem for output reshape']
    %v2 = vld [vmem:[%s0] sm:$0x1]
    %vm3 = vcmask 23552
    %4 = vst.msk [vmem:[#allocation0] sm:$0x1] %vm3, %v2
    %s5 = scalar_lea.vmem %s0, 42
    %v6 = vld [vmem:[%s5] sm:$0x1]
    %s7 = scalar_lea.vmem %s0, 42
    %v8 = vld [vmem:[%s7] sm:$0x1]
    %vm9 = vcmask 15360
    %v10 = vsel %vm9, %v8, %v6
    %11 = vrot.lane.b32.xlu0 %v10, 126
    %v12 = vpop.permute.xlu0 %11
    %vm13 = vcmask 7168
    %s14 = scalar_lea.vmem [#allocation0], 8
    %15 = vst.msk [vmem:[%s14] sm:$0x1] %vm13, %v12
    %vm16 = vcmask 1048560
    %17 = vst.msk [vmem:[#allocation0] sm:$0x1] %vm16, %v12
    %s18 = scalar_lea.vmem %s0, 41
    %v19 = vld [vmem:[%s18] sm:$0x1]
    %20 = vrot.lane.b32.xlu0 %v19, 123
    %v21 = vpop.permute.xlu0 %20
    %vm22 = vcmask 1032152
    %23 = vst.msk [vmem:[#allocation0] sm:$0x1] %vm22, %v21
    %s24 = scalar_lea.vmem %s0, 40
    %v25 = vld [vmem:[%s24] sm:$0x1]
    %26 = vrot.lane.b32.xlu0 %v25, 120
    %v27 = vpop.permute.xlu0 %26
    %vm28 = vcmask 1007552
    %29 = vst.msk [vmem:[#allocation0] sm:$0x1] %vm28, %v27
    %s30 = scalar_lea.vmem %s0, 39
    %v31 = vld [vmem:[%s30] sm:$0x1]
    %32 = vrot.lane.b32.xlu0 %v31, 117
    %v33 = vpop.permute.xlu0 %32
    %vm34 = vcmask 982952
    %35 = vst.msk [vmem:[#allocation0] sm:$0x1] %vm34, %v33
    %s36 = scalar_lea.vmem %s0, 38
    %v37 = vld [vmem:[%s36] sm:$0x1]
    %38 = vrot.lane.b32.xlu0 %v37, 114
    %v39 = vpop.permute.xlu0 %38
    %vm40 = vcmask 958352
    %41 = vst.msk [vmem:[#allocation0] sm:$0x1] %vm40, %v39
    %s42 = scalar_lea.vmem %s0, 37
    %v43 = vld [vmem:[%s42] sm:$0x1]
    %44 = vrot.lane.b32.xlu0 %v43, 111
    %v45 = vpop.permute.xlu0 %44
    %vm46 = vcmask 933752
    %47 = vst.msk [vmem:[#allocation0] sm:$0x1] %vm46, %v45
    %s48 = scalar_lea.vmem %s0, 36
    %v49 = vld [vmem:[%s48] sm:$0x1]
    %50 = vrot.lane.b32.xlu0 %v49, 108
    %v51 = vpop.permute.xlu0 %50
    %vm52 = vcmask 909152
    %53 = vst.msk [vmem:[#allocation0] sm:$0x1] %vm52, %v51
    %s54 = scalar_lea.vmem %s0, 35
    %v55 = vld [vmem:[%s54] sm:$0x1]
    %56 = vrot.lane.b32.xlu0 %v55, 105
    %v57 = vpop.permute.xlu0 %56
    %vm58 = vcmask 884552
    %59 = vst.msk [vmem:[#allocation0] sm:$0x1] %vm58, %v57
    %s60 = scalar_lea.vmem %s0, 34
    %v61 = vld [vmem:[%s60] sm:$0x1]
    %62 = vrot.lane.b32.xlu0 %v61, 102
    %v63 = vpop.permute.xlu0 %62
    %vm64 = vcmask 859952
    %65 = vst.msk [vmem:[#allocation0] sm:$0x1] %vm64, %v63
    %s66 = scalar_lea.vmem %s0, 33
    %v67 = vld [vmem:[%s66] sm:$0x1]
    %68 = vrot.lane.b32.xlu0 %v67, 99
    %v69 = vpop.permute.xlu0 %68
    %vm70 = vcmask 835352
    %71 = vst.msk [vmem:[#allocation0] sm:$0x1] %vm70, %v69
    %s72 = scalar_lea.vmem %s0, 32
    %v73 = vld [vmem:[%s72] sm:$0x1]
    %74 = vrot.lane.b32.xlu0 %v73, 96
    %v75 = vpop.permute.xlu0 %74
    %vm76 = vcmask 810752
    %77 = vst.msk [vmem:[#allocation0] sm:$0x1] %vm76, %v75
    %s78 = scalar_lea.vmem %s0, 31
    %v79 = vld [vmem:[%s78] sm:$0x1]
    %80 = vrot.lane.b32.xlu0 %v79, 93
    %v81 = vpop.permute.xlu0 %80
    %vm82 = vcmask 786152
    %83 = vst.msk [vmem:[#allocation0] sm:$0x1] %vm82, %v81
    %s84 = scalar_lea.vmem %s0, 30
    %v85 = vld [vmem:[%s84] sm:$0x1]
    %86 = vrot.lane.b32.xlu0 %v85, 90
    %v87 = vpop.permute.xlu0 %86
    %vm88 = vcmask 761552
    %89 = vst.msk [vmem:[#allocation0] sm:$0x1] %vm88, %v87
    %s90 = scalar_lea.vmem %s0, 29
    %v91 = vld [vmem:[%s90] sm:$0x1]
    %92 = vrot.lane.b32.xlu0 %v91, 87
    %v93 = vpop.permute.xlu0 %92
    %vm94 = vcmask 736952
    %95 = vst.msk [vmem:[#allocation0] sm:$0x1] %vm94, %v93
    %s96 = scalar_lea.vmem %s0, 28
    %v97 = vld [vmem:[%s96] sm:$0x1]
    %98 = vrot.lane.b32.xlu0 %v97, 84
    %v99 = vpop.permute.xlu0 %98
    %vm100 = vcmask 712352
    %101 = vst.msk [vmem:[#allocation0] sm:$0x1] %vm100, %v99
    %s102 = scalar_lea.vmem %s0, 27
    %v103 = vld [vmem:[%s102] sm:$0x1]
    %104 = vrot.lane.b32.xlu0 %v103, 81
    %v105 = vpop.permute.xlu0 %104
    %vm106 = vcmask 687752
    %107 = vst.msk [vmem:[#allocation0] sm:$0x1] %vm106, %v105
    %s108 = scalar_lea.vmem %s0, 26
    %v109 = vld [vmem:[%s108] sm:$0x1]
    %110 = vrot.lane.b32.xlu0 %v109, 78
    %v111 = vpop.permute.xlu0 %110
    %vm112 = vcmask 663152
    %113 = vst.msk [vmem:[#allocation0] sm:$0x1] %vm112, %v111
    %s114 = scalar_lea.vmem %s0, 25
    %v115 = vld [vmem:[%s114] sm:$0x1]
    %116 = vrot.lane.b32.xlu0 %v115, 75
    %v117 = vpop.permute.xlu0 %116
    %vm118 = vcmask 638552
    %119 = vst.msk [vmem:[#allocation0] sm:$0x1] %vm118, %v117
    %s120 = scalar_lea.vmem %s0, 24
    %v121 = vld [vmem:[%s120] sm:$0x1]
    %122 = vrot.lane.b32.xlu0 %v121, 72
    %v123 = vpop.permute.xlu0 %122
    %vm124 = vcmask 613952
    %125 = vst.msk [vmem:[#allocation0] sm:$0x1] %vm124, %v123
    %s126 = scalar_lea.vmem %s0, 23
    %v127 = vld [vmem:[%s126] sm:$0x1]
    %128 = vrot.lane.b32.xlu0 %v127, 69
    %v129 = vpop.permute.xlu0 %128
    %vm130 = vcmask 589352
    %131 = vst.msk [vmem:[#allocation0] sm:$0x1] %vm130, %v129
    %s132 = scalar_lea.vmem %s0, 22
    %v133 = vld [vmem:[%s132] sm:$0x1]
    %134 = vrot.lane.b32.xlu0 %v133, 66
    %v135 = vpop.permute.xlu0 %134
    %vm136 = vcmask 564752
    %137 = vst.msk [vmem:[#allocation0] sm:$0x1] %vm136, %v135
    %s138 = scalar_lea.vmem %s0, 21
    %v139 = vld [vmem:[%s138] sm:$0x1]
    %140 = vrot.lane.b32.xlu0 %v139, 63
    %v141 = vpop.permute.xlu0 %140
    %vm142 = vcmask 540152
    %143 = vst.msk [vmem:[#allocation0] sm:$0x1] %vm142, %v141
    %s144 = scalar_lea.vmem %s0, 63
    %v145 = vld [vmem:[%s144] sm:$0x1]
    %146 = vrot.lane.b32.xlu0 %v145, 61
    %v147 = vpop.permute.xlu0 %146
    %vm148 = vcmask 523752
    %s149 = scalar_lea.vmem [#allocation0], 8
    %150 = vst.msk [vmem:[%s149] sm:$0x1] %vm148, %v147
    %s151 = scalar_lea.vmem %s0, 20
    %v152 = vld [vmem:[%s151] sm:$0x1]
    %153 = vrot.lane.b32.xlu0 %v152, 60
    %v154 = vpop.permute.xlu0 %153
    %vm155 = vcmask 515552
    %156 = vst.msk [vmem:[#allocation0] sm:$0x1] %vm155, %v154
    %s157 = scalar_lea.vmem %s0, 62
    %v158 = vld [vmem:[%s157] sm:$0x1]
    %159 = vrot.lane.b32.xlu0 %v158, 58
    %v160 = vpop.permute.xlu0 %159
    %vm161 = vcmask 499152
    %s162 = scalar_lea.vmem [#allocation0], 8
    %163 = vst.msk [vmem:[%s162] sm:$0x1] %vm161, %v160
    %s164 = scalar_lea.vmem %s0, 19
    %v165 = vld [vmem:[%s164] sm:$0x1]
    %166 = vrot.lane.b32.xlu0 %v165, 57
    %v167 = vpop.permute.xlu0 %166
    %vm168 = vcmask 490952
    %169 = vst.msk [vmem:[#allocation0] sm:$0x1] %vm168, %v167
    %s170 = scalar_lea.vmem %s0, 61
    %v171 = vld [vmem:[%s170] sm:$0x1]
    %172 = vrot.lane.b32.xlu0 %v171, 55
    %v173 = vpop.permute.xlu0 %172
    %vm174 = vcmask 474552
    %s175 = scalar_lea.vmem [#allocation0], 8
    %176 = vst.msk [vmem:[%s175] sm:$0x1] %vm174, %v173
    %s177 = scalar_lea.vmem %s0, 18
    %v178 = vld [vmem:[%s177] sm:$0x1]
    %179 = vrot.lane.b32.xlu0 %v178, 54
    %v180 = vpop.permute.xlu0 %179
    %vm181 = vcmask 466352
    %182 = vst.msk [vmem:[#allocation0] sm:$0x1] %vm181, %v180
    %s183 = scalar_lea.vmem %s0, 60
    %v184 = vld [vmem:[%s183] sm:$0x1]
    %185 = vrot.lane.b32.xlu0 %v184, 52
    %v186 = vpop.permute.xlu0 %185
    %vm187 = vcmask 449952
    %s188 = scalar_lea.vmem [#allocation0], 8
    %189 = vst.msk [vmem:[%s188] sm:$0x1] %vm187, %v186
    %s190 = scalar_lea.vmem %s0, 17
    %v191 = vld [vmem:[%s190] sm:$0x1]
    %192 = vrot.lane.b32.xlu0 %v191, 51
    %v193 = vpop.permute.xlu0 %192
    %vm194 = vcmask 441752
    %195 = vst.msk [vmem:[#allocation0] sm:$0x1] %vm194, %v193
    %s196 = scalar_lea.vmem %s0, 59
    %v197 = vld [vmem:[%s196] sm:$0x1]
    %198 = vrot.lane.b32.xlu0 %v197, 49
    %v199 = vpop.permute.xlu0 %198
    %vm200 = vcmask 425352
    %s201 = scalar_lea.vmem [#allocation0], 8
    %202 = vst.msk [vmem:[%s201] sm:$0x1] %vm200, %v199
    %s203 = scalar_lea.vmem %s0, 16
    %v204 = vld [vmem:[%s203] sm:$0x1]
    %205 = vrot.lane.b32.xlu0 %v204, 48
    %v206 = vpop.permute.xlu0 %205
    %vm207 = vcmask 417152
    %208 = vst.msk [vmem:[#allocation0] sm:$0x1] %vm207, %v206
    %s209 = scalar_lea.vmem %s0, 58
    %v210 = vld [vmem:[%s209] sm:$0x1]
    %211 = vrot.lane.b32.xlu0 %v210, 46
    %v212 = vpop.permute.xlu0 %211
    %vm213 = vcmask 400752
    %s214 = scalar_lea.vmem [#allocation0], 8
    %215 = vst.msk [vmem:[%s214] sm:$0x1] %vm213, %v212
    %s216 = scalar_lea.vmem %s0, 15
    %v217 = vld [vmem:[%s216] sm:$0x1]
    %218 = vrot.lane.b32.xlu0 %v217, 45
    %v219 = vpop.permute.xlu0 %218
    %vm220 = vcmask 392552
    %221 = vst.msk [vmem:[#allocation0] sm:$0x1] %vm220, %v219
    %s222 = scalar_lea.vmem %s0, 57
    %v223 = vld [vmem:[%s222] sm:$0x1]
    %224 = vrot.lane.b32.xlu0 %v223, 43
    %v225 = vpop.permute.xlu0 %224
    %vm226 = vcmask 376152
    %s227 = scalar_lea.vmem [#allocation0], 8
    %228 = vst.msk [vmem:[%s227] sm:$0x1] %vm226, %v225
    %s229 = scalar_lea.vmem %s0, 14
    %v230 = vld [vmem:[%s229] sm:$0x1]
    %231 = vrot.lane.b32.xlu0 %v230, 42
    %v232 = vpop.permute.xlu0 %231
    %vm233 = vcmask 367952
    %234 = vst.msk [vmem:[#allocation0] sm:$0x1] %vm233, %v232
    %s235 = scalar_lea.vmem %s0, 56
    %v236 = vld [vmem:[%s235] sm:$0x1]
    %237 = vrot.lane.b32.xlu0 %v236, 40
    %v238 = vpop.permute.xlu0 %237
    %vm239 = vcmask 351552
    %s240 = scalar_lea.vmem [#allocation0], 8
    %241 = vst.msk [vmem:[%s240] sm:$0x1] %vm239, %v238
    %s242 = scalar_lea.vmem %s0, 13
    %v243 = vld [vmem:[%s242] sm:$0x1]
    %244 = vrot.lane.b32.xlu0 %v243, 39
    %v245 = vpop.permute.xlu0 %244
    %vm246 = vcmask 343352
    %247 = vst.msk [vmem:[#allocation0] sm:$0x1] %vm246, %v245
    %s248 = scalar_lea.vmem %s0, 55
    %v249 = vld [vmem:[%s248] sm:$0x1]
    %250 = vrot.lane.b32.xlu0 %v249, 37
    %v251 = vpop.permute.xlu0 %250
    %vm252 = vcmask 326952
    %s253 = scalar_lea.vmem [#allocation0], 8
    %254 = vst.msk [vmem:[%s253] sm:$0x1] %vm252, %v251
    %s255 = scalar_lea.vmem %s0, 12
    %v256 = vld [vmem:[%s255] sm:$0x1]
    %257 = vrot.lane.b32.xlu0 %v256, 36
    %v258 = vpop.permute.xlu0 %257
    %vm259 = vcmask 318752
    %260 = vst.msk [vmem:[#allocation0] sm:$0x1] %vm259, %v258
    %s261 = scalar_lea.vmem %s0, 54
    %v262 = vld [vmem:[%s261] sm:$0x1]
    %263 = vrot.lane.b32.xlu0 %v262, 34
    %v264 = vpop.permute.xlu0 %263
    %vm265 = vcmask 302352
    %s266 = scalar_lea.vmem [#allocation0], 8
    %267 = vst.msk [vmem:[%s266] sm:$0x1] %vm265, %v264
    %s268 = scalar_lea.vmem %s0, 11
    %v269 = vld [vmem:[%s268] sm:$0x1]
    %270 = vrot.lane.b32.xlu0 %v269, 33
    %v271 = vpop.permute.xlu0 %270
    %vm272 = vcmask 294152
    %273 = vst.msk [vmem:[#allocation0] sm:$0x1] %vm272, %v271
    %s274 = scalar_lea.vmem %s0, 53
    %v275 = vld [vmem:[%s274] sm:$0x1]
    %276 = vrot.lane.b32.xlu0 %v275, 31
    %v277 = vpop.permute.xlu0 %276
    %vm278 = vcmask 277752
    %s279 = scalar_lea.vmem [#allocation0], 8
    %280 = vst.msk [vmem:[%s279] sm:$0x1] %vm278, %v277
    %s281 = scalar_lea.vmem %s0, 10
    %v282 = vld [vmem:[%s281] sm:$0x1]
    %283 = vrot.lane.b32.xlu0 %v282, 30
    %v284 = vpop.permute.xlu0 %283
    %vm285 = vcmask 269552
    %286 = vst.msk [vmem:[#allocation0] sm:$0x1] %vm285, %v284
    %s287 = scalar_lea.vmem %s0, 52
    %v288 = vld [vmem:[%s287] sm:$0x1]
    %289 = vrot.lane.b32.xlu0 %v288, 28
    %v290 = vpop.permute.xlu0 %289
    %vm291 = vcmask 253152
    %s292 = scalar_lea.vmem [#allocation0], 8
    %293 = vst.msk [vmem:[%s292] sm:$0x1] %vm291, %v290
    %s294 = scalar_lea.vmem %s0, 9
    %v295 = vld [vmem:[%s294] sm:$0x1]
    %296 = vrot.lane.b32.xlu0 %v295, 27
    %v297 = vpop.permute.xlu0 %296
    %vm298 = vcmask 244952
    %299 = vst.msk [vmem:[#allocation0] sm:$0x1] %vm298, %v297
    %s300 = scalar_lea.vmem %s0, 51
    %v301 = vld [vmem:[%s300] sm:$0x1]
    %302 = vrot.lane.b32.xlu0 %v301, 25
    %v303 = vpop.permute.xlu0 %302
    %vm304 = vcmask 228552
    %s305 = scalar_lea.vmem [#allocation0], 8
    %306 = vst.msk [vmem:[%s305] sm:$0x1] %vm304, %v303
    %s307 = scalar_lea.vmem %s0, 8
    %v308 = vld [vmem:[%s307] sm:$0x1]
    %309 = vrot.lane.b32.xlu0 %v308, 24
    %v310 = vpop.permute.xlu0 %309
    %vm311 = vcmask 220352
    %312 = vst.msk [vmem:[#allocation0] sm:$0x1] %vm311, %v310
    %s313 = scalar_lea.vmem %s0, 50
    %v314 = vld [vmem:[%s313] sm:$0x1]
    %315 = vrot.lane.b32.xlu0 %v314, 22
    %v316 = vpop.permute.xlu0 %315
    %vm317 = vcmask 203952
    %s318 = scalar_lea.vmem [#allocation0], 8
    %319 = vst.msk [vmem:[%s318] sm:$0x1] %vm317, %v316
    %s320 = scalar_lea.vmem %s0, 7
    %v321 = vld [vmem:[%s320] sm:$0x1]
    %322 = vrot.lane.b32.xlu0 %v321, 21
    %v323 = vpop.permute.xlu0 %322
    %vm324 = vcmask 195752
    %325 = vst.msk [vmem:[#allocation0] sm:$0x1] %vm324, %v323
    %s326 = scalar_lea.vmem %s0, 49
    %v327 = vld [vmem:[%s326] sm:$0x1]
    %328 = vrot.lane.b32.xlu0 %v327, 19
    %v329 = vpop.permute.xlu0 %328
    %vm330 = vcmask 179352
    %s331 = scalar_lea.vmem [#allocation0], 8
    %332 = vst.msk [vmem:[%s331] sm:$0x1] %vm330, %v329
    %s333 = scalar_lea.vmem %s0, 6
    %v334 = vld [vmem:[%s333] sm:$0x1]
    %335 = vrot.lane.b32.xlu0 %v334, 18
    %v336 = vpop.permute.xlu0 %335
    %vm337 = vcmask 171152
    %338 = vst.msk [vmem:[#allocation0] sm:$0x1] %vm337, %v336
    %s339 = scalar_lea.vmem %s0, 48
    %v340 = vld [vmem:[%s339] sm:$0x1]
    %341 = vrot.lane.b32.xlu0 %v340, 16
    %v342 = vpop.permute.xlu0 %341
    %vm343 = vcmask 154752
    %s344 = scalar_lea.vmem [#allocation0], 8
    %345 = vst.msk [vmem:[%s344] sm:$0x1] %vm343, %v342
    %s346 = scalar_lea.vmem %s0, 5
    %v347 = vld [vmem:[%s346] sm:$0x1]
    %348 = vrot.lane.b32.xlu0 %v347, 15
    %v349 = vpop.permute.xlu0 %348
    %vm350 = vcmask 146552
    %351 = vst.msk [vmem:[#allocation0] sm:$0x1] %vm350, %v349
    %s352 = scalar_lea.vmem %s0, 47
    %v353 = vld [vmem:[%s352] sm:$0x1]
    %354 = vrot.lane.b32.xlu0 %v353, 13
    %v355 = vpop.permute.xlu0 %354
    %vm356 = vcmask 130152
    %s357 = scalar_lea.vmem [#allocation0], 8
    %358 = vst.msk [vmem:[%s357] sm:$0x1] %vm356, %v355
    %s359 = scalar_lea.vmem %s0, 4
    %v360 = vld [vmem:[%s359] sm:$0x1]
    %361 = vrot.lane.b32.xlu0 %v360, 12
    %v362 = vpop.permute.xlu0 %361
    %vm363 = vcmask 121952
    %364 = vst.msk [vmem:[#allocation0] sm:$0x1] %vm363, %v362
    %s365 = scalar_lea.vmem %s0, 46
    %v366 = vld [vmem:[%s365] sm:$0x1]
    %367 = vrot.lane.b32.xlu0 %v366, 10
    %v368 = vpop.permute.xlu0 %367
    %vm369 = vcmask 105552
    %s370 = scalar_lea.vmem [#allocation0], 8
    %371 = vst.msk [vmem:[%s370] sm:$0x1] %vm369, %v368
    %s372 = scalar_lea.vmem %s0, 3
    %v373 = vld [vmem:[%s372] sm:$0x1]
    %374 = vrot.lane.b32.xlu0 %v373, 9
    %v375 = vpop.permute.xlu0 %374
    %vm376 = vcmask 97352
    %377 = vst.msk [vmem:[#allocation0] sm:$0x1] %vm376, %v375
    %s378 = scalar_lea.vmem %s0, 45
    %v379 = vld [vmem:[%s378] sm:$0x1]
    %380 = vrot.lane.b32.xlu0 %v379, 7
    %v381 = vpop.permute.xlu0 %380
    %vm382 = vcmask 80952
    %s383 = scalar_lea.vmem [#allocation0], 8
    %384 = vst.msk [vmem:[%s383] sm:$0x1] %vm382, %v381
    %s385 = scalar_lea.vmem %s0, 2
    %v386 = vld [vmem:[%s385] sm:$0x1]
    %387 = vrot.lane.b32.xlu0 %v386, 6
    %v388 = vpop.permute.xlu0 %387
    %vm389 = vcmask 72752
    %390 = vst.msk [vmem:[#allocation0] sm:$0x1] %vm389, %v388
    %s391 = scalar_lea.vmem %s0, 44
    %v392 = vld [vmem:[%s391] sm:$0x1]
    %393 = vrot.lane.b32.xlu0 %v392, 4
    %v394 = vpop.permute.xlu0 %393
    %vm395 = vcmask 56352
    %s396 = scalar_lea.vmem [#allocation0], 8
    %397 = vst.msk [vmem:[%s396] sm:$0x1] %vm395, %v394
    %s398 = scalar_lea.vmem %s0, 1
    %v399 = vld [vmem:[%s398] sm:$0x1]
    %400 = vrot.lane.b32.xlu0 %v399, 3
    %v401 = vpop.permute.xlu0 %400
    %vm402 = vcmask 48152
    %403 = vst.msk [vmem:[#allocation0] sm:$0x1] %vm402, %v401
    %s404 = scalar_lea.vmem %s0, 43
    %v405 = vld [vmem:[%s404] sm:$0x1]
    %406 = vrot.lane.b32.xlu0 %v405, 1
    %v407 = vpop.permute.xlu0 %406
    %vm408 = vcmask 31752
    %s409 = scalar_lea.vmem [#allocation0], 8
    %410 = vst.msk [vmem:[%s409] sm:$0x1] %vm408, %v407
    %s412 = sshllo.u32 0, 1
    %v414 = vld [vmem:[#allocation0] sm:%s412]
    %s415 = sshllo.u32 0, 1
    %416 = vst [vmem:[%s1] sm:%s415] %v414
    %s417 = scalar_lea.vmem [#allocation0], 8
    %v418 = vld [vmem:[%s417] sm:%s412]
    %s419 = sshllo.u32 0, 1
    %s420 = scalar_lea.vmem %s1, 1
    %421 = vst [vmem:[%s420] sm:%s419] %v418

// kernel: generator_forward.19
$region0: #{generator_forward.19}
  #allocation0 [shape = 'u32[]', space=smem, size = 0x4, offset = 0x4, fixed_abs, tag = 'smem constant byte address 0x4 - core index']
  #allocation1 [shape = 'u32[144,128]{1,0:T(1,128)}', space=vmem, size = 0x12000, scoped, tag = 'internal scratch']
  %s0 = inlined_call_operand.vmem [shape: f32[128,192], index: 0, kind: input, shape index: {}]
  %s1 = inlined_call_operand.vmem [shape: f32[1,192], index: 1, kind: input, shape index: {}]
  %s2 = inlined_call_operand.vmem [shape: f32[128,192], index: 2, kind: output, shape index: {}]
  %s3 = sld [smem:[#allocation0]]
  $region18: #{generator_forward.19} parent=0
    _
  %s5 = ssub.s32 1, %s3
  %s6 = scalar_select 0, %s5, %s3
  // Predicated region
  $region2: #{generator_forward.19} parent=0 // pred_check
    _
  $region3: #{generator_forward.19} parent=0 // pred_check_branch
    %8 = sbr.rel (0) target = $region5
  $region4: #{generator_forward.19} parent=0 // pred_region
    _
  $region5: #{generator_forward.19} parent=0 // pred_fallthru
    _
  // Predicated region
  $region6: #{generator_forward.19} parent=0 // pred_check
    _
  $region7: #{generator_forward.19} parent=0 // pred_check_branch
    %10 = sbr.rel (0) target = $region9
  $region8: #{generator_forward.19} parent=0 // pred_region
    _
  $region9: #{generator_forward.19} parent=0 // pred_fallthru
    _
  %v11 = vld [vmem:[%s0] sm:$0xff]
  %v12 = vld [vmem:[%s0 + $0x8] sm:$0xff]
  %v13 = vld [vmem:[%s0 + $0x10] sm:$0xff]
  %v14 = vld [vmem:[%s0 + $0x18] sm:$0xff]
  %v15 = vld [vmem:[%s0 + $0x20] sm:$0xff]
  %v16 = vld [vmem:[%s0 + $0x28] sm:$0xff]
  %v17 = vld [vmem:[%s0 + $0x30] sm:$0xff]
  %v18 = vld [vmem:[%s0 + $0x38] sm:$0xff]
  %v19 = vld [vmem:[%s0 + $0x40] sm:$0xff]
  %v20 = vld [vmem:[%s0 + $0x48] sm:$0xff]
  %v21 = vld [vmem:[%s0 + $0x50] sm:$0xff]
  %v22 = vld [vmem:[%s0 + $0x58] sm:$0xff]
  %v23 = vld [vmem:[%s0 + $0x60] sm:$0xff]
  %v24 = vld [vmem:[%s0 + $0x68] sm:$0xff]
  %v25 = vld [vmem:[%s0 + $0x70] sm:$0xff]
  %v26 = vld [vmem:[%s0 + $0x78] sm:$0xff]
  %v27 = vld [vmem:[%s0 + $0x80] sm:$0xff]
  %v28 = vld [vmem:[%s0 + $0x88] sm:$0xff]
  %v29 = vld [vmem:[%s0 + $0x90] sm:$0xff]
  %v30 = vld [vmem:[%s0 + $0x98] sm:$0xff]
  %v31 = vld [vmem:[%s0 + $0xa0] sm:$0xff]
  %v32 = vld [vmem:[%s0 + $0xa8] sm:$0xff]
  %v33 = vld [vmem:[%s0 + $0xb0] sm:$0xff]
  %v34 = vld [vmem:[%s0 + $0xb8] sm:$0xff]
  %v35 = vld [vmem:[%s0 + $0xc0] sm:$0xff]
  %v36 = vld [vmem:[%s0 + $0xc8] sm:$0xff]
  %v37 = vld [vmem:[%s0 + $0xd0] sm:$0xff]
  %v38 = vld [vmem:[%s0 + $0xd8] sm:$0xff]
  %v39 = vld [vmem:[%s0 + $0xe0] sm:$0xff]
  %v40 = vld [vmem:[%s0 + $0xe8] sm:$0xff]
  %v41 = vld [vmem:[%s0 + $0xf0] sm:$0xff]
  %v42 = vld [vmem:[%s0 + $0xf8] sm:$0xff]
  %v43 = vld [vmem:[%s1] sm:$0x3]
  %v45 = vlaneseq
  %v46 = vshrl.u32 %v45, 7
  %v47 = vsub.s32 0, %v46
  %v48 = vrot.slane %v43, %v47
  %v49 = vlaneseq
  %v50 = vshrl.u32 %v49, 7
  %v51 = vsub.s32 1, %v50
  %v52 = vrot.slane %v43, %v51
  %v55 = vadd.f32 %v11, %v48
  %v56 = vadd.f32 %v12, %v52
  %v57 = vadd.f32 %v13, %v48
  %v58 = vadd.f32 %v14, %v52
  %v59 = vadd.f32 %v15, %v48
  %v60 = vadd.f32 %v16, %v52
  %v61 = vadd.f32 %v17, %v48
  %v62 = vadd.f32 %v18, %v52
  %v63 = vadd.f32 %v19, %v48
  %v64 = vadd.f32 %v20, %v52
  %v65 = vadd.f32 %v21, %v48
  %v66 = vadd.f32 %v22, %v52
  %v67 = vadd.f32 %v23, %v48
  %v68 = vadd.f32 %v24, %v52
  %v69 = vadd.f32 %v25, %v48
  %v70 = vadd.f32 %v26, %v52
  %v71 = vadd.f32 %v27, %v48
  %v72 = vadd.f32 %v28, %v52
  %v73 = vadd.f32 %v29, %v48
  %v74 = vadd.f32 %v30, %v52
  %v75 = vadd.f32 %v31, %v48
  %v76 = vadd.f32 %v32, %v52
  %v77 = vadd.f32 %v33, %v48
  %v78 = vadd.f32 %v34, %v52
  %v79 = vadd.f32 %v35, %v48
  %v80 = vadd.f32 %v36, %v52
  %v81 = vadd.f32 %v37, %v48
  %v82 = vadd.f32 %v38, %v52
  %v83 = vadd.f32 %v39, %v48
  %v84 = vadd.f32 %v40, %v52
  %v85 = vadd.f32 %v41, %v48
  %v86 = vadd.f32 %v42, %v52
  %v87 = vtanh.pop %v55
  %v88 = vtanh.pop %v56
  %v89 = vtanh.pop %v57
  %v90 = vtanh.pop %v58
  %v91 = vtanh.pop %v59
  %v92 = vtanh.pop %v60
  %v93 = vtanh.pop %v61
  %v94 = vtanh.pop %v62
  %v95 = vtanh.pop %v63
  %v96 = vtanh.pop %v64
  %v97 = vtanh.pop %v65
  %v98 = vtanh.pop %v66
  %v99 = vtanh.pop %v67
  %v100 = vtanh.pop %v68
  %v101 = vtanh.pop %v69
  %v102 = vtanh.pop %v70
  %v103 = vtanh.pop %v71
  %v104 = vtanh.pop %v72
  %v105 = vtanh.pop %v73
  %v106 = vtanh.pop %v74
  %v107 = vtanh.pop %v75
  %v108 = vtanh.pop %v76
  %v109 = vtanh.pop %v77
  %v110 = vtanh.pop %v78
  %v111 = vtanh.pop %v79
  %v112 = vtanh.pop %v80
  %v113 = vtanh.pop %v81
  %v114 = vtanh.pop %v82
  %v115 = vtanh.pop %v83
  %v116 = vtanh.pop %v84
  %v117 = vtanh.pop %v85
  %v118 = vtanh.pop %v86
  %119 = vst [vmem:[%s2] sm:$0xff] %v87
  %vm120 = vcmask 523264
  %121 = vst.msk [vmem:[%s2 + $0x8] sm:$0xff] %vm120, %v88
  %122 = vst [vmem:[%s2 + $0x10] sm:$0xff] %v89
  %123 = vst.msk [vmem:[%s2 + $0x18] sm:$0xff] %vm120, %v90
  %124 = vst [vmem:[%s2 + $0x20] sm:$0xff] %v91
  %125 = vst.msk [vmem:[%s2 + $0x28] sm:$0xff] %vm120, %v92
  %126 = vst [vmem:[%s2 + $0x30] sm:$0xff] %v93
  %127 = vst.msk [vmem:[%s2 + $0x38] sm:$0xff] %vm120, %v94
  %128 = vst [vmem:[%s2 + $0x40] sm:$0xff] %v95
  %129 = vst.msk [vmem:[%s2 + $0x48] sm:$0xff] %vm120, %v96
  %130 = vst [vmem:[%s2 + $0x50] sm:$0xff] %v97
  %131 = vst.msk [vmem:[%s2 + $0x58] sm:$0xff] %vm120, %v98
  %132 = vst [vmem:[%s2 + $0x60] sm:$0xff] %v99
  %133 = vst.msk [vmem:[%s2 + $0x68] sm:$0xff] %vm120, %v100
  %134 = vst [vmem:[%s2 + $0x70] sm:$0xff] %v101
  %135 = vst.msk [vmem:[%s2 + $0x78] sm:$0xff] %vm120, %v102
  %136 = vst [vmem:[%s2 + $0x80] sm:$0xff] %v103
  %137 = vst.msk [vmem:[%s2 + $0x88] sm:$0xff] %vm120, %v104
  %138 = vst [vmem:[%s2 + $0x90] sm:$0xff] %v105
  %139 = vst.msk [vmem:[%s2 + $0x98] sm:$0xff] %vm120, %v106
  %140 = vst [vmem:[%s2 + $0xa0] sm:$0xff] %v107
  %141 = vst.msk [vmem:[%s2 + $0xa8] sm:$0xff] %vm120, %v108
  %142 = vst [vmem:[%s2 + $0xb0] sm:$0xff] %v109
  %143 = vst.msk [vmem:[%s2 + $0xb8] sm:$0xff] %vm120, %v110
  %144 = vst [vmem:[%s2 + $0xc0] sm:$0xff] %v111
  %145 = vst.msk [vmem:[%s2 + $0xc8] sm:$0xff] %vm120, %v112
  %146 = vst [vmem:[%s2 + $0xd0] sm:$0xff] %v113
  %147 = vst.msk [vmem:[%s2 + $0xd8] sm:$0xff] %vm120, %v114
  %148 = vst [vmem:[%s2 + $0xe0] sm:$0xff] %v115
  %149 = vst.msk [vmem:[%s2 + $0xe8] sm:$0xff] %vm120, %v116
  %150 = vst [vmem:[%s2 + $0xf0] sm:$0xff] %v117
  %151 = vst.msk [vmem:[%s2 + $0xf8] sm:$0xff] %vm120, %v118
  // Predicated region
  $region10: #{generator_forward.19} parent=0 // pred_check
    _
  $region11: #{generator_forward.19} parent=0 // pred_check_branch
    %153 = sbr.rel (0) target = $region13
  $region12: #{generator_forward.19} parent=0 // pred_region
    _
  $region13: #{generator_forward.19} parent=0 // pred_fallthru
    _
  // Predicated region
  $region14: #{generator_forward.19} parent=0 // pred_check
    _
  $region15: #{generator_forward.19} parent=0 // pred_check_branch
    %155 = sbr.rel (0) target = $region17
  $region16: #{generator_forward.19} parent=0 // pred_region
    _
  $region17: #{generator_forward.19} parent=0 // pred_fallthru
    _

</llo_original>
